<compile_context>
chip_gen: v6e
topology: v6e:2x2x1
jax: 0.10.0
libtpu: 0.0.40
codegen_flags: <defaults>
</compile_context>

<pallas_src>
import functools
import math

import jax
import jax.numpy as jnp
from jax.experimental import pallas as pl
from jax.experimental.pallas import tpu as pltpu

INP_DIM = 300
HDIM = 1000
RHO_STAR = 1.0 - 0.85  # 0.15
MXU_ROWS = 256         # MXU row granularity on v6e/v7x (multiple of v5e's 128)


def _round_up(n, m):
    return ((n + m - 1) // m) * m


def _choose_tb(batch, block_rows):
    """Batch tile: MXU-row aligned, >=2 tiles when possible (v7x megacore)."""
    if batch <= MXU_ROWS:
        return batch  # single full-extent tile: no ragged rows, no masking
    block_rows = max(MXU_ROWS, (block_rows // MXU_ROWS) * MXU_ROWS)
    half = _round_up(-(-batch // 2), MXU_ROWS)   # keep at least 2 grid tiles
    return min(block_rows, half)


def _spine_kernel(x_ref, w1_ref, b1_ref, w2_ref, b2_ref,
                  h_ref, hparts_ref, xparts_ref, *, batch, block_rows):
    """One batch tile: linear1 -> clamp(0,1) -> linear2 + per-tile loss partials.

    x_ref      : (TB, INP_DIM)   f32   (ragged last block: OOB rows undefined)
    w1_ref     : (INP_DIM, HDIM) bf16  (resident across grid steps)
    b1_ref     : (1, HDIM)       f32
    w2_ref     : (HDIM, INP_DIM) bf16  (resident across grid steps)
    b2_ref     : (1, INP_DIM)    f32
    h_ref      : (TB, HDIM)      f32   (Pallas drops OOB rows on writeback)
    hparts_ref : (1, 8, HDIM)    f32   row 0 = colsum(h), row 1 = colsum(h*(1-h))
    xparts_ref : (1, 8, INP_DIM) f32   row 0 = colsum((out-x)^2)
                 (rows >= written ones are never read by the wrapper)
    """
    x = x_ref[...]                                   # (TB, INP_DIM) f32
    xb = x.astype(jnp.bfloat16)

    # linear1 (bf16 MXU operands, f32 accumulation) + clamp in f32.
    z1 = jnp.dot(xb, w1_ref[...], preferred_element_type=jnp.float32) + b1_ref[...]
    h = jnp.clip(z1, 0.0, 1.0)                       # (TB, HDIM) f32
    h_ref[...] = h

    # linear2 (bf16 MXU operands, f32 accumulation).
    out = jnp.dot(h.astype(jnp.bfloat16), w2_ref[...],
                  preferred_element_type=jnp.float32) + b2_ref[...]
    diff = out - x                                   # (TB, INP_DIM) f32

    def write_partials(hv, dv):
        # Column (sublane) sums only; scalar/ASL reductions happen in the wrapper.
        hparts_ref[0, 0:1, :] = jnp.sum(hv, axis=0, keepdims=True)
        hparts_ref[0, 1:2, :] = jnp.sum(hv * (1.0 - hv), axis=0, keepdims=True)
        xparts_ref[0, 0:1, :] = jnp.sum(dv * dv, axis=0, keepdims=True)

    rem = batch % block_rows  # static
    if rem == 0:
        # Every tile is full: no masking anywhere.
        write_partials(h, diff)
    else:
        is_last = pl.program_id(0) == pl.num_programs(0) - 1

        @pl.when(jnp.logical_not(is_last))
        def _():
            write_partials(h, diff)

        @pl.when(is_last)
        def _():
            # OOB rows of the ragged block are undefined (possibly NaN/Inf):
            # select, don't multiply.
            valid = jax.lax.broadcasted_iota(jnp.int32, (block_rows, 1), 0) < rem
            write_partials(jnp.where(valid, h, 0.0), jnp.where(valid, diff, 0.0))


def prepare_params(w1_pt, b1, w2_pt, b2):
    """One-time weight prep: transpose to (in, out) layout and cast to bf16."""
    return dict(
        w1_t=jnp.asarray(w1_pt, jnp.float32).T.astype(jnp.bfloat16),  # (INP_DIM, HDIM)
        b1=jnp.asarray(b1, jnp.float32).reshape(1, HDIM),
        w2_t=jnp.asarray(w2_pt, jnp.float32).T.astype(jnp.bfloat16),  # (HDIM, INP_DIM)
        b2=jnp.asarray(b2, jnp.float32).reshape(1, INP_DIM),
        w1_pt=jnp.asarray(w1_pt, jnp.float32),    # returned like PyTorch .weight.data
    )


@functools.partial(jax.jit, static_argnames=("block_rows",))
def spine_forward(x, params, *, block_rows=1024):
    """x: (B, INP_DIM). Returns (h, linear1.weight, (recon, psl, asl))."""
    B = x.shape[0]
    tb = _choose_tb(B, block_rows)
    num_tiles = -(-B // tb)

    x32 = x.astype(jnp.float32)
    kernel = functools.partial(_spine_kernel, batch=B, block_rows=tb)

    flops = 4 * B * INP_DIM * HDIM                      # two matmuls
    bytes_accessed = (B * INP_DIM * 4                   # x read
                      + B * HDIM * 4                    # h write (dominant stream)
                      + 2 * INP_DIM * HDIM * 2          # bf16 weights (resident)
                      + (HDIM + INP_DIM) * 4            # biases
                      + num_tiles * 8 * (HDIM + INP_DIM) * 4)  # loss partials

    # Scoped-VMEM default (32 MiB) is plenty at TB<=1024; only raise it for
    # very large user-requested tiles (v5e/v6e; keep default on v7x).
    vmem_limit = (48 << 20) if tb > 1536 else None

    h, hparts, xparts = pl.pallas_call(
        kernel,
        out_shape=(
            jax.ShapeDtypeStruct((B, HDIM), jnp.float32),
            jax.ShapeDtypeStruct((num_tiles, 8, HDIM), jnp.float32),
            jax.ShapeDtypeStruct((num_tiles, 8, INP_DIM), jnp.float32),
        ),
        grid=(num_tiles,),
        in_specs=[
            pl.BlockSpec((tb, INP_DIM), lambda i: (i, 0)),      # x tile (pipelined)
            pl.BlockSpec((INP_DIM, HDIM), lambda i: (0, 0)),    # w1 (resident)
            pl.BlockSpec((1, HDIM), lambda i: (0, 0)),          # b1 (resident)
            pl.BlockSpec((HDIM, INP_DIM), lambda i: (0, 0)),    # w2 (resident)
            pl.BlockSpec((1, INP_DIM), lambda i: (0, 0)),       # b2 (resident)
        ],
        out_specs=(
            pl.BlockSpec((tb, HDIM), lambda i: (i, 0)),         # h tile
            pl.BlockSpec((1, 8, HDIM), lambda i: (i, 0, 0)),    # h/psl column partials
            pl.BlockSpec((1, 8, INP_DIM), lambda i: (i, 0, 0)),  # sse column partials
        ),
        compiler_params=pltpu.CompilerParams(
            dimension_semantics=("parallel",),
            vmem_limit_bytes=vmem_limit),
        cost_estimate=pl.CostEstimate(
            flops=flops, transcendentals=0, bytes_accessed=bytes_accessed),
    )(x32, params["w1_t"], params["b1"], params["w2_t"], params["b2"])

    # Final tiny reductions in JAX with full-batch denominators.
    col_sums = jnp.sum(hparts[:, 0, :], axis=0)                 # (HDIM,)
    psl_total = jnp.sum(hparts[:, 1, :])
    sse_total = jnp.sum(xparts[:, 0, :])

    recon = sse_total / jnp.float32(B * INP_DIM)
    psl = psl_total / jnp.float32(B * HDIM)
    mean_h = col_sums / jnp.float32(B)
    asl = jnp.mean(jnp.maximum(mean_h - RHO_STAR, 0.0) ** 2)

    return h, params["w1_pt"], (recon, psl, asl)


def _init_params(key):
    """Deterministic init matching nn.Linear + xavier_uniform on weights."""
    k1, k2, k3, k4 = jax.random.split(key, 4)

    def xavier(k, out_f, in_f):
        bound = math.sqrt(6.0 / (in_f + out_f))
        return jax.random.uniform(k, (out_f, in_f), jnp.float32, -bound, bound)

    def bias(k, in_f, out_f):
        bound = 1.0 / math.sqrt(in_f)
        return jax.random.uniform(k, (out_f,), jnp.float32, -bound, bound)

    w1 = xavier(k1, HDIM, INP_DIM)      # linear1.weight : (1000, 300)
    b1 = bias(k2, INP_DIM, HDIM)        # linear1.bias   : (1000,)
    w2 = xavier(k3, INP_DIM, HDIM)      # linear2.weight : (300, 1000)
    b2 = bias(k4, HDIM, INP_DIM)        # linear2.bias   : (300,)
    return w1, b1, w2, b2


def _reference(x, w1_pt, b1, w2_pt, b2, match_kernel_numerics=False):
    if match_kernel_numerics:
        # Same bf16-operand / f32-accumulate numerics as the kernel.
        xm = x.astype(jnp.bfloat16)
        w1m = w1_pt.T.astype(jnp.bfloat16)
        w2m = w2_pt.T.astype(jnp.bfloat16)
        z1 = jnp.dot(xm, w1m, preferred_element_type=jnp.float32) + b1
        h = jnp.clip(z1, 0.0, 1.0)
        out = jnp.dot(h.astype(jnp.bfloat16), w2m,
                      preferred_element_type=jnp.float32) + b2
    else:
        z1 = x @ w1_pt.T + b1
        h = jnp.clip(z1, 0.0, 1.0)
        out = h @ w2_pt.T + b2
    recon = jnp.mean((out - x) ** 2)
    psl = jnp.sum(h * (1.0 - h)) / (x.shape[0] * HDIM)
    asl = jnp.mean(jnp.maximum(jnp.mean(h, axis=0) - RHO_STAR, 0.0) ** 2)
    return h, recon, psl, asl


if __name__ == "__main__":
    key = jax.random.PRNGKey(0)
    k_param, k_x, k_x2 = jax.random.split(key, 3)

    w1, b1, w2, b2 = _init_params(k_param)
    params = prepare_params(w1, b1, w2, b2)   # one-time transpose + bf16 cast

    # B not a multiple of the 256-row tile -> exercises the 2-tile grid with a
    # ragged, pl.when-masked last block (no host-side pad/slice anymore).
    B = 300
    x = jax.random.normal(k_x, (B, INP_DIM), jnp.float32)

    h, w1_out, (recon, psl, asl) = spine_forward(x, params)
    jax.block_until_ready((h, w1_out, recon, psl, asl))

    # (1) Strict check against a JAX reference with matched (bf16 MXU) numerics.
    h_m, recon_m, psl_m, asl_m = _reference(
        x, w1, b1, w2, b2, match_kernel_numerics=True)
    assert jnp.allclose(h, h_m, rtol=1e-4, atol=1e-5), "h mismatch (matched numerics)"
    assert jnp.allclose(recon, recon_m, rtol=1e-4, atol=1e-6), "recon mismatch"
    assert jnp.allclose(psl, psl_m, rtol=1e-4, atol=1e-6), "psl mismatch"
    assert jnp.allclose(asl, asl_m, rtol=1e-4, atol=1e-6), "asl mismatch"

    # (2) Loose check against the pure-f32 module semantics (bf16 operands shift
    #     results slightly; only the scalar losses are checked here).
    _, recon_f, psl_f, asl_f = _reference(x, w1, b1, w2, b2)
    assert jnp.allclose(recon, recon_f, rtol=5e-2, atol=1e-3), "recon drift vs f32"
    assert jnp.allclose(psl, psl_f, rtol=5e-2, atol=1e-3), "psl drift vs f32"
    assert jnp.allclose(asl, asl_f, rtol=5e-2, atol=1e-3), "asl drift vs f32"

    # (3) Small-batch path: single full-extent tile, mask-free partials.
    Bs = 64
    xs = jax.random.normal(k_x2, (Bs, INP_DIM), jnp.float32)
    hs, _, (recon_s, psl_s, asl_s) = spine_forward(xs, params)
    jax.block_until_ready((hs, recon_s, psl_s, asl_s))
    hs_m, recon_sm, psl_sm, asl_sm = _reference(
        xs, w1, b1, w2, b2, match_kernel_numerics=True)
    assert jnp.allclose(hs, hs_m, rtol=1e-4, atol=1e-5), "h mismatch (small batch)"
    assert jnp.allclose(recon_s, recon_sm, rtol=1e-4, atol=1e-6), "recon mismatch (small)"
    assert jnp.allclose(psl_s, psl_sm, rtol=1e-4, atol=1e-6), "psl mismatch (small)"
    assert jnp.allclose(asl_s, asl_sm, rtol=1e-4, atol=1e-6), "asl mismatch (small)"

    assert w1_out.shape == (HDIM, INP_DIM)
    print("KERNEL_OK")
</pallas_src>

<mosaic_0001>
module attributes {stable_mosaic.version = 11 : i64} {
  func.func @_spine_kernel(%arg0: i32, %arg1: memref<256x300xf32, #tpu.memory_space<vmem>>, %arg2: memref<300x1000xbf16, #tpu.memory_space<vmem>>, %arg3: memref<1x1000xf32, #tpu.memory_space<vmem>>, %arg4: memref<1000x300xbf16, #tpu.memory_space<vmem>>, %arg5: memref<1x300xf32, #tpu.memory_space<vmem>>, %arg6: memref<256x1000xf32, #tpu.memory_space<vmem>>, %arg7: memref<1x8x1000xf32, #tpu.memory_space<vmem>>, %arg8: memref<1x8x300xf32, #tpu.memory_space<vmem>>) attributes {dimension_semantics = [#tpu.dimension_semantics<parallel>], iteration_bounds = array<i64: 2>, scalar_prefetch = 0 : i64, scratch_operands = 0 : i64, tpu.core_type = #tpu.core_type<tc>, window_params = [{transform_indices = @transform_0, window_bounds = array<i64: 256, 300>}, {pipeline_mode = #tpu.pipeline_mode<synchronous>, transform_indices = @transform_1, window_bounds = array<i64: 300, 1000>}, {pipeline_mode = #tpu.pipeline_mode<synchronous>, transform_indices = @transform_2, window_bounds = array<i64: 1, 1000>}, {pipeline_mode = #tpu.pipeline_mode<synchronous>, transform_indices = @transform_3, window_bounds = array<i64: 1000, 300>}, {pipeline_mode = #tpu.pipeline_mode<synchronous>, transform_indices = @transform_4, window_bounds = array<i64: 1, 300>}, {transform_indices = @transform_5, window_bounds = array<i64: 256, 1000>}, {transform_indices = @transform_6, window_bounds = array<i64: 1, 8, 1000>}, {transform_indices = @transform_7, window_bounds = array<i64: 1, 8, 300>}]} {
    %c0 = arith.constant 0 : index
    %c0_0 = arith.constant 0 : index
    %0 = vector.load %arg1[%c0, %c0_0] : memref<256x300xf32, #tpu.memory_space<vmem>>, vector<256x300xf32>
    %1 = arith.truncf %0 : vector<256x300xf32> to vector<256x300xbf16>
    %c0_1 = arith.constant 0 : index
    %c0_2 = arith.constant 0 : index
    %2 = vector.load %arg2[%c0_1, %c0_2] : memref<300x1000xbf16, #tpu.memory_space<vmem>>, vector<300x1000xbf16>
    %cst = arith.constant dense<0.000000e+00> : vector<256x1000xf32>
    %3 = tpu.matmul %1, %2, %cst {dimension_numbers = #tpu.dot_dimension_numbers<[1], [0], [0], [1], [0, 0, 1, 1], [], []>} : vector<256x300xbf16>, vector<300x1000xbf16>, vector<256x1000xf32> -> vector<256x1000xf32>
    %c0_3 = arith.constant 0 : index
    %c0_4 = arith.constant 0 : index
    %4 = vector.load %arg3[%c0_3, %c0_4] : memref<1x1000xf32, #tpu.memory_space<vmem>>, vector<1x1000xf32>
    %5 = vector.broadcast %4 : vector<1x1000xf32> to vector<256x1000xf32>
    %6 = arith.addf %3, %5 : vector<256x1000xf32>
    %cst_5 = arith.constant 0.000000e+00 : f32
    %cst_6 = arith.constant 1.000000e+00 : f32
    %7 = vector.broadcast %cst_5 : f32 to vector<256x1000xf32>
    %8 = arith.maximumf %7, %6 : vector<256x1000xf32>
    %9 = vector.broadcast %cst_6 : f32 to vector<256x1000xf32>
    %10 = arith.minimumf %9, %8 : vector<256x1000xf32>
    %c0_7 = arith.constant 0 : index
    %c0_8 = arith.constant 0 : index
    %11 = vector.load %arg6[%c0_7, %c0_8] : memref<256x1000xf32, #tpu.memory_space<vmem>>, vector<256x1000xf32>
    tpu.vector_store %arg6[%c0_7, %c0_8], %10 {strides = array<i32>} : memref<256x1000xf32, #tpu.memory_space<vmem>>, vector<256x1000xf32>,
    %12 = arith.truncf %10 : vector<256x1000xf32> to vector<256x1000xbf16>
    %c0_9 = arith.constant 0 : index
    %c0_10 = arith.constant 0 : index
    %13 = vector.load %arg4[%c0_9, %c0_10] : memref<1000x300xbf16, #tpu.memory_space<vmem>>, vector<1000x300xbf16>
    %cst_11 = arith.constant dense<0.000000e+00> : vector<256x300xf32>
    %14 = tpu.matmul %12, %13, %cst_11 {dimension_numbers = #tpu.dot_dimension_numbers<[1], [0], [0], [1], [0, 0, 1, 1], [], []>} : vector<256x1000xbf16>, vector<1000x300xbf16>, vector<256x300xf32> -> vector<256x300xf32>
    %c0_12 = arith.constant 0 : index
    %c0_13 = arith.constant 0 : index
    %15 = vector.load %arg5[%c0_12, %c0_13] : memref<1x300xf32, #tpu.memory_space<vmem>>, vector<1x300xf32>
    %16 = vector.broadcast %15 : vector<1x300xf32> to vector<256x300xf32>
    %17 = arith.addf %14, %16 : vector<256x300xf32>
    %18 = arith.subf %17, %0 : vector<256x300xf32>
    %c1_i32 = arith.constant 1 : i32
    %19 = arith.cmpi eq, %arg0, %c1_i32 : i32
    %true = arith.constant true
    %20 = arith.xori %19, %true : i1
    %21 = arith.extui %20 : i1 to i32
    %c0_i32 = arith.constant 0 : i32
    %22 = arith.cmpi ne, %21, %c0_i32 : i32
    scf.if %22 {
      %cst_15 = arith.constant dense<0.000000e+00> : vector<1000xf32>
      %25 = vector.multi_reduction <add>, %10, %cst_15 [0] : vector<256x1000xf32> to vector<1000xf32>
      %26 = vector.shape_cast %25 : vector<1000xf32> to vector<1x1000xf32>
      %c0_16 = arith.constant 0 : index
      %c0_17 = arith.constant 0 : index
      %c0_18 = arith.constant 0 : index
      %27 = vector.load %arg7[%c0_16, %c0_17, %c0_18] : memref<1x8x1000xf32, #tpu.memory_space<vmem>>, vector<1x1x1000xf32>
      %28 = vector.shape_cast %27 : vector<1x1x1000xf32> to vector<1x1000xf32>
      %29 = vector.shape_cast %26 : vector<1x1000xf32> to vector<1x1x1000xf32>
      tpu.vector_store %arg7[%c0_16, %c0_17, %c0_18], %29 {strides = array<i32>} : memref<1x8x1000xf32, #tpu.memory_space<vmem>>, vector<1x1x1000xf32>,
      %cst_19 = arith.constant 1.000000e+00 : f32
      %30 = vector.broadcast %cst_19 : f32 to vector<256x1000xf32>
      %31 = arith.subf %30, %10 : vector<256x1000xf32>
      %32 = arith.mulf %10, %31 : vector<256x1000xf32>
      %cst_20 = arith.constant dense<0.000000e+00> : vector<1000xf32>
      %33 = vector.multi_reduction <add>, %32, %cst_20 [0] : vector<256x1000xf32> to vector<1000xf32>
      %34 = vector.shape_cast %33 : vector<1000xf32> to vector<1x1000xf32>
      %c0_21 = arith.constant 0 : index
      %c1 = arith.constant 1 : index
      %c0_22 = arith.constant 0 : index
      %35 = vector.load %arg7[%c0_21, %c1, %c0_22] : memref<1x8x1000xf32, #tpu.memory_space<vmem>>, vector<1x1x1000xf32>
      %36 = vector.shape_cast %35 : vector<1x1x1000xf32> to vector<1x1000xf32>
      %37 = vector.shape_cast %34 : vector<1x1000xf32> to vector<1x1x1000xf32>
      tpu.vector_store %arg7[%c0_21, %c1, %c0_22], %37 {strides = array<i32>} : memref<1x8x1000xf32, #tpu.memory_space<vmem>>, vector<1x1x1000xf32>,
      %38 = arith.mulf %18, %18 : vector<256x300xf32>
      %cst_23 = arith.constant dense<0.000000e+00> : vector<300xf32>
      %39 = vector.multi_reduction <add>, %38, %cst_23 [0] : vector<256x300xf32> to vector<300xf32>
      %40 = vector.shape_cast %39 : vector<300xf32> to vector<1x300xf32>
      %c0_24 = arith.constant 0 : index
      %c0_25 = arith.constant 0 : index
      %c0_26 = arith.constant 0 : index
      %41 = vector.load %arg8[%c0_24, %c0_25, %c0_26] : memref<1x8x300xf32, #tpu.memory_space<vmem>>, vector<1x1x300xf32>
      %42 = vector.shape_cast %41 : vector<1x1x300xf32> to vector<1x300xf32>
      %43 = vector.shape_cast %40 : vector<1x300xf32> to vector<1x1x300xf32>
      tpu.vector_store %arg8[%c0_24, %c0_25, %c0_26], %43 {strides = array<i32>} : memref<1x8x300xf32, #tpu.memory_space<vmem>>, vector<1x1x300xf32>,
    } else {
    }
    %23 = arith.extui %19 : i1 to i32
    %c0_i32_14 = arith.constant 0 : i32
    %24 = arith.cmpi ne, %23, %c0_i32_14 : i32
    scf.if %24 {
      %25 = tpu.iota {dimensions = array<i32: 0>} : vector<256x1xi32>
      %c44_i32 = arith.constant 44 : i32
      %26 = vector.broadcast %c44_i32 : i32 to vector<256x1xi32>
      %27 = arith.cmpi slt, %25, %26 : vector<256x1xi32>
      %cst_15 = arith.constant 0.000000e+00 : f32
      %28 = vector.shape_cast %27 : vector<256x1xi1> to vector<256x1xi1>
      %29 = vector.broadcast %28 : vector<256x1xi1> to vector<256x1000xi1>
      %30 = vector.broadcast %cst_15 : f32 to vector<256x1000xf32>
      %31 = arith.select %29, %10, %30 : vector<256x1000xi1>, vector<256x1000xf32>
      %cst_16 = arith.constant 0.000000e+00 : f32
      %32 = vector.shape_cast %27 : vector<256x1xi1> to vector<256x1xi1>
      %33 = vector.broadcast %32 : vector<256x1xi1> to vector<256x300xi1>
      %34 = vector.broadcast %cst_16 : f32 to vector<256x300xf32>
      %35 = arith.select %33, %18, %34 : vector<256x300xi1>, vector<256x300xf32>
      %cst_17 = arith.constant dense<0.000000e+00> : vector<1000xf32>
      %36 = vector.multi_reduction <add>, %31, %cst_17 [0] : vector<256x1000xf32> to vector<1000xf32>
      %37 = vector.shape_cast %36 : vector<1000xf32> to vector<1x1000xf32>
      %c0_18 = arith.constant 0 : index
      %c0_19 = arith.constant 0 : index
      %c0_20 = arith.constant 0 : index
      %38 = vector.load %arg7[%c0_18, %c0_19, %c0_20] : memref<1x8x1000xf32, #tpu.memory_space<vmem>>, vector<1x1x1000xf32>
      %39 = vector.shape_cast %38 : vector<1x1x1000xf32> to vector<1x1000xf32>
      %40 = vector.shape_cast %37 : vector<1x1000xf32> to vector<1x1x1000xf32>
      tpu.vector_store %arg7[%c0_18, %c0_19, %c0_20], %40 {strides = array<i32>} : memref<1x8x1000xf32, #tpu.memory_space<vmem>>, vector<1x1x1000xf32>,
      %cst_21 = arith.constant 1.000000e+00 : f32
      %41 = vector.broadcast %cst_21 : f32 to vector<256x1000xf32>
      %42 = arith.subf %41, %31 : vector<256x1000xf32>
      %43 = arith.mulf %31, %42 : vector<256x1000xf32>
      %cst_22 = arith.constant dense<0.000000e+00> : vector<1000xf32>
      %44 = vector.multi_reduction <add>, %43, %cst_22 [0] : vector<256x1000xf32> to vector<1000xf32>
      %45 = vector.shape_cast %44 : vector<1000xf32> to vector<1x1000xf32>
      %c0_23 = arith.constant 0 : index
      %c1 = arith.constant 1 : index
      %c0_24 = arith.constant 0 : index
      %46 = vector.load %arg7[%c0_23, %c1, %c0_24] : memref<1x8x1000xf32, #tpu.memory_space<vmem>>, vector<1x1x1000xf32>
      %47 = vector.shape_cast %46 : vector<1x1x1000xf32> to vector<1x1000xf32>
      %48 = vector.shape_cast %45 : vector<1x1000xf32> to vector<1x1x1000xf32>
      tpu.vector_store %arg7[%c0_23, %c1, %c0_24], %48 {strides = array<i32>} : memref<1x8x1000xf32, #tpu.memory_space<vmem>>, vector<1x1x1000xf32>,
      %49 = arith.mulf %35, %35 : vector<256x300xf32>
      %cst_25 = arith.constant dense<0.000000e+00> : vector<300xf32>
      %50 = vector.multi_reduction <add>, %49, %cst_25 [0] : vector<256x300xf32> to vector<300xf32>
      %51 = vector.shape_cast %50 : vector<300xf32> to vector<1x300xf32>
      %c0_26 = arith.constant 0 : index
      %c0_27 = arith.constant 0 : index
      %c0_28 = arith.constant 0 : index
      %52 = vector.load %arg8[%c0_26, %c0_27, %c0_28] : memref<1x8x300xf32, #tpu.memory_space<vmem>>, vector<1x1x300xf32>
      %53 = vector.shape_cast %52 : vector<1x1x300xf32> to vector<1x300xf32>
      %54 = vector.shape_cast %51 : vector<1x300xf32> to vector<1x1x300xf32>
      tpu.vector_store %arg8[%c0_26, %c0_27, %c0_28], %54 {strides = array<i32>} : memref<1x8x300xf32, #tpu.memory_space<vmem>>, vector<1x1x300xf32>,
    } else {
    }
    return
  }
  func.func @transform_0(%arg0: i32) -> (i32, i32) {
    %c0_i32 = arith.constant 0 : i32
    %c0_i32_0 = arith.constant 0 : i32
    return %arg0, %c0_i32 : i32, i32
  }
  func.func @transform_1(%arg0: i32) -> (i32, i32) {
    %c0_i32 = arith.constant 0 : i32
    %c0_i32_0 = arith.constant 0 : i32
    %c0_i32_1 = arith.constant 0 : i32
    return %c0_i32, %c0_i32_0 : i32, i32
  }
  func.func @transform_2(%arg0: i32) -> (i32, i32) {
    %c0_i32 = arith.constant 0 : i32
    %c0_i32_0 = arith.constant 0 : i32
    %c0_i32_1 = arith.constant 0 : i32
    return %c0_i32, %c0_i32_0 : i32, i32
  }
  func.func @transform_3(%arg0: i32) -> (i32, i32) {
    %c0_i32 = arith.constant 0 : i32
    %c0_i32_0 = arith.constant 0 : i32
    %c0_i32_1 = arith.constant 0 : i32
    return %c0_i32, %c0_i32_0 : i32, i32
  }
  func.func @transform_4(%arg0: i32) -> (i32, i32) {
    %c0_i32 = arith.constant 0 : i32
    %c0_i32_0 = arith.constant 0 : i32
    %c0_i32_1 = arith.constant 0 : i32
    return %c0_i32, %c0_i32_0 : i32, i32
  }
  func.func @transform_5(%arg0: i32) -> (i32, i32) {
    %c0_i32 = arith.constant 0 : i32
    %c0_i32_0 = arith.constant 0 : i32
    return %arg0, %c0_i32 : i32, i32
  }
  func.func @transform_6(%arg0: i32) -> (i32, i32, i32) {
    %c0_i32 = arith.constant 0 : i32
    %c0_i32_0 = arith.constant 0 : i32
    %c0_i32_1 = arith.constant 0 : i32
    return %arg0, %c0_i32, %c0_i32_0 : i32, i32, i32
  }
  func.func @transform_7(%arg0: i32) -> (i32, i32, i32) {
    %c0_i32 = arith.constant 0 : i32
    %c0_i32_0 = arith.constant 0 : i32
    %c0_i32_1 = arith.constant 0 : i32
    return %arg0, %c0_i32, %c0_i32_0 : i32, i32, i32
  }
}

</mosaic_0001>

<llo_original>
// kernel: spine_forward.1
$region0: #{spine_forward.1}
  #allocation0 [shape = 'u32[]', space=smem, size = 0x4, offset = 0x4, fixed_abs, tag = 'smem constant byte address 0x4 - core index']
  #allocation1 [shape = 'u32[144,128]{1,0:T(1,128)}', space=vmem, size = 0x12000, scoped, tag = 'internal scratch']
  %s0 = inlined_call_operand.vmem [shape: f32[300,300], index: 0, kind: input, shape index: {}]
  %s1 = inlined_call_operand.vmem [shape: bf16[300,1000], index: 1, kind: input, shape index: {}]
  %s2 = inlined_call_operand.vmem [shape: f32[1,1000], index: 2, kind: input, shape index: {}]
  %s3 = inlined_call_operand.vmem [shape: bf16[1000,300], index: 3, kind: input, shape index: {}]
  %s4 = inlined_call_operand.vmem [shape: f32[1,300], index: 4, kind: input, shape index: {}]
  %s5 = inlined_call_operand.hbm [shape: f32[300,1000], index: 5, kind: output, shape index: {0}]
  %s6 = inlined_call_operand.vmem [shape: f32[2,8,1000], index: 6, kind: output, shape index: {1}]
  %s7 = inlined_call_operand.vmem [shape: f32[2,8,300], index: 7, kind: output, shape index: {2}]
  %8 = xla_tuple %s5, %s6, %s7
  %s9 = sld [smem:[#allocation0]]
  $region77: #{spine_forward.1} parent=0
    _
  %s11 = ssub.s32 1, %s9
  %s12 = scalar_select 0, %s11, %s9
  $region1: #{spine_forward.1} parent=0
    #allocation2 [shape = 'u8[2097152]{0}', space=vmem, size = 0x200000, scoped, tag = 'output window, operand 0']
    #allocation3 [shape = 's32[2]{0}', space=sflag, size = 0x8, scoped, tag = 'scoped memory for spine_forward.1']
    %13 = vsyncpa [#allocation3], 0
    %s14 = scalar_lea.sflag [#allocation3], 1
    %15 = vsyncpa %s14, 0
    loop: start=0, step=1, limit=4
    $region2: #{spine_forward.1} parent=1 // loop_pre_header
      _
    $region3: #{spine_forward.1} parent=1 // loop_header
      %s17 = sphi 0, %s21
      %p18 = scmp.ge.s32.totalorder %s17, 4
      %s27 = sphi 0, %s29
      %s30 = sphi 0, %s27
      %s31 = sphi 0, %s30
      %s47 = sphi 0, %s31
      %s51 = sphi 0, %s51
      %s53 = sphi 0, %s51
      %s54 = sphi 0, %s53
      %s68 = sphi 0, %s54
      %s72 = sphi 0, %s72
      %s74 = sphi 0, %s72
      %s75 = sphi 0, %s74
      %s89 = sphi 0, %s75
      %s93 = sphi 0, %s93
      %s95 = sphi 0, %s93
      %s96 = sphi 0, %s95
      %s110 = sphi 0, %s96
      %s114 = sphi 0, %s114
      %s116 = sphi 0, %s114
      %s117 = sphi 0, %s116
      %s131 = sphi 0, %s117
      %s137 = sphi 0, %s139
      %s140 = sphi 0, %s137
      %s141 = sphi 0, %s140
      %s157 = sphi 0, %s141
      %s163 = sphi 0, %s165
      %s166 = sphi 0, %s163
      %s167 = sphi 0, %s166
      %s183 = sphi 0, %s167
      %s189 = sphi 0, %s191
      %s192 = sphi 0, %s189
      %s193 = sphi 0, %s192
      %s209 = sphi 0, %s193
    $region4: #{spine_forward.1} parent=1 // loop_header_branch
      %20 = sbr.rel (%p18) target = $region8
    $region5: #{spine_forward.1} parent=1 // loop_body
      %s22 = ssub.s32 %s17, 1
      %s23 = ssub.s32 %s17, 2
      %s24 = sadd.s32 %s17, 1
      %s25 = ssub.s32 %s17, %s24
      %p26 = scmp.eq.s32.totalorder %s25, 0
      %s28 = sadd.s32 %s27, 1
      %s29 = scalar_select %p26, %s27, %s28
      %p32 = pneg %p26
      %p33 = scmp.eq.s32.totalorder %s17, 1
      %p34 = por %p32, %p33
      %p35 = scmp.ne.s32.totalorder %s27, %s30
      %p36 = scmp.eq.s32.totalorder %s17, 0
      %p37 = por %p35, %p36
      %p38 = scmp.ne.s32.totalorder %s27, %s30
      %p39 = scmp.eq.s32.totalorder %s22, 1
      %p40 = por %p38, %p39
      %p41 = scmp.ne.s32.totalorder %s30, %s31
      %p42 = scmp.eq.s32.totalorder %s22, 0
      %p43 = por %p41, %p42
      %p44 = scmp.ne.s32.totalorder %s30, %s31
      %p45 = scmp.eq.s32.totalorder %s23, 1
      %p46 = por %p44, %p45
      %p48 = scmp.ne.s32.totalorder %s31, %s47
      %p49 = scmp.eq.s32.totalorder %s23, 0
      %p50 = por %p48, %p49
      %s52 = sadd.s32 %s51, 1
      %p55 = scmp.eq.s32.totalorder %s17, 1
      %p56 = scmp.ne.s32.totalorder %s51, %s53
      %p57 = scmp.eq.s32.totalorder %s17, 0
      %p58 = por %p56, %p57
      %p59 = scmp.ne.s32.totalorder %s51, %s53
      %p60 = scmp.eq.s32.totalorder %s22, 1
      %p61 = por %p59, %p60
      %p62 = scmp.ne.s32.totalorder %s53, %s54
      %p63 = scmp.eq.s32.totalorder %s22, 0
      %p64 = por %p62, %p63
      %p65 = scmp.ne.s32.totalorder %s53, %s54
      %p66 = scmp.eq.s32.totalorder %s23, 1
      %p67 = por %p65, %p66
      %p69 = scmp.ne.s32.totalorder %s54, %s68
      %p70 = scmp.eq.s32.totalorder %s23, 0
      %p71 = por %p69, %p70
      %s73 = sadd.s32 %s72, 1
      %p76 = scmp.eq.s32.totalorder %s17, 1
      %p77 = scmp.ne.s32.totalorder %s72, %s74
      %p78 = scmp.eq.s32.totalorder %s17, 0
      %p79 = por %p77, %p78
      %p80 = scmp.ne.s32.totalorder %s72, %s74
      %p81 = scmp.eq.s32.totalorder %s22, 1
      %p82 = por %p80, %p81
      %p83 = scmp.ne.s32.totalorder %s74, %s75
      %p84 = scmp.eq.s32.totalorder %s22, 0
      %p85 = por %p83, %p84
      %p86 = scmp.ne.s32.totalorder %s74, %s75
      %p87 = scmp.eq.s32.totalorder %s23, 1
      %p88 = por %p86, %p87
      %p90 = scmp.ne.s32.totalorder %s75, %s89
      %p91 = scmp.eq.s32.totalorder %s23, 0
      %p92 = por %p90, %p91
      %s94 = sadd.s32 %s93, 1
      %p97 = scmp.eq.s32.totalorder %s17, 1
      %p98 = scmp.ne.s32.totalorder %s93, %s95
      %p99 = scmp.eq.s32.totalorder %s17, 0
      %p100 = por %p98, %p99
      %p101 = scmp.ne.s32.totalorder %s93, %s95
      %p102 = scmp.eq.s32.totalorder %s22, 1
      %p103 = por %p101, %p102
      %p104 = scmp.ne.s32.totalorder %s95, %s96
      %p105 = scmp.eq.s32.totalorder %s22, 0
      %p106 = por %p104, %p105
      %p107 = scmp.ne.s32.totalorder %s95, %s96
      %p108 = scmp.eq.s32.totalorder %s23, 1
      %p109 = por %p107, %p108
      %p111 = scmp.ne.s32.totalorder %s96, %s110
      %p112 = scmp.eq.s32.totalorder %s23, 0
      %p113 = por %p111, %p112
      %s115 = sadd.s32 %s114, 1
      %p118 = scmp.eq.s32.totalorder %s17, 1
      %p119 = scmp.ne.s32.totalorder %s114, %s116
      %p120 = scmp.eq.s32.totalorder %s17, 0
      %p121 = por %p119, %p120
      %p122 = scmp.ne.s32.totalorder %s114, %s116
      %p123 = scmp.eq.s32.totalorder %s22, 1
      %p124 = por %p122, %p123
      %p125 = scmp.ne.s32.totalorder %s116, %s117
      %p126 = scmp.eq.s32.totalorder %s22, 0
      %p127 = por %p125, %p126
      %p128 = scmp.ne.s32.totalorder %s116, %s117
      %p129 = scmp.eq.s32.totalorder %s23, 1
      %p130 = por %p128, %p129
      %p132 = scmp.ne.s32.totalorder %s117, %s131
      %p133 = scmp.eq.s32.totalorder %s23, 0
      %p134 = por %p132, %p133
      %s135 = ssub.s32 %s17, %s24
      %p136 = scmp.eq.s32.totalorder %s135, 0
      %s138 = sadd.s32 %s137, 1
      %s139 = scalar_select %p136, %s137, %s138
      %p142 = pneg %p136
      %p143 = scmp.eq.s32.totalorder %s17, 1
      %p144 = por %p142, %p143
      %p145 = scmp.ne.s32.totalorder %s137, %s140
      %p146 = scmp.eq.s32.totalorder %s17, 0
      %p147 = por %p145, %p146
      %p148 = scmp.ne.s32.totalorder %s137, %s140
      %p149 = scmp.eq.s32.totalorder %s22, 1
      %p150 = por %p148, %p149
      %p151 = scmp.ne.s32.totalorder %s140, %s141
      %p152 = scmp.eq.s32.totalorder %s22, 0
      %p153 = por %p151, %p152
      %p154 = scmp.ne.s32.totalorder %s140, %s141
      %p155 = scmp.eq.s32.totalorder %s23, 1
      %p156 = por %p154, %p155
      %p158 = scmp.ne.s32.totalorder %s141, %s157
      %p159 = scmp.eq.s32.totalorder %s23, 0
      %p160 = por %p158, %p159
      %s161 = ssub.s32 %s17, %s24
      %p162 = scmp.eq.s32.totalorder %s161, 0
      %s164 = sadd.s32 %s163, 1
      %s165 = scalar_select %p162, %s163, %s164
      %p168 = pneg %p162
      %p169 = scmp.eq.s32.totalorder %s17, 1
      %p170 = por %p168, %p169
      %p171 = scmp.ne.s32.totalorder %s163, %s166
      %p172 = scmp.eq.s32.totalorder %s17, 0
      %p173 = por %p171, %p172
      %p174 = scmp.ne.s32.totalorder %s163, %s166
      %p175 = scmp.eq.s32.totalorder %s22, 1
      %p176 = por %p174, %p175
      %p177 = scmp.ne.s32.totalorder %s166, %s167
      %p178 = scmp.eq.s32.totalorder %s22, 0
      %p179 = por %p177, %p178
      %p180 = scmp.ne.s32.totalorder %s166, %s167
      %p181 = scmp.eq.s32.totalorder %s23, 1
      %p182 = por %p180, %p181
      %p184 = scmp.ne.s32.totalorder %s167, %s183
      %p185 = scmp.eq.s32.totalorder %s23, 0
      %p186 = por %p184, %p185
      %s187 = ssub.s32 %s17, %s24
      %p188 = scmp.eq.s32.totalorder %s187, 0
      %s190 = sadd.s32 %s189, 1
      %s191 = scalar_select %p188, %s189, %s190
      %p194 = pneg %p188
      %p195 = scmp.eq.s32.totalorder %s17, 1
      %p196 = por %p194, %p195
      %p197 = scmp.ne.s32.totalorder %s189, %s192
      %p198 = scmp.eq.s32.totalorder %s17, 0
      %p199 = por %p197, %p198
      %p200 = scmp.ne.s32.totalorder %s189, %s192
      %p201 = scmp.eq.s32.totalorder %s22, 1
      %p202 = por %p200, %p201
      %p203 = scmp.ne.s32.totalorder %s192, %s193
      %p204 = scmp.eq.s32.totalorder %s22, 0
      %p205 = por %p203, %p204
      %p206 = scmp.ne.s32.totalorder %s192, %s193
      %p207 = scmp.eq.s32.totalorder %s23, 1
      %p208 = por %p206, %p207
      %p210 = scmp.ne.s32.totalorder %s193, %s209
      %p211 = scmp.eq.s32.totalorder %s23, 0
      %p212 = por %p210, %p211
      %p213 = scmp.le.s32.totalorder 1, %s17
      %p214 = scmp.lt.s32.totalorder %s17, 3
      %p215 = pnand %p213, %p214
      %p216 = pneg %p215
      // Predicated region
      $region9: #{spine_forward.1} parent=5 // pred_check
        _
      $region10: #{spine_forward.1} parent=5 // pred_check_branch
        %218 = sbr.rel (%p215) target = $region12
      $region11: #{spine_forward.1} parent=5 // pred_region
        %s219 = ssub.s32 %s17, 1
        // Predicated region
        $region13: #{spine_forward.1} parent=11 // pred_check
          %p220 = pneg %p64
        $region14: #{spine_forward.1} parent=11 // pred_check_branch
          %222 = sbr.rel (%p220) target = $region16
        $region15: #{spine_forward.1} parent=11 // pred_region
          _
        $region16: #{spine_forward.1} parent=11 // pred_fallthru
          _
        // Predicated region
        $region17: #{spine_forward.1} parent=11 // pred_check
          %p223 = pneg %p85
        $region18: #{spine_forward.1} parent=11 // pred_check_branch
          %225 = sbr.rel (%p223) target = $region20
        $region19: #{spine_forward.1} parent=11 // pred_region
          _
        $region20: #{spine_forward.1} parent=11 // pred_fallthru
          _
        // Predicated region
        $region21: #{spine_forward.1} parent=11 // pred_check
          %p226 = pneg %p106
        $region22: #{spine_forward.1} parent=11 // pred_check_branch
          %228 = sbr.rel (%p226) target = $region24
        $region23: #{spine_forward.1} parent=11 // pred_region
          _
        $region24: #{spine_forward.1} parent=11 // pred_fallthru
          _
        // Predicated region
        $region25: #{spine_forward.1} parent=11 // pred_check
          %p229 = pneg %p127
        $region26: #{spine_forward.1} parent=11 // pred_check_branch
          %231 = sbr.rel (%p229) target = $region28
        $region27: #{spine_forward.1} parent=11 // pred_region
          _
        $region28: #{spine_forward.1} parent=11 // pred_fallthru
          _
      $region12: #{spine_forward.1} parent=5 // pred_fallthru
        _
      %p232 = scmp.lt.s32.totalorder %s17, 2
      // Predicated region
      $region29: #{spine_forward.1} parent=5 // pred_check
        %p233 = pneg %p232
      $region30: #{spine_forward.1} parent=5 // pred_check_branch
        %235 = sbr.rel (%p233) target = $region32
      $region31: #{spine_forward.1} parent=5 // pred_region
        // Predicated region
        $region33: #{spine_forward.1} parent=31 // pred_check
          %p236 = pneg %p37
        $region34: #{spine_forward.1} parent=31 // pred_check_branch
          %238 = sbr.rel (%p236) target = $region36
        $region35: #{spine_forward.1} parent=31 // pred_region
          %s239 = smul.u32 32, %s17
          %s240 = ssub.s32 38, %s239
          %p241 = scmp.lt.s32.totalorder %s240, 32
          %s242 = scalar_select %p241, %s240, 32
          %s243 = smul.u32 128, %s242
          %s244 = smul.u32 %s243, 3
          %p245 = scmp.lt.s32.totalorder %s239, 37
          %s246 = scalar_select %p245, %s239, 37
          %s247 = smul.addr %s246, 3
          %s248 = smul.addr %s247, 8
          %s249 = scalar_lea.vmem %s0, %s248
          %s250 = smul.u32 32, %s17
          %s251 = ssub.s32 38, %s250
          %p252 = scmp.lt.s32.totalorder %s251, 32
          %s253 = scalar_select %p252, %s251, 32
          %s254 = smul.u32 128, %s253
          %s255 = smul.u32 %s254, 3
        $region36: #{spine_forward.1} parent=31 // pred_fallthru
          _
      $region32: #{spine_forward.1} parent=5 // pred_fallthru
        _
      %p256 = scmp.le.s32.totalorder 1, %s17
      %p257 = scmp.lt.s32.totalorder %s17, 3
      %p258 = pnand %p256, %p257
      %p259 = pneg %p258
      // Predicated region
      $region37: #{spine_forward.1} parent=5 // pred_check
        _
      $region38: #{spine_forward.1} parent=5 // pred_check_branch
        %261 = sbr.rel (%p258) target = $region40
      $region39: #{spine_forward.1} parent=5 // pred_region
        %s262 = ssub.s32 %s17, 1
        %s263 = smul.u32 32, %s22
        %s264 = ssub.s32 38, %s263
        %p265 = scmp.lt.s32.totalorder %s264, 32
        %s266 = scalar_select %p265, %s264, 32
        %s267 = smul.u32 128, %s266
        %s268 = smul.u32 %s267, 3
        %p269 = scmp.lt.s32.totalorder %s263, 37
        %s270 = scalar_select %p269, %s263, 37
        %s271 = smul.addr %s270, 3
        %s272 = smul.addr %s271, 8
        %s273 = scalar_lea.vmem %s0, %s272
        %p274 = pneg %p43
        %p275 = pneg %p40
        %p276 = pneg %p64
        %p277 = pneg %p61
        %p278 = pneg %p85
        %p279 = pneg %p82
        %p280 = pneg %p106
        %p281 = pneg %p103
        %p282 = pneg %p127
        %p283 = pneg %p124
        %p284 = pneg %p153
        %p285 = pneg %p150
        %s286 = sand.u32 %s140, 1
        %s287 = scalar_lea.sflag [#allocation3], %s286
        %s288 = sand.u32 %s140, 1
        %s289 = smul.addr %s288, 2048
        %s290 = scalar_lea.vmem [#allocation2], %s289
        %p291 = pneg %p179
        %p292 = pneg %p176
        %p293 = scmp.lt.s32.totalorder %s22, 1
        %s294 = scalar_select %p293, %s22, 1
        %s295 = smul.addr %s294, 8
        %s296 = smul.addr %s295, 8
        %s297 = scalar_lea.vmem %s6, %s296
        %p298 = pneg %p205
        %p299 = pneg %p202
        %p300 = scmp.lt.s32.totalorder %s22, 1
        %s301 = scalar_select %p300, %s22, 1
        %s302 = smul.addr %s301, 3
        %s303 = smul.addr %s302, 8
        %s304 = scalar_lea.vmem %s7, %s303
        %s305 = smul.u32 32, %s22
        %s306 = ssub.s32 38, %s305
        %p307 = scmp.lt.s32.totalorder %s306, 32
        %s308 = scalar_select %p307, %s306, 32
        %s309 = smul.u32 128, %s308
        %s310 = smul.u32 %s309, 3
        %p311 = scmp.lt.s32.totalorder %s305, 37
        %s312 = scalar_select %p311, %s305, 37
        %s313 = smul.addr %s312, 3
        %s314 = smul.addr %s313, 8
        %s315 = scalar_lea.vmem %s0, %s314
        %s316 = smul.u32 32, %s22
        %s317 = ssub.s32 38, %s316
        %p318 = scmp.lt.s32.totalorder %s317, 32
        %s319 = scalar_select %p318, %s317, 32
        %s320 = smul.u32 128, %s319
        %s321 = smul.u32 %s320, 3
        %s322 = smul.u32 32, %s22
        %s323 = ssub.s32 38, %s322
        %p324 = scmp.lt.s32.totalorder %s323, 32
        %s325 = scalar_select %p324, %s323, 32
        %s326 = smul.u32 128, %s325
        %s327 = smul.u32 %s326, 8
        %p328 = scmp.lt.s32.totalorder %s22, 1
        %s329 = scalar_select %p328, %s22, 1
        %s330 = smul.addr %s329, 8
        %s331 = smul.addr %s330, 8
        %s332 = scalar_lea.vmem %s6, %s331
        %p333 = scmp.lt.s32.totalorder %s22, 1
        %s334 = scalar_select %p333, %s22, 1
        %s335 = smul.addr %s334, 3
        %s336 = smul.addr %s335, 8
        %s337 = scalar_lea.vmem %s7, %s336
        %v339 = vld [vmem:[%s315] sm:$0xff]
        %v340 = vld [vmem:[%s315 + $0x8] sm:$0xff]
        %v341 = vld [vmem:[%s315 + $0x10] sm:$0xff]
        %v342 = vld [vmem:[%s315 + $0x18] sm:$0xff]
        %v343 = vld [vmem:[%s315 + $0x20] sm:$0xff]
        %v344 = vld [vmem:[%s315 + $0x28] sm:$0xff]
        %v345 = vld [vmem:[%s315 + $0x30] sm:$0xff]
        %v346 = vld [vmem:[%s315 + $0x38] sm:$0xff]
        %v347 = vld [vmem:[%s315 + $0x40] sm:$0xff]
        %v348 = vld [vmem:[%s315 + $0x48] sm:$0xff]
        %v349 = vld [vmem:[%s315 + $0x50] sm:$0xff]
        %v350 = vld [vmem:[%s315 + $0x58] sm:$0xff]
        %v351 = vld [vmem:[%s315 + $0x60] sm:$0xff]
        %v352 = vld [vmem:[%s315 + $0x68] sm:$0xff]
        %v353 = vld [vmem:[%s315 + $0x70] sm:$0xff]
        %v354 = vld [vmem:[%s315 + $0x78] sm:$0xff]
        %v355 = vld [vmem:[%s315 + $0x80] sm:$0xff]
        %v356 = vld [vmem:[%s315 + $0x88] sm:$0xff]
        %v357 = vld [vmem:[%s315 + $0x90] sm:$0xff]
        %v358 = vld [vmem:[%s315 + $0x98] sm:$0xff]
        %v359 = vld [vmem:[%s315 + $0xa0] sm:$0xff]
        %v360 = vld [vmem:[%s315 + $0xa8] sm:$0xff]
        %v361 = vld [vmem:[%s315 + $0xb0] sm:$0xff]
        %v362 = vld [vmem:[%s315 + $0xb8] sm:$0xff]
        %v363 = vld [vmem:[%s315 + $0xc0] sm:$0xff]
        %v364 = vld [vmem:[%s315 + $0xc8] sm:$0xff]
        %v365 = vld [vmem:[%s315 + $0xd0] sm:$0xff]
        %v366 = vld [vmem:[%s315 + $0xd8] sm:$0xff]
        %v367 = vld [vmem:[%s315 + $0xe0] sm:$0xff]
        %v368 = vld [vmem:[%s315 + $0xe8] sm:$0xff]
        %v369 = vld [vmem:[%s315 + $0xf0] sm:$0xff]
        %v370 = vld [vmem:[%s315 + $0xf8] sm:$0xff]
        %v371 = vld [vmem:[%s315 + $0x100] sm:$0xff]
        %v372 = vld [vmem:[%s315 + $0x108] sm:$0xff]
        %v373 = vld [vmem:[%s315 + $0x110] sm:$0xff]
        %v374 = vld [vmem:[%s315 + $0x118] sm:$0xff]
        %v375 = vld [vmem:[%s315 + $0x120] sm:$0xff]
        %v376 = vld [vmem:[%s315 + $0x128] sm:$0xff]
        %v377 = vld [vmem:[%s315 + $0x130] sm:$0xff]
        %v378 = vld [vmem:[%s315 + $0x138] sm:$0xff]
        %v379 = vld [vmem:[%s315 + $0x140] sm:$0xff]
        %v380 = vld [vmem:[%s315 + $0x148] sm:$0xff]
        %v381 = vld [vmem:[%s315 + $0x150] sm:$0xff]
        %v382 = vld [vmem:[%s315 + $0x158] sm:$0xff]
        %v383 = vld [vmem:[%s315 + $0x160] sm:$0xff]
        %v384 = vld [vmem:[%s315 + $0x168] sm:$0xff]
        %v385 = vld [vmem:[%s315 + $0x170] sm:$0xff]
        %v386 = vld [vmem:[%s315 + $0x178] sm:$0xff]
        %v387 = vld [vmem:[%s315 + $0x180] sm:$0xff]
        %v388 = vld [vmem:[%s315 + $0x188] sm:$0xff]
        %v389 = vld [vmem:[%s315 + $0x190] sm:$0xff]
        %v390 = vld [vmem:[%s315 + $0x198] sm:$0xff]
        %v391 = vld [vmem:[%s315 + $0x1a0] sm:$0xff]
        %v392 = vld [vmem:[%s315 + $0x1a8] sm:$0xff]
        %v393 = vld [vmem:[%s315 + $0x1b0] sm:$0xff]
        %v394 = vld [vmem:[%s315 + $0x1b8] sm:$0xff]
        %v395 = vld [vmem:[%s315 + $0x1c0] sm:$0xff]
        %v396 = vld [vmem:[%s315 + $0x1c8] sm:$0xff]
        %v397 = vld [vmem:[%s315 + $0x1d0] sm:$0xff]
        %v398 = vld [vmem:[%s315 + $0x1d8] sm:$0xff]
        %v399 = vld [vmem:[%s315 + $0x1e0] sm:$0xff]
        %v400 = vld [vmem:[%s315 + $0x1e8] sm:$0xff]
        %v401 = vld [vmem:[%s315 + $0x1f0] sm:$0xff]
        %v402 = vld [vmem:[%s315 + $0x1f8] sm:$0xff]
        %v403 = vld [vmem:[%s315 + $0x200] sm:$0xff]
        %v404 = vld [vmem:[%s315 + $0x208] sm:$0xff]
        %v405 = vld [vmem:[%s315 + $0x210] sm:$0xff]
        %v406 = vld [vmem:[%s315 + $0x218] sm:$0xff]
        %v407 = vld [vmem:[%s315 + $0x220] sm:$0xff]
        %v408 = vld [vmem:[%s315 + $0x228] sm:$0xff]
        %v409 = vld [vmem:[%s315 + $0x230] sm:$0xff]
        %v410 = vld [vmem:[%s315 + $0x238] sm:$0xff]
        %v411 = vld [vmem:[%s315 + $0x240] sm:$0xff]
        %v412 = vld [vmem:[%s315 + $0x248] sm:$0xff]
        %v413 = vld [vmem:[%s315 + $0x250] sm:$0xff]
        %v414 = vld [vmem:[%s315 + $0x258] sm:$0xff]
        %v415 = vld [vmem:[%s315 + $0x260] sm:$0xff]
        %v416 = vld [vmem:[%s315 + $0x268] sm:$0xff]
        %v417 = vld [vmem:[%s315 + $0x270] sm:$0xff]
        %v418 = vld [vmem:[%s315 + $0x278] sm:$0xff]
        %v419 = vld [vmem:[%s315 + $0x280] sm:$0xff]
        %v420 = vld [vmem:[%s315 + $0x288] sm:$0xff]
        %v421 = vld [vmem:[%s315 + $0x290] sm:$0xff]
        %v422 = vld [vmem:[%s315 + $0x298] sm:$0xff]
        %v423 = vld [vmem:[%s315 + $0x2a0] sm:$0xff]
        %v424 = vld [vmem:[%s315 + $0x2a8] sm:$0xff]
        %v425 = vld [vmem:[%s315 + $0x2b0] sm:$0xff]
        %v426 = vld [vmem:[%s315 + $0x2b8] sm:$0xff]
        %v427 = vld [vmem:[%s315 + $0x2c0] sm:$0xff]
        %v428 = vld [vmem:[%s315 + $0x2c8] sm:$0xff]
        %v429 = vld [vmem:[%s315 + $0x2d0] sm:$0xff]
        %v430 = vld [vmem:[%s315 + $0x2d8] sm:$0xff]
        %v431 = vld [vmem:[%s315 + $0x2e0] sm:$0xff]
        %v432 = vld [vmem:[%s315 + $0x2e8] sm:$0xff]
        %v433 = vld [vmem:[%s315 + $0x2f0] sm:$0xff]
        %v434 = vld [vmem:[%s315 + $0x2f8] sm:$0xff]
        %v435 = vpack.c.bf16 %v342, %v339
        %v436 = vpack.c.bf16 %v343, %v340
        %v437 = vpack.c.bf16 %v344, %v341
        %v438 = vpack.c.bf16 %v348, %v345
        %v439 = vpack.c.bf16 %v349, %v346
        %v440 = vpack.c.bf16 %v350, %v347
        %v441 = vpack.c.bf16 %v354, %v351
        %v442 = vpack.c.bf16 %v355, %v352
        %v443 = vpack.c.bf16 %v356, %v353
        %v444 = vpack.c.bf16 %v360, %v357
        %v445 = vpack.c.bf16 %v361, %v358
        %v446 = vpack.c.bf16 %v362, %v359
        %v447 = vpack.c.bf16 %v366, %v363
        %v448 = vpack.c.bf16 %v367, %v364
        %v449 = vpack.c.bf16 %v368, %v365
        %v450 = vpack.c.bf16 %v372, %v369
        %v451 = vpack.c.bf16 %v373, %v370
        %v452 = vpack.c.bf16 %v374, %v371
        %v453 = vpack.c.bf16 %v378, %v375
        %v454 = vpack.c.bf16 %v379, %v376
        %v455 = vpack.c.bf16 %v380, %v377
        %v456 = vpack.c.bf16 %v384, %v381
        %v457 = vpack.c.bf16 %v385, %v382
        %v458 = vpack.c.bf16 %v386, %v383
        %v459 = vpack.c.bf16 %v390, %v387
        %v460 = vpack.c.bf16 %v391, %v388
        %v461 = vpack.c.bf16 %v392, %v389
        %v462 = vpack.c.bf16 %v396, %v393
        %v463 = vpack.c.bf16 %v397, %v394
        %v464 = vpack.c.bf16 %v398, %v395
        %v465 = vpack.c.bf16 %v402, %v399
        %v466 = vpack.c.bf16 %v403, %v400
        %v467 = vpack.c.bf16 %v404, %v401
        %v468 = vpack.c.bf16 %v408, %v405
        %v469 = vpack.c.bf16 %v409, %v406
        %v470 = vpack.c.bf16 %v410, %v407
        %v471 = vpack.c.bf16 %v414, %v411
        %v472 = vpack.c.bf16 %v415, %v412
        %v473 = vpack.c.bf16 %v416, %v413
        %v474 = vpack.c.bf16 %v420, %v417
        %v475 = vpack.c.bf16 %v421, %v418
        %v476 = vpack.c.bf16 %v422, %v419
        %v477 = vpack.c.bf16 %v426, %v423
        %v478 = vpack.c.bf16 %v427, %v424
        %v479 = vpack.c.bf16 %v428, %v425
        %v480 = vpack.c.bf16 %v432, %v429
        %v481 = vpack.c.bf16 %v433, %v430
        %v482 = vpack.c.bf16 %v434, %v431
        %v483 = vld [vmem:[%s1] sm:$0xff]
        %v484 = vld [vmem:[%s1 + $0x8] sm:$0xff]
        %v485 = vld [vmem:[%s1 + $0x10] sm:$0xff]
        %v486 = vld [vmem:[%s1 + $0x18] sm:$0xff]
        %v487 = vld [vmem:[%s1 + $0x20] sm:$0xff]
        %v488 = vld [vmem:[%s1 + $0x28] sm:$0xff]
        %v489 = vld [vmem:[%s1 + $0x30] sm:$0xff]
        %v490 = vld [vmem:[%s1 + $0x38] sm:$0xff]
        %v491 = vld [vmem:[%s1 + $0x40] sm:$0xff]
        %v492 = vld [vmem:[%s1 + $0x48] sm:$0xff]
        %v493 = vld [vmem:[%s1 + $0x50] sm:$0xff]
        %v494 = vld [vmem:[%s1 + $0x58] sm:$0xff]
        %v495 = vld [vmem:[%s1 + $0x60] sm:$0xff]
        %v496 = vld [vmem:[%s1 + $0x68] sm:$0xff]
        %v497 = vld [vmem:[%s1 + $0x70] sm:$0xff]
        %v498 = vld [vmem:[%s1 + $0x78] sm:$0xff]
        %v499 = vld [vmem:[%s1 + $0x80] sm:$0xff]
        %v500 = vld [vmem:[%s1 + $0x88] sm:$0xff]
        %v501 = vld [vmem:[%s1 + $0x90] sm:$0xff]
        %v502 = vld [vmem:[%s1 + $0x98] sm:$0xff]
        %v503 = vld [vmem:[%s1 + $0xa0] sm:$0xff]
        %v504 = vld [vmem:[%s1 + $0xa8] sm:$0xff]
        %v505 = vld [vmem:[%s1 + $0xb0] sm:$0xff]
        %v506 = vld [vmem:[%s1 + $0xb8] sm:$0xff]
        %v507 = vld [vmem:[%s1 + $0xc0] sm:$0xff]
        %v508 = vld [vmem:[%s1 + $0xc8] sm:$0xff]
        %v509 = vld [vmem:[%s1 + $0xd0] sm:$0xff]
        %v510 = vld [vmem:[%s1 + $0xd8] sm:$0xff]
        %v511 = vld [vmem:[%s1 + $0xe0] sm:$0xff]
        %v512 = vld [vmem:[%s1 + $0xe8] sm:$0xff]
        %v513 = vld [vmem:[%s1 + $0xf0] sm:$0xff]
        %v514 = vld [vmem:[%s1 + $0xf8] sm:$0xff]
        %v515 = vld [vmem:[%s1 + $0x100] sm:$0xff]
        %v516 = vld [vmem:[%s1 + $0x108] sm:$0xff]
        %v517 = vld [vmem:[%s1 + $0x110] sm:$0xff]
        %v518 = vld [vmem:[%s1 + $0x118] sm:$0xff]
        %v519 = vld [vmem:[%s1 + $0x120] sm:$0xff]
        %v520 = vld [vmem:[%s1 + $0x128] sm:$0xff]
        %v521 = vld [vmem:[%s1 + $0x130] sm:$0xff]
        %v522 = vld [vmem:[%s1 + $0x138] sm:$0xff]
        %v523 = vld [vmem:[%s1 + $0x140] sm:$0xff]
        %v524 = vld [vmem:[%s1 + $0x148] sm:$0xff]
        %v525 = vld [vmem:[%s1 + $0x150] sm:$0xff]
        %v526 = vld [vmem:[%s1 + $0x158] sm:$0xff]
        %v527 = vld [vmem:[%s1 + $0x160] sm:$0xff]
        %v528 = vld [vmem:[%s1 + $0x168] sm:$0xff]
        %v529 = vld [vmem:[%s1 + $0x170] sm:$0xff]
        %v530 = vld [vmem:[%s1 + $0x178] sm:$0xff]
        %v531 = vld [vmem:[%s1 + $0x180] sm:$0xff]
        %v532 = vld [vmem:[%s1 + $0x188] sm:$0xff]
        %v533 = vld [vmem:[%s1 + $0x190] sm:$0xff]
        %v534 = vld [vmem:[%s1 + $0x198] sm:$0xff]
        %v535 = vld [vmem:[%s1 + $0x1a0] sm:$0xff]
        %v536 = vld [vmem:[%s1 + $0x1a8] sm:$0xff]
        %v537 = vld [vmem:[%s1 + $0x1b0] sm:$0xff]
        %v538 = vld [vmem:[%s1 + $0x1b8] sm:$0xff]
        %v539 = vld [vmem:[%s1 + $0x1c0] sm:$0xff]
        %v540 = vld [vmem:[%s1 + $0x1c8] sm:$0xff]
        %v541 = vld [vmem:[%s1 + $0x1d0] sm:$0xff]
        %v542 = vld [vmem:[%s1 + $0x1d8] sm:$0xff]
        %v543 = vld [vmem:[%s1 + $0x1e0] sm:$0xff]
        %v544 = vld [vmem:[%s1 + $0x1e8] sm:$0xff]
        %v545 = vld [vmem:[%s1 + $0x1f0] sm:$0xff]
        %v546 = vld [vmem:[%s1 + $0x1f8] sm:$0xff]
        %v547 = vld [vmem:[%s1 + $0x200] sm:$0xff]
        %v548 = vld [vmem:[%s1 + $0x208] sm:$0xff]
        %v549 = vld [vmem:[%s1 + $0x210] sm:$0xff]
        %v550 = vld [vmem:[%s1 + $0x218] sm:$0xff]
        %v551 = vld [vmem:[%s1 + $0x220] sm:$0xff]
        %v552 = vld [vmem:[%s1 + $0x228] sm:$0xff]
        %v553 = vld [vmem:[%s1 + $0x230] sm:$0xff]
        %v554 = vld [vmem:[%s1 + $0x238] sm:$0xff]
        %v555 = vld [vmem:[%s1 + $0x240] sm:$0xff]
        %v556 = vld [vmem:[%s1 + $0x248] sm:$0xff]
        %v557 = vld [vmem:[%s1 + $0x250] sm:$0xff]
        %v558 = vld [vmem:[%s1 + $0x258] sm:$0xff]
        %v559 = vld [vmem:[%s1 + $0x260] sm:$0xff]
        %v560 = vld [vmem:[%s1 + $0x268] sm:$0xff]
        %v561 = vld [vmem:[%s1 + $0x270] sm:$0xff]
        %v562 = vld [vmem:[%s1 + $0x278] sm:$0xff]
        %v563 = vld [vmem:[%s1 + $0x280] sm:$0xff]
        %v564 = vld [vmem:[%s1 + $0x288] sm:$0xff]
        %v565 = vld [vmem:[%s1 + $0x290] sm:$0xff]
        %v566 = vld [vmem:[%s1 + $0x298] sm:$0xff]
        %v567 = vld [vmem:[%s1 + $0x2a0] sm:$0xff]
        %v568 = vld [vmem:[%s1 + $0x2a8] sm:$0xff]
        %v569 = vld [vmem:[%s1 + $0x2b0] sm:$0xff]
        %v570 = vld [vmem:[%s1 + $0x2b8] sm:$0xff]
        %v571 = vld [vmem:[%s1 + $0x2c0] sm:$0xff]
        %v572 = vld [vmem:[%s1 + $0x2c8] sm:$0xff]
        %v573 = vld [vmem:[%s1 + $0x2d0] sm:$0xff]
        %v574 = vld [vmem:[%s1 + $0x2d8] sm:$0xff]
        %v575 = vld [vmem:[%s1 + $0x2e0] sm:$0xff]
        %v576 = vld [vmem:[%s1 + $0x2e8] sm:$0xff]
        %v577 = vld [vmem:[%s1 + $0x2f0] sm:$0xff]
        %v578 = vld [vmem:[%s1 + $0x2f8] sm:$0xff]
        %v579 = vld [vmem:[%s1 + $0x300] sm:$0xff]
        %v580 = vld [vmem:[%s1 + $0x308] sm:$0xff]
        %v581 = vld [vmem:[%s1 + $0x310] sm:$0xff]
        %v582 = vld [vmem:[%s1 + $0x318] sm:$0xff]
        %v583 = vld [vmem:[%s1 + $0x320] sm:$0xff]
        %v584 = vld [vmem:[%s1 + $0x328] sm:$0xff]
        %v585 = vld [vmem:[%s1 + $0x330] sm:$0xff]
        %v586 = vld [vmem:[%s1 + $0x338] sm:$0xff]
        %v587 = vld [vmem:[%s1 + $0x340] sm:$0xff]
        %v588 = vld [vmem:[%s1 + $0x348] sm:$0xff]
        %v589 = vld [vmem:[%s1 + $0x350] sm:$0xff]
        %v590 = vld [vmem:[%s1 + $0x358] sm:$0xff]
        %v591 = vld [vmem:[%s1 + $0x360] sm:$0xff]
        %v592 = vld [vmem:[%s1 + $0x368] sm:$0xff]
        %v593 = vld [vmem:[%s1 + $0x370] sm:$0xff]
        %v594 = vld [vmem:[%s1 + $0x378] sm:$0xff]
        %v595 = vld [vmem:[%s1 + $0x380] sm:$0xff]
        %v596 = vld [vmem:[%s1 + $0x388] sm:$0xff]
        %v597 = vld [vmem:[%s1 + $0x390] sm:$0xff]
        %v598 = vld [vmem:[%s1 + $0x398] sm:$0xff]
        %v599 = vld [vmem:[%s1 + $0x3a0] sm:$0xff]
        %v600 = vld [vmem:[%s1 + $0x3a8] sm:$0xff]
        %v601 = vld [vmem:[%s1 + $0x3b0] sm:$0xff]
        %v602 = vld [vmem:[%s1 + $0x3b8] sm:$0xff]
        %v603 = vld [vmem:[%s1 + $0x3c0] sm:$0xff]
        %v604 = vld [vmem:[%s1 + $0x3c8] sm:$0xff]
        %v605 = vld [vmem:[%s1 + $0x3d0] sm:$0xff]
        %v606 = vld [vmem:[%s1 + $0x3d8] sm:$0xff]
        %v607 = vld [vmem:[%s1 + $0x3e0] sm:$0xff]
        %v608 = vld [vmem:[%s1 + $0x3e8] sm:$0xff]
        %v609 = vld [vmem:[%s1 + $0x3f0] sm:$0xff]
        %v610 = vld [vmem:[%s1 + $0x3f8] sm:$0xff]
        %v611 = vld [vmem:[%s1 + $0x400] sm:$0xff]
        %v612 = vld [vmem:[%s1 + $0x408] sm:$0xff]
        %v613 = vld [vmem:[%s1 + $0x410] sm:$0xff]
        %v614 = vld [vmem:[%s1 + $0x418] sm:$0xff]
        %v615 = vld [vmem:[%s1 + $0x420] sm:$0xff]
        %v616 = vld [vmem:[%s1 + $0x428] sm:$0xff]
        %v617 = vld [vmem:[%s1 + $0x430] sm:$0xff]
        %v618 = vld [vmem:[%s1 + $0x438] sm:$0xff]
        %v619 = vld [vmem:[%s1 + $0x440] sm:$0xff]
        %v620 = vld [vmem:[%s1 + $0x448] sm:$0xff]
        %v621 = vld [vmem:[%s1 + $0x450] sm:$0xff]
        %v622 = vld [vmem:[%s1 + $0x458] sm:$0xff]
        %v623 = vld [vmem:[%s1 + $0x460] sm:$0xff]
        %v624 = vld [vmem:[%s1 + $0x468] sm:$0xff]
        %v625 = vld [vmem:[%s1 + $0x470] sm:$0xff]
        %v626 = vld [vmem:[%s1 + $0x478] sm:$0xff]
        %v627 = vld [vmem:[%s1 + $0x480] sm:$0xff]
        %v628 = vld [vmem:[%s1 + $0x488] sm:$0xff]
        %v629 = vld [vmem:[%s1 + $0x490] sm:$0xff]
        %v630 = vld [vmem:[%s1 + $0x498] sm:$0xff]
        %v631 = vld [vmem:[%s1 + $0x4a0] sm:$0x33]
        %v632 = vld [vmem:[%s1 + $0x4a8] sm:$0x33]
        %v633 = vld [vmem:[%s1 + $0x4b0] sm:$0x33]
        %v634 = vld [vmem:[%s1 + $0x4b8] sm:$0x33]
        %v635 = vld [vmem:[%s2] sm:$0xff]
        %v637 = vlaneseq
        %v638 = vshrl.u32 %v637, 7
        %v639 = vsub.s32 0, %v638
        %v640 = vrot.slane %v635, %v639
        %v641 = vlaneseq
        %v642 = vshrl.u32 %v641, 7
        %v643 = vsub.s32 1, %v642
        %v644 = vrot.slane %v635, %v643
        %v645 = vlaneseq
        %v646 = vshrl.u32 %v645, 7
        %v647 = vsub.s32 2, %v646
        %v648 = vrot.slane %v635, %v647
        %v649 = vlaneseq
        %v650 = vshrl.u32 %v649, 7
        %v651 = vsub.s32 3, %v650
        %v652 = vrot.slane %v635, %v651
        %v653 = vlaneseq
        %v654 = vshrl.u32 %v653, 7
        %v655 = vsub.s32 4, %v654
        %v656 = vrot.slane %v635, %v655
        %v657 = vlaneseq
        %v658 = vshrl.u32 %v657, 7
        %v659 = vsub.s32 5, %v658
        %v660 = vrot.slane %v635, %v659
        %v661 = vlaneseq
        %v662 = vshrl.u32 %v661, 7
        %v663 = vsub.s32 6, %v662
        %v664 = vrot.slane %v635, %v663
        %v665 = vlaneseq
        %v666 = vshrl.u32 %v665, 7
        %v667 = vsub.s32 7, %v666
        %v668 = vrot.slane %v635, %v667
        %v829 = vunpack.c.l.b16 %v483
        %v830 = vunpack.c.h.b16 %v483
        %v831 = vunpack.c.l.b16 %v484
        %v832 = vunpack.c.h.b16 %v484
        %v833 = vunpack.c.l.b16 %v485
        %v834 = vunpack.c.h.b16 %v485
        %v835 = vunpack.c.l.b16 %v486
        %v836 = vunpack.c.h.b16 %v486
        %v837 = vunpack.c.l.b16 %v487
        %v838 = vunpack.c.h.b16 %v487
        %v839 = vunpack.c.l.b16 %v488
        %v840 = vunpack.c.h.b16 %v488
        %v841 = vunpack.c.l.b16 %v489
        %v842 = vunpack.c.h.b16 %v489
        %v843 = vunpack.c.l.b16 %v490
        %v844 = vunpack.c.h.b16 %v490
        %v845 = vunpack.c.l.b16 %v491
        %v846 = vunpack.c.h.b16 %v491
        %v847 = vunpack.c.l.b16 %v492
        %v848 = vunpack.c.h.b16 %v492
        %v849 = vunpack.c.l.b16 %v493
        %v850 = vunpack.c.h.b16 %v493
        %v851 = vunpack.c.l.b16 %v494
        %v852 = vunpack.c.h.b16 %v494
        %v853 = vunpack.c.l.b16 %v495
        %v854 = vunpack.c.h.b16 %v495
        %v855 = vunpack.c.l.b16 %v496
        %v856 = vunpack.c.h.b16 %v496
        %v857 = vunpack.c.l.b16 %v497
        %v858 = vunpack.c.h.b16 %v497
        %v859 = vunpack.c.l.b16 %v498
        %v860 = vunpack.c.h.b16 %v498
        %v861 = vunpack.c.l.b16 %v499
        %v862 = vunpack.c.h.b16 %v499
        %v863 = vunpack.c.l.b16 %v500
        %v864 = vunpack.c.h.b16 %v500
        %v865 = vunpack.c.l.b16 %v501
        %v866 = vunpack.c.h.b16 %v501
        %v867 = vunpack.c.l.b16 %v502
        %v868 = vunpack.c.h.b16 %v502
        %v869 = vunpack.c.l.b16 %v503
        %v870 = vunpack.c.h.b16 %v503
        %v871 = vunpack.c.l.b16 %v504
        %v872 = vunpack.c.h.b16 %v504
        %v873 = vunpack.c.l.b16 %v505
        %v874 = vunpack.c.h.b16 %v505
        %v875 = vunpack.c.l.b16 %v506
        %v876 = vunpack.c.h.b16 %v506
        %v877 = vunpack.c.l.b16 %v507
        %v878 = vunpack.c.h.b16 %v507
        %v879 = vunpack.c.l.b16 %v508
        %v880 = vunpack.c.h.b16 %v508
        %v881 = vunpack.c.l.b16 %v509
        %v882 = vunpack.c.h.b16 %v509
        %v883 = vunpack.c.l.b16 %v510
        %v884 = vunpack.c.h.b16 %v510
        %v885 = vunpack.c.l.b16 %v511
        %v886 = vunpack.c.h.b16 %v511
        %v887 = vunpack.c.l.b16 %v512
        %v888 = vunpack.c.h.b16 %v512
        %v889 = vunpack.c.l.b16 %v513
        %v890 = vunpack.c.h.b16 %v513
        %v891 = vunpack.c.l.b16 %v514
        %v892 = vunpack.c.h.b16 %v514
        %v893 = vunpack.c.l.b16 %v515
        %v894 = vunpack.c.h.b16 %v515
        %v895 = vunpack.c.l.b16 %v516
        %v896 = vunpack.c.h.b16 %v516
        %v897 = vunpack.c.l.b16 %v517
        %v898 = vunpack.c.h.b16 %v517
        %v899 = vunpack.c.l.b16 %v518
        %v900 = vunpack.c.h.b16 %v518
        %v901 = vunpack.c.l.b16 %v519
        %v902 = vunpack.c.h.b16 %v519
        %v903 = vunpack.c.l.b16 %v520
        %v904 = vunpack.c.h.b16 %v520
        %v905 = vunpack.c.l.b16 %v521
        %v906 = vunpack.c.h.b16 %v521
        %v907 = vunpack.c.l.b16 %v522
        %v908 = vunpack.c.h.b16 %v522
        %v909 = vunpack.c.l.b16 %v523
        %v910 = vunpack.c.h.b16 %v523
        %v911 = vunpack.c.l.b16 %v524
        %v912 = vunpack.c.h.b16 %v524
        %v913 = vunpack.c.l.b16 %v525
        %v914 = vunpack.c.h.b16 %v525
        %v915 = vunpack.c.l.b16 %v526
        %v916 = vunpack.c.h.b16 %v526
        %v917 = vunpack.c.l.b16 %v527
        %v918 = vunpack.c.h.b16 %v527
        %v919 = vunpack.c.l.b16 %v528
        %v920 = vunpack.c.h.b16 %v528
        %v921 = vunpack.c.l.b16 %v529
        %v922 = vunpack.c.h.b16 %v529
        %v923 = vunpack.c.l.b16 %v530
        %v924 = vunpack.c.h.b16 %v530
        %v925 = vunpack.c.l.b16 %v531
        %v926 = vunpack.c.h.b16 %v531
        %v927 = vunpack.c.l.b16 %v532
        %v928 = vunpack.c.h.b16 %v532
        %v929 = vunpack.c.l.b16 %v533
        %v930 = vunpack.c.h.b16 %v533
        %v931 = vunpack.c.l.b16 %v534
        %v932 = vunpack.c.h.b16 %v534
        %v933 = vunpack.c.l.b16 %v535
        %v934 = vunpack.c.h.b16 %v535
        %v935 = vunpack.c.l.b16 %v536
        %v936 = vunpack.c.h.b16 %v536
        %v937 = vunpack.c.l.b16 %v537
        %v938 = vunpack.c.h.b16 %v537
        %v939 = vunpack.c.l.b16 %v538
        %v940 = vunpack.c.h.b16 %v538
        %v941 = vunpack.c.l.b16 %v539
        %v942 = vunpack.c.h.b16 %v539
        %v943 = vunpack.c.l.b16 %v540
        %v944 = vunpack.c.h.b16 %v540
        %v945 = vunpack.c.l.b16 %v541
        %v946 = vunpack.c.h.b16 %v541
        %v947 = vunpack.c.l.b16 %v542
        %v948 = vunpack.c.h.b16 %v542
        %v949 = vunpack.c.l.b16 %v543
        %v950 = vunpack.c.h.b16 %v543
        %v951 = vunpack.c.l.b16 %v544
        %v952 = vunpack.c.h.b16 %v544
        %v953 = vunpack.c.l.b16 %v545
        %v954 = vunpack.c.h.b16 %v545
        %v955 = vunpack.c.l.b16 %v546
        %v956 = vunpack.c.h.b16 %v546
        %v957 = vunpack.c.l.b16 %v547
        %v958 = vunpack.c.h.b16 %v547
        %v959 = vunpack.c.l.b16 %v548
        %v960 = vunpack.c.h.b16 %v548
        %v961 = vunpack.c.l.b16 %v549
        %v962 = vunpack.c.h.b16 %v549
        %v963 = vunpack.c.l.b16 %v550
        %v964 = vunpack.c.h.b16 %v550
        %v965 = vunpack.c.l.b16 %v551
        %v966 = vunpack.c.h.b16 %v551
        %v967 = vunpack.c.l.b16 %v552
        %v968 = vunpack.c.h.b16 %v552
        %v969 = vunpack.c.l.b16 %v553
        %v970 = vunpack.c.h.b16 %v553
        %v971 = vunpack.c.l.b16 %v554
        %v972 = vunpack.c.h.b16 %v554
        %v973 = vunpack.c.l.b16 %v555
        %v974 = vunpack.c.h.b16 %v555
        %v975 = vunpack.c.l.b16 %v556
        %v976 = vunpack.c.h.b16 %v556
        %v977 = vunpack.c.l.b16 %v557
        %v978 = vunpack.c.h.b16 %v557
        %v979 = vunpack.c.l.b16 %v558
        %v980 = vunpack.c.h.b16 %v558
        %v981 = vunpack.c.l.b16 %v559
        %v982 = vunpack.c.h.b16 %v559
        %v983 = vunpack.c.l.b16 %v560
        %v984 = vunpack.c.h.b16 %v560
        %v985 = vunpack.c.l.b16 %v561
        %v986 = vunpack.c.h.b16 %v561
        %v987 = vunpack.c.l.b16 %v562
        %v988 = vunpack.c.h.b16 %v562
        %v989 = vunpack.c.l.b16 %v563
        %v990 = vunpack.c.h.b16 %v563
        %v991 = vunpack.c.l.b16 %v564
        %v992 = vunpack.c.h.b16 %v564
        %v993 = vunpack.c.l.b16 %v565
        %v994 = vunpack.c.h.b16 %v565
        %v995 = vunpack.c.l.b16 %v566
        %v996 = vunpack.c.h.b16 %v566
        %v997 = vunpack.c.l.b16 %v567
        %v998 = vunpack.c.h.b16 %v567
        %v999 = vunpack.c.l.b16 %v568
        %v1000 = vunpack.c.h.b16 %v568
        %v1001 = vunpack.c.l.b16 %v569
        %v1002 = vunpack.c.h.b16 %v569
        %v1003 = vunpack.c.l.b16 %v570
        %v1004 = vunpack.c.h.b16 %v570
        %v1005 = vunpack.c.l.b16 %v571
        %v1006 = vunpack.c.h.b16 %v571
        %v1007 = vunpack.c.l.b16 %v572
        %v1008 = vunpack.c.h.b16 %v572
        %v1009 = vunpack.c.l.b16 %v573
        %v1010 = vunpack.c.h.b16 %v573
        %v1011 = vunpack.c.l.b16 %v574
        %v1012 = vunpack.c.h.b16 %v574
        %v1013 = vunpack.c.l.b16 %v575
        %v1014 = vunpack.c.h.b16 %v575
        %v1015 = vunpack.c.l.b16 %v576
        %v1016 = vunpack.c.h.b16 %v576
        %v1017 = vunpack.c.l.b16 %v577
        %v1018 = vunpack.c.h.b16 %v577
        %v1019 = vunpack.c.l.b16 %v578
        %v1020 = vunpack.c.h.b16 %v578
        %v1021 = vunpack.c.l.b16 %v579
        %v1022 = vunpack.c.h.b16 %v579
        %v1023 = vunpack.c.l.b16 %v580
        %v1024 = vunpack.c.h.b16 %v580
        %v1025 = vunpack.c.l.b16 %v581
        %v1026 = vunpack.c.h.b16 %v581
        %v1027 = vunpack.c.l.b16 %v582
        %v1028 = vunpack.c.h.b16 %v582
        %v1029 = vunpack.c.l.b16 %v583
        %v1030 = vunpack.c.h.b16 %v583
        %v1031 = vunpack.c.l.b16 %v584
        %v1032 = vunpack.c.h.b16 %v584
        %v1033 = vunpack.c.l.b16 %v585
        %v1034 = vunpack.c.h.b16 %v585
        %v1035 = vunpack.c.l.b16 %v586
        %v1036 = vunpack.c.h.b16 %v586
        %v1037 = vunpack.c.l.b16 %v587
        %v1038 = vunpack.c.h.b16 %v587
        %v1039 = vunpack.c.l.b16 %v588
        %v1040 = vunpack.c.h.b16 %v588
        %v1041 = vunpack.c.l.b16 %v589
        %v1042 = vunpack.c.h.b16 %v589
        %v1043 = vunpack.c.l.b16 %v590
        %v1044 = vunpack.c.h.b16 %v590
        %v1045 = vunpack.c.l.b16 %v591
        %v1046 = vunpack.c.h.b16 %v591
        %v1047 = vunpack.c.l.b16 %v592
        %v1048 = vunpack.c.h.b16 %v592
        %v1049 = vunpack.c.l.b16 %v593
        %v1050 = vunpack.c.h.b16 %v593
        %v1051 = vunpack.c.l.b16 %v594
        %v1052 = vunpack.c.h.b16 %v594
        %v1053 = vunpack.c.l.b16 %v595
        %v1054 = vunpack.c.h.b16 %v595
        %v1055 = vunpack.c.l.b16 %v596
        %v1056 = vunpack.c.h.b16 %v596
        %v1057 = vunpack.c.l.b16 %v597
        %v1058 = vunpack.c.h.b16 %v597
        %v1059 = vunpack.c.l.b16 %v598
        %v1060 = vunpack.c.h.b16 %v598
        %v1061 = vunpack.c.l.b16 %v599
        %v1062 = vunpack.c.h.b16 %v599
        %v1063 = vunpack.c.l.b16 %v600
        %v1064 = vunpack.c.h.b16 %v600
        %v1065 = vunpack.c.l.b16 %v601
        %v1066 = vunpack.c.h.b16 %v601
        %v1067 = vunpack.c.l.b16 %v602
        %v1068 = vunpack.c.h.b16 %v602
        %v1069 = vunpack.c.l.b16 %v603
        %v1070 = vunpack.c.h.b16 %v603
        %v1071 = vunpack.c.l.b16 %v604
        %v1072 = vunpack.c.h.b16 %v604
        %v1073 = vunpack.c.l.b16 %v605
        %v1074 = vunpack.c.h.b16 %v605
        %v1075 = vunpack.c.l.b16 %v606
        %v1076 = vunpack.c.h.b16 %v606
        %v1077 = vunpack.c.l.b16 %v607
        %v1078 = vunpack.c.h.b16 %v607
        %v1079 = vunpack.c.l.b16 %v608
        %v1080 = vunpack.c.h.b16 %v608
        %v1081 = vunpack.c.l.b16 %v609
        %v1082 = vunpack.c.h.b16 %v609
        %v1083 = vunpack.c.l.b16 %v610
        %v1084 = vunpack.c.h.b16 %v610
        %v1085 = vunpack.c.l.b16 %v611
        %v1086 = vunpack.c.h.b16 %v611
        %v1087 = vunpack.c.l.b16 %v612
        %v1088 = vunpack.c.h.b16 %v612
        %v1089 = vunpack.c.l.b16 %v613
        %v1090 = vunpack.c.h.b16 %v613
        %v1091 = vunpack.c.l.b16 %v614
        %v1092 = vunpack.c.h.b16 %v614
        %v1093 = vunpack.c.l.b16 %v615
        %v1094 = vunpack.c.h.b16 %v615
        %v1095 = vunpack.c.l.b16 %v616
        %v1096 = vunpack.c.h.b16 %v616
        %v1097 = vunpack.c.l.b16 %v617
        %v1098 = vunpack.c.h.b16 %v617
        %v1099 = vunpack.c.l.b16 %v618
        %v1100 = vunpack.c.h.b16 %v618
        %v1101 = vunpack.c.l.b16 %v619
        %v1102 = vunpack.c.h.b16 %v619
        %v1103 = vunpack.c.l.b16 %v620
        %v1104 = vunpack.c.h.b16 %v620
        %v1105 = vunpack.c.l.b16 %v621
        %v1106 = vunpack.c.h.b16 %v621
        %v1107 = vunpack.c.l.b16 %v622
        %v1108 = vunpack.c.h.b16 %v622
        %v1109 = vunpack.c.l.b16 %v623
        %v1110 = vunpack.c.h.b16 %v623
        %v1111 = vunpack.c.l.b16 %v624
        %v1112 = vunpack.c.h.b16 %v624
        %v1113 = vunpack.c.l.b16 %v625
        %v1114 = vunpack.c.h.b16 %v625
        %v1115 = vunpack.c.l.b16 %v626
        %v1116 = vunpack.c.h.b16 %v626
        %v1117 = vunpack.c.l.b16 %v627
        %v1118 = vunpack.c.h.b16 %v627
        %v1119 = vunpack.c.l.b16 %v628
        %v1120 = vunpack.c.h.b16 %v628
        %v1121 = vunpack.c.l.b16 %v629
        %v1122 = vunpack.c.h.b16 %v629
        %v1123 = vunpack.c.l.b16 %v630
        %v1124 = vunpack.c.h.b16 %v630
        %v1125 = vunpack.c.l.b16 %v631
        %v1126 = vunpack.c.h.b16 %v631
        %v1127 = vunpack.c.l.b16 %v632
        %v1128 = vunpack.c.h.b16 %v632
        %v1129 = vunpack.c.l.b16 %v633
        %v1130 = vunpack.c.h.b16 %v633
        %v1131 = vunpack.c.l.b16 %v634
        %v1132 = vunpack.c.h.b16 %v634
        %v1133 = vpack.c.b16 %v837, %v829
        %v1134 = vpack.c.b16 %v838, %v830
        %v1135 = vpack.c.b16 %v839, %v831
        %v1136 = vpack.c.b16 %v840, %v832
        %v1137 = vpack.c.b16 %v841, %v833
        %v1138 = vpack.c.b16 %v842, %v834
        %v1139 = vpack.c.b16 %v843, %v835
        %v1140 = vpack.c.b16 %v844, %v836
        %v1141 = vpack.c.b16 %v853, %v845
        %v1142 = vpack.c.b16 %v854, %v846
        %v1143 = vpack.c.b16 %v855, %v847
        %v1144 = vpack.c.b16 %v856, %v848
        %v1145 = vpack.c.b16 %v857, %v849
        %v1146 = vpack.c.b16 %v858, %v850
        %v1147 = vpack.c.b16 %v859, %v851
        %v1148 = vpack.c.b16 %v860, %v852
        %v1149 = vpack.c.b16 %v869, %v861
        %v1150 = vpack.c.b16 %v870, %v862
        %v1151 = vpack.c.b16 %v871, %v863
        %v1152 = vpack.c.b16 %v872, %v864
        %v1153 = vpack.c.b16 %v873, %v865
        %v1154 = vpack.c.b16 %v874, %v866
        %v1155 = vpack.c.b16 %v875, %v867
        %v1156 = vpack.c.b16 %v876, %v868
        %v1157 = vpack.c.b16 %v885, %v877
        %v1158 = vpack.c.b16 %v886, %v878
        %v1159 = vpack.c.b16 %v887, %v879
        %v1160 = vpack.c.b16 %v888, %v880
        %v1161 = vpack.c.b16 %v889, %v881
        %v1162 = vpack.c.b16 %v890, %v882
        %v1163 = vpack.c.b16 %v891, %v883
        %v1164 = vpack.c.b16 %v892, %v884
        %v1165 = vpack.c.b16 %v901, %v893
        %v1166 = vpack.c.b16 %v902, %v894
        %v1167 = vpack.c.b16 %v903, %v895
        %v1168 = vpack.c.b16 %v904, %v896
        %v1169 = vpack.c.b16 %v905, %v897
        %v1170 = vpack.c.b16 %v906, %v898
        %v1171 = vpack.c.b16 %v907, %v899
        %v1172 = vpack.c.b16 %v908, %v900
        %v1173 = vpack.c.b16 %v917, %v909
        %v1174 = vpack.c.b16 %v918, %v910
        %v1175 = vpack.c.b16 %v919, %v911
        %v1176 = vpack.c.b16 %v920, %v912
        %v1177 = vpack.c.b16 %v921, %v913
        %v1178 = vpack.c.b16 %v922, %v914
        %v1179 = vpack.c.b16 %v923, %v915
        %v1180 = vpack.c.b16 %v924, %v916
        %v1181 = vpack.c.b16 %v933, %v925
        %v1182 = vpack.c.b16 %v934, %v926
        %v1183 = vpack.c.b16 %v935, %v927
        %v1184 = vpack.c.b16 %v936, %v928
        %v1185 = vpack.c.b16 %v937, %v929
        %v1186 = vpack.c.b16 %v938, %v930
        %v1187 = vpack.c.b16 %v939, %v931
        %v1188 = vpack.c.b16 %v940, %v932
        %v1189 = vpack.c.b16 %v949, %v941
        %v1190 = vpack.c.b16 %v950, %v942
        %v1191 = vpack.c.b16 %v951, %v943
        %v1192 = vpack.c.b16 %v952, %v944
        %v1193 = vpack.c.b16 %v953, %v945
        %v1194 = vpack.c.b16 %v954, %v946
        %v1195 = vpack.c.b16 %v955, %v947
        %v1196 = vpack.c.b16 %v956, %v948
        %v1197 = vpack.c.b16 %v965, %v957
        %v1198 = vpack.c.b16 %v966, %v958
        %v1199 = vpack.c.b16 %v967, %v959
        %v1200 = vpack.c.b16 %v968, %v960
        %v1201 = vpack.c.b16 %v969, %v961
        %v1202 = vpack.c.b16 %v970, %v962
        %v1203 = vpack.c.b16 %v971, %v963
        %v1204 = vpack.c.b16 %v972, %v964
        %v1205 = vpack.c.b16 %v981, %v973
        %v1206 = vpack.c.b16 %v982, %v974
        %v1207 = vpack.c.b16 %v983, %v975
        %v1208 = vpack.c.b16 %v984, %v976
        %v1209 = vpack.c.b16 %v985, %v977
        %v1210 = vpack.c.b16 %v986, %v978
        %v1211 = vpack.c.b16 %v987, %v979
        %v1212 = vpack.c.b16 %v988, %v980
        %v1213 = vpack.c.b16 %v997, %v989
        %v1214 = vpack.c.b16 %v998, %v990
        %v1215 = vpack.c.b16 %v999, %v991
        %v1216 = vpack.c.b16 %v1000, %v992
        %v1217 = vpack.c.b16 %v1001, %v993
        %v1218 = vpack.c.b16 %v1002, %v994
        %v1219 = vpack.c.b16 %v1003, %v995
        %v1220 = vpack.c.b16 %v1004, %v996
        %v1221 = vpack.c.b16 %v1013, %v1005
        %v1222 = vpack.c.b16 %v1014, %v1006
        %v1223 = vpack.c.b16 %v1015, %v1007
        %v1224 = vpack.c.b16 %v1016, %v1008
        %v1225 = vpack.c.b16 %v1017, %v1009
        %v1226 = vpack.c.b16 %v1018, %v1010
        %v1227 = vpack.c.b16 %v1019, %v1011
        %v1228 = vpack.c.b16 %v1020, %v1012
        %v1229 = vpack.c.b16 %v1029, %v1021
        %v1230 = vpack.c.b16 %v1030, %v1022
        %v1231 = vpack.c.b16 %v1031, %v1023
        %v1232 = vpack.c.b16 %v1032, %v1024
        %v1233 = vpack.c.b16 %v1033, %v1025
        %v1234 = vpack.c.b16 %v1034, %v1026
        %v1235 = vpack.c.b16 %v1035, %v1027
        %v1236 = vpack.c.b16 %v1036, %v1028
        %v1237 = vpack.c.b16 %v1045, %v1037
        %v1238 = vpack.c.b16 %v1046, %v1038
        %v1239 = vpack.c.b16 %v1047, %v1039
        %v1240 = vpack.c.b16 %v1048, %v1040
        %v1241 = vpack.c.b16 %v1049, %v1041
        %v1242 = vpack.c.b16 %v1050, %v1042
        %v1243 = vpack.c.b16 %v1051, %v1043
        %v1244 = vpack.c.b16 %v1052, %v1044
        %v1245 = vpack.c.b16 %v1061, %v1053
        %v1246 = vpack.c.b16 %v1062, %v1054
        %v1247 = vpack.c.b16 %v1063, %v1055
        %v1248 = vpack.c.b16 %v1064, %v1056
        %v1249 = vpack.c.b16 %v1065, %v1057
        %v1250 = vpack.c.b16 %v1066, %v1058
        %v1251 = vpack.c.b16 %v1067, %v1059
        %v1252 = vpack.c.b16 %v1068, %v1060
        %v1253 = vpack.c.b16 %v1077, %v1069
        %v1254 = vpack.c.b16 %v1078, %v1070
        %v1255 = vpack.c.b16 %v1079, %v1071
        %v1256 = vpack.c.b16 %v1080, %v1072
        %v1257 = vpack.c.b16 %v1081, %v1073
        %v1258 = vpack.c.b16 %v1082, %v1074
        %v1259 = vpack.c.b16 %v1083, %v1075
        %v1260 = vpack.c.b16 %v1084, %v1076
        %v1261 = vpack.c.b16 %v1093, %v1085
        %v1262 = vpack.c.b16 %v1094, %v1086
        %v1263 = vpack.c.b16 %v1095, %v1087
        %v1264 = vpack.c.b16 %v1096, %v1088
        %v1265 = vpack.c.b16 %v1097, %v1089
        %v1266 = vpack.c.b16 %v1098, %v1090
        %v1267 = vpack.c.b16 %v1099, %v1091
        %v1268 = vpack.c.b16 %v1100, %v1092
        %v1269 = vpack.c.b16 %v1109, %v1101
        %v1270 = vpack.c.b16 %v1110, %v1102
        %v1271 = vpack.c.b16 %v1111, %v1103
        %v1272 = vpack.c.b16 %v1112, %v1104
        %v1273 = vpack.c.b16 %v1113, %v1105
        %v1274 = vpack.c.b16 %v1114, %v1106
        %v1275 = vpack.c.b16 %v1115, %v1107
        %v1276 = vpack.c.b16 %v1116, %v1108
        %v1277 = vpack.c.b16 %v1125, %v1117
        %v1278 = vpack.c.b16 %v1126, %v1118
        %v1279 = vpack.c.b16 %v1127, %v1119
        %v1280 = vpack.c.b16 %v1128, %v1120
        %v1281 = vpack.c.b16 %v1129, %v1121
        %v1282 = vpack.c.b16 %v1130, %v1122
        %v1283 = vpack.c.b16 %v1131, %v1123
        %v1284 = vpack.c.b16 %v1132, %v1124
        %vm1429 = vcmask 359424
        %v1431 = vsel %vm1429, %v437, 0
        %v1434 = vsel %vm1429, %v440, 0
        %v1437 = vsel %vm1429, %v443, 0
        %v1440 = vsel %vm1429, %v446, 0
        %v1443 = vsel %vm1429, %v449, 0
        %v1446 = vsel %vm1429, %v452, 0
        %v1449 = vsel %vm1429, %v455, 0
        %v1452 = vsel %vm1429, %v458, 0
        %v1455 = vsel %vm1429, %v461, 0
        %v1458 = vsel %vm1429, %v464, 0
        %v1461 = vsel %vm1429, %v467, 0
        %v1464 = vsel %vm1429, %v470, 0
        %v1467 = vsel %vm1429, %v473, 0
        %v1470 = vsel %vm1429, %v476, 0
        %v1473 = vsel %vm1429, %v479, 0
        %v1476 = vsel %vm1429, %v482, 0
        %vm1478 = vcmask 1045504
        %v1480 = vsel %vm1478, %v1277, 0
        %v1483 = vsel %vm1478, %v1278, 0
        %v1486 = vsel %vm1478, %v1279, 0
        %v1489 = vsel %vm1478, %v1280, 0
        %v1492 = vsel %vm1478, %v1281, 0
        %v1495 = vsel %vm1478, %v1282, 0
        %v1498 = vsel %vm1478, %v1283, 0
        %v1501 = vsel %vm1478, %v1284, 0
        %1503 = vmatprep.subr.bf16.mxu0 %v1190
        %1504 = vmatpush1.bf16.msra.mxu0 %v1189
        %1505 = vmatprep.subr.bf16.mxu0 %v1182
        %1506 = vmatpush1.bf16.msra.mxu0 %v1181
        %1507 = vmatprep.subr.bf16.mxu0 %v1174
        %1508 = vmatpush1.bf16.msra.mxu0 %v1173
        %1509 = vmatprep.subr.bf16.mxu0 %v1166
        %1510 = vmatpush1.bf16.msra.mxu0 %v1165
        %1511 = vmatprep.subr.bf16.mxu0 %v1158
        %1512 = vmatpush1.bf16.msra.mxu0 %v1157
        %1513 = vmatprep.subr.bf16.mxu0 %v1150
        %1514 = vmatpush1.bf16.msra.mxu0 %v1149
        %1515 = vmatprep.subr.bf16.mxu0 %v1142
        %1516 = vmatpush1.bf16.msra.mxu0 %v1141
        %1517 = vmatprep.subr.bf16.mxu0 %v1134
        %1518 = vmatpush1.bf16.msra.mxu0 %v1133
        %1519 = vmatprep.subr.bf16.mxu0 %v1254
        %1520 = vmatpush2.bf16.msra.mxu0 %v1253
        %1521 = vmatprep.subr.bf16.mxu0 %v1246
        %1522 = vmatpush2.bf16.msra.mxu0 %v1245
        %1523 = vmatprep.subr.bf16.mxu0 %v1238
        %1524 = vmatpush2.bf16.msra.mxu0 %v1237
        %1525 = vmatprep.subr.bf16.mxu0 %v1230
        %1526 = vmatpush2.bf16.msra.mxu0 %v1229
        %1527 = vmatprep.subr.bf16.mxu0 %v1222
        %1528 = vmatpush2.bf16.msra.mxu0 %v1221
        %1529 = vmatprep.subr.bf16.mxu0 %v1214
        %1530 = vmatpush2.bf16.msra.mxu0 %v1213
        %1531 = vmatprep.subr.bf16.mxu0 %v1206
        %1532 = vmatpush2.bf16.msra.mxu0 %v1205
        %1533 = vmatprep.subr.bf16.mxu0 %v1198
        %1534 = vmatpush2.bf16.msra.mxu0 %v1197
        %1535 = vmatprep.mubr.bf16.mxu0 %v436
        %1536 = vmatmul.mubr.bf16.gmra.mxu0 %v435
        %v1537 = vpop.f32.mrf.mxu0
        %v1538 = vadd.f32 %v640, %v1537
        %v1539 = vpop.f32.mrf.mxu0
        %v1540 = vadd.f32 %v644, %v1539
        %v1541 = vpop.f32.mrf.mxu0
        %v1542 = vadd.f32 %v640, %v1541
        %v1543 = vpop.f32.mrf.mxu0
        %v1544 = vadd.f32 %v644, %v1543
        %1545 = vmatprep.mubr.bf16.mxu0 %v439
        %1546 = vmatmul.mubr.bf16.gmra.mxu0 %v438
        %v1547 = vpop.f32.mrf.mxu0
        %v1548 = vadd.f32 %v640, %v1547
        %v1549 = vpop.f32.mrf.mxu0
        %v1550 = vadd.f32 %v644, %v1549
        %v1551 = vpop.f32.mrf.mxu0
        %v1552 = vadd.f32 %v640, %v1551
        %v1553 = vpop.f32.mrf.mxu0
        %v1554 = vadd.f32 %v644, %v1553
        %1555 = vmatprep.mubr.bf16.mxu0 %v442
        %1556 = vmatmul.mubr.bf16.gmra.mxu0 %v441
        %v1557 = vpop.f32.mrf.mxu0
        %v1558 = vadd.f32 %v640, %v1557
        %v1559 = vpop.f32.mrf.mxu0
        %v1560 = vadd.f32 %v644, %v1559
        %v1561 = vpop.f32.mrf.mxu0
        %v1562 = vadd.f32 %v640, %v1561
        %v1563 = vpop.f32.mrf.mxu0
        %v1564 = vadd.f32 %v644, %v1563
        %1565 = vmatprep.mubr.bf16.mxu0 %v445
        %1566 = vmatmul.mubr.bf16.gmra.mxu0 %v444
        %v1567 = vpop.f32.mrf.mxu0
        %v1568 = vadd.f32 %v640, %v1567
        %v1569 = vpop.f32.mrf.mxu0
        %v1570 = vadd.f32 %v644, %v1569
        %v1571 = vpop.f32.mrf.mxu0
        %v1572 = vadd.f32 %v640, %v1571
        %v1573 = vpop.f32.mrf.mxu0
        %v1574 = vadd.f32 %v644, %v1573
        %1575 = vmatprep.mubr.bf16.mxu0 %v448
        %1576 = vmatmul.mubr.bf16.gmra.mxu0 %v447
        %v1577 = vpop.f32.mrf.mxu0
        %v1578 = vadd.f32 %v640, %v1577
        %v1579 = vpop.f32.mrf.mxu0
        %v1580 = vadd.f32 %v644, %v1579
        %v1581 = vpop.f32.mrf.mxu0
        %v1582 = vadd.f32 %v640, %v1581
        %v1583 = vpop.f32.mrf.mxu0
        %v1584 = vadd.f32 %v644, %v1583
        %1585 = vmatprep.mubr.bf16.mxu0 %v451
        %1586 = vmatmul.mubr.bf16.gmra.mxu0 %v450
        %v1587 = vpop.f32.mrf.mxu0
        %v1588 = vadd.f32 %v640, %v1587
        %v1589 = vpop.f32.mrf.mxu0
        %v1590 = vadd.f32 %v644, %v1589
        %v1591 = vpop.f32.mrf.mxu0
        %v1592 = vadd.f32 %v640, %v1591
        %v1593 = vpop.f32.mrf.mxu0
        %v1594 = vadd.f32 %v644, %v1593
        %1595 = vmatprep.mubr.bf16.mxu0 %v454
        %1596 = vmatmul.mubr.bf16.gmra.mxu0 %v453
        %v1597 = vpop.f32.mrf.mxu0
        %v1598 = vadd.f32 %v640, %v1597
        %v1599 = vpop.f32.mrf.mxu0
        %v1600 = vadd.f32 %v644, %v1599
        %v1601 = vpop.f32.mrf.mxu0
        %v1602 = vadd.f32 %v640, %v1601
        %v1603 = vpop.f32.mrf.mxu0
        %v1604 = vadd.f32 %v644, %v1603
        %1605 = vmatprep.mubr.bf16.mxu0 %v457
        %1606 = vmatmul.mubr.bf16.gmra.mxu0 %v456
        %v1607 = vpop.f32.mrf.mxu0
        %v1608 = vadd.f32 %v640, %v1607
        %v1609 = vpop.f32.mrf.mxu0
        %v1610 = vadd.f32 %v644, %v1609
        %v1611 = vpop.f32.mrf.mxu0
        %v1612 = vadd.f32 %v640, %v1611
        %v1613 = vpop.f32.mrf.mxu0
        %v1614 = vadd.f32 %v644, %v1613
        %1615 = vmatprep.mubr.bf16.mxu0 %v460
        %1616 = vmatmul.mubr.bf16.gmra.mxu0 %v459
        %v1617 = vpop.f32.mrf.mxu0
        %v1618 = vadd.f32 %v640, %v1617
        %v1619 = vpop.f32.mrf.mxu0
        %v1620 = vadd.f32 %v644, %v1619
        %v1621 = vpop.f32.mrf.mxu0
        %v1622 = vadd.f32 %v640, %v1621
        %v1623 = vpop.f32.mrf.mxu0
        %v1624 = vadd.f32 %v644, %v1623
        %1625 = vmatprep.mubr.bf16.mxu0 %v463
        %1626 = vmatmul.mubr.bf16.gmra.mxu0 %v462
        %v1627 = vpop.f32.mrf.mxu0
        %v1628 = vadd.f32 %v640, %v1627
        %v1629 = vpop.f32.mrf.mxu0
        %v1630 = vadd.f32 %v644, %v1629
        %v1631 = vpop.f32.mrf.mxu0
        %v1632 = vadd.f32 %v640, %v1631
        %v1633 = vpop.f32.mrf.mxu0
        %v1634 = vadd.f32 %v644, %v1633
        %1635 = vmatprep.mubr.bf16.mxu0 %v466
        %1636 = vmatmul.mubr.bf16.gmra.mxu0 %v465
        %v1637 = vpop.f32.mrf.mxu0
        %v1638 = vadd.f32 %v640, %v1637
        %v1639 = vpop.f32.mrf.mxu0
        %v1640 = vadd.f32 %v644, %v1639
        %v1641 = vpop.f32.mrf.mxu0
        %v1642 = vadd.f32 %v640, %v1641
        %v1643 = vpop.f32.mrf.mxu0
        %v1644 = vadd.f32 %v644, %v1643
        %1645 = vmatprep.mubr.bf16.mxu0 %v469
        %1646 = vmatmul.mubr.bf16.gmra.mxu0 %v468
        %v1647 = vpop.f32.mrf.mxu0
        %v1648 = vadd.f32 %v640, %v1647
        %v1649 = vpop.f32.mrf.mxu0
        %v1650 = vadd.f32 %v644, %v1649
        %v1651 = vpop.f32.mrf.mxu0
        %v1652 = vadd.f32 %v640, %v1651
        %v1653 = vpop.f32.mrf.mxu0
        %v1654 = vadd.f32 %v644, %v1653
        %1655 = vmatprep.mubr.bf16.mxu0 %v472
        %1656 = vmatmul.mubr.bf16.gmra.mxu0 %v471
        %v1657 = vpop.f32.mrf.mxu0
        %v1658 = vadd.f32 %v640, %v1657
        %v1659 = vpop.f32.mrf.mxu0
        %v1660 = vadd.f32 %v644, %v1659
        %v1661 = vpop.f32.mrf.mxu0
        %v1662 = vadd.f32 %v640, %v1661
        %v1663 = vpop.f32.mrf.mxu0
        %v1664 = vadd.f32 %v644, %v1663
        %1665 = vmatprep.mubr.bf16.mxu0 %v475
        %1666 = vmatmul.mubr.bf16.gmra.mxu0 %v474
        %v1667 = vpop.f32.mrf.mxu0
        %v1668 = vadd.f32 %v640, %v1667
        %v1669 = vpop.f32.mrf.mxu0
        %v1670 = vadd.f32 %v644, %v1669
        %v1671 = vpop.f32.mrf.mxu0
        %v1672 = vadd.f32 %v640, %v1671
        %v1673 = vpop.f32.mrf.mxu0
        %v1674 = vadd.f32 %v644, %v1673
        %1675 = vmatprep.mubr.bf16.mxu0 %v478
        %1676 = vmatmul.mubr.bf16.gmra.mxu0 %v477
        %v1677 = vpop.f32.mrf.mxu0
        %v1678 = vadd.f32 %v640, %v1677
        %v1679 = vpop.f32.mrf.mxu0
        %v1680 = vadd.f32 %v644, %v1679
        %v1681 = vpop.f32.mrf.mxu0
        %v1682 = vadd.f32 %v640, %v1681
        %v1683 = vpop.f32.mrf.mxu0
        %v1684 = vadd.f32 %v644, %v1683
        %1685 = vmatprep.mubr.bf16.mxu0 %v481
        %1686 = vmatmul.mubr.bf16.gmra.mxu0 %v480
        %v1687 = vpop.f32.mrf.mxu0
        %v1688 = vadd.f32 %v640, %v1687
        %v1689 = vpop.f32.mrf.mxu0
        %v1690 = vadd.f32 %v644, %v1689
        %v1691 = vpop.f32.mrf.mxu0
        %v1692 = vadd.f32 %v640, %v1691
        %v1693 = vpop.f32.mrf.mxu0
        %v1694 = vadd.f32 %v644, %v1693
        %1695 = vdwg.mxu0
        %1696 = vmatprep.subr.bf16.mxu0 0
        %1697 = vmatpush1.bf16.msra.mxu0 0
        %1698 = vmatprep.subr.bf16.mxu0 0
        %1699 = vmatpush1.bf16.msra.mxu0 0
        %1700 = vmatprep.subr.bf16.mxu0 0
        %1701 = vmatpush1.bf16.msra.mxu0 0
        %1702 = vmatprep.subr.bf16.mxu0 0
        %1703 = vmatpush1.bf16.msra.mxu0 0
        %1704 = vmatprep.subr.bf16.mxu0 0
        %1705 = vmatpush1.bf16.msra.mxu0 0
        %1706 = vmatprep.subr.bf16.mxu0 %v1483
        %1707 = vmatpush1.bf16.msra.mxu0 %v1480
        %1708 = vmatprep.subr.bf16.mxu0 %v1270
        %1709 = vmatpush1.bf16.msra.mxu0 %v1269
        %1710 = vmatprep.subr.bf16.mxu0 %v1262
        %1711 = vmatpush1.bf16.msra.mxu0 %v1261
        %1712 = vmatprep.subr.bf16.mxu0 0
        %1713 = vmatpush2.bf16.msra.mxu0 0
        %1714 = vmatprep.subr.bf16.mxu0 0
        %1715 = vmatpush2.bf16.msra.mxu0 0
        %1716 = vmatprep.subr.bf16.mxu0 0
        %1717 = vmatpush2.bf16.msra.mxu0 0
        %1718 = vmatprep.subr.bf16.mxu0 0
        %1719 = vmatpush2.bf16.msra.mxu0 0
        %1720 = vmatprep.subr.bf16.mxu0 0
        %1721 = vmatpush2.bf16.msra.mxu0 0
        %1722 = vmatprep.subr.bf16.mxu0 0
        %1723 = vmatpush2.bf16.msra.mxu0 0
        %1724 = vmatprep.subr.bf16.mxu0 0
        %1725 = vmatpush2.bf16.msra.mxu0 0
        %1726 = vmatprep.subr.bf16.mxu0 0
        %1727 = vmatpush2.bf16.msra.mxu0 0
        %1728 = vmatprep.mubr.bf16.mxu0 0
        %1729 = vmatmul.mubr.bf16.gmra.mxu0 %v1431
        %v1730 = vpop.f32.mrf.mxu0
        %v1731 = vadd.f32 %v1538, %v1730
        %v1732 = vpop.f32.mrf.mxu0
        %v1733 = vadd.f32 %v1540, %v1732
        %v1734 = vpop.f32.mrf.mxu0
        %v1735 = vadd.f32 %v1542, %v1734
        %v1736 = vpop.f32.mrf.mxu0
        %v1737 = vadd.f32 %v1544, %v1736
        %1738 = vmatprep.mubr.bf16.mxu0 0
        %1739 = vmatmul.mubr.bf16.gmra.mxu0 %v1434
        %v1740 = vpop.f32.mrf.mxu0
        %v1741 = vadd.f32 %v1548, %v1740
        %v1742 = vpop.f32.mrf.mxu0
        %v1743 = vadd.f32 %v1550, %v1742
        %v1744 = vpop.f32.mrf.mxu0
        %v1745 = vadd.f32 %v1552, %v1744
        %v1746 = vpop.f32.mrf.mxu0
        %v1747 = vadd.f32 %v1554, %v1746
        %1748 = vmatprep.mubr.bf16.mxu0 0
        %1749 = vmatmul.mubr.bf16.gmra.mxu0 %v1437
        %v1750 = vpop.f32.mrf.mxu0
        %v1751 = vadd.f32 %v1558, %v1750
        %v1752 = vpop.f32.mrf.mxu0
        %v1753 = vadd.f32 %v1560, %v1752
        %v1754 = vpop.f32.mrf.mxu0
        %v1755 = vadd.f32 %v1562, %v1754
        %v1756 = vpop.f32.mrf.mxu0
        %v1757 = vadd.f32 %v1564, %v1756
        %1758 = vmatprep.mubr.bf16.mxu0 0
        %1759 = vmatmul.mubr.bf16.gmra.mxu0 %v1440
        %v1760 = vpop.f32.mrf.mxu0
        %v1761 = vadd.f32 %v1568, %v1760
        %v1762 = vpop.f32.mrf.mxu0
        %v1763 = vadd.f32 %v1570, %v1762
        %v1764 = vpop.f32.mrf.mxu0
        %v1765 = vadd.f32 %v1572, %v1764
        %v1766 = vpop.f32.mrf.mxu0
        %v1767 = vadd.f32 %v1574, %v1766
        %1768 = vmatprep.mubr.bf16.mxu0 0
        %1769 = vmatmul.mubr.bf16.gmra.mxu0 %v1443
        %v1770 = vpop.f32.mrf.mxu0
        %v1771 = vadd.f32 %v1578, %v1770
        %v1772 = vpop.f32.mrf.mxu0
        %v1773 = vadd.f32 %v1580, %v1772
        %v1774 = vpop.f32.mrf.mxu0
        %v1775 = vadd.f32 %v1582, %v1774
        %v1776 = vpop.f32.mrf.mxu0
        %v1777 = vadd.f32 %v1584, %v1776
        %1778 = vmatprep.mubr.bf16.mxu0 0
        %1779 = vmatmul.mubr.bf16.gmra.mxu0 %v1446
        %v1780 = vpop.f32.mrf.mxu0
        %v1781 = vadd.f32 %v1588, %v1780
        %v1782 = vpop.f32.mrf.mxu0
        %v1783 = vadd.f32 %v1590, %v1782
        %v1784 = vpop.f32.mrf.mxu0
        %v1785 = vadd.f32 %v1592, %v1784
        %v1786 = vpop.f32.mrf.mxu0
        %v1787 = vadd.f32 %v1594, %v1786
        %1788 = vmatprep.mubr.bf16.mxu0 0
        %1789 = vmatmul.mubr.bf16.gmra.mxu0 %v1449
        %v1790 = vpop.f32.mrf.mxu0
        %v1791 = vadd.f32 %v1598, %v1790
        %v1792 = vpop.f32.mrf.mxu0
        %v1793 = vadd.f32 %v1600, %v1792
        %v1794 = vpop.f32.mrf.mxu0
        %v1795 = vadd.f32 %v1602, %v1794
        %v1796 = vpop.f32.mrf.mxu0
        %v1797 = vadd.f32 %v1604, %v1796
        %1798 = vmatprep.mubr.bf16.mxu0 0
        %1799 = vmatmul.mubr.bf16.gmra.mxu0 %v1452
        %v1800 = vpop.f32.mrf.mxu0
        %v1801 = vadd.f32 %v1608, %v1800
        %v1802 = vpop.f32.mrf.mxu0
        %v1803 = vadd.f32 %v1610, %v1802
        %v1804 = vpop.f32.mrf.mxu0
        %v1805 = vadd.f32 %v1612, %v1804
        %v1806 = vpop.f32.mrf.mxu0
        %v1807 = vadd.f32 %v1614, %v1806
        %1808 = vmatprep.mubr.bf16.mxu0 0
        %1809 = vmatmul.mubr.bf16.gmra.mxu0 %v1455
        %v1810 = vpop.f32.mrf.mxu0
        %v1811 = vadd.f32 %v1618, %v1810
        %v1812 = vpop.f32.mrf.mxu0
        %v1813 = vadd.f32 %v1620, %v1812
        %v1814 = vpop.f32.mrf.mxu0
        %v1815 = vadd.f32 %v1622, %v1814
        %v1816 = vpop.f32.mrf.mxu0
        %v1817 = vadd.f32 %v1624, %v1816
        %1818 = vmatprep.mubr.bf16.mxu0 0
        %1819 = vmatmul.mubr.bf16.gmra.mxu0 %v1458
        %v1820 = vpop.f32.mrf.mxu0
        %v1821 = vadd.f32 %v1628, %v1820
        %v1822 = vpop.f32.mrf.mxu0
        %v1823 = vadd.f32 %v1630, %v1822
        %v1824 = vpop.f32.mrf.mxu0
        %v1825 = vadd.f32 %v1632, %v1824
        %v1826 = vpop.f32.mrf.mxu0
        %v1827 = vadd.f32 %v1634, %v1826
        %1828 = vmatprep.mubr.bf16.mxu0 0
        %1829 = vmatmul.mubr.bf16.gmra.mxu0 %v1461
        %v1830 = vpop.f32.mrf.mxu0
        %v1831 = vadd.f32 %v1638, %v1830
        %v1832 = vpop.f32.mrf.mxu0
        %v1833 = vadd.f32 %v1640, %v1832
        %v1834 = vpop.f32.mrf.mxu0
        %v1835 = vadd.f32 %v1642, %v1834
        %v1836 = vpop.f32.mrf.mxu0
        %v1837 = vadd.f32 %v1644, %v1836
        %1838 = vmatprep.mubr.bf16.mxu0 0
        %1839 = vmatmul.mubr.bf16.gmra.mxu0 %v1464
        %v1840 = vpop.f32.mrf.mxu0
        %v1841 = vadd.f32 %v1648, %v1840
        %v1842 = vpop.f32.mrf.mxu0
        %v1843 = vadd.f32 %v1650, %v1842
        %v1844 = vpop.f32.mrf.mxu0
        %v1845 = vadd.f32 %v1652, %v1844
        %v1846 = vpop.f32.mrf.mxu0
        %v1847 = vadd.f32 %v1654, %v1846
        %1848 = vmatprep.mubr.bf16.mxu0 0
        %1849 = vmatmul.mubr.bf16.gmra.mxu0 %v1467
        %v1850 = vpop.f32.mrf.mxu0
        %v1851 = vadd.f32 %v1658, %v1850
        %v1852 = vpop.f32.mrf.mxu0
        %v1853 = vadd.f32 %v1660, %v1852
        %v1854 = vpop.f32.mrf.mxu0
        %v1855 = vadd.f32 %v1662, %v1854
        %v1856 = vpop.f32.mrf.mxu0
        %v1857 = vadd.f32 %v1664, %v1856
        %1858 = vmatprep.mubr.bf16.mxu0 0
        %1859 = vmatmul.mubr.bf16.gmra.mxu0 %v1470
        %v1860 = vpop.f32.mrf.mxu0
        %v1861 = vadd.f32 %v1668, %v1860
        %v1862 = vpop.f32.mrf.mxu0
        %v1863 = vadd.f32 %v1670, %v1862
        %v1864 = vpop.f32.mrf.mxu0
        %v1865 = vadd.f32 %v1672, %v1864
        %v1866 = vpop.f32.mrf.mxu0
        %v1867 = vadd.f32 %v1674, %v1866
        %1868 = vmatprep.mubr.bf16.mxu0 0
        %1869 = vmatmul.mubr.bf16.gmra.mxu0 %v1473
        %v1870 = vpop.f32.mrf.mxu0
        %v1871 = vadd.f32 %v1678, %v1870
        %v1872 = vpop.f32.mrf.mxu0
        %v1873 = vadd.f32 %v1680, %v1872
        %v1874 = vpop.f32.mrf.mxu0
        %v1875 = vadd.f32 %v1682, %v1874
        %v1876 = vpop.f32.mrf.mxu0
        %v1877 = vadd.f32 %v1684, %v1876
        %1878 = vmatprep.mubr.bf16.mxu0 0
        %1879 = vmatmul.mubr.bf16.gmra.mxu0 %v1476
        %v1880 = vpop.f32.mrf.mxu0
        %v1881 = vadd.f32 %v1688, %v1880
        %v1882 = vpop.f32.mrf.mxu0
        %v1883 = vadd.f32 %v1690, %v1882
        %v1884 = vpop.f32.mrf.mxu0
        %v1885 = vadd.f32 %v1692, %v1884
        %v1886 = vpop.f32.mrf.mxu0
        %v1887 = vadd.f32 %v1694, %v1886
        %1888 = vdwg.mxu0
        %1889 = vmatprep.subr.bf16.mxu0 %v1192
        %1890 = vmatpush1.bf16.msra.mxu0 %v1191
        %1891 = vmatprep.subr.bf16.mxu0 %v1184
        %1892 = vmatpush1.bf16.msra.mxu0 %v1183
        %1893 = vmatprep.subr.bf16.mxu0 %v1176
        %1894 = vmatpush1.bf16.msra.mxu0 %v1175
        %1895 = vmatprep.subr.bf16.mxu0 %v1168
        %1896 = vmatpush1.bf16.msra.mxu0 %v1167
        %1897 = vmatprep.subr.bf16.mxu0 %v1160
        %1898 = vmatpush1.bf16.msra.mxu0 %v1159
        %1899 = vmatprep.subr.bf16.mxu0 %v1152
        %1900 = vmatpush1.bf16.msra.mxu0 %v1151
        %1901 = vmatprep.subr.bf16.mxu0 %v1144
        %1902 = vmatpush1.bf16.msra.mxu0 %v1143
        %1903 = vmatprep.subr.bf16.mxu0 %v1136
        %1904 = vmatpush1.bf16.msra.mxu0 %v1135
        %1905 = vmatprep.subr.bf16.mxu0 %v1256
        %1906 = vmatpush2.bf16.msra.mxu0 %v1255
        %1907 = vmatprep.subr.bf16.mxu0 %v1248
        %1908 = vmatpush2.bf16.msra.mxu0 %v1247
        %1909 = vmatprep.subr.bf16.mxu0 %v1240
        %1910 = vmatpush2.bf16.msra.mxu0 %v1239
        %1911 = vmatprep.subr.bf16.mxu0 %v1232
        %1912 = vmatpush2.bf16.msra.mxu0 %v1231
        %1913 = vmatprep.subr.bf16.mxu0 %v1224
        %1914 = vmatpush2.bf16.msra.mxu0 %v1223
        %1915 = vmatprep.subr.bf16.mxu0 %v1216
        %1916 = vmatpush2.bf16.msra.mxu0 %v1215
        %1917 = vmatprep.subr.bf16.mxu0 %v1208
        %1918 = vmatpush2.bf16.msra.mxu0 %v1207
        %1919 = vmatprep.subr.bf16.mxu0 %v1200
        %1920 = vmatpush2.bf16.msra.mxu0 %v1199
        %1921 = vmatprep.mubr.bf16.mxu0 %v436
        %1922 = vmatmul.mubr.bf16.gmra.mxu0 %v435
        %v1923 = vpop.f32.mrf.mxu0
        %v1924 = vadd.f32 %v648, %v1923
        %v1925 = vpop.f32.mrf.mxu0
        %v1926 = vadd.f32 %v652, %v1925
        %v1927 = vpop.f32.mrf.mxu0
        %v1928 = vadd.f32 %v648, %v1927
        %v1929 = vpop.f32.mrf.mxu0
        %v1930 = vadd.f32 %v652, %v1929
        %1931 = vmatprep.mubr.bf16.mxu0 %v439
        %1932 = vmatmul.mubr.bf16.gmra.mxu0 %v438
        %v1933 = vpop.f32.mrf.mxu0
        %v1934 = vadd.f32 %v648, %v1933
        %v1935 = vpop.f32.mrf.mxu0
        %v1936 = vadd.f32 %v652, %v1935
        %v1937 = vpop.f32.mrf.mxu0
        %v1938 = vadd.f32 %v648, %v1937
        %v1939 = vpop.f32.mrf.mxu0
        %v1940 = vadd.f32 %v652, %v1939
        %1941 = vmatprep.mubr.bf16.mxu0 %v442
        %1942 = vmatmul.mubr.bf16.gmra.mxu0 %v441
        %v1943 = vpop.f32.mrf.mxu0
        %v1944 = vadd.f32 %v648, %v1943
        %v1945 = vpop.f32.mrf.mxu0
        %v1946 = vadd.f32 %v652, %v1945
        %v1947 = vpop.f32.mrf.mxu0
        %v1948 = vadd.f32 %v648, %v1947
        %v1949 = vpop.f32.mrf.mxu0
        %v1950 = vadd.f32 %v652, %v1949
        %1951 = vmatprep.mubr.bf16.mxu0 %v445
        %1952 = vmatmul.mubr.bf16.gmra.mxu0 %v444
        %v1953 = vpop.f32.mrf.mxu0
        %v1954 = vadd.f32 %v648, %v1953
        %v1955 = vpop.f32.mrf.mxu0
        %v1956 = vadd.f32 %v652, %v1955
        %v1957 = vpop.f32.mrf.mxu0
        %v1958 = vadd.f32 %v648, %v1957
        %v1959 = vpop.f32.mrf.mxu0
        %v1960 = vadd.f32 %v652, %v1959
        %1961 = vmatprep.mubr.bf16.mxu0 %v448
        %1962 = vmatmul.mubr.bf16.gmra.mxu0 %v447
        %v1963 = vpop.f32.mrf.mxu0
        %v1964 = vadd.f32 %v648, %v1963
        %v1965 = vpop.f32.mrf.mxu0
        %v1966 = vadd.f32 %v652, %v1965
        %v1967 = vpop.f32.mrf.mxu0
        %v1968 = vadd.f32 %v648, %v1967
        %v1969 = vpop.f32.mrf.mxu0
        %v1970 = vadd.f32 %v652, %v1969
        %1971 = vmatprep.mubr.bf16.mxu0 %v451
        %1972 = vmatmul.mubr.bf16.gmra.mxu0 %v450
        %v1973 = vpop.f32.mrf.mxu0
        %v1974 = vadd.f32 %v648, %v1973
        %v1975 = vpop.f32.mrf.mxu0
        %v1976 = vadd.f32 %v652, %v1975
        %v1977 = vpop.f32.mrf.mxu0
        %v1978 = vadd.f32 %v648, %v1977
        %v1979 = vpop.f32.mrf.mxu0
        %v1980 = vadd.f32 %v652, %v1979
        %1981 = vmatprep.mubr.bf16.mxu0 %v454
        %1982 = vmatmul.mubr.bf16.gmra.mxu0 %v453
        %v1983 = vpop.f32.mrf.mxu0
        %v1984 = vadd.f32 %v648, %v1983
        %v1985 = vpop.f32.mrf.mxu0
        %v1986 = vadd.f32 %v652, %v1985
        %v1987 = vpop.f32.mrf.mxu0
        %v1988 = vadd.f32 %v648, %v1987
        %v1989 = vpop.f32.mrf.mxu0
        %v1990 = vadd.f32 %v652, %v1989
        %1991 = vmatprep.mubr.bf16.mxu0 %v457
        %1992 = vmatmul.mubr.bf16.gmra.mxu0 %v456
        %v1993 = vpop.f32.mrf.mxu0
        %v1994 = vadd.f32 %v648, %v1993
        %v1995 = vpop.f32.mrf.mxu0
        %v1996 = vadd.f32 %v652, %v1995
        %v1997 = vpop.f32.mrf.mxu0
        %v1998 = vadd.f32 %v648, %v1997
        %v1999 = vpop.f32.mrf.mxu0
        %v2000 = vadd.f32 %v652, %v1999
        %2001 = vmatprep.mubr.bf16.mxu0 %v460
        %2002 = vmatmul.mubr.bf16.gmra.mxu0 %v459
        %v2003 = vpop.f32.mrf.mxu0
        %v2004 = vadd.f32 %v648, %v2003
        %v2005 = vpop.f32.mrf.mxu0
        %v2006 = vadd.f32 %v652, %v2005
        %v2007 = vpop.f32.mrf.mxu0
        %v2008 = vadd.f32 %v648, %v2007
        %v2009 = vpop.f32.mrf.mxu0
        %v2010 = vadd.f32 %v652, %v2009
        %2011 = vmatprep.mubr.bf16.mxu0 %v463
        %2012 = vmatmul.mubr.bf16.gmra.mxu0 %v462
        %v2013 = vpop.f32.mrf.mxu0
        %v2014 = vadd.f32 %v648, %v2013
        %v2015 = vpop.f32.mrf.mxu0
        %v2016 = vadd.f32 %v652, %v2015
        %v2017 = vpop.f32.mrf.mxu0
        %v2018 = vadd.f32 %v648, %v2017
        %v2019 = vpop.f32.mrf.mxu0
        %v2020 = vadd.f32 %v652, %v2019
        %2021 = vmatprep.mubr.bf16.mxu0 %v466
        %2022 = vmatmul.mubr.bf16.gmra.mxu0 %v465
        %v2023 = vpop.f32.mrf.mxu0
        %v2024 = vadd.f32 %v648, %v2023
        %v2025 = vpop.f32.mrf.mxu0
        %v2026 = vadd.f32 %v652, %v2025
        %v2027 = vpop.f32.mrf.mxu0
        %v2028 = vadd.f32 %v648, %v2027
        %v2029 = vpop.f32.mrf.mxu0
        %v2030 = vadd.f32 %v652, %v2029
        %2031 = vmatprep.mubr.bf16.mxu0 %v469
        %2032 = vmatmul.mubr.bf16.gmra.mxu0 %v468
        %v2033 = vpop.f32.mrf.mxu0
        %v2034 = vadd.f32 %v648, %v2033
        %v2035 = vpop.f32.mrf.mxu0
        %v2036 = vadd.f32 %v652, %v2035
        %v2037 = vpop.f32.mrf.mxu0
        %v2038 = vadd.f32 %v648, %v2037
        %v2039 = vpop.f32.mrf.mxu0
        %v2040 = vadd.f32 %v652, %v2039
        %2041 = vmatprep.mubr.bf16.mxu0 %v472
        %2042 = vmatmul.mubr.bf16.gmra.mxu0 %v471
        %v2043 = vpop.f32.mrf.mxu0
        %v2044 = vadd.f32 %v648, %v2043
        %v2045 = vpop.f32.mrf.mxu0
        %v2046 = vadd.f32 %v652, %v2045
        %v2047 = vpop.f32.mrf.mxu0
        %v2048 = vadd.f32 %v648, %v2047
        %v2049 = vpop.f32.mrf.mxu0
        %v2050 = vadd.f32 %v652, %v2049
        %2051 = vmatprep.mubr.bf16.mxu0 %v475
        %2052 = vmatmul.mubr.bf16.gmra.mxu0 %v474
        %v2053 = vpop.f32.mrf.mxu0
        %v2054 = vadd.f32 %v648, %v2053
        %v2055 = vpop.f32.mrf.mxu0
        %v2056 = vadd.f32 %v652, %v2055
        %v2057 = vpop.f32.mrf.mxu0
        %v2058 = vadd.f32 %v648, %v2057
        %v2059 = vpop.f32.mrf.mxu0
        %v2060 = vadd.f32 %v652, %v2059
        %2061 = vmatprep.mubr.bf16.mxu0 %v478
        %2062 = vmatmul.mubr.bf16.gmra.mxu0 %v477
        %v2063 = vpop.f32.mrf.mxu0
        %v2064 = vadd.f32 %v648, %v2063
        %v2065 = vpop.f32.mrf.mxu0
        %v2066 = vadd.f32 %v652, %v2065
        %v2067 = vpop.f32.mrf.mxu0
        %v2068 = vadd.f32 %v648, %v2067
        %v2069 = vpop.f32.mrf.mxu0
        %v2070 = vadd.f32 %v652, %v2069
        %2071 = vmatprep.mubr.bf16.mxu0 %v481
        %2072 = vmatmul.mubr.bf16.gmra.mxu0 %v480
        %v2073 = vpop.f32.mrf.mxu0
        %v2074 = vadd.f32 %v648, %v2073
        %v2075 = vpop.f32.mrf.mxu0
        %v2076 = vadd.f32 %v652, %v2075
        %v2077 = vpop.f32.mrf.mxu0
        %v2078 = vadd.f32 %v648, %v2077
        %v2079 = vpop.f32.mrf.mxu0
        %v2080 = vadd.f32 %v652, %v2079
        %2081 = vdwg.mxu0
        %2082 = vmatprep.subr.bf16.mxu0 0
        %2083 = vmatpush1.bf16.msra.mxu0 0
        %2084 = vmatprep.subr.bf16.mxu0 0
        %2085 = vmatpush1.bf16.msra.mxu0 0
        %2086 = vmatprep.subr.bf16.mxu0 0
        %2087 = vmatpush1.bf16.msra.mxu0 0
        %2088 = vmatprep.subr.bf16.mxu0 0
        %2089 = vmatpush1.bf16.msra.mxu0 0
        %2090 = vmatprep.subr.bf16.mxu0 0
        %2091 = vmatpush1.bf16.msra.mxu0 0
        %2092 = vmatprep.subr.bf16.mxu0 %v1489
        %2093 = vmatpush1.bf16.msra.mxu0 %v1486
        %2094 = vmatprep.subr.bf16.mxu0 %v1272
        %2095 = vmatpush1.bf16.msra.mxu0 %v1271
        %2096 = vmatprep.subr.bf16.mxu0 %v1264
        %2097 = vmatpush1.bf16.msra.mxu0 %v1263
        %2098 = vmatprep.subr.bf16.mxu0 0
        %2099 = vmatpush2.bf16.msra.mxu0 0
        %2100 = vmatprep.subr.bf16.mxu0 0
        %2101 = vmatpush2.bf16.msra.mxu0 0
        %2102 = vmatprep.subr.bf16.mxu0 0
        %2103 = vmatpush2.bf16.msra.mxu0 0
        %2104 = vmatprep.subr.bf16.mxu0 0
        %2105 = vmatpush2.bf16.msra.mxu0 0
        %2106 = vmatprep.subr.bf16.mxu0 0
        %2107 = vmatpush2.bf16.msra.mxu0 0
        %2108 = vmatprep.subr.bf16.mxu0 0
        %2109 = vmatpush2.bf16.msra.mxu0 0
        %2110 = vmatprep.subr.bf16.mxu0 0
        %2111 = vmatpush2.bf16.msra.mxu0 0
        %2112 = vmatprep.subr.bf16.mxu0 0
        %2113 = vmatpush2.bf16.msra.mxu0 0
        %2114 = vmatprep.mubr.bf16.mxu0 0
        %2115 = vmatmul.mubr.bf16.gmra.mxu0 %v1431
        %v2116 = vpop.f32.mrf.mxu0
        %v2117 = vadd.f32 %v1924, %v2116
        %v2118 = vpop.f32.mrf.mxu0
        %v2119 = vadd.f32 %v1926, %v2118
        %v2120 = vpop.f32.mrf.mxu0
        %v2121 = vadd.f32 %v1928, %v2120
        %v2122 = vpop.f32.mrf.mxu0
        %v2123 = vadd.f32 %v1930, %v2122
        %2124 = vmatprep.mubr.bf16.mxu0 0
        %2125 = vmatmul.mubr.bf16.gmra.mxu0 %v1434
        %v2126 = vpop.f32.mrf.mxu0
        %v2127 = vadd.f32 %v1934, %v2126
        %v2128 = vpop.f32.mrf.mxu0
        %v2129 = vadd.f32 %v1936, %v2128
        %v2130 = vpop.f32.mrf.mxu0
        %v2131 = vadd.f32 %v1938, %v2130
        %v2132 = vpop.f32.mrf.mxu0
        %v2133 = vadd.f32 %v1940, %v2132
        %2134 = vmatprep.mubr.bf16.mxu0 0
        %2135 = vmatmul.mubr.bf16.gmra.mxu0 %v1437
        %v2136 = vpop.f32.mrf.mxu0
        %v2137 = vadd.f32 %v1944, %v2136
        %v2138 = vpop.f32.mrf.mxu0
        %v2139 = vadd.f32 %v1946, %v2138
        %v2140 = vpop.f32.mrf.mxu0
        %v2141 = vadd.f32 %v1948, %v2140
        %v2142 = vpop.f32.mrf.mxu0
        %v2143 = vadd.f32 %v1950, %v2142
        %2144 = vmatprep.mubr.bf16.mxu0 0
        %2145 = vmatmul.mubr.bf16.gmra.mxu0 %v1440
        %v2146 = vpop.f32.mrf.mxu0
        %v2147 = vadd.f32 %v1954, %v2146
        %v2148 = vpop.f32.mrf.mxu0
        %v2149 = vadd.f32 %v1956, %v2148
        %v2150 = vpop.f32.mrf.mxu0
        %v2151 = vadd.f32 %v1958, %v2150
        %v2152 = vpop.f32.mrf.mxu0
        %v2153 = vadd.f32 %v1960, %v2152
        %2154 = vmatprep.mubr.bf16.mxu0 0
        %2155 = vmatmul.mubr.bf16.gmra.mxu0 %v1443
        %v2156 = vpop.f32.mrf.mxu0
        %v2157 = vadd.f32 %v1964, %v2156
        %v2158 = vpop.f32.mrf.mxu0
        %v2159 = vadd.f32 %v1966, %v2158
        %v2160 = vpop.f32.mrf.mxu0
        %v2161 = vadd.f32 %v1968, %v2160
        %v2162 = vpop.f32.mrf.mxu0
        %v2163 = vadd.f32 %v1970, %v2162
        %2164 = vmatprep.mubr.bf16.mxu0 0
        %2165 = vmatmul.mubr.bf16.gmra.mxu0 %v1446
        %v2166 = vpop.f32.mrf.mxu0
        %v2167 = vadd.f32 %v1974, %v2166
        %v2168 = vpop.f32.mrf.mxu0
        %v2169 = vadd.f32 %v1976, %v2168
        %v2170 = vpop.f32.mrf.mxu0
        %v2171 = vadd.f32 %v1978, %v2170
        %v2172 = vpop.f32.mrf.mxu0
        %v2173 = vadd.f32 %v1980, %v2172
        %2174 = vmatprep.mubr.bf16.mxu0 0
        %2175 = vmatmul.mubr.bf16.gmra.mxu0 %v1449
        %v2176 = vpop.f32.mrf.mxu0
        %v2177 = vadd.f32 %v1984, %v2176
        %v2178 = vpop.f32.mrf.mxu0
        %v2179 = vadd.f32 %v1986, %v2178
        %v2180 = vpop.f32.mrf.mxu0
        %v2181 = vadd.f32 %v1988, %v2180
        %v2182 = vpop.f32.mrf.mxu0
        %v2183 = vadd.f32 %v1990, %v2182
        %2184 = vmatprep.mubr.bf16.mxu0 0
        %2185 = vmatmul.mubr.bf16.gmra.mxu0 %v1452
        %v2186 = vpop.f32.mrf.mxu0
        %v2187 = vadd.f32 %v1994, %v2186
        %v2188 = vpop.f32.mrf.mxu0
        %v2189 = vadd.f32 %v1996, %v2188
        %v2190 = vpop.f32.mrf.mxu0
        %v2191 = vadd.f32 %v1998, %v2190
        %v2192 = vpop.f32.mrf.mxu0
        %v2193 = vadd.f32 %v2000, %v2192
        %2194 = vmatprep.mubr.bf16.mxu0 0
        %2195 = vmatmul.mubr.bf16.gmra.mxu0 %v1455
        %v2196 = vpop.f32.mrf.mxu0
        %v2197 = vadd.f32 %v2004, %v2196
        %v2198 = vpop.f32.mrf.mxu0
        %v2199 = vadd.f32 %v2006, %v2198
        %v2200 = vpop.f32.mrf.mxu0
        %v2201 = vadd.f32 %v2008, %v2200
        %v2202 = vpop.f32.mrf.mxu0
        %v2203 = vadd.f32 %v2010, %v2202
        %2204 = vmatprep.mubr.bf16.mxu0 0
        %2205 = vmatmul.mubr.bf16.gmra.mxu0 %v1458
        %v2206 = vpop.f32.mrf.mxu0
        %v2207 = vadd.f32 %v2014, %v2206
        %v2208 = vpop.f32.mrf.mxu0
        %v2209 = vadd.f32 %v2016, %v2208
        %v2210 = vpop.f32.mrf.mxu0
        %v2211 = vadd.f32 %v2018, %v2210
        %v2212 = vpop.f32.mrf.mxu0
        %v2213 = vadd.f32 %v2020, %v2212
        %2214 = vmatprep.mubr.bf16.mxu0 0
        %2215 = vmatmul.mubr.bf16.gmra.mxu0 %v1461
        %v2216 = vpop.f32.mrf.mxu0
        %v2217 = vadd.f32 %v2024, %v2216
        %v2218 = vpop.f32.mrf.mxu0
        %v2219 = vadd.f32 %v2026, %v2218
        %v2220 = vpop.f32.mrf.mxu0
        %v2221 = vadd.f32 %v2028, %v2220
        %v2222 = vpop.f32.mrf.mxu0
        %v2223 = vadd.f32 %v2030, %v2222
        %2224 = vmatprep.mubr.bf16.mxu0 0
        %2225 = vmatmul.mubr.bf16.gmra.mxu0 %v1464
        %v2226 = vpop.f32.mrf.mxu0
        %v2227 = vadd.f32 %v2034, %v2226
        %v2228 = vpop.f32.mrf.mxu0
        %v2229 = vadd.f32 %v2036, %v2228
        %v2230 = vpop.f32.mrf.mxu0
        %v2231 = vadd.f32 %v2038, %v2230
        %v2232 = vpop.f32.mrf.mxu0
        %v2233 = vadd.f32 %v2040, %v2232
        %2234 = vmatprep.mubr.bf16.mxu0 0
        %2235 = vmatmul.mubr.bf16.gmra.mxu0 %v1467
        %v2236 = vpop.f32.mrf.mxu0
        %v2237 = vadd.f32 %v2044, %v2236
        %v2238 = vpop.f32.mrf.mxu0
        %v2239 = vadd.f32 %v2046, %v2238
        %v2240 = vpop.f32.mrf.mxu0
        %v2241 = vadd.f32 %v2048, %v2240
        %v2242 = vpop.f32.mrf.mxu0
        %v2243 = vadd.f32 %v2050, %v2242
        %2244 = vmatprep.mubr.bf16.mxu0 0
        %2245 = vmatmul.mubr.bf16.gmra.mxu0 %v1470
        %v2246 = vpop.f32.mrf.mxu0
        %v2247 = vadd.f32 %v2054, %v2246
        %v2248 = vpop.f32.mrf.mxu0
        %v2249 = vadd.f32 %v2056, %v2248
        %v2250 = vpop.f32.mrf.mxu0
        %v2251 = vadd.f32 %v2058, %v2250
        %v2252 = vpop.f32.mrf.mxu0
        %v2253 = vadd.f32 %v2060, %v2252
        %2254 = vmatprep.mubr.bf16.mxu0 0
        %2255 = vmatmul.mubr.bf16.gmra.mxu0 %v1473
        %v2256 = vpop.f32.mrf.mxu0
        %v2257 = vadd.f32 %v2064, %v2256
        %v2258 = vpop.f32.mrf.mxu0
        %v2259 = vadd.f32 %v2066, %v2258
        %v2260 = vpop.f32.mrf.mxu0
        %v2261 = vadd.f32 %v2068, %v2260
        %v2262 = vpop.f32.mrf.mxu0
        %v2263 = vadd.f32 %v2070, %v2262
        %2264 = vmatprep.mubr.bf16.mxu0 0
        %2265 = vmatmul.mubr.bf16.gmra.mxu0 %v1476
        %v2266 = vpop.f32.mrf.mxu0
        %v2267 = vadd.f32 %v2074, %v2266
        %v2268 = vpop.f32.mrf.mxu0
        %v2269 = vadd.f32 %v2076, %v2268
        %v2270 = vpop.f32.mrf.mxu0
        %v2271 = vadd.f32 %v2078, %v2270
        %v2272 = vpop.f32.mrf.mxu0
        %v2273 = vadd.f32 %v2080, %v2272
        %2274 = vdwg.mxu0
        %2275 = vmatprep.subr.bf16.mxu0 %v1194
        %2276 = vmatpush1.bf16.msra.mxu0 %v1193
        %2277 = vmatprep.subr.bf16.mxu0 %v1186
        %2278 = vmatpush1.bf16.msra.mxu0 %v1185
        %2279 = vmatprep.subr.bf16.mxu0 %v1178
        %2280 = vmatpush1.bf16.msra.mxu0 %v1177
        %2281 = vmatprep.subr.bf16.mxu0 %v1170
        %2282 = vmatpush1.bf16.msra.mxu0 %v1169
        %2283 = vmatprep.subr.bf16.mxu0 %v1162
        %2284 = vmatpush1.bf16.msra.mxu0 %v1161
        %2285 = vmatprep.subr.bf16.mxu0 %v1154
        %2286 = vmatpush1.bf16.msra.mxu0 %v1153
        %2287 = vmatprep.subr.bf16.mxu0 %v1146
        %2288 = vmatpush1.bf16.msra.mxu0 %v1145
        %2289 = vmatprep.subr.bf16.mxu0 %v1138
        %2290 = vmatpush1.bf16.msra.mxu0 %v1137
        %2291 = vmatprep.subr.bf16.mxu0 %v1258
        %2292 = vmatpush2.bf16.msra.mxu0 %v1257
        %2293 = vmatprep.subr.bf16.mxu0 %v1250
        %2294 = vmatpush2.bf16.msra.mxu0 %v1249
        %2295 = vmatprep.subr.bf16.mxu0 %v1242
        %2296 = vmatpush2.bf16.msra.mxu0 %v1241
        %2297 = vmatprep.subr.bf16.mxu0 %v1234
        %2298 = vmatpush2.bf16.msra.mxu0 %v1233
        %2299 = vmatprep.subr.bf16.mxu0 %v1226
        %2300 = vmatpush2.bf16.msra.mxu0 %v1225
        %2301 = vmatprep.subr.bf16.mxu0 %v1218
        %2302 = vmatpush2.bf16.msra.mxu0 %v1217
        %2303 = vmatprep.subr.bf16.mxu0 %v1210
        %2304 = vmatpush2.bf16.msra.mxu0 %v1209
        %2305 = vmatprep.subr.bf16.mxu0 %v1202
        %2306 = vmatpush2.bf16.msra.mxu0 %v1201
        %2307 = vmatprep.mubr.bf16.mxu0 %v436
        %2308 = vmatmul.mubr.bf16.gmra.mxu0 %v435
        %v2309 = vpop.f32.mrf.mxu0
        %v2310 = vadd.f32 %v656, %v2309
        %v2311 = vpop.f32.mrf.mxu0
        %v2312 = vadd.f32 %v660, %v2311
        %v2313 = vpop.f32.mrf.mxu0
        %v2314 = vadd.f32 %v656, %v2313
        %v2315 = vpop.f32.mrf.mxu0
        %v2316 = vadd.f32 %v660, %v2315
        %2317 = vmatprep.mubr.bf16.mxu0 %v439
        %2318 = vmatmul.mubr.bf16.gmra.mxu0 %v438
        %v2319 = vpop.f32.mrf.mxu0
        %v2320 = vadd.f32 %v656, %v2319
        %v2321 = vpop.f32.mrf.mxu0
        %v2322 = vadd.f32 %v660, %v2321
        %v2323 = vpop.f32.mrf.mxu0
        %v2324 = vadd.f32 %v656, %v2323
        %v2325 = vpop.f32.mrf.mxu0
        %v2326 = vadd.f32 %v660, %v2325
        %2327 = vmatprep.mubr.bf16.mxu0 %v442
        %2328 = vmatmul.mubr.bf16.gmra.mxu0 %v441
        %v2329 = vpop.f32.mrf.mxu0
        %v2330 = vadd.f32 %v656, %v2329
        %v2331 = vpop.f32.mrf.mxu0
        %v2332 = vadd.f32 %v660, %v2331
        %v2333 = vpop.f32.mrf.mxu0
        %v2334 = vadd.f32 %v656, %v2333
        %v2335 = vpop.f32.mrf.mxu0
        %v2336 = vadd.f32 %v660, %v2335
        %2337 = vmatprep.mubr.bf16.mxu0 %v445
        %2338 = vmatmul.mubr.bf16.gmra.mxu0 %v444
        %v2339 = vpop.f32.mrf.mxu0
        %v2340 = vadd.f32 %v656, %v2339
        %v2341 = vpop.f32.mrf.mxu0
        %v2342 = vadd.f32 %v660, %v2341
        %v2343 = vpop.f32.mrf.mxu0
        %v2344 = vadd.f32 %v656, %v2343
        %v2345 = vpop.f32.mrf.mxu0
        %v2346 = vadd.f32 %v660, %v2345
        %2347 = vmatprep.mubr.bf16.mxu0 %v448
        %2348 = vmatmul.mubr.bf16.gmra.mxu0 %v447
        %v2349 = vpop.f32.mrf.mxu0
        %v2350 = vadd.f32 %v656, %v2349
        %v2351 = vpop.f32.mrf.mxu0
        %v2352 = vadd.f32 %v660, %v2351
        %v2353 = vpop.f32.mrf.mxu0
        %v2354 = vadd.f32 %v656, %v2353
        %v2355 = vpop.f32.mrf.mxu0
        %v2356 = vadd.f32 %v660, %v2355
        %2357 = vmatprep.mubr.bf16.mxu0 %v451
        %2358 = vmatmul.mubr.bf16.gmra.mxu0 %v450
        %v2359 = vpop.f32.mrf.mxu0
        %v2360 = vadd.f32 %v656, %v2359
        %v2361 = vpop.f32.mrf.mxu0
        %v2362 = vadd.f32 %v660, %v2361
        %v2363 = vpop.f32.mrf.mxu0
        %v2364 = vadd.f32 %v656, %v2363
        %v2365 = vpop.f32.mrf.mxu0
        %v2366 = vadd.f32 %v660, %v2365
        %2367 = vmatprep.mubr.bf16.mxu0 %v454
        %2368 = vmatmul.mubr.bf16.gmra.mxu0 %v453
        %v2369 = vpop.f32.mrf.mxu0
        %v2370 = vadd.f32 %v656, %v2369
        %v2371 = vpop.f32.mrf.mxu0
        %v2372 = vadd.f32 %v660, %v2371
        %v2373 = vpop.f32.mrf.mxu0
        %v2374 = vadd.f32 %v656, %v2373
        %v2375 = vpop.f32.mrf.mxu0
        %v2376 = vadd.f32 %v660, %v2375
        %2377 = vmatprep.mubr.bf16.mxu0 %v457
        %2378 = vmatmul.mubr.bf16.gmra.mxu0 %v456
        %v2379 = vpop.f32.mrf.mxu0
        %v2380 = vadd.f32 %v656, %v2379
        %v2381 = vpop.f32.mrf.mxu0
        %v2382 = vadd.f32 %v660, %v2381
        %v2383 = vpop.f32.mrf.mxu0
        %v2384 = vadd.f32 %v656, %v2383
        %v2385 = vpop.f32.mrf.mxu0
        %v2386 = vadd.f32 %v660, %v2385
        %2387 = vmatprep.mubr.bf16.mxu0 %v460
        %2388 = vmatmul.mubr.bf16.gmra.mxu0 %v459
        %v2389 = vpop.f32.mrf.mxu0
        %v2390 = vadd.f32 %v656, %v2389
        %v2391 = vpop.f32.mrf.mxu0
        %v2392 = vadd.f32 %v660, %v2391
        %v2393 = vpop.f32.mrf.mxu0
        %v2394 = vadd.f32 %v656, %v2393
        %v2395 = vpop.f32.mrf.mxu0
        %v2396 = vadd.f32 %v660, %v2395
        %2397 = vmatprep.mubr.bf16.mxu0 %v463
        %2398 = vmatmul.mubr.bf16.gmra.mxu0 %v462
        %v2399 = vpop.f32.mrf.mxu0
        %v2400 = vadd.f32 %v656, %v2399
        %v2401 = vpop.f32.mrf.mxu0
        %v2402 = vadd.f32 %v660, %v2401
        %v2403 = vpop.f32.mrf.mxu0
        %v2404 = vadd.f32 %v656, %v2403
        %v2405 = vpop.f32.mrf.mxu0
        %v2406 = vadd.f32 %v660, %v2405
        %2407 = vmatprep.mubr.bf16.mxu0 %v466
        %2408 = vmatmul.mubr.bf16.gmra.mxu0 %v465
        %v2409 = vpop.f32.mrf.mxu0
        %v2410 = vadd.f32 %v656, %v2409
        %v2411 = vpop.f32.mrf.mxu0
        %v2412 = vadd.f32 %v660, %v2411
        %v2413 = vpop.f32.mrf.mxu0
        %v2414 = vadd.f32 %v656, %v2413
        %v2415 = vpop.f32.mrf.mxu0
        %v2416 = vadd.f32 %v660, %v2415
        %2417 = vmatprep.mubr.bf16.mxu0 %v469
        %2418 = vmatmul.mubr.bf16.gmra.mxu0 %v468
        %v2419 = vpop.f32.mrf.mxu0
        %v2420 = vadd.f32 %v656, %v2419
        %v2421 = vpop.f32.mrf.mxu0
        %v2422 = vadd.f32 %v660, %v2421
        %v2423 = vpop.f32.mrf.mxu0
        %v2424 = vadd.f32 %v656, %v2423
        %v2425 = vpop.f32.mrf.mxu0
        %v2426 = vadd.f32 %v660, %v2425
        %2427 = vmatprep.mubr.bf16.mxu0 %v472
        %2428 = vmatmul.mubr.bf16.gmra.mxu0 %v471
        %v2429 = vpop.f32.mrf.mxu0
        %v2430 = vadd.f32 %v656, %v2429
        %v2431 = vpop.f32.mrf.mxu0
        %v2432 = vadd.f32 %v660, %v2431
        %v2433 = vpop.f32.mrf.mxu0
        %v2434 = vadd.f32 %v656, %v2433
        %v2435 = vpop.f32.mrf.mxu0
        %v2436 = vadd.f32 %v660, %v2435
        %2437 = vmatprep.mubr.bf16.mxu0 %v475
        %2438 = vmatmul.mubr.bf16.gmra.mxu0 %v474
        %v2439 = vpop.f32.mrf.mxu0
        %v2440 = vadd.f32 %v656, %v2439
        %v2441 = vpop.f32.mrf.mxu0
        %v2442 = vadd.f32 %v660, %v2441
        %v2443 = vpop.f32.mrf.mxu0
        %v2444 = vadd.f32 %v656, %v2443
        %v2445 = vpop.f32.mrf.mxu0
        %v2446 = vadd.f32 %v660, %v2445
        %2447 = vmatprep.mubr.bf16.mxu0 %v478
        %2448 = vmatmul.mubr.bf16.gmra.mxu0 %v477
        %v2449 = vpop.f32.mrf.mxu0
        %v2450 = vadd.f32 %v656, %v2449
        %v2451 = vpop.f32.mrf.mxu0
        %v2452 = vadd.f32 %v660, %v2451
        %v2453 = vpop.f32.mrf.mxu0
        %v2454 = vadd.f32 %v656, %v2453
        %v2455 = vpop.f32.mrf.mxu0
        %v2456 = vadd.f32 %v660, %v2455
        %2457 = vmatprep.mubr.bf16.mxu0 %v481
        %2458 = vmatmul.mubr.bf16.gmra.mxu0 %v480
        %v2459 = vpop.f32.mrf.mxu0
        %v2460 = vadd.f32 %v656, %v2459
        %v2461 = vpop.f32.mrf.mxu0
        %v2462 = vadd.f32 %v660, %v2461
        %v2463 = vpop.f32.mrf.mxu0
        %v2464 = vadd.f32 %v656, %v2463
        %v2465 = vpop.f32.mrf.mxu0
        %v2466 = vadd.f32 %v660, %v2465
        %2467 = vdwg.mxu0
        %2468 = vmatprep.subr.bf16.mxu0 0
        %2469 = vmatpush1.bf16.msra.mxu0 0
        %2470 = vmatprep.subr.bf16.mxu0 0
        %2471 = vmatpush1.bf16.msra.mxu0 0
        %2472 = vmatprep.subr.bf16.mxu0 0
        %2473 = vmatpush1.bf16.msra.mxu0 0
        %2474 = vmatprep.subr.bf16.mxu0 0
        %2475 = vmatpush1.bf16.msra.mxu0 0
        %2476 = vmatprep.subr.bf16.mxu0 0
        %2477 = vmatpush1.bf16.msra.mxu0 0
        %2478 = vmatprep.subr.bf16.mxu0 %v1495
        %2479 = vmatpush1.bf16.msra.mxu0 %v1492
        %2480 = vmatprep.subr.bf16.mxu0 %v1274
        %2481 = vmatpush1.bf16.msra.mxu0 %v1273
        %2482 = vmatprep.subr.bf16.mxu0 %v1266
        %2483 = vmatpush1.bf16.msra.mxu0 %v1265
        %2484 = vmatprep.subr.bf16.mxu0 0
        %2485 = vmatpush2.bf16.msra.mxu0 0
        %2486 = vmatprep.subr.bf16.mxu0 0
        %2487 = vmatpush2.bf16.msra.mxu0 0
        %2488 = vmatprep.subr.bf16.mxu0 0
        %2489 = vmatpush2.bf16.msra.mxu0 0
        %2490 = vmatprep.subr.bf16.mxu0 0
        %2491 = vmatpush2.bf16.msra.mxu0 0
        %2492 = vmatprep.subr.bf16.mxu0 0
        %2493 = vmatpush2.bf16.msra.mxu0 0
        %2494 = vmatprep.subr.bf16.mxu0 0
        %2495 = vmatpush2.bf16.msra.mxu0 0
        %2496 = vmatprep.subr.bf16.mxu0 0
        %2497 = vmatpush2.bf16.msra.mxu0 0
        %2498 = vmatprep.subr.bf16.mxu0 0
        %2499 = vmatpush2.bf16.msra.mxu0 0
        %2500 = vmatprep.mubr.bf16.mxu0 0
        %2501 = vmatmul.mubr.bf16.gmra.mxu0 %v1431
        %v2502 = vpop.f32.mrf.mxu0
        %v2503 = vadd.f32 %v2310, %v2502
        %v2504 = vpop.f32.mrf.mxu0
        %v2505 = vadd.f32 %v2312, %v2504
        %v2506 = vpop.f32.mrf.mxu0
        %v2507 = vadd.f32 %v2314, %v2506
        %v2508 = vpop.f32.mrf.mxu0
        %v2509 = vadd.f32 %v2316, %v2508
        %2510 = vmatprep.mubr.bf16.mxu0 0
        %2511 = vmatmul.mubr.bf16.gmra.mxu0 %v1434
        %v2512 = vpop.f32.mrf.mxu0
        %v2513 = vadd.f32 %v2320, %v2512
        %v2514 = vpop.f32.mrf.mxu0
        %v2515 = vadd.f32 %v2322, %v2514
        %v2516 = vpop.f32.mrf.mxu0
        %v2517 = vadd.f32 %v2324, %v2516
        %v2518 = vpop.f32.mrf.mxu0
        %v2519 = vadd.f32 %v2326, %v2518
        %2520 = vmatprep.mubr.bf16.mxu0 0
        %2521 = vmatmul.mubr.bf16.gmra.mxu0 %v1437
        %v2522 = vpop.f32.mrf.mxu0
        %v2523 = vadd.f32 %v2330, %v2522
        %v2524 = vpop.f32.mrf.mxu0
        %v2525 = vadd.f32 %v2332, %v2524
        %v2526 = vpop.f32.mrf.mxu0
        %v2527 = vadd.f32 %v2334, %v2526
        %v2528 = vpop.f32.mrf.mxu0
        %v2529 = vadd.f32 %v2336, %v2528
        %2530 = vmatprep.mubr.bf16.mxu0 0
        %2531 = vmatmul.mubr.bf16.gmra.mxu0 %v1440
        %v2532 = vpop.f32.mrf.mxu0
        %v2533 = vadd.f32 %v2340, %v2532
        %v2534 = vpop.f32.mrf.mxu0
        %v2535 = vadd.f32 %v2342, %v2534
        %v2536 = vpop.f32.mrf.mxu0
        %v2537 = vadd.f32 %v2344, %v2536
        %v2538 = vpop.f32.mrf.mxu0
        %v2539 = vadd.f32 %v2346, %v2538
        %2540 = vmatprep.mubr.bf16.mxu0 0
        %2541 = vmatmul.mubr.bf16.gmra.mxu0 %v1443
        %v2542 = vpop.f32.mrf.mxu0
        %v2543 = vadd.f32 %v2350, %v2542
        %v2544 = vpop.f32.mrf.mxu0
        %v2545 = vadd.f32 %v2352, %v2544
        %v2546 = vpop.f32.mrf.mxu0
        %v2547 = vadd.f32 %v2354, %v2546
        %v2548 = vpop.f32.mrf.mxu0
        %v2549 = vadd.f32 %v2356, %v2548
        %2550 = vmatprep.mubr.bf16.mxu0 0
        %2551 = vmatmul.mubr.bf16.gmra.mxu0 %v1446
        %v2552 = vpop.f32.mrf.mxu0
        %v2553 = vadd.f32 %v2360, %v2552
        %v2554 = vpop.f32.mrf.mxu0
        %v2555 = vadd.f32 %v2362, %v2554
        %v2556 = vpop.f32.mrf.mxu0
        %v2557 = vadd.f32 %v2364, %v2556
        %v2558 = vpop.f32.mrf.mxu0
        %v2559 = vadd.f32 %v2366, %v2558
        %2560 = vmatprep.mubr.bf16.mxu0 0
        %2561 = vmatmul.mubr.bf16.gmra.mxu0 %v1449
        %v2562 = vpop.f32.mrf.mxu0
        %v2563 = vadd.f32 %v2370, %v2562
        %v2564 = vpop.f32.mrf.mxu0
        %v2565 = vadd.f32 %v2372, %v2564
        %v2566 = vpop.f32.mrf.mxu0
        %v2567 = vadd.f32 %v2374, %v2566
        %v2568 = vpop.f32.mrf.mxu0
        %v2569 = vadd.f32 %v2376, %v2568
        %2570 = vmatprep.mubr.bf16.mxu0 0
        %2571 = vmatmul.mubr.bf16.gmra.mxu0 %v1452
        %v2572 = vpop.f32.mrf.mxu0
        %v2573 = vadd.f32 %v2380, %v2572
        %v2574 = vpop.f32.mrf.mxu0
        %v2575 = vadd.f32 %v2382, %v2574
        %v2576 = vpop.f32.mrf.mxu0
        %v2577 = vadd.f32 %v2384, %v2576
        %v2578 = vpop.f32.mrf.mxu0
        %v2579 = vadd.f32 %v2386, %v2578
        %2580 = vmatprep.mubr.bf16.mxu0 0
        %2581 = vmatmul.mubr.bf16.gmra.mxu0 %v1455
        %v2582 = vpop.f32.mrf.mxu0
        %v2583 = vadd.f32 %v2390, %v2582
        %v2584 = vpop.f32.mrf.mxu0
        %v2585 = vadd.f32 %v2392, %v2584
        %v2586 = vpop.f32.mrf.mxu0
        %v2587 = vadd.f32 %v2394, %v2586
        %v2588 = vpop.f32.mrf.mxu0
        %v2589 = vadd.f32 %v2396, %v2588
        %2590 = vmatprep.mubr.bf16.mxu0 0
        %2591 = vmatmul.mubr.bf16.gmra.mxu0 %v1458
        %v2592 = vpop.f32.mrf.mxu0
        %v2593 = vadd.f32 %v2400, %v2592
        %v2594 = vpop.f32.mrf.mxu0
        %v2595 = vadd.f32 %v2402, %v2594
        %v2596 = vpop.f32.mrf.mxu0
        %v2597 = vadd.f32 %v2404, %v2596
        %v2598 = vpop.f32.mrf.mxu0
        %v2599 = vadd.f32 %v2406, %v2598
        %2600 = vmatprep.mubr.bf16.mxu0 0
        %2601 = vmatmul.mubr.bf16.gmra.mxu0 %v1461
        %v2602 = vpop.f32.mrf.mxu0
        %v2603 = vadd.f32 %v2410, %v2602
        %v2604 = vpop.f32.mrf.mxu0
        %v2605 = vadd.f32 %v2412, %v2604
        %v2606 = vpop.f32.mrf.mxu0
        %v2607 = vadd.f32 %v2414, %v2606
        %v2608 = vpop.f32.mrf.mxu0
        %v2609 = vadd.f32 %v2416, %v2608
        %2610 = vmatprep.mubr.bf16.mxu0 0
        %2611 = vmatmul.mubr.bf16.gmra.mxu0 %v1464
        %v2612 = vpop.f32.mrf.mxu0
        %v2613 = vadd.f32 %v2420, %v2612
        %v2614 = vpop.f32.mrf.mxu0
        %v2615 = vadd.f32 %v2422, %v2614
        %v2616 = vpop.f32.mrf.mxu0
        %v2617 = vadd.f32 %v2424, %v2616
        %v2618 = vpop.f32.mrf.mxu0
        %v2619 = vadd.f32 %v2426, %v2618
        %2620 = vmatprep.mubr.bf16.mxu0 0
        %2621 = vmatmul.mubr.bf16.gmra.mxu0 %v1467
        %v2622 = vpop.f32.mrf.mxu0
        %v2623 = vadd.f32 %v2430, %v2622
        %v2624 = vpop.f32.mrf.mxu0
        %v2625 = vadd.f32 %v2432, %v2624
        %v2626 = vpop.f32.mrf.mxu0
        %v2627 = vadd.f32 %v2434, %v2626
        %v2628 = vpop.f32.mrf.mxu0
        %v2629 = vadd.f32 %v2436, %v2628
        %2630 = vmatprep.mubr.bf16.mxu0 0
        %2631 = vmatmul.mubr.bf16.gmra.mxu0 %v1470
        %v2632 = vpop.f32.mrf.mxu0
        %v2633 = vadd.f32 %v2440, %v2632
        %v2634 = vpop.f32.mrf.mxu0
        %v2635 = vadd.f32 %v2442, %v2634
        %v2636 = vpop.f32.mrf.mxu0
        %v2637 = vadd.f32 %v2444, %v2636
        %v2638 = vpop.f32.mrf.mxu0
        %v2639 = vadd.f32 %v2446, %v2638
        %2640 = vmatprep.mubr.bf16.mxu0 0
        %2641 = vmatmul.mubr.bf16.gmra.mxu0 %v1473
        %v2642 = vpop.f32.mrf.mxu0
        %v2643 = vadd.f32 %v2450, %v2642
        %v2644 = vpop.f32.mrf.mxu0
        %v2645 = vadd.f32 %v2452, %v2644
        %v2646 = vpop.f32.mrf.mxu0
        %v2647 = vadd.f32 %v2454, %v2646
        %v2648 = vpop.f32.mrf.mxu0
        %v2649 = vadd.f32 %v2456, %v2648
        %2650 = vmatprep.mubr.bf16.mxu0 0
        %2651 = vmatmul.mubr.bf16.gmra.mxu0 %v1476
        %v2652 = vpop.f32.mrf.mxu0
        %v2653 = vadd.f32 %v2460, %v2652
        %v2654 = vpop.f32.mrf.mxu0
        %v2655 = vadd.f32 %v2462, %v2654
        %v2656 = vpop.f32.mrf.mxu0
        %v2657 = vadd.f32 %v2464, %v2656
        %v2658 = vpop.f32.mrf.mxu0
        %v2659 = vadd.f32 %v2466, %v2658
        %2660 = vdwg.mxu0
        %2661 = vmatprep.subr.bf16.mxu0 %v1196
        %2662 = vmatpush1.bf16.msra.mxu0 %v1195
        %2663 = vmatprep.subr.bf16.mxu0 %v1188
        %2664 = vmatpush1.bf16.msra.mxu0 %v1187
        %2665 = vmatprep.subr.bf16.mxu0 %v1180
        %2666 = vmatpush1.bf16.msra.mxu0 %v1179
        %2667 = vmatprep.subr.bf16.mxu0 %v1172
        %2668 = vmatpush1.bf16.msra.mxu0 %v1171
        %2669 = vmatprep.subr.bf16.mxu0 %v1164
        %2670 = vmatpush1.bf16.msra.mxu0 %v1163
        %2671 = vmatprep.subr.bf16.mxu0 %v1156
        %2672 = vmatpush1.bf16.msra.mxu0 %v1155
        %2673 = vmatprep.subr.bf16.mxu0 %v1148
        %2674 = vmatpush1.bf16.msra.mxu0 %v1147
        %2675 = vmatprep.subr.bf16.mxu0 %v1140
        %2676 = vmatpush1.bf16.msra.mxu0 %v1139
        %2677 = vmatprep.subr.bf16.mxu0 %v1260
        %2678 = vmatpush2.bf16.msra.mxu0 %v1259
        %2679 = vmatprep.subr.bf16.mxu0 %v1252
        %2680 = vmatpush2.bf16.msra.mxu0 %v1251
        %2681 = vmatprep.subr.bf16.mxu0 %v1244
        %2682 = vmatpush2.bf16.msra.mxu0 %v1243
        %2683 = vmatprep.subr.bf16.mxu0 %v1236
        %2684 = vmatpush2.bf16.msra.mxu0 %v1235
        %2685 = vmatprep.subr.bf16.mxu0 %v1228
        %2686 = vmatpush2.bf16.msra.mxu0 %v1227
        %2687 = vmatprep.subr.bf16.mxu0 %v1220
        %2688 = vmatpush2.bf16.msra.mxu0 %v1219
        %2689 = vmatprep.subr.bf16.mxu0 %v1212
        %2690 = vmatpush2.bf16.msra.mxu0 %v1211
        %2691 = vmatprep.subr.bf16.mxu0 %v1204
        %2692 = vmatpush2.bf16.msra.mxu0 %v1203
        %2693 = vmatprep.mubr.bf16.mxu0 %v436
        %2694 = vmatmul.mubr.bf16.gmra.mxu0 %v435
        %v2695 = vpop.f32.mrf.mxu0
        %v2696 = vadd.f32 %v664, %v2695
        %v2697 = vpop.f32.mrf.mxu0
        %v2698 = vadd.f32 %v668, %v2697
        %v2699 = vpop.f32.mrf.mxu0
        %v2700 = vadd.f32 %v664, %v2699
        %v2701 = vpop.f32.mrf.mxu0
        %v2702 = vadd.f32 %v668, %v2701
        %2703 = vmatprep.mubr.bf16.mxu0 %v439
        %2704 = vmatmul.mubr.bf16.gmra.mxu0 %v438
        %v2705 = vpop.f32.mrf.mxu0
        %v2706 = vadd.f32 %v664, %v2705
        %v2707 = vpop.f32.mrf.mxu0
        %v2708 = vadd.f32 %v668, %v2707
        %v2709 = vpop.f32.mrf.mxu0
        %v2710 = vadd.f32 %v664, %v2709
        %v2711 = vpop.f32.mrf.mxu0
        %v2712 = vadd.f32 %v668, %v2711
        %2713 = vmatprep.mubr.bf16.mxu0 %v442
        %2714 = vmatmul.mubr.bf16.gmra.mxu0 %v441
        %v2715 = vpop.f32.mrf.mxu0
        %v2716 = vadd.f32 %v664, %v2715
        %v2717 = vpop.f32.mrf.mxu0
        %v2718 = vadd.f32 %v668, %v2717
        %v2719 = vpop.f32.mrf.mxu0
        %v2720 = vadd.f32 %v664, %v2719
        %v2721 = vpop.f32.mrf.mxu0
        %v2722 = vadd.f32 %v668, %v2721
        %2723 = vmatprep.mubr.bf16.mxu0 %v445
        %2724 = vmatmul.mubr.bf16.gmra.mxu0 %v444
        %v2725 = vpop.f32.mrf.mxu0
        %v2726 = vadd.f32 %v664, %v2725
        %v2727 = vpop.f32.mrf.mxu0
        %v2728 = vadd.f32 %v668, %v2727
        %v2729 = vpop.f32.mrf.mxu0
        %v2730 = vadd.f32 %v664, %v2729
        %v2731 = vpop.f32.mrf.mxu0
        %v2732 = vadd.f32 %v668, %v2731
        %2733 = vmatprep.mubr.bf16.mxu0 %v448
        %2734 = vmatmul.mubr.bf16.gmra.mxu0 %v447
        %v2735 = vpop.f32.mrf.mxu0
        %v2736 = vadd.f32 %v664, %v2735
        %v2737 = vpop.f32.mrf.mxu0
        %v2738 = vadd.f32 %v668, %v2737
        %v2739 = vpop.f32.mrf.mxu0
        %v2740 = vadd.f32 %v664, %v2739
        %v2741 = vpop.f32.mrf.mxu0
        %v2742 = vadd.f32 %v668, %v2741
        %2743 = vmatprep.mubr.bf16.mxu0 %v451
        %2744 = vmatmul.mubr.bf16.gmra.mxu0 %v450
        %v2745 = vpop.f32.mrf.mxu0
        %v2746 = vadd.f32 %v664, %v2745
        %v2747 = vpop.f32.mrf.mxu0
        %v2748 = vadd.f32 %v668, %v2747
        %v2749 = vpop.f32.mrf.mxu0
        %v2750 = vadd.f32 %v664, %v2749
        %v2751 = vpop.f32.mrf.mxu0
        %v2752 = vadd.f32 %v668, %v2751
        %2753 = vmatprep.mubr.bf16.mxu0 %v454
        %2754 = vmatmul.mubr.bf16.gmra.mxu0 %v453
        %v2755 = vpop.f32.mrf.mxu0
        %v2756 = vadd.f32 %v664, %v2755
        %v2757 = vpop.f32.mrf.mxu0
        %v2758 = vadd.f32 %v668, %v2757
        %v2759 = vpop.f32.mrf.mxu0
        %v2760 = vadd.f32 %v664, %v2759
        %v2761 = vpop.f32.mrf.mxu0
        %v2762 = vadd.f32 %v668, %v2761
        %2763 = vmatprep.mubr.bf16.mxu0 %v457
        %2764 = vmatmul.mubr.bf16.gmra.mxu0 %v456
        %v2765 = vpop.f32.mrf.mxu0
        %v2766 = vadd.f32 %v664, %v2765
        %v2767 = vpop.f32.mrf.mxu0
        %v2768 = vadd.f32 %v668, %v2767
        %v2769 = vpop.f32.mrf.mxu0
        %v2770 = vadd.f32 %v664, %v2769
        %v2771 = vpop.f32.mrf.mxu0
        %v2772 = vadd.f32 %v668, %v2771
        %2773 = vmatprep.mubr.bf16.mxu0 %v460
        %2774 = vmatmul.mubr.bf16.gmra.mxu0 %v459
        %v2775 = vpop.f32.mrf.mxu0
        %v2776 = vadd.f32 %v664, %v2775
        %v2777 = vpop.f32.mrf.mxu0
        %v2778 = vadd.f32 %v668, %v2777
        %v2779 = vpop.f32.mrf.mxu0
        %v2780 = vadd.f32 %v664, %v2779
        %v2781 = vpop.f32.mrf.mxu0
        %v2782 = vadd.f32 %v668, %v2781
        %2783 = vmatprep.mubr.bf16.mxu0 %v463
        %2784 = vmatmul.mubr.bf16.gmra.mxu0 %v462
        %v2785 = vpop.f32.mrf.mxu0
        %v2786 = vadd.f32 %v664, %v2785
        %v2787 = vpop.f32.mrf.mxu0
        %v2788 = vadd.f32 %v668, %v2787
        %v2789 = vpop.f32.mrf.mxu0
        %v2790 = vadd.f32 %v664, %v2789
        %v2791 = vpop.f32.mrf.mxu0
        %v2792 = vadd.f32 %v668, %v2791
        %2793 = vmatprep.mubr.bf16.mxu0 %v466
        %2794 = vmatmul.mubr.bf16.gmra.mxu0 %v465
        %v2795 = vpop.f32.mrf.mxu0
        %v2796 = vadd.f32 %v664, %v2795
        %v2797 = vpop.f32.mrf.mxu0
        %v2798 = vadd.f32 %v668, %v2797
        %v2799 = vpop.f32.mrf.mxu0
        %v2800 = vadd.f32 %v664, %v2799
        %v2801 = vpop.f32.mrf.mxu0
        %v2802 = vadd.f32 %v668, %v2801
        %2803 = vmatprep.mubr.bf16.mxu0 %v469
        %2804 = vmatmul.mubr.bf16.gmra.mxu0 %v468
        %v2805 = vpop.f32.mrf.mxu0
        %v2806 = vadd.f32 %v664, %v2805
        %v2807 = vpop.f32.mrf.mxu0
        %v2808 = vadd.f32 %v668, %v2807
        %v2809 = vpop.f32.mrf.mxu0
        %v2810 = vadd.f32 %v664, %v2809
        %v2811 = vpop.f32.mrf.mxu0
        %v2812 = vadd.f32 %v668, %v2811
        %2813 = vmatprep.mubr.bf16.mxu0 %v472
        %2814 = vmatmul.mubr.bf16.gmra.mxu0 %v471
        %v2815 = vpop.f32.mrf.mxu0
        %v2816 = vadd.f32 %v664, %v2815
        %v2817 = vpop.f32.mrf.mxu0
        %v2818 = vadd.f32 %v668, %v2817
        %v2819 = vpop.f32.mrf.mxu0
        %v2820 = vadd.f32 %v664, %v2819
        %v2821 = vpop.f32.mrf.mxu0
        %v2822 = vadd.f32 %v668, %v2821
        %2823 = vmatprep.mubr.bf16.mxu0 %v475
        %2824 = vmatmul.mubr.bf16.gmra.mxu0 %v474
        %v2825 = vpop.f32.mrf.mxu0
        %v2826 = vadd.f32 %v664, %v2825
        %v2827 = vpop.f32.mrf.mxu0
        %v2828 = vadd.f32 %v668, %v2827
        %v2829 = vpop.f32.mrf.mxu0
        %v2830 = vadd.f32 %v664, %v2829
        %v2831 = vpop.f32.mrf.mxu0
        %v2832 = vadd.f32 %v668, %v2831
        %2833 = vmatprep.mubr.bf16.mxu0 %v478
        %2834 = vmatmul.mubr.bf16.gmra.mxu0 %v477
        %v2835 = vpop.f32.mrf.mxu0
        %v2836 = vadd.f32 %v664, %v2835
        %v2837 = vpop.f32.mrf.mxu0
        %v2838 = vadd.f32 %v668, %v2837
        %v2839 = vpop.f32.mrf.mxu0
        %v2840 = vadd.f32 %v664, %v2839
        %v2841 = vpop.f32.mrf.mxu0
        %v2842 = vadd.f32 %v668, %v2841
        %2843 = vmatprep.mubr.bf16.mxu0 %v481
        %2844 = vmatmul.mubr.bf16.gmra.mxu0 %v480
        %v2845 = vpop.f32.mrf.mxu0
        %v2846 = vadd.f32 %v664, %v2845
        %v2847 = vpop.f32.mrf.mxu0
        %v2848 = vadd.f32 %v668, %v2847
        %v2849 = vpop.f32.mrf.mxu0
        %v2850 = vadd.f32 %v664, %v2849
        %v2851 = vpop.f32.mrf.mxu0
        %v2852 = vadd.f32 %v668, %v2851
        %2853 = vdwg.mxu0
        %2854 = vmatprep.subr.bf16.mxu0 0
        %2855 = vmatpush1.bf16.msra.mxu0 0
        %2856 = vmatprep.subr.bf16.mxu0 0
        %2857 = vmatpush1.bf16.msra.mxu0 0
        %2858 = vmatprep.subr.bf16.mxu0 0
        %2859 = vmatpush1.bf16.msra.mxu0 0
        %2860 = vmatprep.subr.bf16.mxu0 0
        %2861 = vmatpush1.bf16.msra.mxu0 0
        %2862 = vmatprep.subr.bf16.mxu0 0
        %2863 = vmatpush1.bf16.msra.mxu0 0
        %2864 = vmatprep.subr.bf16.mxu0 %v1501
        %2865 = vmatpush1.bf16.msra.mxu0 %v1498
        %2866 = vmatprep.subr.bf16.mxu0 %v1276
        %2867 = vmatpush1.bf16.msra.mxu0 %v1275
        %2868 = vmatprep.subr.bf16.mxu0 %v1268
        %2869 = vmatpush1.bf16.msra.mxu0 %v1267
        %2870 = vmatprep.subr.bf16.mxu0 0
        %2871 = vmatpush2.bf16.msra.mxu0 0
        %2872 = vmatprep.subr.bf16.mxu0 0
        %2873 = vmatpush2.bf16.msra.mxu0 0
        %2874 = vmatprep.subr.bf16.mxu0 0
        %2875 = vmatpush2.bf16.msra.mxu0 0
        %2876 = vmatprep.subr.bf16.mxu0 0
        %2877 = vmatpush2.bf16.msra.mxu0 0
        %2878 = vmatprep.subr.bf16.mxu0 0
        %2879 = vmatpush2.bf16.msra.mxu0 0
        %2880 = vmatprep.subr.bf16.mxu0 0
        %2881 = vmatpush2.bf16.msra.mxu0 0
        %2882 = vmatprep.subr.bf16.mxu0 0
        %2883 = vmatpush2.bf16.msra.mxu0 0
        %2884 = vmatprep.subr.bf16.mxu0 0
        %2885 = vmatpush2.bf16.msra.mxu0 0
        %2886 = vmatprep.mubr.bf16.mxu0 0
        %2887 = vmatmul.mubr.bf16.gmra.mxu0 %v1431
        %v2888 = vpop.f32.mrf.mxu0
        %v2889 = vadd.f32 %v2696, %v2888
        %v2890 = vpop.f32.mrf.mxu0
        %v2891 = vadd.f32 %v2698, %v2890
        %v2892 = vpop.f32.mrf.mxu0
        %v2893 = vadd.f32 %v2700, %v2892
        %v2894 = vpop.f32.mrf.mxu0
        %v2895 = vadd.f32 %v2702, %v2894
        %2896 = vmatprep.mubr.bf16.mxu0 0
        %2897 = vmatmul.mubr.bf16.gmra.mxu0 %v1434
        %v2898 = vpop.f32.mrf.mxu0
        %v2899 = vadd.f32 %v2706, %v2898
        %v2900 = vpop.f32.mrf.mxu0
        %v2901 = vadd.f32 %v2708, %v2900
        %v2902 = vpop.f32.mrf.mxu0
        %v2903 = vadd.f32 %v2710, %v2902
        %v2904 = vpop.f32.mrf.mxu0
        %v2905 = vadd.f32 %v2712, %v2904
        %2906 = vmatprep.mubr.bf16.mxu0 0
        %2907 = vmatmul.mubr.bf16.gmra.mxu0 %v1437
        %v2908 = vpop.f32.mrf.mxu0
        %v2909 = vadd.f32 %v2716, %v2908
        %v2910 = vpop.f32.mrf.mxu0
        %v2911 = vadd.f32 %v2718, %v2910
        %v2912 = vpop.f32.mrf.mxu0
        %v2913 = vadd.f32 %v2720, %v2912
        %v2914 = vpop.f32.mrf.mxu0
        %v2915 = vadd.f32 %v2722, %v2914
        %2916 = vmatprep.mubr.bf16.mxu0 0
        %2917 = vmatmul.mubr.bf16.gmra.mxu0 %v1440
        %v2918 = vpop.f32.mrf.mxu0
        %v2919 = vadd.f32 %v2726, %v2918
        %v2920 = vpop.f32.mrf.mxu0
        %v2921 = vadd.f32 %v2728, %v2920
        %v2922 = vpop.f32.mrf.mxu0
        %v2923 = vadd.f32 %v2730, %v2922
        %v2924 = vpop.f32.mrf.mxu0
        %v2925 = vadd.f32 %v2732, %v2924
        %2926 = vmatprep.mubr.bf16.mxu0 0
        %2927 = vmatmul.mubr.bf16.gmra.mxu0 %v1443
        %v2928 = vpop.f32.mrf.mxu0
        %v2929 = vadd.f32 %v2736, %v2928
        %v2930 = vpop.f32.mrf.mxu0
        %v2931 = vadd.f32 %v2738, %v2930
        %v2932 = vpop.f32.mrf.mxu0
        %v2933 = vadd.f32 %v2740, %v2932
        %v2934 = vpop.f32.mrf.mxu0
        %v2935 = vadd.f32 %v2742, %v2934
        %2936 = vmatprep.mubr.bf16.mxu0 0
        %2937 = vmatmul.mubr.bf16.gmra.mxu0 %v1446
        %v2938 = vpop.f32.mrf.mxu0
        %v2939 = vadd.f32 %v2746, %v2938
        %v2940 = vpop.f32.mrf.mxu0
        %v2941 = vadd.f32 %v2748, %v2940
        %v2942 = vpop.f32.mrf.mxu0
        %v2943 = vadd.f32 %v2750, %v2942
        %v2944 = vpop.f32.mrf.mxu0
        %v2945 = vadd.f32 %v2752, %v2944
        %2946 = vmatprep.mubr.bf16.mxu0 0
        %2947 = vmatmul.mubr.bf16.gmra.mxu0 %v1449
        %v2948 = vpop.f32.mrf.mxu0
        %v2949 = vadd.f32 %v2756, %v2948
        %v2950 = vpop.f32.mrf.mxu0
        %v2951 = vadd.f32 %v2758, %v2950
        %v2952 = vpop.f32.mrf.mxu0
        %v2953 = vadd.f32 %v2760, %v2952
        %v2954 = vpop.f32.mrf.mxu0
        %v2955 = vadd.f32 %v2762, %v2954
        %2956 = vmatprep.mubr.bf16.mxu0 0
        %2957 = vmatmul.mubr.bf16.gmra.mxu0 %v1452
        %v2958 = vpop.f32.mrf.mxu0
        %v2959 = vadd.f32 %v2766, %v2958
        %v2960 = vpop.f32.mrf.mxu0
        %v2961 = vadd.f32 %v2768, %v2960
        %v2962 = vpop.f32.mrf.mxu0
        %v2963 = vadd.f32 %v2770, %v2962
        %v2964 = vpop.f32.mrf.mxu0
        %v2965 = vadd.f32 %v2772, %v2964
        %2966 = vmatprep.mubr.bf16.mxu0 0
        %2967 = vmatmul.mubr.bf16.gmra.mxu0 %v1455
        %v2968 = vpop.f32.mrf.mxu0
        %v2969 = vadd.f32 %v2776, %v2968
        %v2970 = vpop.f32.mrf.mxu0
        %v2971 = vadd.f32 %v2778, %v2970
        %v2972 = vpop.f32.mrf.mxu0
        %v2973 = vadd.f32 %v2780, %v2972
        %v2974 = vpop.f32.mrf.mxu0
        %v2975 = vadd.f32 %v2782, %v2974
        %2976 = vmatprep.mubr.bf16.mxu0 0
        %2977 = vmatmul.mubr.bf16.gmra.mxu0 %v1458
        %v2978 = vpop.f32.mrf.mxu0
        %v2979 = vadd.f32 %v2786, %v2978
        %v2980 = vpop.f32.mrf.mxu0
        %v2981 = vadd.f32 %v2788, %v2980
        %v2982 = vpop.f32.mrf.mxu0
        %v2983 = vadd.f32 %v2790, %v2982
        %v2984 = vpop.f32.mrf.mxu0
        %v2985 = vadd.f32 %v2792, %v2984
        %2986 = vmatprep.mubr.bf16.mxu0 0
        %2987 = vmatmul.mubr.bf16.gmra.mxu0 %v1461
        %v2988 = vpop.f32.mrf.mxu0
        %v2989 = vadd.f32 %v2796, %v2988
        %v2990 = vpop.f32.mrf.mxu0
        %v2991 = vadd.f32 %v2798, %v2990
        %v2992 = vpop.f32.mrf.mxu0
        %v2993 = vadd.f32 %v2800, %v2992
        %v2994 = vpop.f32.mrf.mxu0
        %v2995 = vadd.f32 %v2802, %v2994
        %2996 = vmatprep.mubr.bf16.mxu0 0
        %2997 = vmatmul.mubr.bf16.gmra.mxu0 %v1464
        %v2998 = vpop.f32.mrf.mxu0
        %v2999 = vadd.f32 %v2806, %v2998
        %v3000 = vpop.f32.mrf.mxu0
        %v3001 = vadd.f32 %v2808, %v3000
        %v3002 = vpop.f32.mrf.mxu0
        %v3003 = vadd.f32 %v2810, %v3002
        %v3004 = vpop.f32.mrf.mxu0
        %v3005 = vadd.f32 %v2812, %v3004
        %3006 = vmatprep.mubr.bf16.mxu0 0
        %3007 = vmatmul.mubr.bf16.gmra.mxu0 %v1467
        %v3008 = vpop.f32.mrf.mxu0
        %v3009 = vadd.f32 %v2816, %v3008
        %v3010 = vpop.f32.mrf.mxu0
        %v3011 = vadd.f32 %v2818, %v3010
        %v3012 = vpop.f32.mrf.mxu0
        %v3013 = vadd.f32 %v2820, %v3012
        %v3014 = vpop.f32.mrf.mxu0
        %v3015 = vadd.f32 %v2822, %v3014
        %3016 = vmatprep.mubr.bf16.mxu0 0
        %3017 = vmatmul.mubr.bf16.gmra.mxu0 %v1470
        %v3018 = vpop.f32.mrf.mxu0
        %v3019 = vadd.f32 %v2826, %v3018
        %v3020 = vpop.f32.mrf.mxu0
        %v3021 = vadd.f32 %v2828, %v3020
        %v3022 = vpop.f32.mrf.mxu0
        %v3023 = vadd.f32 %v2830, %v3022
        %v3024 = vpop.f32.mrf.mxu0
        %v3025 = vadd.f32 %v2832, %v3024
        %3026 = vmatprep.mubr.bf16.mxu0 0
        %3027 = vmatmul.mubr.bf16.gmra.mxu0 %v1473
        %v3028 = vpop.f32.mrf.mxu0
        %v3029 = vadd.f32 %v2836, %v3028
        %v3030 = vpop.f32.mrf.mxu0
        %v3031 = vadd.f32 %v2838, %v3030
        %v3032 = vpop.f32.mrf.mxu0
        %v3033 = vadd.f32 %v2840, %v3032
        %v3034 = vpop.f32.mrf.mxu0
        %v3035 = vadd.f32 %v2842, %v3034
        %3036 = vmatprep.mubr.bf16.mxu0 0
        %3037 = vmatmul.mubr.bf16.gmra.mxu0 %v1476
        %v3038 = vpop.f32.mrf.mxu0
        %v3039 = vadd.f32 %v2846, %v3038
        %v3040 = vpop.f32.mrf.mxu0
        %v3041 = vadd.f32 %v2848, %v3040
        %v3042 = vpop.f32.mrf.mxu0
        %v3043 = vadd.f32 %v2850, %v3042
        %v3044 = vpop.f32.mrf.mxu0
        %v3045 = vadd.f32 %v2852, %v3044
        %3046 = vdwg.mxu0
        %v3047 = vmax.f32 %v1731, 0.0
        %v3048 = vmax.f32 %v1733, 0.0
        %v3049 = vmax.f32 %v2117, 0.0
        %v3050 = vmax.f32 %v2119, 0.0
        %v3051 = vmax.f32 %v2503, 0.0
        %v3052 = vmax.f32 %v2505, 0.0
        %v3053 = vmax.f32 %v2889, 0.0
        %v3054 = vmax.f32 %v2891, 0.0
        %v3055 = vmax.f32 %v1735, 0.0
        %v3056 = vmax.f32 %v1737, 0.0
        %v3057 = vmax.f32 %v2121, 0.0
        %v3058 = vmax.f32 %v2123, 0.0
        %v3059 = vmax.f32 %v2507, 0.0
        %v3060 = vmax.f32 %v2509, 0.0
        %v3061 = vmax.f32 %v2893, 0.0
        %v3062 = vmax.f32 %v2895, 0.0
        %v3063 = vmax.f32 %v1741, 0.0
        %v3064 = vmax.f32 %v1743, 0.0
        %v3065 = vmax.f32 %v2127, 0.0
        %v3066 = vmax.f32 %v2129, 0.0
        %v3067 = vmax.f32 %v2513, 0.0
        %v3068 = vmax.f32 %v2515, 0.0
        %v3069 = vmax.f32 %v2899, 0.0
        %v3070 = vmax.f32 %v2901, 0.0
        %v3071 = vmax.f32 %v1745, 0.0
        %v3072 = vmax.f32 %v1747, 0.0
        %v3073 = vmax.f32 %v2131, 0.0
        %v3074 = vmax.f32 %v2133, 0.0
        %v3075 = vmax.f32 %v2517, 0.0
        %v3076 = vmax.f32 %v2519, 0.0
        %v3077 = vmax.f32 %v2903, 0.0
        %v3078 = vmax.f32 %v2905, 0.0
        %v3079 = vmax.f32 %v1751, 0.0
        %v3080 = vmax.f32 %v1753, 0.0
        %v3081 = vmax.f32 %v2137, 0.0
        %v3082 = vmax.f32 %v2139, 0.0
        %v3083 = vmax.f32 %v2523, 0.0
        %v3084 = vmax.f32 %v2525, 0.0
        %v3085 = vmax.f32 %v2909, 0.0
        %v3086 = vmax.f32 %v2911, 0.0
        %v3087 = vmax.f32 %v1755, 0.0
        %v3088 = vmax.f32 %v1757, 0.0
        %v3089 = vmax.f32 %v2141, 0.0
        %v3090 = vmax.f32 %v2143, 0.0
        %v3091 = vmax.f32 %v2527, 0.0
        %v3092 = vmax.f32 %v2529, 0.0
        %v3093 = vmax.f32 %v2913, 0.0
        %v3094 = vmax.f32 %v2915, 0.0
        %v3095 = vmax.f32 %v1761, 0.0
        %v3096 = vmax.f32 %v1763, 0.0
        %v3097 = vmax.f32 %v2147, 0.0
        %v3098 = vmax.f32 %v2149, 0.0
        %v3099 = vmax.f32 %v2533, 0.0
        %v3100 = vmax.f32 %v2535, 0.0
        %v3101 = vmax.f32 %v2919, 0.0
        %v3102 = vmax.f32 %v2921, 0.0
        %v3103 = vmax.f32 %v1765, 0.0
        %v3104 = vmax.f32 %v1767, 0.0
        %v3105 = vmax.f32 %v2151, 0.0
        %v3106 = vmax.f32 %v2153, 0.0
        %v3107 = vmax.f32 %v2537, 0.0
        %v3108 = vmax.f32 %v2539, 0.0
        %v3109 = vmax.f32 %v2923, 0.0
        %v3110 = vmax.f32 %v2925, 0.0
        %v3111 = vmax.f32 %v1771, 0.0
        %v3112 = vmax.f32 %v1773, 0.0
        %v3113 = vmax.f32 %v2157, 0.0
        %v3114 = vmax.f32 %v2159, 0.0
        %v3115 = vmax.f32 %v2543, 0.0
        %v3116 = vmax.f32 %v2545, 0.0
        %v3117 = vmax.f32 %v2929, 0.0
        %v3118 = vmax.f32 %v2931, 0.0
        %v3119 = vmax.f32 %v1775, 0.0
        %v3120 = vmax.f32 %v1777, 0.0
        %v3121 = vmax.f32 %v2161, 0.0
        %v3122 = vmax.f32 %v2163, 0.0
        %v3123 = vmax.f32 %v2547, 0.0
        %v3124 = vmax.f32 %v2549, 0.0
        %v3125 = vmax.f32 %v2933, 0.0
        %v3126 = vmax.f32 %v2935, 0.0
        %v3127 = vmax.f32 %v1781, 0.0
        %v3128 = vmax.f32 %v1783, 0.0
        %v3129 = vmax.f32 %v2167, 0.0
        %v3130 = vmax.f32 %v2169, 0.0
        %v3131 = vmax.f32 %v2553, 0.0
        %v3132 = vmax.f32 %v2555, 0.0
        %v3133 = vmax.f32 %v2939, 0.0
        %v3134 = vmax.f32 %v2941, 0.0
        %v3135 = vmax.f32 %v1785, 0.0
        %v3136 = vmax.f32 %v1787, 0.0
        %v3137 = vmax.f32 %v2171, 0.0
        %v3138 = vmax.f32 %v2173, 0.0
        %v3139 = vmax.f32 %v2557, 0.0
        %v3140 = vmax.f32 %v2559, 0.0
        %v3141 = vmax.f32 %v2943, 0.0
        %v3142 = vmax.f32 %v2945, 0.0
        %v3143 = vmax.f32 %v1791, 0.0
        %v3144 = vmax.f32 %v1793, 0.0
        %v3145 = vmax.f32 %v2177, 0.0
        %v3146 = vmax.f32 %v2179, 0.0
        %v3147 = vmax.f32 %v2563, 0.0
        %v3148 = vmax.f32 %v2565, 0.0
        %v3149 = vmax.f32 %v2949, 0.0
        %v3150 = vmax.f32 %v2951, 0.0
        %v3151 = vmax.f32 %v1795, 0.0
        %v3152 = vmax.f32 %v1797, 0.0
        %v3153 = vmax.f32 %v2181, 0.0
        %v3154 = vmax.f32 %v2183, 0.0
        %v3155 = vmax.f32 %v2567, 0.0
        %v3156 = vmax.f32 %v2569, 0.0
        %v3157 = vmax.f32 %v2953, 0.0
        %v3158 = vmax.f32 %v2955, 0.0
        %v3159 = vmax.f32 %v1801, 0.0
        %v3160 = vmax.f32 %v1803, 0.0
        %v3161 = vmax.f32 %v2187, 0.0
        %v3162 = vmax.f32 %v2189, 0.0
        %v3163 = vmax.f32 %v2573, 0.0
        %v3164 = vmax.f32 %v2575, 0.0
        %v3165 = vmax.f32 %v2959, 0.0
        %v3166 = vmax.f32 %v2961, 0.0
        %v3167 = vmax.f32 %v1805, 0.0
        %v3168 = vmax.f32 %v1807, 0.0
        %v3169 = vmax.f32 %v2191, 0.0
        %v3170 = vmax.f32 %v2193, 0.0
        %v3171 = vmax.f32 %v2577, 0.0
        %v3172 = vmax.f32 %v2579, 0.0
        %v3173 = vmax.f32 %v2963, 0.0
        %v3174 = vmax.f32 %v2965, 0.0
        %v3175 = vmax.f32 %v1811, 0.0
        %v3176 = vmax.f32 %v1813, 0.0
        %v3177 = vmax.f32 %v2197, 0.0
        %v3178 = vmax.f32 %v2199, 0.0
        %v3179 = vmax.f32 %v2583, 0.0
        %v3180 = vmax.f32 %v2585, 0.0
        %v3181 = vmax.f32 %v2969, 0.0
        %v3182 = vmax.f32 %v2971, 0.0
        %v3183 = vmax.f32 %v1815, 0.0
        %v3184 = vmax.f32 %v1817, 0.0
        %v3185 = vmax.f32 %v2201, 0.0
        %v3186 = vmax.f32 %v2203, 0.0
        %v3187 = vmax.f32 %v2587, 0.0
        %v3188 = vmax.f32 %v2589, 0.0
        %v3189 = vmax.f32 %v2973, 0.0
        %v3190 = vmax.f32 %v2975, 0.0
        %v3191 = vmax.f32 %v1821, 0.0
        %v3192 = vmax.f32 %v1823, 0.0
        %v3193 = vmax.f32 %v2207, 0.0
        %v3194 = vmax.f32 %v2209, 0.0
        %v3195 = vmax.f32 %v2593, 0.0
        %v3196 = vmax.f32 %v2595, 0.0
        %v3197 = vmax.f32 %v2979, 0.0
        %v3198 = vmax.f32 %v2981, 0.0
        %v3199 = vmax.f32 %v1825, 0.0
        %v3200 = vmax.f32 %v1827, 0.0
        %v3201 = vmax.f32 %v2211, 0.0
        %v3202 = vmax.f32 %v2213, 0.0
        %v3203 = vmax.f32 %v2597, 0.0
        %v3204 = vmax.f32 %v2599, 0.0
        %v3205 = vmax.f32 %v2983, 0.0
        %v3206 = vmax.f32 %v2985, 0.0
        %v3207 = vmax.f32 %v1831, 0.0
        %v3208 = vmax.f32 %v1833, 0.0
        %v3209 = vmax.f32 %v2217, 0.0
        %v3210 = vmax.f32 %v2219, 0.0
        %v3211 = vmax.f32 %v2603, 0.0
        %v3212 = vmax.f32 %v2605, 0.0
        %v3213 = vmax.f32 %v2989, 0.0
        %v3214 = vmax.f32 %v2991, 0.0
        %v3215 = vmax.f32 %v1835, 0.0
        %v3216 = vmax.f32 %v1837, 0.0
        %v3217 = vmax.f32 %v2221, 0.0
        %v3218 = vmax.f32 %v2223, 0.0
        %v3219 = vmax.f32 %v2607, 0.0
        %v3220 = vmax.f32 %v2609, 0.0
        %v3221 = vmax.f32 %v2993, 0.0
        %v3222 = vmax.f32 %v2995, 0.0
        %v3223 = vmax.f32 %v1841, 0.0
        %v3224 = vmax.f32 %v1843, 0.0
        %v3225 = vmax.f32 %v2227, 0.0
        %v3226 = vmax.f32 %v2229, 0.0
        %v3227 = vmax.f32 %v2613, 0.0
        %v3228 = vmax.f32 %v2615, 0.0
        %v3229 = vmax.f32 %v2999, 0.0
        %v3230 = vmax.f32 %v3001, 0.0
        %v3231 = vmax.f32 %v1845, 0.0
        %v3232 = vmax.f32 %v1847, 0.0
        %v3233 = vmax.f32 %v2231, 0.0
        %v3234 = vmax.f32 %v2233, 0.0
        %v3235 = vmax.f32 %v2617, 0.0
        %v3236 = vmax.f32 %v2619, 0.0
        %v3237 = vmax.f32 %v3003, 0.0
        %v3238 = vmax.f32 %v3005, 0.0
        %v3239 = vmax.f32 %v1851, 0.0
        %v3240 = vmax.f32 %v1853, 0.0
        %v3241 = vmax.f32 %v2237, 0.0
        %v3242 = vmax.f32 %v2239, 0.0
        %v3243 = vmax.f32 %v2623, 0.0
        %v3244 = vmax.f32 %v2625, 0.0
        %v3245 = vmax.f32 %v3009, 0.0
        %v3246 = vmax.f32 %v3011, 0.0
        %v3247 = vmax.f32 %v1855, 0.0
        %v3248 = vmax.f32 %v1857, 0.0
        %v3249 = vmax.f32 %v2241, 0.0
        %v3250 = vmax.f32 %v2243, 0.0
        %v3251 = vmax.f32 %v2627, 0.0
        %v3252 = vmax.f32 %v2629, 0.0
        %v3253 = vmax.f32 %v3013, 0.0
        %v3254 = vmax.f32 %v3015, 0.0
        %v3255 = vmax.f32 %v1861, 0.0
        %v3256 = vmax.f32 %v1863, 0.0
        %v3257 = vmax.f32 %v2247, 0.0
        %v3258 = vmax.f32 %v2249, 0.0
        %v3259 = vmax.f32 %v2633, 0.0
        %v3260 = vmax.f32 %v2635, 0.0
        %v3261 = vmax.f32 %v3019, 0.0
        %v3262 = vmax.f32 %v3021, 0.0
        %v3263 = vmax.f32 %v1865, 0.0
        %v3264 = vmax.f32 %v1867, 0.0
        %v3265 = vmax.f32 %v2251, 0.0
        %v3266 = vmax.f32 %v2253, 0.0
        %v3267 = vmax.f32 %v2637, 0.0
        %v3268 = vmax.f32 %v2639, 0.0
        %v3269 = vmax.f32 %v3023, 0.0
        %v3270 = vmax.f32 %v3025, 0.0
        %v3271 = vmax.f32 %v1871, 0.0
        %v3272 = vmax.f32 %v1873, 0.0
        %v3273 = vmax.f32 %v2257, 0.0
        %v3274 = vmax.f32 %v2259, 0.0
        %v3275 = vmax.f32 %v2643, 0.0
        %v3276 = vmax.f32 %v2645, 0.0
        %v3277 = vmax.f32 %v3029, 0.0
        %v3278 = vmax.f32 %v3031, 0.0
        %v3279 = vmax.f32 %v1875, 0.0
        %v3280 = vmax.f32 %v1877, 0.0
        %v3281 = vmax.f32 %v2261, 0.0
        %v3282 = vmax.f32 %v2263, 0.0
        %v3283 = vmax.f32 %v2647, 0.0
        %v3284 = vmax.f32 %v2649, 0.0
        %v3285 = vmax.f32 %v3033, 0.0
        %v3286 = vmax.f32 %v3035, 0.0
        %v3287 = vmax.f32 %v1881, 0.0
        %v3288 = vmax.f32 %v1883, 0.0
        %v3289 = vmax.f32 %v2267, 0.0
        %v3290 = vmax.f32 %v2269, 0.0
        %v3291 = vmax.f32 %v2653, 0.0
        %v3292 = vmax.f32 %v2655, 0.0
        %v3293 = vmax.f32 %v3039, 0.0
        %v3294 = vmax.f32 %v3041, 0.0
        %v3295 = vmax.f32 %v1885, 0.0
        %v3296 = vmax.f32 %v1887, 0.0
        %v3297 = vmax.f32 %v2271, 0.0
        %v3298 = vmax.f32 %v2273, 0.0
        %v3299 = vmax.f32 %v2657, 0.0
        %v3300 = vmax.f32 %v2659, 0.0
        %v3301 = vmax.f32 %v3043, 0.0
        %v3302 = vmax.f32 %v3045, 0.0
        %v3303 = vmin.f32 %v3047, 1.0
        %v3304 = vmin.f32 %v3048, 1.0
        %v3305 = vmin.f32 %v3049, 1.0
        %v3306 = vmin.f32 %v3050, 1.0
        %v3307 = vmin.f32 %v3051, 1.0
        %v3308 = vmin.f32 %v3052, 1.0
        %v3309 = vmin.f32 %v3053, 1.0
        %v3310 = vmin.f32 %v3054, 1.0
        %v3311 = vmin.f32 %v3055, 1.0
        %v3312 = vmin.f32 %v3056, 1.0
        %v3313 = vmin.f32 %v3057, 1.0
        %v3314 = vmin.f32 %v3058, 1.0
        %v3315 = vmin.f32 %v3059, 1.0
        %v3316 = vmin.f32 %v3060, 1.0
        %v3317 = vmin.f32 %v3061, 1.0
        %v3318 = vmin.f32 %v3062, 1.0
        %v3319 = vmin.f32 %v3063, 1.0
        %v3320 = vmin.f32 %v3064, 1.0
        %v3321 = vmin.f32 %v3065, 1.0
        %v3322 = vmin.f32 %v3066, 1.0
        %v3323 = vmin.f32 %v3067, 1.0
        %v3324 = vmin.f32 %v3068, 1.0
        %v3325 = vmin.f32 %v3069, 1.0
        %v3326 = vmin.f32 %v3070, 1.0
        %v3327 = vmin.f32 %v3071, 1.0
        %v3328 = vmin.f32 %v3072, 1.0
        %v3329 = vmin.f32 %v3073, 1.0
        %v3330 = vmin.f32 %v3074, 1.0
        %v3331 = vmin.f32 %v3075, 1.0
        %v3332 = vmin.f32 %v3076, 1.0
        %v3333 = vmin.f32 %v3077, 1.0
        %v3334 = vmin.f32 %v3078, 1.0
        %v3335 = vmin.f32 %v3079, 1.0
        %v3336 = vmin.f32 %v3080, 1.0
        %v3337 = vmin.f32 %v3081, 1.0
        %v3338 = vmin.f32 %v3082, 1.0
        %v3339 = vmin.f32 %v3083, 1.0
        %v3340 = vmin.f32 %v3084, 1.0
        %v3341 = vmin.f32 %v3085, 1.0
        %v3342 = vmin.f32 %v3086, 1.0
        %v3343 = vmin.f32 %v3087, 1.0
        %v3344 = vmin.f32 %v3088, 1.0
        %v3345 = vmin.f32 %v3089, 1.0
        %v3346 = vmin.f32 %v3090, 1.0
        %v3347 = vmin.f32 %v3091, 1.0
        %v3348 = vmin.f32 %v3092, 1.0
        %v3349 = vmin.f32 %v3093, 1.0
        %v3350 = vmin.f32 %v3094, 1.0
        %v3351 = vmin.f32 %v3095, 1.0
        %v3352 = vmin.f32 %v3096, 1.0
        %v3353 = vmin.f32 %v3097, 1.0
        %v3354 = vmin.f32 %v3098, 1.0
        %v3355 = vmin.f32 %v3099, 1.0
        %v3356 = vmin.f32 %v3100, 1.0
        %v3357 = vmin.f32 %v3101, 1.0
        %v3358 = vmin.f32 %v3102, 1.0
        %v3359 = vmin.f32 %v3103, 1.0
        %v3360 = vmin.f32 %v3104, 1.0
        %v3361 = vmin.f32 %v3105, 1.0
        %v3362 = vmin.f32 %v3106, 1.0
        %v3363 = vmin.f32 %v3107, 1.0
        %v3364 = vmin.f32 %v3108, 1.0
        %v3365 = vmin.f32 %v3109, 1.0
        %v3366 = vmin.f32 %v3110, 1.0
        %v3367 = vmin.f32 %v3111, 1.0
        %v3368 = vmin.f32 %v3112, 1.0
        %v3369 = vmin.f32 %v3113, 1.0
        %v3370 = vmin.f32 %v3114, 1.0
        %v3371 = vmin.f32 %v3115, 1.0
        %v3372 = vmin.f32 %v3116, 1.0
        %v3373 = vmin.f32 %v3117, 1.0
        %v3374 = vmin.f32 %v3118, 1.0
        %v3375 = vmin.f32 %v3119, 1.0
        %v3376 = vmin.f32 %v3120, 1.0
        %v3377 = vmin.f32 %v3121, 1.0
        %v3378 = vmin.f32 %v3122, 1.0
        %v3379 = vmin.f32 %v3123, 1.0
        %v3380 = vmin.f32 %v3124, 1.0
        %v3381 = vmin.f32 %v3125, 1.0
        %v3382 = vmin.f32 %v3126, 1.0
        %v3383 = vmin.f32 %v3127, 1.0
        %v3384 = vmin.f32 %v3128, 1.0
        %v3385 = vmin.f32 %v3129, 1.0
        %v3386 = vmin.f32 %v3130, 1.0
        %v3387 = vmin.f32 %v3131, 1.0
        %v3388 = vmin.f32 %v3132, 1.0
        %v3389 = vmin.f32 %v3133, 1.0
        %v3390 = vmin.f32 %v3134, 1.0
        %v3391 = vmin.f32 %v3135, 1.0
        %v3392 = vmin.f32 %v3136, 1.0
        %v3393 = vmin.f32 %v3137, 1.0
        %v3394 = vmin.f32 %v3138, 1.0
        %v3395 = vmin.f32 %v3139, 1.0
        %v3396 = vmin.f32 %v3140, 1.0
        %v3397 = vmin.f32 %v3141, 1.0
        %v3398 = vmin.f32 %v3142, 1.0
        %v3399 = vmin.f32 %v3143, 1.0
        %v3400 = vmin.f32 %v3144, 1.0
        %v3401 = vmin.f32 %v3145, 1.0
        %v3402 = vmin.f32 %v3146, 1.0
        %v3403 = vmin.f32 %v3147, 1.0
        %v3404 = vmin.f32 %v3148, 1.0
        %v3405 = vmin.f32 %v3149, 1.0
        %v3406 = vmin.f32 %v3150, 1.0
        %v3407 = vmin.f32 %v3151, 1.0
        %v3408 = vmin.f32 %v3152, 1.0
        %v3409 = vmin.f32 %v3153, 1.0
        %v3410 = vmin.f32 %v3154, 1.0
        %v3411 = vmin.f32 %v3155, 1.0
        %v3412 = vmin.f32 %v3156, 1.0
        %v3413 = vmin.f32 %v3157, 1.0
        %v3414 = vmin.f32 %v3158, 1.0
        %v3415 = vmin.f32 %v3159, 1.0
        %v3416 = vmin.f32 %v3160, 1.0
        %v3417 = vmin.f32 %v3161, 1.0
        %v3418 = vmin.f32 %v3162, 1.0
        %v3419 = vmin.f32 %v3163, 1.0
        %v3420 = vmin.f32 %v3164, 1.0
        %v3421 = vmin.f32 %v3165, 1.0
        %v3422 = vmin.f32 %v3166, 1.0
        %v3423 = vmin.f32 %v3167, 1.0
        %v3424 = vmin.f32 %v3168, 1.0
        %v3425 = vmin.f32 %v3169, 1.0
        %v3426 = vmin.f32 %v3170, 1.0
        %v3427 = vmin.f32 %v3171, 1.0
        %v3428 = vmin.f32 %v3172, 1.0
        %v3429 = vmin.f32 %v3173, 1.0
        %v3430 = vmin.f32 %v3174, 1.0
        %v3431 = vmin.f32 %v3175, 1.0
        %v3432 = vmin.f32 %v3176, 1.0
        %v3433 = vmin.f32 %v3177, 1.0
        %v3434 = vmin.f32 %v3178, 1.0
        %v3435 = vmin.f32 %v3179, 1.0
        %v3436 = vmin.f32 %v3180, 1.0
        %v3437 = vmin.f32 %v3181, 1.0
        %v3438 = vmin.f32 %v3182, 1.0
        %v3439 = vmin.f32 %v3183, 1.0
        %v3440 = vmin.f32 %v3184, 1.0
        %v3441 = vmin.f32 %v3185, 1.0
        %v3442 = vmin.f32 %v3186, 1.0
        %v3443 = vmin.f32 %v3187, 1.0
        %v3444 = vmin.f32 %v3188, 1.0
        %v3445 = vmin.f32 %v3189, 1.0
        %v3446 = vmin.f32 %v3190, 1.0
        %v3447 = vmin.f32 %v3191, 1.0
        %v3448 = vmin.f32 %v3192, 1.0
        %v3449 = vmin.f32 %v3193, 1.0
        %v3450 = vmin.f32 %v3194, 1.0
        %v3451 = vmin.f32 %v3195, 1.0
        %v3452 = vmin.f32 %v3196, 1.0
        %v3453 = vmin.f32 %v3197, 1.0
        %v3454 = vmin.f32 %v3198, 1.0
        %v3455 = vmin.f32 %v3199, 1.0
        %v3456 = vmin.f32 %v3200, 1.0
        %v3457 = vmin.f32 %v3201, 1.0
        %v3458 = vmin.f32 %v3202, 1.0
        %v3459 = vmin.f32 %v3203, 1.0
        %v3460 = vmin.f32 %v3204, 1.0
        %v3461 = vmin.f32 %v3205, 1.0
        %v3462 = vmin.f32 %v3206, 1.0
        %v3463 = vmin.f32 %v3207, 1.0
        %v3464 = vmin.f32 %v3208, 1.0
        %v3465 = vmin.f32 %v3209, 1.0
        %v3466 = vmin.f32 %v3210, 1.0
        %v3467 = vmin.f32 %v3211, 1.0
        %v3468 = vmin.f32 %v3212, 1.0
        %v3469 = vmin.f32 %v3213, 1.0
        %v3470 = vmin.f32 %v3214, 1.0
        %v3471 = vmin.f32 %v3215, 1.0
        %v3472 = vmin.f32 %v3216, 1.0
        %v3473 = vmin.f32 %v3217, 1.0
        %v3474 = vmin.f32 %v3218, 1.0
        %v3475 = vmin.f32 %v3219, 1.0
        %v3476 = vmin.f32 %v3220, 1.0
        %v3477 = vmin.f32 %v3221, 1.0
        %v3478 = vmin.f32 %v3222, 1.0
        %v3479 = vmin.f32 %v3223, 1.0
        %v3480 = vmin.f32 %v3224, 1.0
        %v3481 = vmin.f32 %v3225, 1.0
        %v3482 = vmin.f32 %v3226, 1.0
        %v3483 = vmin.f32 %v3227, 1.0
        %v3484 = vmin.f32 %v3228, 1.0
        %v3485 = vmin.f32 %v3229, 1.0
        %v3486 = vmin.f32 %v3230, 1.0
        %v3487 = vmin.f32 %v3231, 1.0
        %v3488 = vmin.f32 %v3232, 1.0
        %v3489 = vmin.f32 %v3233, 1.0
        %v3490 = vmin.f32 %v3234, 1.0
        %v3491 = vmin.f32 %v3235, 1.0
        %v3492 = vmin.f32 %v3236, 1.0
        %v3493 = vmin.f32 %v3237, 1.0
        %v3494 = vmin.f32 %v3238, 1.0
        %v3495 = vmin.f32 %v3239, 1.0
        %v3496 = vmin.f32 %v3240, 1.0
        %v3497 = vmin.f32 %v3241, 1.0
        %v3498 = vmin.f32 %v3242, 1.0
        %v3499 = vmin.f32 %v3243, 1.0
        %v3500 = vmin.f32 %v3244, 1.0
        %v3501 = vmin.f32 %v3245, 1.0
        %v3502 = vmin.f32 %v3246, 1.0
        %v3503 = vmin.f32 %v3247, 1.0
        %v3504 = vmin.f32 %v3248, 1.0
        %v3505 = vmin.f32 %v3249, 1.0
        %v3506 = vmin.f32 %v3250, 1.0
        %v3507 = vmin.f32 %v3251, 1.0
        %v3508 = vmin.f32 %v3252, 1.0
        %v3509 = vmin.f32 %v3253, 1.0
        %v3510 = vmin.f32 %v3254, 1.0
        %v3511 = vmin.f32 %v3255, 1.0
        %v3512 = vmin.f32 %v3256, 1.0
        %v3513 = vmin.f32 %v3257, 1.0
        %v3514 = vmin.f32 %v3258, 1.0
        %v3515 = vmin.f32 %v3259, 1.0
        %v3516 = vmin.f32 %v3260, 1.0
        %v3517 = vmin.f32 %v3261, 1.0
        %v3518 = vmin.f32 %v3262, 1.0
        %v3519 = vmin.f32 %v3263, 1.0
        %v3520 = vmin.f32 %v3264, 1.0
        %v3521 = vmin.f32 %v3265, 1.0
        %v3522 = vmin.f32 %v3266, 1.0
        %v3523 = vmin.f32 %v3267, 1.0
        %v3524 = vmin.f32 %v3268, 1.0
        %v3525 = vmin.f32 %v3269, 1.0
        %v3526 = vmin.f32 %v3270, 1.0
        %v3527 = vmin.f32 %v3271, 1.0
        %v3528 = vmin.f32 %v3272, 1.0
        %v3529 = vmin.f32 %v3273, 1.0
        %v3530 = vmin.f32 %v3274, 1.0
        %v3531 = vmin.f32 %v3275, 1.0
        %v3532 = vmin.f32 %v3276, 1.0
        %v3533 = vmin.f32 %v3277, 1.0
        %v3534 = vmin.f32 %v3278, 1.0
        %v3535 = vmin.f32 %v3279, 1.0
        %v3536 = vmin.f32 %v3280, 1.0
        %v3537 = vmin.f32 %v3281, 1.0
        %v3538 = vmin.f32 %v3282, 1.0
        %v3539 = vmin.f32 %v3283, 1.0
        %v3540 = vmin.f32 %v3284, 1.0
        %v3541 = vmin.f32 %v3285, 1.0
        %v3542 = vmin.f32 %v3286, 1.0
        %v3543 = vmin.f32 %v3287, 1.0
        %v3544 = vmin.f32 %v3288, 1.0
        %v3545 = vmin.f32 %v3289, 1.0
        %v3546 = vmin.f32 %v3290, 1.0
        %v3547 = vmin.f32 %v3291, 1.0
        %v3548 = vmin.f32 %v3292, 1.0
        %v3549 = vmin.f32 %v3293, 1.0
        %v3550 = vmin.f32 %v3294, 1.0
        %v3551 = vmin.f32 %v3295, 1.0
        %v3552 = vmin.f32 %v3296, 1.0
        %v3553 = vmin.f32 %v3297, 1.0
        %v3554 = vmin.f32 %v3298, 1.0
        %v3555 = vmin.f32 %v3299, 1.0
        %v3556 = vmin.f32 %v3300, 1.0
        %v3557 = vmin.f32 %v3301, 1.0
        %v3558 = vmin.f32 %v3302, 1.0
        %3559 = vst [vmem:[%s290] sm:$0xff] %v3303
        %3560 = vst [vmem:[%s290 + $0x8] sm:$0xff] %v3304
        %3561 = vst [vmem:[%s290 + $0x10] sm:$0xff] %v3305
        %3562 = vst [vmem:[%s290 + $0x18] sm:$0xff] %v3306
        %3563 = vst [vmem:[%s290 + $0x20] sm:$0xff] %v3307
        %3564 = vst [vmem:[%s290 + $0x28] sm:$0xff] %v3308
        %3565 = vst [vmem:[%s290 + $0x30] sm:$0xff] %v3309
        %vm3566 = vcmask 850944
        %3567 = vst.msk [vmem:[%s290 + $0x38] sm:$0xff] %vm3566, %v3310
        %3568 = vst [vmem:[%s290 + $0x40] sm:$0xff] %v3311
        %3569 = vst [vmem:[%s290 + $0x48] sm:$0xff] %v3312
        %3570 = vst [vmem:[%s290 + $0x50] sm:$0xff] %v3313
        %3571 = vst [vmem:[%s290 + $0x58] sm:$0xff] %v3314
        %3572 = vst [vmem:[%s290 + $0x60] sm:$0xff] %v3315
        %3573 = vst [vmem:[%s290 + $0x68] sm:$0xff] %v3316
        %3574 = vst [vmem:[%s290 + $0x70] sm:$0xff] %v3317
        %3575 = vst.msk [vmem:[%s290 + $0x78] sm:$0xff] %vm3566, %v3318
        %3576 = vst [vmem:[%s290 + $0x80] sm:$0xff] %v3319
        %3577 = vst [vmem:[%s290 + $0x88] sm:$0xff] %v3320
        %3578 = vst [vmem:[%s290 + $0x90] sm:$0xff] %v3321
        %3579 = vst [vmem:[%s290 + $0x98] sm:$0xff] %v3322
        %3580 = vst [vmem:[%s290 + $0xa0] sm:$0xff] %v3323
        %3581 = vst [vmem:[%s290 + $0xa8] sm:$0xff] %v3324
        %3582 = vst [vmem:[%s290 + $0xb0] sm:$0xff] %v3325
        %3583 = vst.msk [vmem:[%s290 + $0xb8] sm:$0xff] %vm3566, %v3326
        %3584 = vst [vmem:[%s290 + $0xc0] sm:$0xff] %v3327
        %3585 = vst [vmem:[%s290 + $0xc8] sm:$0xff] %v3328
        %3586 = vst [vmem:[%s290 + $0xd0] sm:$0xff] %v3329
        %3587 = vst [vmem:[%s290 + $0xd8] sm:$0xff] %v3330
        %3588 = vst [vmem:[%s290 + $0xe0] sm:$0xff] %v3331
        %3589 = vst [vmem:[%s290 + $0xe8] sm:$0xff] %v3332
        %3590 = vst [vmem:[%s290 + $0xf0] sm:$0xff] %v3333
        %3591 = vst.msk [vmem:[%s290 + $0xf8] sm:$0xff] %vm3566, %v3334
        %3592 = vst [vmem:[%s290 + $0x100] sm:$0xff] %v3335
        %3593 = vst [vmem:[%s290 + $0x108] sm:$0xff] %v3336
        %3594 = vst [vmem:[%s290 + $0x110] sm:$0xff] %v3337
        %3595 = vst [vmem:[%s290 + $0x118] sm:$0xff] %v3338
        %3596 = vst [vmem:[%s290 + $0x120] sm:$0xff] %v3339
        %3597 = vst [vmem:[%s290 + $0x128] sm:$0xff] %v3340
        %3598 = vst [vmem:[%s290 + $0x130] sm:$0xff] %v3341
        %3599 = vst.msk [vmem:[%s290 + $0x138] sm:$0xff] %vm3566, %v3342
        %3600 = vst [vmem:[%s290 + $0x140] sm:$0xff] %v3343
        %3601 = vst [vmem:[%s290 + $0x148] sm:$0xff] %v3344
        %3602 = vst [vmem:[%s290 + $0x150] sm:$0xff] %v3345
        %3603 = vst [vmem:[%s290 + $0x158] sm:$0xff] %v3346
        %3604 = vst [vmem:[%s290 + $0x160] sm:$0xff] %v3347
        %3605 = vst [vmem:[%s290 + $0x168] sm:$0xff] %v3348
        %3606 = vst [vmem:[%s290 + $0x170] sm:$0xff] %v3349
        %3607 = vst.msk [vmem:[%s290 + $0x178] sm:$0xff] %vm3566, %v3350
        %3608 = vst [vmem:[%s290 + $0x180] sm:$0xff] %v3351
        %3609 = vst [vmem:[%s290 + $0x188] sm:$0xff] %v3352
        %3610 = vst [vmem:[%s290 + $0x190] sm:$0xff] %v3353
        %3611 = vst [vmem:[%s290 + $0x198] sm:$0xff] %v3354
        %3612 = vst [vmem:[%s290 + $0x1a0] sm:$0xff] %v3355
        %3613 = vst [vmem:[%s290 + $0x1a8] sm:$0xff] %v3356
        %3614 = vst [vmem:[%s290 + $0x1b0] sm:$0xff] %v3357
        %3615 = vst.msk [vmem:[%s290 + $0x1b8] sm:$0xff] %vm3566, %v3358
        %3616 = vst [vmem:[%s290 + $0x1c0] sm:$0xff] %v3359
        %3617 = vst [vmem:[%s290 + $0x1c8] sm:$0xff] %v3360
        %3618 = vst [vmem:[%s290 + $0x1d0] sm:$0xff] %v3361
        %3619 = vst [vmem:[%s290 + $0x1d8] sm:$0xff] %v3362
        %3620 = vst [vmem:[%s290 + $0x1e0] sm:$0xff] %v3363
        %3621 = vst [vmem:[%s290 + $0x1e8] sm:$0xff] %v3364
        %3622 = vst [vmem:[%s290 + $0x1f0] sm:$0xff] %v3365
        %3623 = vst.msk [vmem:[%s290 + $0x1f8] sm:$0xff] %vm3566, %v3366
        %3624 = vst [vmem:[%s290 + $0x200] sm:$0xff] %v3367
        %3625 = vst [vmem:[%s290 + $0x208] sm:$0xff] %v3368
        %3626 = vst [vmem:[%s290 + $0x210] sm:$0xff] %v3369
        %3627 = vst [vmem:[%s290 + $0x218] sm:$0xff] %v3370
        %3628 = vst [vmem:[%s290 + $0x220] sm:$0xff] %v3371
        %3629 = vst [vmem:[%s290 + $0x228] sm:$0xff] %v3372
        %3630 = vst [vmem:[%s290 + $0x230] sm:$0xff] %v3373
        %3631 = vst.msk [vmem:[%s290 + $0x238] sm:$0xff] %vm3566, %v3374
        %3632 = vst [vmem:[%s290 + $0x240] sm:$0xff] %v3375
        %3633 = vst [vmem:[%s290 + $0x248] sm:$0xff] %v3376
        %3634 = vst [vmem:[%s290 + $0x250] sm:$0xff] %v3377
        %3635 = vst [vmem:[%s290 + $0x258] sm:$0xff] %v3378
        %3636 = vst [vmem:[%s290 + $0x260] sm:$0xff] %v3379
        %3637 = vst [vmem:[%s290 + $0x268] sm:$0xff] %v3380
        %3638 = vst [vmem:[%s290 + $0x270] sm:$0xff] %v3381
        %3639 = vst.msk [vmem:[%s290 + $0x278] sm:$0xff] %vm3566, %v3382
        %3640 = vst [vmem:[%s290 + $0x280] sm:$0xff] %v3383
        %3641 = vst [vmem:[%s290 + $0x288] sm:$0xff] %v3384
        %3642 = vst [vmem:[%s290 + $0x290] sm:$0xff] %v3385
        %3643 = vst [vmem:[%s290 + $0x298] sm:$0xff] %v3386
        %3644 = vst [vmem:[%s290 + $0x2a0] sm:$0xff] %v3387
        %3645 = vst [vmem:[%s290 + $0x2a8] sm:$0xff] %v3388
        %3646 = vst [vmem:[%s290 + $0x2b0] sm:$0xff] %v3389
        %3647 = vst.msk [vmem:[%s290 + $0x2b8] sm:$0xff] %vm3566, %v3390
        %3648 = vst [vmem:[%s290 + $0x2c0] sm:$0xff] %v3391
        %3649 = vst [vmem:[%s290 + $0x2c8] sm:$0xff] %v3392
        %3650 = vst [vmem:[%s290 + $0x2d0] sm:$0xff] %v3393
        %3651 = vst [vmem:[%s290 + $0x2d8] sm:$0xff] %v3394
        %3652 = vst [vmem:[%s290 + $0x2e0] sm:$0xff] %v3395
        %3653 = vst [vmem:[%s290 + $0x2e8] sm:$0xff] %v3396
        %3654 = vst [vmem:[%s290 + $0x2f0] sm:$0xff] %v3397
        %3655 = vst.msk [vmem:[%s290 + $0x2f8] sm:$0xff] %vm3566, %v3398
        %3656 = vst [vmem:[%s290 + $0x300] sm:$0xff] %v3399
        %3657 = vst [vmem:[%s290 + $0x308] sm:$0xff] %v3400
        %3658 = vst [vmem:[%s290 + $0x310] sm:$0xff] %v3401
        %3659 = vst [vmem:[%s290 + $0x318] sm:$0xff] %v3402
        %3660 = vst [vmem:[%s290 + $0x320] sm:$0xff] %v3403
        %3661 = vst [vmem:[%s290 + $0x328] sm:$0xff] %v3404
        %3662 = vst [vmem:[%s290 + $0x330] sm:$0xff] %v3405
        %3663 = vst.msk [vmem:[%s290 + $0x338] sm:$0xff] %vm3566, %v3406
        %3664 = vst [vmem:[%s290 + $0x340] sm:$0xff] %v3407
        %3665 = vst [vmem:[%s290 + $0x348] sm:$0xff] %v3408
        %3666 = vst [vmem:[%s290 + $0x350] sm:$0xff] %v3409
        %3667 = vst [vmem:[%s290 + $0x358] sm:$0xff] %v3410
        %3668 = vst [vmem:[%s290 + $0x360] sm:$0xff] %v3411
        %3669 = vst [vmem:[%s290 + $0x368] sm:$0xff] %v3412
        %3670 = vst [vmem:[%s290 + $0x370] sm:$0xff] %v3413
        %3671 = vst.msk [vmem:[%s290 + $0x378] sm:$0xff] %vm3566, %v3414
        %3672 = vst [vmem:[%s290 + $0x380] sm:$0xff] %v3415
        %3673 = vst [vmem:[%s290 + $0x388] sm:$0xff] %v3416
        %3674 = vst [vmem:[%s290 + $0x390] sm:$0xff] %v3417
        %3675 = vst [vmem:[%s290 + $0x398] sm:$0xff] %v3418
        %3676 = vst [vmem:[%s290 + $0x3a0] sm:$0xff] %v3419
        %3677 = vst [vmem:[%s290 + $0x3a8] sm:$0xff] %v3420
        %3678 = vst [vmem:[%s290 + $0x3b0] sm:$0xff] %v3421
        %3679 = vst.msk [vmem:[%s290 + $0x3b8] sm:$0xff] %vm3566, %v3422
        %3680 = vst [vmem:[%s290 + $0x3c0] sm:$0xff] %v3423
        %3681 = vst [vmem:[%s290 + $0x3c8] sm:$0xff] %v3424
        %3682 = vst [vmem:[%s290 + $0x3d0] sm:$0xff] %v3425
        %3683 = vst [vmem:[%s290 + $0x3d8] sm:$0xff] %v3426
        %3684 = vst [vmem:[%s290 + $0x3e0] sm:$0xff] %v3427
        %3685 = vst [vmem:[%s290 + $0x3e8] sm:$0xff] %v3428
        %3686 = vst [vmem:[%s290 + $0x3f0] sm:$0xff] %v3429
        %3687 = vst.msk [vmem:[%s290 + $0x3f8] sm:$0xff] %vm3566, %v3430
        %3688 = vst [vmem:[%s290 + $0x400] sm:$0xff] %v3431
        %3689 = vst [vmem:[%s290 + $0x408] sm:$0xff] %v3432
        %3690 = vst [vmem:[%s290 + $0x410] sm:$0xff] %v3433
        %3691 = vst [vmem:[%s290 + $0x418] sm:$0xff] %v3434
        %3692 = vst [vmem:[%s290 + $0x420] sm:$0xff] %v3435
        %3693 = vst [vmem:[%s290 + $0x428] sm:$0xff] %v3436
        %3694 = vst [vmem:[%s290 + $0x430] sm:$0xff] %v3437
        %3695 = vst.msk [vmem:[%s290 + $0x438] sm:$0xff] %vm3566, %v3438
        %3696 = vst [vmem:[%s290 + $0x440] sm:$0xff] %v3439
        %3697 = vst [vmem:[%s290 + $0x448] sm:$0xff] %v3440
        %3698 = vst [vmem:[%s290 + $0x450] sm:$0xff] %v3441
        %3699 = vst [vmem:[%s290 + $0x458] sm:$0xff] %v3442
        %3700 = vst [vmem:[%s290 + $0x460] sm:$0xff] %v3443
        %3701 = vst [vmem:[%s290 + $0x468] sm:$0xff] %v3444
        %3702 = vst [vmem:[%s290 + $0x470] sm:$0xff] %v3445
        %3703 = vst.msk [vmem:[%s290 + $0x478] sm:$0xff] %vm3566, %v3446
        %3704 = vst [vmem:[%s290 + $0x480] sm:$0xff] %v3447
        %3705 = vst [vmem:[%s290 + $0x488] sm:$0xff] %v3448
        %3706 = vst [vmem:[%s290 + $0x490] sm:$0xff] %v3449
        %3707 = vst [vmem:[%s290 + $0x498] sm:$0xff] %v3450
        %3708 = vst [vmem:[%s290 + $0x4a0] sm:$0xff] %v3451
        %3709 = vst [vmem:[%s290 + $0x4a8] sm:$0xff] %v3452
        %3710 = vst [vmem:[%s290 + $0x4b0] sm:$0xff] %v3453
        %3711 = vst.msk [vmem:[%s290 + $0x4b8] sm:$0xff] %vm3566, %v3454
        %3712 = vst [vmem:[%s290 + $0x4c0] sm:$0xff] %v3455
        %3713 = vst [vmem:[%s290 + $0x4c8] sm:$0xff] %v3456
        %3714 = vst [vmem:[%s290 + $0x4d0] sm:$0xff] %v3457
        %3715 = vst [vmem:[%s290 + $0x4d8] sm:$0xff] %v3458
        %3716 = vst [vmem:[%s290 + $0x4e0] sm:$0xff] %v3459
        %3717 = vst [vmem:[%s290 + $0x4e8] sm:$0xff] %v3460
        %3718 = vst [vmem:[%s290 + $0x4f0] sm:$0xff] %v3461
        %3719 = vst.msk [vmem:[%s290 + $0x4f8] sm:$0xff] %vm3566, %v3462
        %3720 = vst [vmem:[%s290 + $0x500] sm:$0xff] %v3463
        %3721 = vst [vmem:[%s290 + $0x508] sm:$0xff] %v3464
        %3722 = vst [vmem:[%s290 + $0x510] sm:$0xff] %v3465
        %3723 = vst [vmem:[%s290 + $0x518] sm:$0xff] %v3466
        %3724 = vst [vmem:[%s290 + $0x520] sm:$0xff] %v3467
        %3725 = vst [vmem:[%s290 + $0x528] sm:$0xff] %v3468
        %3726 = vst [vmem:[%s290 + $0x530] sm:$0xff] %v3469
        %3727 = vst.msk [vmem:[%s290 + $0x538] sm:$0xff] %vm3566, %v3470
        %3728 = vst [vmem:[%s290 + $0x540] sm:$0xff] %v3471
        %3729 = vst [vmem:[%s290 + $0x548] sm:$0xff] %v3472
        %3730 = vst [vmem:[%s290 + $0x550] sm:$0xff] %v3473
        %3731 = vst [vmem:[%s290 + $0x558] sm:$0xff] %v3474
        %3732 = vst [vmem:[%s290 + $0x560] sm:$0xff] %v3475
        %3733 = vst [vmem:[%s290 + $0x568] sm:$0xff] %v3476
        %3734 = vst [vmem:[%s290 + $0x570] sm:$0xff] %v3477
        %3735 = vst.msk [vmem:[%s290 + $0x578] sm:$0xff] %vm3566, %v3478
        %3736 = vst [vmem:[%s290 + $0x580] sm:$0xff] %v3479
        %3737 = vst [vmem:[%s290 + $0x588] sm:$0xff] %v3480
        %3738 = vst [vmem:[%s290 + $0x590] sm:$0xff] %v3481
        %3739 = vst [vmem:[%s290 + $0x598] sm:$0xff] %v3482
        %3740 = vst [vmem:[%s290 + $0x5a0] sm:$0xff] %v3483
        %3741 = vst [vmem:[%s290 + $0x5a8] sm:$0xff] %v3484
        %3742 = vst [vmem:[%s290 + $0x5b0] sm:$0xff] %v3485
        %3743 = vst.msk [vmem:[%s290 + $0x5b8] sm:$0xff] %vm3566, %v3486
        %3744 = vst [vmem:[%s290 + $0x5c0] sm:$0xff] %v3487
        %3745 = vst [vmem:[%s290 + $0x5c8] sm:$0xff] %v3488
        %3746 = vst [vmem:[%s290 + $0x5d0] sm:$0xff] %v3489
        %3747 = vst [vmem:[%s290 + $0x5d8] sm:$0xff] %v3490
        %3748 = vst [vmem:[%s290 + $0x5e0] sm:$0xff] %v3491
        %3749 = vst [vmem:[%s290 + $0x5e8] sm:$0xff] %v3492
        %3750 = vst [vmem:[%s290 + $0x5f0] sm:$0xff] %v3493
        %3751 = vst.msk [vmem:[%s290 + $0x5f8] sm:$0xff] %vm3566, %v3494
        %3752 = vst [vmem:[%s290 + $0x600] sm:$0xff] %v3495
        %3753 = vst [vmem:[%s290 + $0x608] sm:$0xff] %v3496
        %3754 = vst [vmem:[%s290 + $0x610] sm:$0xff] %v3497
        %3755 = vst [vmem:[%s290 + $0x618] sm:$0xff] %v3498
        %3756 = vst [vmem:[%s290 + $0x620] sm:$0xff] %v3499
        %3757 = vst [vmem:[%s290 + $0x628] sm:$0xff] %v3500
        %3758 = vst [vmem:[%s290 + $0x630] sm:$0xff] %v3501
        %3759 = vst.msk [vmem:[%s290 + $0x638] sm:$0xff] %vm3566, %v3502
        %3760 = vst [vmem:[%s290 + $0x640] sm:$0xff] %v3503
        %3761 = vst [vmem:[%s290 + $0x648] sm:$0xff] %v3504
        %3762 = vst [vmem:[%s290 + $0x650] sm:$0xff] %v3505
        %3763 = vst [vmem:[%s290 + $0x658] sm:$0xff] %v3506
        %3764 = vst [vmem:[%s290 + $0x660] sm:$0xff] %v3507
        %3765 = vst [vmem:[%s290 + $0x668] sm:$0xff] %v3508
        %3766 = vst [vmem:[%s290 + $0x670] sm:$0xff] %v3509
        %3767 = vst.msk [vmem:[%s290 + $0x678] sm:$0xff] %vm3566, %v3510
        %3768 = vst [vmem:[%s290 + $0x680] sm:$0xff] %v3511
        %3769 = vst [vmem:[%s290 + $0x688] sm:$0xff] %v3512
        %3770 = vst [vmem:[%s290 + $0x690] sm:$0xff] %v3513
        %3771 = vst [vmem:[%s290 + $0x698] sm:$0xff] %v3514
        %3772 = vst [vmem:[%s290 + $0x6a0] sm:$0xff] %v3515
        %3773 = vst [vmem:[%s290 + $0x6a8] sm:$0xff] %v3516
        %3774 = vst [vmem:[%s290 + $0x6b0] sm:$0xff] %v3517
        %3775 = vst.msk [vmem:[%s290 + $0x6b8] sm:$0xff] %vm3566, %v3518
        %3776 = vst [vmem:[%s290 + $0x6c0] sm:$0xff] %v3519
        %3777 = vst [vmem:[%s290 + $0x6c8] sm:$0xff] %v3520
        %3778 = vst [vmem:[%s290 + $0x6d0] sm:$0xff] %v3521
        %3779 = vst [vmem:[%s290 + $0x6d8] sm:$0xff] %v3522
        %3780 = vst [vmem:[%s290 + $0x6e0] sm:$0xff] %v3523
        %3781 = vst [vmem:[%s290 + $0x6e8] sm:$0xff] %v3524
        %3782 = vst [vmem:[%s290 + $0x6f0] sm:$0xff] %v3525
        %3783 = vst.msk [vmem:[%s290 + $0x6f8] sm:$0xff] %vm3566, %v3526
        %3784 = vst [vmem:[%s290 + $0x700] sm:$0xff] %v3527
        %3785 = vst [vmem:[%s290 + $0x708] sm:$0xff] %v3528
        %3786 = vst [vmem:[%s290 + $0x710] sm:$0xff] %v3529
        %3787 = vst [vmem:[%s290 + $0x718] sm:$0xff] %v3530
        %3788 = vst [vmem:[%s290 + $0x720] sm:$0xff] %v3531
        %3789 = vst [vmem:[%s290 + $0x728] sm:$0xff] %v3532
        %3790 = vst [vmem:[%s290 + $0x730] sm:$0xff] %v3533
        %3791 = vst.msk [vmem:[%s290 + $0x738] sm:$0xff] %vm3566, %v3534
        %3792 = vst [vmem:[%s290 + $0x740] sm:$0xff] %v3535
        %3793 = vst [vmem:[%s290 + $0x748] sm:$0xff] %v3536
        %3794 = vst [vmem:[%s290 + $0x750] sm:$0xff] %v3537
        %3795 = vst [vmem:[%s290 + $0x758] sm:$0xff] %v3538
        %3796 = vst [vmem:[%s290 + $0x760] sm:$0xff] %v3539
        %3797 = vst [vmem:[%s290 + $0x768] sm:$0xff] %v3540
        %3798 = vst [vmem:[%s290 + $0x770] sm:$0xff] %v3541
        %3799 = vst.msk [vmem:[%s290 + $0x778] sm:$0xff] %vm3566, %v3542
        %3800 = vst [vmem:[%s290 + $0x780] sm:$0xff] %v3543
        %3801 = vst [vmem:[%s290 + $0x788] sm:$0xff] %v3544
        %3802 = vst [vmem:[%s290 + $0x790] sm:$0xff] %v3545
        %3803 = vst [vmem:[%s290 + $0x798] sm:$0xff] %v3546
        %3804 = vst [vmem:[%s290 + $0x7a0] sm:$0xff] %v3547
        %3805 = vst [vmem:[%s290 + $0x7a8] sm:$0xff] %v3548
        %3806 = vst [vmem:[%s290 + $0x7b0] sm:$0xff] %v3549
        %3807 = vst.msk [vmem:[%s290 + $0x7b8] sm:$0xff] %vm3566, %v3550
        %3808 = vst [vmem:[%s290 + $0x7c0] sm:$0xff] %v3551
        %3809 = vst [vmem:[%s290 + $0x7c8] sm:$0xff] %v3552
        %3810 = vst [vmem:[%s290 + $0x7d0] sm:$0xff] %v3553
        %3811 = vst [vmem:[%s290 + $0x7d8] sm:$0xff] %v3554
        %3812 = vst [vmem:[%s290 + $0x7e0] sm:$0xff] %v3555
        %3813 = vst [vmem:[%s290 + $0x7e8] sm:$0xff] %v3556
        %3814 = vst [vmem:[%s290 + $0x7f0] sm:$0xff] %v3557
        %3815 = vst.msk [vmem:[%s290 + $0x7f8] sm:$0xff] %vm3566, %v3558
        %v3816 = vpack.c.bf16 %v3311, %v3303
        %v3817 = vpack.c.bf16 %v3312, %v3304
        %v3818 = vpack.c.bf16 %v3313, %v3305
        %v3819 = vpack.c.bf16 %v3314, %v3306
        %v3820 = vpack.c.bf16 %v3315, %v3307
        %v3821 = vpack.c.bf16 %v3316, %v3308
        %v3822 = vpack.c.bf16 %v3317, %v3309
        %v3823 = vpack.c.bf16 %v3318, %v3310
        %v3824 = vpack.c.bf16 %v3327, %v3319
        %v3825 = vpack.c.bf16 %v3328, %v3320
        %v3826 = vpack.c.bf16 %v3329, %v3321
        %v3827 = vpack.c.bf16 %v3330, %v3322
        %v3828 = vpack.c.bf16 %v3331, %v3323
        %v3829 = vpack.c.bf16 %v3332, %v3324
        %v3830 = vpack.c.bf16 %v3333, %v3325
        %v3831 = vpack.c.bf16 %v3334, %v3326
        %v3832 = vpack.c.bf16 %v3343, %v3335
        %v3833 = vpack.c.bf16 %v3344, %v3336
        %v3834 = vpack.c.bf16 %v3345, %v3337
        %v3835 = vpack.c.bf16 %v3346, %v3338
        %v3836 = vpack.c.bf16 %v3347, %v3339
        %v3837 = vpack.c.bf16 %v3348, %v3340
        %v3838 = vpack.c.bf16 %v3349, %v3341
        %v3839 = vpack.c.bf16 %v3350, %v3342
        %v3840 = vpack.c.bf16 %v3359, %v3351
        %v3841 = vpack.c.bf16 %v3360, %v3352
        %v3842 = vpack.c.bf16 %v3361, %v3353
        %v3843 = vpack.c.bf16 %v3362, %v3354
        %v3844 = vpack.c.bf16 %v3363, %v3355
        %v3845 = vpack.c.bf16 %v3364, %v3356
        %v3846 = vpack.c.bf16 %v3365, %v3357
        %v3847 = vpack.c.bf16 %v3366, %v3358
        %v3848 = vpack.c.bf16 %v3375, %v3367
        %v3849 = vpack.c.bf16 %v3376, %v3368
        %v3850 = vpack.c.bf16 %v3377, %v3369
        %v3851 = vpack.c.bf16 %v3378, %v3370
        %v3852 = vpack.c.bf16 %v3379, %v3371
        %v3853 = vpack.c.bf16 %v3380, %v3372
        %v3854 = vpack.c.bf16 %v3381, %v3373
        %v3855 = vpack.c.bf16 %v3382, %v3374
        %v3856 = vpack.c.bf16 %v3391, %v3383
        %v3857 = vpack.c.bf16 %v3392, %v3384
        %v3858 = vpack.c.bf16 %v3393, %v3385
        %v3859 = vpack.c.bf16 %v3394, %v3386
        %v3860 = vpack.c.bf16 %v3395, %v3387
        %v3861 = vpack.c.bf16 %v3396, %v3388
        %v3862 = vpack.c.bf16 %v3397, %v3389
        %v3863 = vpack.c.bf16 %v3398, %v3390
        %v3864 = vpack.c.bf16 %v3407, %v3399
        %v3865 = vpack.c.bf16 %v3408, %v3400
        %v3866 = vpack.c.bf16 %v3409, %v3401
        %v3867 = vpack.c.bf16 %v3410, %v3402
        %v3868 = vpack.c.bf16 %v3411, %v3403
        %v3869 = vpack.c.bf16 %v3412, %v3404
        %v3870 = vpack.c.bf16 %v3413, %v3405
        %v3871 = vpack.c.bf16 %v3414, %v3406
        %v3872 = vpack.c.bf16 %v3423, %v3415
        %v3873 = vpack.c.bf16 %v3424, %v3416
        %v3874 = vpack.c.bf16 %v3425, %v3417
        %v3875 = vpack.c.bf16 %v3426, %v3418
        %v3876 = vpack.c.bf16 %v3427, %v3419
        %v3877 = vpack.c.bf16 %v3428, %v3420
        %v3878 = vpack.c.bf16 %v3429, %v3421
        %v3879 = vpack.c.bf16 %v3430, %v3422
        %v3880 = vpack.c.bf16 %v3439, %v3431
        %v3881 = vpack.c.bf16 %v3440, %v3432
        %v3882 = vpack.c.bf16 %v3441, %v3433
        %v3883 = vpack.c.bf16 %v3442, %v3434
        %v3884 = vpack.c.bf16 %v3443, %v3435
        %v3885 = vpack.c.bf16 %v3444, %v3436
        %v3886 = vpack.c.bf16 %v3445, %v3437
        %v3887 = vpack.c.bf16 %v3446, %v3438
        %v3888 = vpack.c.bf16 %v3455, %v3447
        %v3889 = vpack.c.bf16 %v3456, %v3448
        %v3890 = vpack.c.bf16 %v3457, %v3449
        %v3891 = vpack.c.bf16 %v3458, %v3450
        %v3892 = vpack.c.bf16 %v3459, %v3451
        %v3893 = vpack.c.bf16 %v3460, %v3452
        %v3894 = vpack.c.bf16 %v3461, %v3453
        %v3895 = vpack.c.bf16 %v3462, %v3454
        %v3896 = vpack.c.bf16 %v3471, %v3463
        %v3897 = vpack.c.bf16 %v3472, %v3464
        %v3898 = vpack.c.bf16 %v3473, %v3465
        %v3899 = vpack.c.bf16 %v3474, %v3466
        %v3900 = vpack.c.bf16 %v3475, %v3467
        %v3901 = vpack.c.bf16 %v3476, %v3468
        %v3902 = vpack.c.bf16 %v3477, %v3469
        %v3903 = vpack.c.bf16 %v3478, %v3470
        %v3904 = vpack.c.bf16 %v3487, %v3479
        %v3905 = vpack.c.bf16 %v3488, %v3480
        %v3906 = vpack.c.bf16 %v3489, %v3481
        %v3907 = vpack.c.bf16 %v3490, %v3482
        %v3908 = vpack.c.bf16 %v3491, %v3483
        %v3909 = vpack.c.bf16 %v3492, %v3484
        %v3910 = vpack.c.bf16 %v3493, %v3485
        %v3911 = vpack.c.bf16 %v3494, %v3486
        %v3912 = vpack.c.bf16 %v3503, %v3495
        %v3913 = vpack.c.bf16 %v3504, %v3496
        %v3914 = vpack.c.bf16 %v3505, %v3497
        %v3915 = vpack.c.bf16 %v3506, %v3498
        %v3916 = vpack.c.bf16 %v3507, %v3499
        %v3917 = vpack.c.bf16 %v3508, %v3500
        %v3918 = vpack.c.bf16 %v3509, %v3501
        %v3919 = vpack.c.bf16 %v3510, %v3502
        %v3920 = vpack.c.bf16 %v3519, %v3511
        %v3921 = vpack.c.bf16 %v3520, %v3512
        %v3922 = vpack.c.bf16 %v3521, %v3513
        %v3923 = vpack.c.bf16 %v3522, %v3514
        %v3924 = vpack.c.bf16 %v3523, %v3515
        %v3925 = vpack.c.bf16 %v3524, %v3516
        %v3926 = vpack.c.bf16 %v3525, %v3517
        %v3927 = vpack.c.bf16 %v3526, %v3518
        %v3928 = vpack.c.bf16 %v3535, %v3527
        %v3929 = vpack.c.bf16 %v3536, %v3528
        %v3930 = vpack.c.bf16 %v3537, %v3529
        %v3931 = vpack.c.bf16 %v3538, %v3530
        %v3932 = vpack.c.bf16 %v3539, %v3531
        %v3933 = vpack.c.bf16 %v3540, %v3532
        %v3934 = vpack.c.bf16 %v3541, %v3533
        %v3935 = vpack.c.bf16 %v3542, %v3534
        %v3936 = vpack.c.bf16 %v3551, %v3543
        %v3937 = vpack.c.bf16 %v3552, %v3544
        %v3938 = vpack.c.bf16 %v3553, %v3545
        %v3939 = vpack.c.bf16 %v3554, %v3546
        %v3940 = vpack.c.bf16 %v3555, %v3547
        %v3941 = vpack.c.bf16 %v3556, %v3548
        %v3942 = vpack.c.bf16 %v3557, %v3549
        %v3943 = vpack.c.bf16 %v3558, %v3550
        %v3944 = vld [vmem:[%s3] sm:$0xff]
        %v3945 = vld [vmem:[%s3 + $0x8] sm:$0xf]
        %v3946 = vld [vmem:[%s3 + $0xc] sm:$0xff]
        %v3947 = vld [vmem:[%s3 + $0x14] sm:$0xf]
        %v3948 = vld [vmem:[%s3 + $0x18] sm:$0xff]
        %v3949 = vld [vmem:[%s3 + $0x20] sm:$0xf]
        %v3950 = vld [vmem:[%s3 + $0x24] sm:$0xff]
        %v3951 = vld [vmem:[%s3 + $0x2c] sm:$0xf]
        %v3952 = vld [vmem:[%s3 + $0x30] sm:$0xff]
        %v3953 = vld [vmem:[%s3 + $0x38] sm:$0xf]
        %v3954 = vld [vmem:[%s3 + $0x3c] sm:$0xff]
        %v3955 = vld [vmem:[%s3 + $0x44] sm:$0xf]
        %v3956 = vld [vmem:[%s3 + $0x48] sm:$0xff]
        %v3957 = vld [vmem:[%s3 + $0x50] sm:$0xf]
        %v3958 = vld [vmem:[%s3 + $0x54] sm:$0xff]
        %v3959 = vld [vmem:[%s3 + $0x5c] sm:$0xf]
        %v3960 = vld [vmem:[%s3 + $0x60] sm:$0xff]
        %v3961 = vld [vmem:[%s3 + $0x68] sm:$0xf]
        %v3962 = vld [vmem:[%s3 + $0x6c] sm:$0xff]
        %v3963 = vld [vmem:[%s3 + $0x74] sm:$0xf]
        %v3964 = vld [vmem:[%s3 + $0x78] sm:$0xff]
        %v3965 = vld [vmem:[%s3 + $0x80] sm:$0xf]
        %v3966 = vld [vmem:[%s3 + $0x84] sm:$0xff]
        %v3967 = vld [vmem:[%s3 + $0x8c] sm:$0xf]
        %v3968 = vld [vmem:[%s3 + $0x90] sm:$0xff]
        %v3969 = vld [vmem:[%s3 + $0x98] sm:$0xf]
        %v3970 = vld [vmem:[%s3 + $0x9c] sm:$0xff]
        %v3971 = vld [vmem:[%s3 + $0xa4] sm:$0xf]
        %v3972 = vld [vmem:[%s3 + $0xa8] sm:$0xff]
        %v3973 = vld [vmem:[%s3 + $0xb0] sm:$0xf]
        %v3974 = vld [vmem:[%s3 + $0xb4] sm:$0xff]
        %v3975 = vld [vmem:[%s3 + $0xbc] sm:$0xf]
        %v3976 = vld [vmem:[%s3 + $0xc0] sm:$0xff]
        %v3977 = vld [vmem:[%s3 + $0xc8] sm:$0xf]
        %v3978 = vld [vmem:[%s3 + $0xcc] sm:$0xff]
        %v3979 = vld [vmem:[%s3 + $0xd4] sm:$0xf]
        %v3980 = vld [vmem:[%s3 + $0xd8] sm:$0xff]
        %v3981 = vld [vmem:[%s3 + $0xe0] sm:$0xf]
        %v3982 = vld [vmem:[%s3 + $0xe4] sm:$0xff]
        %v3983 = vld [vmem:[%s3 + $0xec] sm:$0xf]
        %v3984 = vld [vmem:[%s3 + $0xf0] sm:$0xff]
        %v3985 = vld [vmem:[%s3 + $0xf8] sm:$0xf]
        %v3986 = vld [vmem:[%s3 + $0xfc] sm:$0xff]
        %v3987 = vld [vmem:[%s3 + $0x104] sm:$0xf]
        %v3988 = vld [vmem:[%s3 + $0x108] sm:$0xff]
        %v3989 = vld [vmem:[%s3 + $0x110] sm:$0xf]
        %v3990 = vld [vmem:[%s3 + $0x114] sm:$0xff]
        %v3991 = vld [vmem:[%s3 + $0x11c] sm:$0xf]
        %v3992 = vld [vmem:[%s3 + $0x120] sm:$0xff]
        %v3993 = vld [vmem:[%s3 + $0x128] sm:$0xf]
        %v3994 = vld [vmem:[%s3 + $0x12c] sm:$0xff]
        %v3995 = vld [vmem:[%s3 + $0x134] sm:$0xf]
        %v3996 = vld [vmem:[%s3 + $0x138] sm:$0xff]
        %v3997 = vld [vmem:[%s3 + $0x140] sm:$0xf]
        %v3998 = vld [vmem:[%s3 + $0x144] sm:$0xff]
        %v3999 = vld [vmem:[%s3 + $0x14c] sm:$0xf]
        %v4000 = vld [vmem:[%s3 + $0x150] sm:$0xff]
        %v4001 = vld [vmem:[%s3 + $0x158] sm:$0xf]
        %v4002 = vld [vmem:[%s3 + $0x15c] sm:$0xff]
        %v4003 = vld [vmem:[%s3 + $0x164] sm:$0xf]
        %v4004 = vld [vmem:[%s3 + $0x168] sm:$0xff]
        %v4005 = vld [vmem:[%s3 + $0x170] sm:$0xf]
        %v4006 = vld [vmem:[%s3 + $0x174] sm:$0xff]
        %v4007 = vld [vmem:[%s3 + $0x17c] sm:$0xf]
        %v4008 = vld [vmem:[%s3 + $0x180] sm:$0xff]
        %v4009 = vld [vmem:[%s3 + $0x188] sm:$0xf]
        %v4010 = vld [vmem:[%s3 + $0x18c] sm:$0xff]
        %v4011 = vld [vmem:[%s3 + $0x194] sm:$0xf]
        %v4012 = vld [vmem:[%s3 + $0x198] sm:$0xff]
        %v4013 = vld [vmem:[%s3 + $0x1a0] sm:$0xf]
        %v4014 = vld [vmem:[%s3 + $0x1a4] sm:$0xff]
        %v4015 = vld [vmem:[%s3 + $0x1ac] sm:$0xf]
        %v4016 = vld [vmem:[%s3 + $0x1b0] sm:$0xff]
        %v4017 = vld [vmem:[%s3 + $0x1b8] sm:$0xf]
        %v4018 = vld [vmem:[%s3 + $0x1bc] sm:$0xff]
        %v4019 = vld [vmem:[%s3 + $0x1c4] sm:$0xf]
        %v4020 = vld [vmem:[%s3 + $0x1c8] sm:$0xff]
        %v4021 = vld [vmem:[%s3 + $0x1d0] sm:$0xf]
        %v4022 = vld [vmem:[%s3 + $0x1d4] sm:$0xff]
        %v4023 = vld [vmem:[%s3 + $0x1dc] sm:$0xf]
        %v4024 = vld [vmem:[%s3 + $0x1e0] sm:$0xff]
        %v4025 = vld [vmem:[%s3 + $0x1e8] sm:$0xf]
        %v4026 = vld [vmem:[%s3 + $0x1ec] sm:$0xff]
        %v4027 = vld [vmem:[%s3 + $0x1f4] sm:$0xf]
        %v4028 = vld [vmem:[%s3 + $0x1f8] sm:$0xff]
        %v4029 = vld [vmem:[%s3 + $0x200] sm:$0xf]
        %v4030 = vld [vmem:[%s3 + $0x204] sm:$0xff]
        %v4031 = vld [vmem:[%s3 + $0x20c] sm:$0xf]
        %v4032 = vld [vmem:[%s3 + $0x210] sm:$0xff]
        %v4033 = vld [vmem:[%s3 + $0x218] sm:$0xf]
        %v4034 = vld [vmem:[%s3 + $0x21c] sm:$0xff]
        %v4035 = vld [vmem:[%s3 + $0x224] sm:$0xf]
        %v4036 = vld [vmem:[%s3 + $0x228] sm:$0xff]
        %v4037 = vld [vmem:[%s3 + $0x230] sm:$0xf]
        %v4038 = vld [vmem:[%s3 + $0x234] sm:$0xff]
        %v4039 = vld [vmem:[%s3 + $0x23c] sm:$0xf]
        %v4040 = vld [vmem:[%s3 + $0x240] sm:$0xff]
        %v4041 = vld [vmem:[%s3 + $0x248] sm:$0xf]
        %v4042 = vld [vmem:[%s3 + $0x24c] sm:$0xff]
        %v4043 = vld [vmem:[%s3 + $0x254] sm:$0xf]
        %v4044 = vld [vmem:[%s3 + $0x258] sm:$0xff]
        %v4045 = vld [vmem:[%s3 + $0x260] sm:$0xf]
        %v4046 = vld [vmem:[%s3 + $0x264] sm:$0xff]
        %v4047 = vld [vmem:[%s3 + $0x26c] sm:$0xf]
        %v4048 = vld [vmem:[%s3 + $0x270] sm:$0xff]
        %v4049 = vld [vmem:[%s3 + $0x278] sm:$0xf]
        %v4050 = vld [vmem:[%s3 + $0x27c] sm:$0xff]
        %v4051 = vld [vmem:[%s3 + $0x284] sm:$0xf]
        %v4052 = vld [vmem:[%s3 + $0x288] sm:$0xff]
        %v4053 = vld [vmem:[%s3 + $0x290] sm:$0xf]
        %v4054 = vld [vmem:[%s3 + $0x294] sm:$0xff]
        %v4055 = vld [vmem:[%s3 + $0x29c] sm:$0xf]
        %v4056 = vld [vmem:[%s3 + $0x2a0] sm:$0xff]
        %v4057 = vld [vmem:[%s3 + $0x2a8] sm:$0xf]
        %v4058 = vld [vmem:[%s3 + $0x2ac] sm:$0xff]
        %v4059 = vld [vmem:[%s3 + $0x2b4] sm:$0xf]
        %v4060 = vld [vmem:[%s3 + $0x2b8] sm:$0xff]
        %v4061 = vld [vmem:[%s3 + $0x2c0] sm:$0xf]
        %v4062 = vld [vmem:[%s3 + $0x2c4] sm:$0xff]
        %v4063 = vld [vmem:[%s3 + $0x2cc] sm:$0xf]
        %v4064 = vld [vmem:[%s3 + $0x2d0] sm:$0xff]
        %v4065 = vld [vmem:[%s3 + $0x2d8] sm:$0xf]
        %v4066 = vld [vmem:[%s3 + $0x2dc] sm:$0xff]
        %v4067 = vld [vmem:[%s3 + $0x2e4] sm:$0xf]
        %v4068 = vld [vmem:[%s3 + $0x2e8] sm:$0xff]
        %v4069 = vld [vmem:[%s3 + $0x2f0] sm:$0xf]
        %v4070 = vld [vmem:[%s3 + $0x2f4] sm:$0xff]
        %v4071 = vld [vmem:[%s3 + $0x2fc] sm:$0xf]
        %v4072 = vld [vmem:[%s3 + $0x300] sm:$0xff]
        %v4073 = vld [vmem:[%s3 + $0x308] sm:$0xf]
        %v4074 = vld [vmem:[%s3 + $0x30c] sm:$0xff]
        %v4075 = vld [vmem:[%s3 + $0x314] sm:$0xf]
        %v4076 = vld [vmem:[%s3 + $0x318] sm:$0xff]
        %v4077 = vld [vmem:[%s3 + $0x320] sm:$0xf]
        %v4078 = vld [vmem:[%s3 + $0x324] sm:$0xff]
        %v4079 = vld [vmem:[%s3 + $0x32c] sm:$0xf]
        %v4080 = vld [vmem:[%s3 + $0x330] sm:$0xff]
        %v4081 = vld [vmem:[%s3 + $0x338] sm:$0xf]
        %v4082 = vld [vmem:[%s3 + $0x33c] sm:$0xff]
        %v4083 = vld [vmem:[%s3 + $0x344] sm:$0xf]
        %v4084 = vld [vmem:[%s3 + $0x348] sm:$0xff]
        %v4085 = vld [vmem:[%s3 + $0x350] sm:$0xf]
        %v4086 = vld [vmem:[%s3 + $0x354] sm:$0xff]
        %v4087 = vld [vmem:[%s3 + $0x35c] sm:$0xf]
        %v4088 = vld [vmem:[%s3 + $0x360] sm:$0xff]
        %v4089 = vld [vmem:[%s3 + $0x368] sm:$0xf]
        %v4090 = vld [vmem:[%s3 + $0x36c] sm:$0xff]
        %v4091 = vld [vmem:[%s3 + $0x374] sm:$0xf]
        %v4092 = vld [vmem:[%s3 + $0x378] sm:$0xff]
        %v4093 = vld [vmem:[%s3 + $0x380] sm:$0xf]
        %v4094 = vld [vmem:[%s3 + $0x384] sm:$0xff]
        %v4095 = vld [vmem:[%s3 + $0x38c] sm:$0xf]
        %v4096 = vld [vmem:[%s3 + $0x390] sm:$0xff]
        %v4097 = vld [vmem:[%s3 + $0x398] sm:$0xf]
        %v4098 = vld [vmem:[%s3 + $0x39c] sm:$0xff]
        %v4099 = vld [vmem:[%s3 + $0x3a4] sm:$0xf]
        %v4100 = vld [vmem:[%s3 + $0x3a8] sm:$0xff]
        %v4101 = vld [vmem:[%s3 + $0x3b0] sm:$0xf]
        %v4102 = vld [vmem:[%s3 + $0x3b4] sm:$0xff]
        %v4103 = vld [vmem:[%s3 + $0x3bc] sm:$0xf]
        %v4104 = vld [vmem:[%s3 + $0x3c0] sm:$0xff]
        %v4105 = vld [vmem:[%s3 + $0x3c8] sm:$0xf]
        %v4106 = vld [vmem:[%s3 + $0x3cc] sm:$0xff]
        %v4107 = vld [vmem:[%s3 + $0x3d4] sm:$0xf]
        %v4108 = vld [vmem:[%s3 + $0x3d8] sm:$0xff]
        %v4109 = vld [vmem:[%s3 + $0x3e0] sm:$0xf]
        %v4110 = vld [vmem:[%s3 + $0x3e4] sm:$0xff]
        %v4111 = vld [vmem:[%s3 + $0x3ec] sm:$0xf]
        %v4112 = vld [vmem:[%s3 + $0x3f0] sm:$0xff]
        %v4113 = vld [vmem:[%s3 + $0x3f8] sm:$0xf]
        %v4114 = vld [vmem:[%s3 + $0x3fc] sm:$0xff]
        %v4115 = vld [vmem:[%s3 + $0x404] sm:$0xf]
        %v4116 = vld [vmem:[%s3 + $0x408] sm:$0xff]
        %v4117 = vld [vmem:[%s3 + $0x410] sm:$0xf]
        %v4118 = vld [vmem:[%s3 + $0x414] sm:$0xff]
        %v4119 = vld [vmem:[%s3 + $0x41c] sm:$0xf]
        %v4120 = vld [vmem:[%s3 + $0x420] sm:$0xff]
        %v4121 = vld [vmem:[%s3 + $0x428] sm:$0xf]
        %v4122 = vld [vmem:[%s3 + $0x42c] sm:$0xff]
        %v4123 = vld [vmem:[%s3 + $0x434] sm:$0xf]
        %v4124 = vld [vmem:[%s3 + $0x438] sm:$0xff]
        %v4125 = vld [vmem:[%s3 + $0x440] sm:$0xf]
        %v4126 = vld [vmem:[%s3 + $0x444] sm:$0xff]
        %v4127 = vld [vmem:[%s3 + $0x44c] sm:$0xf]
        %v4128 = vld [vmem:[%s3 + $0x450] sm:$0xff]
        %v4129 = vld [vmem:[%s3 + $0x458] sm:$0xf]
        %v4130 = vld [vmem:[%s3 + $0x45c] sm:$0xff]
        %v4131 = vld [vmem:[%s3 + $0x464] sm:$0xf]
        %v4132 = vld [vmem:[%s3 + $0x468] sm:$0xff]
        %v4133 = vld [vmem:[%s3 + $0x470] sm:$0xf]
        %v4134 = vld [vmem:[%s3 + $0x474] sm:$0xff]
        %v4135 = vld [vmem:[%s3 + $0x47c] sm:$0xf]
        %v4136 = vld [vmem:[%s3 + $0x480] sm:$0xff]
        %v4137 = vld [vmem:[%s3 + $0x488] sm:$0xf]
        %v4138 = vld [vmem:[%s3 + $0x48c] sm:$0xff]
        %v4139 = vld [vmem:[%s3 + $0x494] sm:$0xf]
        %v4140 = vld [vmem:[%s3 + $0x498] sm:$0xff]
        %v4141 = vld [vmem:[%s3 + $0x4a0] sm:$0xf]
        %v4142 = vld [vmem:[%s3 + $0x4a4] sm:$0xff]
        %v4143 = vld [vmem:[%s3 + $0x4ac] sm:$0xf]
        %v4144 = vld [vmem:[%s3 + $0x4b0] sm:$0xff]
        %v4145 = vld [vmem:[%s3 + $0x4b8] sm:$0xf]
        %v4146 = vld [vmem:[%s3 + $0x4bc] sm:$0xff]
        %v4147 = vld [vmem:[%s3 + $0x4c4] sm:$0xf]
        %v4148 = vld [vmem:[%s3 + $0x4c8] sm:$0xff]
        %v4149 = vld [vmem:[%s3 + $0x4d0] sm:$0xf]
        %v4150 = vld [vmem:[%s3 + $0x4d4] sm:$0xff]
        %v4151 = vld [vmem:[%s3 + $0x4dc] sm:$0xf]
        %v4152 = vld [vmem:[%s3 + $0x4e0] sm:$0xff]
        %v4153 = vld [vmem:[%s3 + $0x4e8] sm:$0xf]
        %v4154 = vld [vmem:[%s3 + $0x4ec] sm:$0xff]
        %v4155 = vld [vmem:[%s3 + $0x4f4] sm:$0xf]
        %v4156 = vld [vmem:[%s3 + $0x4f8] sm:$0xff]
        %v4157 = vld [vmem:[%s3 + $0x500] sm:$0xf]
        %v4158 = vld [vmem:[%s3 + $0x504] sm:$0xff]
        %v4159 = vld [vmem:[%s3 + $0x50c] sm:$0xf]
        %v4160 = vld [vmem:[%s3 + $0x510] sm:$0xff]
        %v4161 = vld [vmem:[%s3 + $0x518] sm:$0xf]
        %v4162 = vld [vmem:[%s3 + $0x51c] sm:$0xff]
        %v4163 = vld [vmem:[%s3 + $0x524] sm:$0xf]
        %v4164 = vld [vmem:[%s3 + $0x528] sm:$0xff]
        %v4165 = vld [vmem:[%s3 + $0x530] sm:$0xf]
        %v4166 = vld [vmem:[%s3 + $0x534] sm:$0xff]
        %v4167 = vld [vmem:[%s3 + $0x53c] sm:$0xf]
        %v4168 = vld [vmem:[%s3 + $0x540] sm:$0xff]
        %v4169 = vld [vmem:[%s3 + $0x548] sm:$0xf]
        %v4170 = vld [vmem:[%s3 + $0x54c] sm:$0xff]
        %v4171 = vld [vmem:[%s3 + $0x554] sm:$0xf]
        %v4172 = vld [vmem:[%s3 + $0x558] sm:$0xff]
        %v4173 = vld [vmem:[%s3 + $0x560] sm:$0xf]
        %v4174 = vld [vmem:[%s3 + $0x564] sm:$0xff]
        %v4175 = vld [vmem:[%s3 + $0x56c] sm:$0xf]
        %v4176 = vld [vmem:[%s3 + $0x570] sm:$0xff]
        %v4177 = vld [vmem:[%s3 + $0x578] sm:$0xf]
        %v4178 = vld [vmem:[%s3 + $0x57c] sm:$0xff]
        %v4179 = vld [vmem:[%s3 + $0x584] sm:$0xf]
        %v4180 = vld [vmem:[%s3 + $0x588] sm:$0xff]
        %v4181 = vld [vmem:[%s3 + $0x590] sm:$0xf]
        %v4182 = vld [vmem:[%s3 + $0x594] sm:$0xff]
        %v4183 = vld [vmem:[%s3 + $0x59c] sm:$0xf]
        %v4184 = vld [vmem:[%s3 + $0x5a0] sm:$0xff]
        %v4185 = vld [vmem:[%s3 + $0x5a8] sm:$0xf]
        %v4186 = vld [vmem:[%s3 + $0x5ac] sm:$0xff]
        %v4187 = vld [vmem:[%s3 + $0x5b4] sm:$0xf]
        %v4188 = vld [vmem:[%s3 + $0x5b8] sm:$0xff]
        %v4189 = vld [vmem:[%s3 + $0x5c0] sm:$0xf]
        %v4190 = vld [vmem:[%s3 + $0x5c4] sm:$0xff]
        %v4191 = vld [vmem:[%s3 + $0x5cc] sm:$0xf]
        %v4192 = vld [vmem:[%s3 + $0x5d0] sm:$0xff]
        %v4193 = vld [vmem:[%s3 + $0x5d8] sm:$0xf]
        %v4194 = vld [vmem:[%s4] sm:$0x7]
        %v4196 = vlaneseq
        %v4197 = vshrl.u32 %v4196, 7
        %v4198 = vsub.s32 0, %v4197
        %v4199 = vrot.slane %v4194, %v4198
        %v4200 = vlaneseq
        %v4201 = vshrl.u32 %v4200, 7
        %v4202 = vsub.s32 1, %v4201
        %v4203 = vrot.slane %v4194, %v4202
        %v4204 = vlaneseq
        %v4205 = vshrl.u32 %v4204, 7
        %v4206 = vsub.s32 2, %v4205
        %v4207 = vrot.slane %v4194, %v4206
        %v4461 = vunpack.c.l.b16 %v3944
        %v4462 = vunpack.c.h.b16 %v3944
        %v4463 = vunpack.c.l.b16 %v3945
        %v4464 = vunpack.c.l.b16 %v3946
        %v4465 = vunpack.c.h.b16 %v3946
        %v4466 = vunpack.c.l.b16 %v3947
        %v4467 = vunpack.c.l.b16 %v3948
        %v4468 = vunpack.c.h.b16 %v3948
        %v4469 = vunpack.c.l.b16 %v3949
        %v4470 = vunpack.c.l.b16 %v3950
        %v4471 = vunpack.c.h.b16 %v3950
        %v4472 = vunpack.c.l.b16 %v3951
        %v4473 = vunpack.c.l.b16 %v3952
        %v4474 = vunpack.c.h.b16 %v3952
        %v4475 = vunpack.c.l.b16 %v3953
        %v4476 = vunpack.c.l.b16 %v3954
        %v4477 = vunpack.c.h.b16 %v3954
        %v4478 = vunpack.c.l.b16 %v3955
        %v4479 = vunpack.c.l.b16 %v3956
        %v4480 = vunpack.c.h.b16 %v3956
        %v4481 = vunpack.c.l.b16 %v3957
        %v4482 = vunpack.c.l.b16 %v3958
        %v4483 = vunpack.c.h.b16 %v3958
        %v4484 = vunpack.c.l.b16 %v3959
        %v4485 = vunpack.c.l.b16 %v3960
        %v4486 = vunpack.c.h.b16 %v3960
        %v4487 = vunpack.c.l.b16 %v3961
        %v4488 = vunpack.c.l.b16 %v3962
        %v4489 = vunpack.c.h.b16 %v3962
        %v4490 = vunpack.c.l.b16 %v3963
        %v4491 = vunpack.c.l.b16 %v3964
        %v4492 = vunpack.c.h.b16 %v3964
        %v4493 = vunpack.c.l.b16 %v3965
        %v4494 = vunpack.c.l.b16 %v3966
        %v4495 = vunpack.c.h.b16 %v3966
        %v4496 = vunpack.c.l.b16 %v3967
        %v4497 = vunpack.c.l.b16 %v3968
        %v4498 = vunpack.c.h.b16 %v3968
        %v4499 = vunpack.c.l.b16 %v3969
        %v4500 = vunpack.c.l.b16 %v3970
        %v4501 = vunpack.c.h.b16 %v3970
        %v4502 = vunpack.c.l.b16 %v3971
        %v4503 = vunpack.c.l.b16 %v3972
        %v4504 = vunpack.c.h.b16 %v3972
        %v4505 = vunpack.c.l.b16 %v3973
        %v4506 = vunpack.c.l.b16 %v3974
        %v4507 = vunpack.c.h.b16 %v3974
        %v4508 = vunpack.c.l.b16 %v3975
        %v4509 = vunpack.c.l.b16 %v3976
        %v4510 = vunpack.c.h.b16 %v3976
        %v4511 = vunpack.c.l.b16 %v3977
        %v4512 = vunpack.c.l.b16 %v3978
        %v4513 = vunpack.c.h.b16 %v3978
        %v4514 = vunpack.c.l.b16 %v3979
        %v4515 = vunpack.c.l.b16 %v3980
        %v4516 = vunpack.c.h.b16 %v3980
        %v4517 = vunpack.c.l.b16 %v3981
        %v4518 = vunpack.c.l.b16 %v3982
        %v4519 = vunpack.c.h.b16 %v3982
        %v4520 = vunpack.c.l.b16 %v3983
        %v4521 = vunpack.c.l.b16 %v3984
        %v4522 = vunpack.c.h.b16 %v3984
        %v4523 = vunpack.c.l.b16 %v3985
        %v4524 = vunpack.c.l.b16 %v3986
        %v4525 = vunpack.c.h.b16 %v3986
        %v4526 = vunpack.c.l.b16 %v3987
        %v4527 = vunpack.c.l.b16 %v3988
        %v4528 = vunpack.c.h.b16 %v3988
        %v4529 = vunpack.c.l.b16 %v3989
        %v4530 = vunpack.c.l.b16 %v3990
        %v4531 = vunpack.c.h.b16 %v3990
        %v4532 = vunpack.c.l.b16 %v3991
        %v4533 = vunpack.c.l.b16 %v3992
        %v4534 = vunpack.c.h.b16 %v3992
        %v4535 = vunpack.c.l.b16 %v3993
        %v4536 = vunpack.c.l.b16 %v3994
        %v4537 = vunpack.c.h.b16 %v3994
        %v4538 = vunpack.c.l.b16 %v3995
        %v4539 = vunpack.c.l.b16 %v3996
        %v4540 = vunpack.c.h.b16 %v3996
        %v4541 = vunpack.c.l.b16 %v3997
        %v4542 = vunpack.c.l.b16 %v3998
        %v4543 = vunpack.c.h.b16 %v3998
        %v4544 = vunpack.c.l.b16 %v3999
        %v4545 = vunpack.c.l.b16 %v4000
        %v4546 = vunpack.c.h.b16 %v4000
        %v4547 = vunpack.c.l.b16 %v4001
        %v4548 = vunpack.c.l.b16 %v4002
        %v4549 = vunpack.c.h.b16 %v4002
        %v4550 = vunpack.c.l.b16 %v4003
        %v4551 = vunpack.c.l.b16 %v4004
        %v4552 = vunpack.c.h.b16 %v4004
        %v4553 = vunpack.c.l.b16 %v4005
        %v4554 = vunpack.c.l.b16 %v4006
        %v4555 = vunpack.c.h.b16 %v4006
        %v4556 = vunpack.c.l.b16 %v4007
        %v4557 = vunpack.c.l.b16 %v4008
        %v4558 = vunpack.c.h.b16 %v4008
        %v4559 = vunpack.c.l.b16 %v4009
        %v4560 = vunpack.c.l.b16 %v4010
        %v4561 = vunpack.c.h.b16 %v4010
        %v4562 = vunpack.c.l.b16 %v4011
        %v4563 = vunpack.c.l.b16 %v4012
        %v4564 = vunpack.c.h.b16 %v4012
        %v4565 = vunpack.c.l.b16 %v4013
        %v4566 = vunpack.c.l.b16 %v4014
        %v4567 = vunpack.c.h.b16 %v4014
        %v4568 = vunpack.c.l.b16 %v4015
        %v4569 = vunpack.c.l.b16 %v4016
        %v4570 = vunpack.c.h.b16 %v4016
        %v4571 = vunpack.c.l.b16 %v4017
        %v4572 = vunpack.c.l.b16 %v4018
        %v4573 = vunpack.c.h.b16 %v4018
        %v4574 = vunpack.c.l.b16 %v4019
        %v4575 = vunpack.c.l.b16 %v4020
        %v4576 = vunpack.c.h.b16 %v4020
        %v4577 = vunpack.c.l.b16 %v4021
        %v4578 = vunpack.c.l.b16 %v4022
        %v4579 = vunpack.c.h.b16 %v4022
        %v4580 = vunpack.c.l.b16 %v4023
        %v4581 = vunpack.c.l.b16 %v4024
        %v4582 = vunpack.c.h.b16 %v4024
        %v4583 = vunpack.c.l.b16 %v4025
        %v4584 = vunpack.c.l.b16 %v4026
        %v4585 = vunpack.c.h.b16 %v4026
        %v4586 = vunpack.c.l.b16 %v4027
        %v4587 = vunpack.c.l.b16 %v4028
        %v4588 = vunpack.c.h.b16 %v4028
        %v4589 = vunpack.c.l.b16 %v4029
        %v4590 = vunpack.c.l.b16 %v4030
        %v4591 = vunpack.c.h.b16 %v4030
        %v4592 = vunpack.c.l.b16 %v4031
        %v4593 = vunpack.c.l.b16 %v4032
        %v4594 = vunpack.c.h.b16 %v4032
        %v4595 = vunpack.c.l.b16 %v4033
        %v4596 = vunpack.c.l.b16 %v4034
        %v4597 = vunpack.c.h.b16 %v4034
        %v4598 = vunpack.c.l.b16 %v4035
        %v4599 = vunpack.c.l.b16 %v4036
        %v4600 = vunpack.c.h.b16 %v4036
        %v4601 = vunpack.c.l.b16 %v4037
        %v4602 = vunpack.c.l.b16 %v4038
        %v4603 = vunpack.c.h.b16 %v4038
        %v4604 = vunpack.c.l.b16 %v4039
        %v4605 = vunpack.c.l.b16 %v4040
        %v4606 = vunpack.c.h.b16 %v4040
        %v4607 = vunpack.c.l.b16 %v4041
        %v4608 = vunpack.c.l.b16 %v4042
        %v4609 = vunpack.c.h.b16 %v4042
        %v4610 = vunpack.c.l.b16 %v4043
        %v4611 = vunpack.c.l.b16 %v4044
        %v4612 = vunpack.c.h.b16 %v4044
        %v4613 = vunpack.c.l.b16 %v4045
        %v4614 = vunpack.c.l.b16 %v4046
        %v4615 = vunpack.c.h.b16 %v4046
        %v4616 = vunpack.c.l.b16 %v4047
        %v4617 = vunpack.c.l.b16 %v4048
        %v4618 = vunpack.c.h.b16 %v4048
        %v4619 = vunpack.c.l.b16 %v4049
        %v4620 = vunpack.c.l.b16 %v4050
        %v4621 = vunpack.c.h.b16 %v4050
        %v4622 = vunpack.c.l.b16 %v4051
        %v4623 = vunpack.c.l.b16 %v4052
        %v4624 = vunpack.c.h.b16 %v4052
        %v4625 = vunpack.c.l.b16 %v4053
        %v4626 = vunpack.c.l.b16 %v4054
        %v4627 = vunpack.c.h.b16 %v4054
        %v4628 = vunpack.c.l.b16 %v4055
        %v4629 = vunpack.c.l.b16 %v4056
        %v4630 = vunpack.c.h.b16 %v4056
        %v4631 = vunpack.c.l.b16 %v4057
        %v4632 = vunpack.c.l.b16 %v4058
        %v4633 = vunpack.c.h.b16 %v4058
        %v4634 = vunpack.c.l.b16 %v4059
        %v4635 = vunpack.c.l.b16 %v4060
        %v4636 = vunpack.c.h.b16 %v4060
        %v4637 = vunpack.c.l.b16 %v4061
        %v4638 = vunpack.c.l.b16 %v4062
        %v4639 = vunpack.c.h.b16 %v4062
        %v4640 = vunpack.c.l.b16 %v4063
        %v4641 = vunpack.c.l.b16 %v4064
        %v4642 = vunpack.c.h.b16 %v4064
        %v4643 = vunpack.c.l.b16 %v4065
        %v4644 = vunpack.c.l.b16 %v4066
        %v4645 = vunpack.c.h.b16 %v4066
        %v4646 = vunpack.c.l.b16 %v4067
        %v4647 = vunpack.c.l.b16 %v4068
        %v4648 = vunpack.c.h.b16 %v4068
        %v4649 = vunpack.c.l.b16 %v4069
        %v4650 = vunpack.c.l.b16 %v4070
        %v4651 = vunpack.c.h.b16 %v4070
        %v4652 = vunpack.c.l.b16 %v4071
        %v4653 = vunpack.c.l.b16 %v4072
        %v4654 = vunpack.c.h.b16 %v4072
        %v4655 = vunpack.c.l.b16 %v4073
        %v4656 = vunpack.c.l.b16 %v4074
        %v4657 = vunpack.c.h.b16 %v4074
        %v4658 = vunpack.c.l.b16 %v4075
        %v4659 = vunpack.c.l.b16 %v4076
        %v4660 = vunpack.c.h.b16 %v4076
        %v4661 = vunpack.c.l.b16 %v4077
        %v4662 = vunpack.c.l.b16 %v4078
        %v4663 = vunpack.c.h.b16 %v4078
        %v4664 = vunpack.c.l.b16 %v4079
        %v4665 = vunpack.c.l.b16 %v4080
        %v4666 = vunpack.c.h.b16 %v4080
        %v4667 = vunpack.c.l.b16 %v4081
        %v4668 = vunpack.c.l.b16 %v4082
        %v4669 = vunpack.c.h.b16 %v4082
        %v4670 = vunpack.c.l.b16 %v4083
        %v4671 = vunpack.c.l.b16 %v4084
        %v4672 = vunpack.c.h.b16 %v4084
        %v4673 = vunpack.c.l.b16 %v4085
        %v4674 = vunpack.c.l.b16 %v4086
        %v4675 = vunpack.c.h.b16 %v4086
        %v4676 = vunpack.c.l.b16 %v4087
        %v4677 = vunpack.c.l.b16 %v4088
        %v4678 = vunpack.c.h.b16 %v4088
        %v4679 = vunpack.c.l.b16 %v4089
        %v4680 = vunpack.c.l.b16 %v4090
        %v4681 = vunpack.c.h.b16 %v4090
        %v4682 = vunpack.c.l.b16 %v4091
        %v4683 = vunpack.c.l.b16 %v4092
        %v4684 = vunpack.c.h.b16 %v4092
        %v4685 = vunpack.c.l.b16 %v4093
        %v4686 = vunpack.c.l.b16 %v4094
        %v4687 = vunpack.c.h.b16 %v4094
        %v4688 = vunpack.c.l.b16 %v4095
        %v4689 = vunpack.c.l.b16 %v4096
        %v4690 = vunpack.c.h.b16 %v4096
        %v4691 = vunpack.c.l.b16 %v4097
        %v4692 = vunpack.c.l.b16 %v4098
        %v4693 = vunpack.c.h.b16 %v4098
        %v4694 = vunpack.c.l.b16 %v4099
        %v4695 = vunpack.c.l.b16 %v4100
        %v4696 = vunpack.c.h.b16 %v4100
        %v4697 = vunpack.c.l.b16 %v4101
        %v4698 = vunpack.c.l.b16 %v4102
        %v4699 = vunpack.c.h.b16 %v4102
        %v4700 = vunpack.c.l.b16 %v4103
        %v4701 = vunpack.c.l.b16 %v4104
        %v4702 = vunpack.c.h.b16 %v4104
        %v4703 = vunpack.c.l.b16 %v4105
        %v4704 = vunpack.c.l.b16 %v4106
        %v4705 = vunpack.c.h.b16 %v4106
        %v4706 = vunpack.c.l.b16 %v4107
        %v4707 = vunpack.c.l.b16 %v4108
        %v4708 = vunpack.c.h.b16 %v4108
        %v4709 = vunpack.c.l.b16 %v4109
        %v4710 = vunpack.c.l.b16 %v4110
        %v4711 = vunpack.c.h.b16 %v4110
        %v4712 = vunpack.c.l.b16 %v4111
        %v4713 = vunpack.c.l.b16 %v4112
        %v4714 = vunpack.c.h.b16 %v4112
        %v4715 = vunpack.c.l.b16 %v4113
        %v4716 = vunpack.c.l.b16 %v4114
        %v4717 = vunpack.c.h.b16 %v4114
        %v4718 = vunpack.c.l.b16 %v4115
        %v4719 = vunpack.c.l.b16 %v4116
        %v4720 = vunpack.c.h.b16 %v4116
        %v4721 = vunpack.c.l.b16 %v4117
        %v4722 = vunpack.c.l.b16 %v4118
        %v4723 = vunpack.c.h.b16 %v4118
        %v4724 = vunpack.c.l.b16 %v4119
        %v4725 = vunpack.c.l.b16 %v4120
        %v4726 = vunpack.c.h.b16 %v4120
        %v4727 = vunpack.c.l.b16 %v4121
        %v4728 = vunpack.c.l.b16 %v4122
        %v4729 = vunpack.c.h.b16 %v4122
        %v4730 = vunpack.c.l.b16 %v4123
        %v4731 = vunpack.c.l.b16 %v4124
        %v4732 = vunpack.c.h.b16 %v4124
        %v4733 = vunpack.c.l.b16 %v4125
        %v4734 = vunpack.c.l.b16 %v4126
        %v4735 = vunpack.c.h.b16 %v4126
        %v4736 = vunpack.c.l.b16 %v4127
        %v4737 = vunpack.c.l.b16 %v4128
        %v4738 = vunpack.c.h.b16 %v4128
        %v4739 = vunpack.c.l.b16 %v4129
        %v4740 = vunpack.c.l.b16 %v4130
        %v4741 = vunpack.c.h.b16 %v4130
        %v4742 = vunpack.c.l.b16 %v4131
        %v4743 = vunpack.c.l.b16 %v4132
        %v4744 = vunpack.c.h.b16 %v4132
        %v4745 = vunpack.c.l.b16 %v4133
        %v4746 = vunpack.c.l.b16 %v4134
        %v4747 = vunpack.c.h.b16 %v4134
        %v4748 = vunpack.c.l.b16 %v4135
        %v4749 = vunpack.c.l.b16 %v4136
        %v4750 = vunpack.c.h.b16 %v4136
        %v4751 = vunpack.c.l.b16 %v4137
        %v4752 = vunpack.c.l.b16 %v4138
        %v4753 = vunpack.c.h.b16 %v4138
        %v4754 = vunpack.c.l.b16 %v4139
        %v4755 = vunpack.c.l.b16 %v4140
        %v4756 = vunpack.c.h.b16 %v4140
        %v4757 = vunpack.c.l.b16 %v4141
        %v4758 = vunpack.c.l.b16 %v4142
        %v4759 = vunpack.c.h.b16 %v4142
        %v4760 = vunpack.c.l.b16 %v4143
        %v4761 = vunpack.c.l.b16 %v4144
        %v4762 = vunpack.c.h.b16 %v4144
        %v4763 = vunpack.c.l.b16 %v4145
        %v4764 = vunpack.c.l.b16 %v4146
        %v4765 = vunpack.c.h.b16 %v4146
        %v4766 = vunpack.c.l.b16 %v4147
        %v4767 = vunpack.c.l.b16 %v4148
        %v4768 = vunpack.c.h.b16 %v4148
        %v4769 = vunpack.c.l.b16 %v4149
        %v4770 = vunpack.c.l.b16 %v4150
        %v4771 = vunpack.c.h.b16 %v4150
        %v4772 = vunpack.c.l.b16 %v4151
        %v4773 = vunpack.c.l.b16 %v4152
        %v4774 = vunpack.c.h.b16 %v4152
        %v4775 = vunpack.c.l.b16 %v4153
        %v4776 = vunpack.c.l.b16 %v4154
        %v4777 = vunpack.c.h.b16 %v4154
        %v4778 = vunpack.c.l.b16 %v4155
        %v4779 = vunpack.c.l.b16 %v4156
        %v4780 = vunpack.c.h.b16 %v4156
        %v4781 = vunpack.c.l.b16 %v4157
        %v4782 = vunpack.c.l.b16 %v4158
        %v4783 = vunpack.c.h.b16 %v4158
        %v4784 = vunpack.c.l.b16 %v4159
        %v4785 = vunpack.c.l.b16 %v4160
        %v4786 = vunpack.c.h.b16 %v4160
        %v4787 = vunpack.c.l.b16 %v4161
        %v4788 = vunpack.c.l.b16 %v4162
        %v4789 = vunpack.c.h.b16 %v4162
        %v4790 = vunpack.c.l.b16 %v4163
        %v4791 = vunpack.c.l.b16 %v4164
        %v4792 = vunpack.c.h.b16 %v4164
        %v4793 = vunpack.c.l.b16 %v4165
        %v4794 = vunpack.c.l.b16 %v4166
        %v4795 = vunpack.c.h.b16 %v4166
        %v4796 = vunpack.c.l.b16 %v4167
        %v4797 = vunpack.c.l.b16 %v4168
        %v4798 = vunpack.c.h.b16 %v4168
        %v4799 = vunpack.c.l.b16 %v4169
        %v4800 = vunpack.c.l.b16 %v4170
        %v4801 = vunpack.c.h.b16 %v4170
        %v4802 = vunpack.c.l.b16 %v4171
        %v4803 = vunpack.c.l.b16 %v4172
        %v4804 = vunpack.c.h.b16 %v4172
        %v4805 = vunpack.c.l.b16 %v4173
        %v4806 = vunpack.c.l.b16 %v4174
        %v4807 = vunpack.c.h.b16 %v4174
        %v4808 = vunpack.c.l.b16 %v4175
        %v4809 = vunpack.c.l.b16 %v4176
        %v4810 = vunpack.c.h.b16 %v4176
        %v4811 = vunpack.c.l.b16 %v4177
        %v4812 = vunpack.c.l.b16 %v4178
        %v4813 = vunpack.c.h.b16 %v4178
        %v4814 = vunpack.c.l.b16 %v4179
        %v4815 = vunpack.c.l.b16 %v4180
        %v4816 = vunpack.c.h.b16 %v4180
        %v4817 = vunpack.c.l.b16 %v4181
        %v4818 = vunpack.c.l.b16 %v4182
        %v4819 = vunpack.c.h.b16 %v4182
        %v4820 = vunpack.c.l.b16 %v4183
        %v4821 = vunpack.c.l.b16 %v4184
        %v4822 = vunpack.c.h.b16 %v4184
        %v4823 = vunpack.c.l.b16 %v4185
        %v4824 = vunpack.c.l.b16 %v4186
        %v4825 = vunpack.c.h.b16 %v4186
        %v4826 = vunpack.c.l.b16 %v4187
        %v4827 = vunpack.c.l.b16 %v4188
        %v4828 = vunpack.c.h.b16 %v4188
        %v4829 = vunpack.c.l.b16 %v4189
        %v4830 = vunpack.c.l.b16 %v4190
        %v4831 = vunpack.c.h.b16 %v4190
        %v4832 = vunpack.c.l.b16 %v4191
        %v4833 = vunpack.c.l.b16 %v4192
        %v4834 = vunpack.c.h.b16 %v4192
        %v4835 = vunpack.c.l.b16 %v4193
        %v4836 = vpack.c.b16 %v4464, %v4461
        %v4837 = vpack.c.b16 %v4465, %v4462
        %v4838 = vpack.c.b16 %v4466, %v4463
        %v4839 = vpack.c.b16 %v4470, %v4467
        %v4840 = vpack.c.b16 %v4471, %v4468
        %v4841 = vpack.c.b16 %v4472, %v4469
        %v4842 = vpack.c.b16 %v4476, %v4473
        %v4843 = vpack.c.b16 %v4477, %v4474
        %v4844 = vpack.c.b16 %v4478, %v4475
        %v4845 = vpack.c.b16 %v4482, %v4479
        %v4846 = vpack.c.b16 %v4483, %v4480
        %v4847 = vpack.c.b16 %v4484, %v4481
        %v4848 = vpack.c.b16 %v4488, %v4485
        %v4849 = vpack.c.b16 %v4489, %v4486
        %v4850 = vpack.c.b16 %v4490, %v4487
        %v4851 = vpack.c.b16 %v4494, %v4491
        %v4852 = vpack.c.b16 %v4495, %v4492
        %v4853 = vpack.c.b16 %v4496, %v4493
        %v4854 = vpack.c.b16 %v4500, %v4497
        %v4855 = vpack.c.b16 %v4501, %v4498
        %v4856 = vpack.c.b16 %v4502, %v4499
        %v4857 = vpack.c.b16 %v4506, %v4503
        %v4858 = vpack.c.b16 %v4507, %v4504
        %v4859 = vpack.c.b16 %v4508, %v4505
        %v4860 = vpack.c.b16 %v4512, %v4509
        %v4861 = vpack.c.b16 %v4513, %v4510
        %v4862 = vpack.c.b16 %v4514, %v4511
        %v4863 = vpack.c.b16 %v4518, %v4515
        %v4864 = vpack.c.b16 %v4519, %v4516
        %v4865 = vpack.c.b16 %v4520, %v4517
        %v4866 = vpack.c.b16 %v4524, %v4521
        %v4867 = vpack.c.b16 %v4525, %v4522
        %v4868 = vpack.c.b16 %v4526, %v4523
        %v4869 = vpack.c.b16 %v4530, %v4527
        %v4870 = vpack.c.b16 %v4531, %v4528
        %v4871 = vpack.c.b16 %v4532, %v4529
        %v4872 = vpack.c.b16 %v4536, %v4533
        %v4873 = vpack.c.b16 %v4537, %v4534
        %v4874 = vpack.c.b16 %v4538, %v4535
        %v4875 = vpack.c.b16 %v4542, %v4539
        %v4876 = vpack.c.b16 %v4543, %v4540
        %v4877 = vpack.c.b16 %v4544, %v4541
        %v4878 = vpack.c.b16 %v4548, %v4545
        %v4879 = vpack.c.b16 %v4549, %v4546
        %v4880 = vpack.c.b16 %v4550, %v4547
        %v4881 = vpack.c.b16 %v4554, %v4551
        %v4882 = vpack.c.b16 %v4555, %v4552
        %v4883 = vpack.c.b16 %v4556, %v4553
        %v4884 = vpack.c.b16 %v4560, %v4557
        %v4885 = vpack.c.b16 %v4561, %v4558
        %v4886 = vpack.c.b16 %v4562, %v4559
        %v4887 = vpack.c.b16 %v4566, %v4563
        %v4888 = vpack.c.b16 %v4567, %v4564
        %v4889 = vpack.c.b16 %v4568, %v4565
        %v4890 = vpack.c.b16 %v4572, %v4569
        %v4891 = vpack.c.b16 %v4573, %v4570
        %v4892 = vpack.c.b16 %v4574, %v4571
        %v4893 = vpack.c.b16 %v4578, %v4575
        %v4894 = vpack.c.b16 %v4579, %v4576
        %v4895 = vpack.c.b16 %v4580, %v4577
        %v4896 = vpack.c.b16 %v4584, %v4581
        %v4897 = vpack.c.b16 %v4585, %v4582
        %v4898 = vpack.c.b16 %v4586, %v4583
        %v4899 = vpack.c.b16 %v4590, %v4587
        %v4900 = vpack.c.b16 %v4591, %v4588
        %v4901 = vpack.c.b16 %v4592, %v4589
        %v4902 = vpack.c.b16 %v4596, %v4593
        %v4903 = vpack.c.b16 %v4597, %v4594
        %v4904 = vpack.c.b16 %v4598, %v4595
        %v4905 = vpack.c.b16 %v4602, %v4599
        %v4906 = vpack.c.b16 %v4603, %v4600
        %v4907 = vpack.c.b16 %v4604, %v4601
        %v4908 = vpack.c.b16 %v4608, %v4605
        %v4909 = vpack.c.b16 %v4609, %v4606
        %v4910 = vpack.c.b16 %v4610, %v4607
        %v4911 = vpack.c.b16 %v4614, %v4611
        %v4912 = vpack.c.b16 %v4615, %v4612
        %v4913 = vpack.c.b16 %v4616, %v4613
        %v4914 = vpack.c.b16 %v4620, %v4617
        %v4915 = vpack.c.b16 %v4621, %v4618
        %v4916 = vpack.c.b16 %v4622, %v4619
        %v4917 = vpack.c.b16 %v4626, %v4623
        %v4918 = vpack.c.b16 %v4627, %v4624
        %v4919 = vpack.c.b16 %v4628, %v4625
        %v4920 = vpack.c.b16 %v4632, %v4629
        %v4921 = vpack.c.b16 %v4633, %v4630
        %v4922 = vpack.c.b16 %v4634, %v4631
        %v4923 = vpack.c.b16 %v4638, %v4635
        %v4924 = vpack.c.b16 %v4639, %v4636
        %v4925 = vpack.c.b16 %v4640, %v4637
        %v4926 = vpack.c.b16 %v4644, %v4641
        %v4927 = vpack.c.b16 %v4645, %v4642
        %v4928 = vpack.c.b16 %v4646, %v4643
        %v4929 = vpack.c.b16 %v4650, %v4647
        %v4930 = vpack.c.b16 %v4651, %v4648
        %v4931 = vpack.c.b16 %v4652, %v4649
        %v4932 = vpack.c.b16 %v4656, %v4653
        %v4933 = vpack.c.b16 %v4657, %v4654
        %v4934 = vpack.c.b16 %v4658, %v4655
        %v4935 = vpack.c.b16 %v4662, %v4659
        %v4936 = vpack.c.b16 %v4663, %v4660
        %v4937 = vpack.c.b16 %v4664, %v4661
        %v4938 = vpack.c.b16 %v4668, %v4665
        %v4939 = vpack.c.b16 %v4669, %v4666
        %v4940 = vpack.c.b16 %v4670, %v4667
        %v4941 = vpack.c.b16 %v4674, %v4671
        %v4942 = vpack.c.b16 %v4675, %v4672
        %v4943 = vpack.c.b16 %v4676, %v4673
        %v4944 = vpack.c.b16 %v4680, %v4677
        %v4945 = vpack.c.b16 %v4681, %v4678
        %v4946 = vpack.c.b16 %v4682, %v4679
        %v4947 = vpack.c.b16 %v4686, %v4683
        %v4948 = vpack.c.b16 %v4687, %v4684
        %v4949 = vpack.c.b16 %v4688, %v4685
        %v4950 = vpack.c.b16 %v4692, %v4689
        %v4951 = vpack.c.b16 %v4693, %v4690
        %v4952 = vpack.c.b16 %v4694, %v4691
        %v4953 = vpack.c.b16 %v4698, %v4695
        %v4954 = vpack.c.b16 %v4699, %v4696
        %v4955 = vpack.c.b16 %v4700, %v4697
        %v4956 = vpack.c.b16 %v4704, %v4701
        %v4957 = vpack.c.b16 %v4705, %v4702
        %v4958 = vpack.c.b16 %v4706, %v4703
        %v4959 = vpack.c.b16 %v4710, %v4707
        %v4960 = vpack.c.b16 %v4711, %v4708
        %v4961 = vpack.c.b16 %v4712, %v4709
        %v4962 = vpack.c.b16 %v4716, %v4713
        %v4963 = vpack.c.b16 %v4717, %v4714
        %v4964 = vpack.c.b16 %v4718, %v4715
        %v4965 = vpack.c.b16 %v4722, %v4719
        %v4966 = vpack.c.b16 %v4723, %v4720
        %v4967 = vpack.c.b16 %v4724, %v4721
        %v4968 = vpack.c.b16 %v4728, %v4725
        %v4969 = vpack.c.b16 %v4729, %v4726
        %v4970 = vpack.c.b16 %v4730, %v4727
        %v4971 = vpack.c.b16 %v4734, %v4731
        %v4972 = vpack.c.b16 %v4735, %v4732
        %v4973 = vpack.c.b16 %v4736, %v4733
        %v4974 = vpack.c.b16 %v4740, %v4737
        %v4975 = vpack.c.b16 %v4741, %v4738
        %v4976 = vpack.c.b16 %v4742, %v4739
        %v4977 = vpack.c.b16 %v4746, %v4743
        %v4978 = vpack.c.b16 %v4747, %v4744
        %v4979 = vpack.c.b16 %v4748, %v4745
        %v4980 = vpack.c.b16 %v4752, %v4749
        %v4981 = vpack.c.b16 %v4753, %v4750
        %v4982 = vpack.c.b16 %v4754, %v4751
        %v4983 = vpack.c.b16 %v4758, %v4755
        %v4984 = vpack.c.b16 %v4759, %v4756
        %v4985 = vpack.c.b16 %v4760, %v4757
        %v4986 = vpack.c.b16 %v4764, %v4761
        %v4987 = vpack.c.b16 %v4765, %v4762
        %v4988 = vpack.c.b16 %v4766, %v4763
        %v4989 = vpack.c.b16 %v4770, %v4767
        %v4990 = vpack.c.b16 %v4771, %v4768
        %v4991 = vpack.c.b16 %v4772, %v4769
        %v4992 = vpack.c.b16 %v4776, %v4773
        %v4993 = vpack.c.b16 %v4777, %v4774
        %v4994 = vpack.c.b16 %v4778, %v4775
        %v4995 = vpack.c.b16 %v4782, %v4779
        %v4996 = vpack.c.b16 %v4783, %v4780
        %v4997 = vpack.c.b16 %v4784, %v4781
        %v4998 = vpack.c.b16 %v4788, %v4785
        %v4999 = vpack.c.b16 %v4789, %v4786
        %v5000 = vpack.c.b16 %v4790, %v4787
        %v5001 = vpack.c.b16 %v4794, %v4791
        %v5002 = vpack.c.b16 %v4795, %v4792
        %v5003 = vpack.c.b16 %v4796, %v4793
        %v5004 = vpack.c.b16 %v4800, %v4797
        %v5005 = vpack.c.b16 %v4801, %v4798
        %v5006 = vpack.c.b16 %v4802, %v4799
        %v5007 = vpack.c.b16 %v4806, %v4803
        %v5008 = vpack.c.b16 %v4807, %v4804
        %v5009 = vpack.c.b16 %v4808, %v4805
        %v5010 = vpack.c.b16 %v4812, %v4809
        %v5011 = vpack.c.b16 %v4813, %v4810
        %v5012 = vpack.c.b16 %v4814, %v4811
        %v5013 = vpack.c.b16 %v4818, %v4815
        %v5014 = vpack.c.b16 %v4819, %v4816
        %v5015 = vpack.c.b16 %v4820, %v4817
        %v5016 = vpack.c.b16 %v4824, %v4821
        %v5017 = vpack.c.b16 %v4825, %v4822
        %v5018 = vpack.c.b16 %v4826, %v4823
        %v5019 = vpack.c.b16 %v4830, %v4827
        %v5020 = vpack.c.b16 %v4831, %v4828
        %v5021 = vpack.c.b16 %v4832, %v4829
        %v5022 = vpack.c.b16 %v4833, %v4833
        %v5023 = vpack.c.b16 %v4834, %v4834
        %v5024 = vpack.c.b16 %v4835, %v4835
        %v5212 = vsel %vm3566, %v3823, 0
        %v5215 = vsel %vm3566, %v3831, 0
        %v5218 = vsel %vm3566, %v3839, 0
        %v5221 = vsel %vm3566, %v3847, 0
        %v5224 = vsel %vm3566, %v3855, 0
        %v5227 = vsel %vm3566, %v3863, 0
        %v5230 = vsel %vm3566, %v3871, 0
        %v5233 = vsel %vm3566, %v3879, 0
        %v5236 = vsel %vm3566, %v3887, 0
        %v5239 = vsel %vm3566, %v3895, 0
        %v5242 = vsel %vm3566, %v3903, 0
        %v5245 = vsel %vm3566, %v3911, 0
        %v5248 = vsel %vm3566, %v3919, 0
        %v5251 = vsel %vm3566, %v3927, 0
        %v5254 = vsel %vm3566, %v3935, 0
        %v5257 = vsel %vm3566, %v3943, 0
        %vm5259 = vcmask 1043456
        %v5261 = vsel %vm5259, %v5022, 0
        %v5264 = vsel %vm5259, %v5023, 0
        %v5267 = vsel %vm5259, %v5024, 0
        %5269 = vmatprep.subr.bf16.mxu0 %v4858
        %5270 = vmatpush1.bf16.msra.mxu0 %v4857
        %5271 = vmatprep.subr.bf16.mxu0 %v4855
        %5272 = vmatpush1.bf16.msra.mxu0 %v4854
        %5273 = vmatprep.subr.bf16.mxu0 %v4852
        %5274 = vmatpush1.bf16.msra.mxu0 %v4851
        %5275 = vmatprep.subr.bf16.mxu0 %v4849
        %5276 = vmatpush1.bf16.msra.mxu0 %v4848
        %5277 = vmatprep.subr.bf16.mxu0 %v4846
        %5278 = vmatpush1.bf16.msra.mxu0 %v4845
        %5279 = vmatprep.subr.bf16.mxu0 %v4843
        %5280 = vmatpush1.bf16.msra.mxu0 %v4842
        %5281 = vmatprep.subr.bf16.mxu0 %v4840
        %5282 = vmatpush1.bf16.msra.mxu0 %v4839
        %5283 = vmatprep.subr.bf16.mxu0 %v4837
        %5284 = vmatpush1.bf16.msra.mxu0 %v4836
        %5285 = vmatprep.subr.bf16.mxu0 %v4882
        %5286 = vmatpush2.bf16.msra.mxu0 %v4881
        %5287 = vmatprep.subr.bf16.mxu0 %v4879
        %5288 = vmatpush2.bf16.msra.mxu0 %v4878
        %5289 = vmatprep.subr.bf16.mxu0 %v4876
        %5290 = vmatpush2.bf16.msra.mxu0 %v4875
        %5291 = vmatprep.subr.bf16.mxu0 %v4873
        %5292 = vmatpush2.bf16.msra.mxu0 %v4872
        %5293 = vmatprep.subr.bf16.mxu0 %v4870
        %5294 = vmatpush2.bf16.msra.mxu0 %v4869
        %5295 = vmatprep.subr.bf16.mxu0 %v4867
        %5296 = vmatpush2.bf16.msra.mxu0 %v4866
        %5297 = vmatprep.subr.bf16.mxu0 %v4864
        %5298 = vmatpush2.bf16.msra.mxu0 %v4863
        %5299 = vmatprep.subr.bf16.mxu0 %v4861
        %5300 = vmatpush2.bf16.msra.mxu0 %v4860
        %5301 = vmatprep.mubr.bf16.mxu0 %v3817
        %5302 = vmatmul.mubr.bf16.gmra.mxu0 %v3816
        %v5303 = vpop.f32.mrf.mxu0
        %v5304 = vadd.f32 %v4199, %v5303
        %v5305 = vpop.f32.mrf.mxu0
        %v5306 = vadd.f32 %v4203, %v5305
        %v5307 = vpop.f32.mrf.mxu0
        %v5308 = vadd.f32 %v4199, %v5307
        %v5309 = vpop.f32.mrf.mxu0
        %v5310 = vadd.f32 %v4203, %v5309
        %5311 = vmatprep.mubr.bf16.mxu0 %v3825
        %5312 = vmatmul.mubr.bf16.gmra.mxu0 %v3824
        %v5313 = vpop.f32.mrf.mxu0
        %v5314 = vadd.f32 %v4199, %v5313
        %v5315 = vpop.f32.mrf.mxu0
        %v5316 = vadd.f32 %v4203, %v5315
        %v5317 = vpop.f32.mrf.mxu0
        %v5318 = vadd.f32 %v4199, %v5317
        %v5319 = vpop.f32.mrf.mxu0
        %v5320 = vadd.f32 %v4203, %v5319
        %5321 = vmatprep.mubr.bf16.mxu0 %v3833
        %5322 = vmatmul.mubr.bf16.gmra.mxu0 %v3832
        %v5323 = vpop.f32.mrf.mxu0
        %v5324 = vadd.f32 %v4199, %v5323
        %v5325 = vpop.f32.mrf.mxu0
        %v5326 = vadd.f32 %v4203, %v5325
        %v5327 = vpop.f32.mrf.mxu0
        %v5328 = vadd.f32 %v4199, %v5327
        %v5329 = vpop.f32.mrf.mxu0
        %v5330 = vadd.f32 %v4203, %v5329
        %5331 = vmatprep.mubr.bf16.mxu0 %v3841
        %5332 = vmatmul.mubr.bf16.gmra.mxu0 %v3840
        %v5333 = vpop.f32.mrf.mxu0
        %v5334 = vadd.f32 %v4199, %v5333
        %v5335 = vpop.f32.mrf.mxu0
        %v5336 = vadd.f32 %v4203, %v5335
        %v5337 = vpop.f32.mrf.mxu0
        %v5338 = vadd.f32 %v4199, %v5337
        %v5339 = vpop.f32.mrf.mxu0
        %v5340 = vadd.f32 %v4203, %v5339
        %5341 = vmatprep.mubr.bf16.mxu0 %v3849
        %5342 = vmatmul.mubr.bf16.gmra.mxu0 %v3848
        %v5343 = vpop.f32.mrf.mxu0
        %v5344 = vadd.f32 %v4199, %v5343
        %v5345 = vpop.f32.mrf.mxu0
        %v5346 = vadd.f32 %v4203, %v5345
        %v5347 = vpop.f32.mrf.mxu0
        %v5348 = vadd.f32 %v4199, %v5347
        %v5349 = vpop.f32.mrf.mxu0
        %v5350 = vadd.f32 %v4203, %v5349
        %5351 = vmatprep.mubr.bf16.mxu0 %v3857
        %5352 = vmatmul.mubr.bf16.gmra.mxu0 %v3856
        %v5353 = vpop.f32.mrf.mxu0
        %v5354 = vadd.f32 %v4199, %v5353
        %v5355 = vpop.f32.mrf.mxu0
        %v5356 = vadd.f32 %v4203, %v5355
        %v5357 = vpop.f32.mrf.mxu0
        %v5358 = vadd.f32 %v4199, %v5357
        %v5359 = vpop.f32.mrf.mxu0
        %v5360 = vadd.f32 %v4203, %v5359
        %5361 = vmatprep.mubr.bf16.mxu0 %v3865
        %5362 = vmatmul.mubr.bf16.gmra.mxu0 %v3864
        %v5363 = vpop.f32.mrf.mxu0
        %v5364 = vadd.f32 %v4199, %v5363
        %v5365 = vpop.f32.mrf.mxu0
        %v5366 = vadd.f32 %v4203, %v5365
        %v5367 = vpop.f32.mrf.mxu0
        %v5368 = vadd.f32 %v4199, %v5367
        %v5369 = vpop.f32.mrf.mxu0
        %v5370 = vadd.f32 %v4203, %v5369
        %5371 = vmatprep.mubr.bf16.mxu0 %v3873
        %5372 = vmatmul.mubr.bf16.gmra.mxu0 %v3872
        %v5373 = vpop.f32.mrf.mxu0
        %v5374 = vadd.f32 %v4199, %v5373
        %v5375 = vpop.f32.mrf.mxu0
        %v5376 = vadd.f32 %v4203, %v5375
        %v5377 = vpop.f32.mrf.mxu0
        %v5378 = vadd.f32 %v4199, %v5377
        %v5379 = vpop.f32.mrf.mxu0
        %v5380 = vadd.f32 %v4203, %v5379
        %5381 = vmatprep.mubr.bf16.mxu0 %v3881
        %5382 = vmatmul.mubr.bf16.gmra.mxu0 %v3880
        %v5383 = vpop.f32.mrf.mxu0
        %v5384 = vadd.f32 %v4199, %v5383
        %v5385 = vpop.f32.mrf.mxu0
        %v5386 = vadd.f32 %v4203, %v5385
        %v5387 = vpop.f32.mrf.mxu0
        %v5388 = vadd.f32 %v4199, %v5387
        %v5389 = vpop.f32.mrf.mxu0
        %v5390 = vadd.f32 %v4203, %v5389
        %5391 = vmatprep.mubr.bf16.mxu0 %v3889
        %5392 = vmatmul.mubr.bf16.gmra.mxu0 %v3888
        %v5393 = vpop.f32.mrf.mxu0
        %v5394 = vadd.f32 %v4199, %v5393
        %v5395 = vpop.f32.mrf.mxu0
        %v5396 = vadd.f32 %v4203, %v5395
        %v5397 = vpop.f32.mrf.mxu0
        %v5398 = vadd.f32 %v4199, %v5397
        %v5399 = vpop.f32.mrf.mxu0
        %v5400 = vadd.f32 %v4203, %v5399
        %5401 = vmatprep.mubr.bf16.mxu0 %v3897
        %5402 = vmatmul.mubr.bf16.gmra.mxu0 %v3896
        %v5403 = vpop.f32.mrf.mxu0
        %v5404 = vadd.f32 %v4199, %v5403
        %v5405 = vpop.f32.mrf.mxu0
        %v5406 = vadd.f32 %v4203, %v5405
        %v5407 = vpop.f32.mrf.mxu0
        %v5408 = vadd.f32 %v4199, %v5407
        %v5409 = vpop.f32.mrf.mxu0
        %v5410 = vadd.f32 %v4203, %v5409
        %5411 = vmatprep.mubr.bf16.mxu0 %v3905
        %5412 = vmatmul.mubr.bf16.gmra.mxu0 %v3904
        %v5413 = vpop.f32.mrf.mxu0
        %v5414 = vadd.f32 %v4199, %v5413
        %v5415 = vpop.f32.mrf.mxu0
        %v5416 = vadd.f32 %v4203, %v5415
        %v5417 = vpop.f32.mrf.mxu0
        %v5418 = vadd.f32 %v4199, %v5417
        %v5419 = vpop.f32.mrf.mxu0
        %v5420 = vadd.f32 %v4203, %v5419
        %5421 = vmatprep.mubr.bf16.mxu0 %v3913
        %5422 = vmatmul.mubr.bf16.gmra.mxu0 %v3912
        %v5423 = vpop.f32.mrf.mxu0
        %v5424 = vadd.f32 %v4199, %v5423
        %v5425 = vpop.f32.mrf.mxu0
        %v5426 = vadd.f32 %v4203, %v5425
        %v5427 = vpop.f32.mrf.mxu0
        %v5428 = vadd.f32 %v4199, %v5427
        %v5429 = vpop.f32.mrf.mxu0
        %v5430 = vadd.f32 %v4203, %v5429
        %5431 = vmatprep.mubr.bf16.mxu0 %v3921
        %5432 = vmatmul.mubr.bf16.gmra.mxu0 %v3920
        %v5433 = vpop.f32.mrf.mxu0
        %v5434 = vadd.f32 %v4199, %v5433
        %v5435 = vpop.f32.mrf.mxu0
        %v5436 = vadd.f32 %v4203, %v5435
        %v5437 = vpop.f32.mrf.mxu0
        %v5438 = vadd.f32 %v4199, %v5437
        %v5439 = vpop.f32.mrf.mxu0
        %v5440 = vadd.f32 %v4203, %v5439
        %5441 = vmatprep.mubr.bf16.mxu0 %v3929
        %5442 = vmatmul.mubr.bf16.gmra.mxu0 %v3928
        %v5443 = vpop.f32.mrf.mxu0
        %v5444 = vadd.f32 %v4199, %v5443
        %v5445 = vpop.f32.mrf.mxu0
        %v5446 = vadd.f32 %v4203, %v5445
        %v5447 = vpop.f32.mrf.mxu0
        %v5448 = vadd.f32 %v4199, %v5447
        %v5449 = vpop.f32.mrf.mxu0
        %v5450 = vadd.f32 %v4203, %v5449
        %5451 = vmatprep.mubr.bf16.mxu0 %v3937
        %5452 = vmatmul.mubr.bf16.gmra.mxu0 %v3936
        %v5453 = vpop.f32.mrf.mxu0
        %v5454 = vadd.f32 %v4199, %v5453
        %v5455 = vpop.f32.mrf.mxu0
        %v5456 = vadd.f32 %v4203, %v5455
        %v5457 = vpop.f32.mrf.mxu0
        %v5458 = vadd.f32 %v4199, %v5457
        %v5459 = vpop.f32.mrf.mxu0
        %v5460 = vadd.f32 %v4203, %v5459
        %5461 = vdwg.mxu0
        %5462 = vmatprep.subr.bf16.mxu0 %v4906
        %5463 = vmatpush1.bf16.msra.mxu0 %v4905
        %5464 = vmatprep.subr.bf16.mxu0 %v4903
        %5465 = vmatpush1.bf16.msra.mxu0 %v4902
        %5466 = vmatprep.subr.bf16.mxu0 %v4900
        %5467 = vmatpush1.bf16.msra.mxu0 %v4899
        %5468 = vmatprep.subr.bf16.mxu0 %v4897
        %5469 = vmatpush1.bf16.msra.mxu0 %v4896
        %5470 = vmatprep.subr.bf16.mxu0 %v4894
        %5471 = vmatpush1.bf16.msra.mxu0 %v4893
        %5472 = vmatprep.subr.bf16.mxu0 %v4891
        %5473 = vmatpush1.bf16.msra.mxu0 %v4890
        %5474 = vmatprep.subr.bf16.mxu0 %v4888
        %5475 = vmatpush1.bf16.msra.mxu0 %v4887
        %5476 = vmatprep.subr.bf16.mxu0 %v4885
        %5477 = vmatpush1.bf16.msra.mxu0 %v4884
        %5478 = vmatprep.subr.bf16.mxu0 %v4930
        %5479 = vmatpush2.bf16.msra.mxu0 %v4929
        %5480 = vmatprep.subr.bf16.mxu0 %v4927
        %5481 = vmatpush2.bf16.msra.mxu0 %v4926
        %5482 = vmatprep.subr.bf16.mxu0 %v4924
        %5483 = vmatpush2.bf16.msra.mxu0 %v4923
        %5484 = vmatprep.subr.bf16.mxu0 %v4921
        %5485 = vmatpush2.bf16.msra.mxu0 %v4920
        %5486 = vmatprep.subr.bf16.mxu0 %v4918
        %5487 = vmatpush2.bf16.msra.mxu0 %v4917
        %5488 = vmatprep.subr.bf16.mxu0 %v4915
        %5489 = vmatpush2.bf16.msra.mxu0 %v4914
        %5490 = vmatprep.subr.bf16.mxu0 %v4912
        %5491 = vmatpush2.bf16.msra.mxu0 %v4911
        %5492 = vmatprep.subr.bf16.mxu0 %v4909
        %5493 = vmatpush2.bf16.msra.mxu0 %v4908
        %5494 = vmatprep.mubr.bf16.mxu0 %v3819
        %5495 = vmatmul.mubr.bf16.gmra.mxu0 %v3818
        %v5496 = vpop.f32.mrf.mxu0
        %v5497 = vadd.f32 %v5304, %v5496
        %v5498 = vpop.f32.mrf.mxu0
        %v5499 = vadd.f32 %v5306, %v5498
        %v5500 = vpop.f32.mrf.mxu0
        %v5501 = vadd.f32 %v5308, %v5500
        %v5502 = vpop.f32.mrf.mxu0
        %v5503 = vadd.f32 %v5310, %v5502
        %5504 = vmatprep.mubr.bf16.mxu0 %v3827
        %5505 = vmatmul.mubr.bf16.gmra.mxu0 %v3826
        %v5506 = vpop.f32.mrf.mxu0
        %v5507 = vadd.f32 %v5314, %v5506
        %v5508 = vpop.f32.mrf.mxu0
        %v5509 = vadd.f32 %v5316, %v5508
        %v5510 = vpop.f32.mrf.mxu0
        %v5511 = vadd.f32 %v5318, %v5510
        %v5512 = vpop.f32.mrf.mxu0
        %v5513 = vadd.f32 %v5320, %v5512
        %5514 = vmatprep.mubr.bf16.mxu0 %v3835
        %5515 = vmatmul.mubr.bf16.gmra.mxu0 %v3834
        %v5516 = vpop.f32.mrf.mxu0
        %v5517 = vadd.f32 %v5324, %v5516
        %v5518 = vpop.f32.mrf.mxu0
        %v5519 = vadd.f32 %v5326, %v5518
        %v5520 = vpop.f32.mrf.mxu0
        %v5521 = vadd.f32 %v5328, %v5520
        %v5522 = vpop.f32.mrf.mxu0
        %v5523 = vadd.f32 %v5330, %v5522
        %5524 = vmatprep.mubr.bf16.mxu0 %v3843
        %5525 = vmatmul.mubr.bf16.gmra.mxu0 %v3842
        %v5526 = vpop.f32.mrf.mxu0
        %v5527 = vadd.f32 %v5334, %v5526
        %v5528 = vpop.f32.mrf.mxu0
        %v5529 = vadd.f32 %v5336, %v5528
        %v5530 = vpop.f32.mrf.mxu0
        %v5531 = vadd.f32 %v5338, %v5530
        %v5532 = vpop.f32.mrf.mxu0
        %v5533 = vadd.f32 %v5340, %v5532
        %5534 = vmatprep.mubr.bf16.mxu0 %v3851
        %5535 = vmatmul.mubr.bf16.gmra.mxu0 %v3850
        %v5536 = vpop.f32.mrf.mxu0
        %v5537 = vadd.f32 %v5344, %v5536
        %v5538 = vpop.f32.mrf.mxu0
        %v5539 = vadd.f32 %v5346, %v5538
        %v5540 = vpop.f32.mrf.mxu0
        %v5541 = vadd.f32 %v5348, %v5540
        %v5542 = vpop.f32.mrf.mxu0
        %v5543 = vadd.f32 %v5350, %v5542
        %5544 = vmatprep.mubr.bf16.mxu0 %v3859
        %5545 = vmatmul.mubr.bf16.gmra.mxu0 %v3858
        %v5546 = vpop.f32.mrf.mxu0
        %v5547 = vadd.f32 %v5354, %v5546
        %v5548 = vpop.f32.mrf.mxu0
        %v5549 = vadd.f32 %v5356, %v5548
        %v5550 = vpop.f32.mrf.mxu0
        %v5551 = vadd.f32 %v5358, %v5550
        %v5552 = vpop.f32.mrf.mxu0
        %v5553 = vadd.f32 %v5360, %v5552
        %5554 = vmatprep.mubr.bf16.mxu0 %v3867
        %5555 = vmatmul.mubr.bf16.gmra.mxu0 %v3866
        %v5556 = vpop.f32.mrf.mxu0
        %v5557 = vadd.f32 %v5364, %v5556
        %v5558 = vpop.f32.mrf.mxu0
        %v5559 = vadd.f32 %v5366, %v5558
        %v5560 = vpop.f32.mrf.mxu0
        %v5561 = vadd.f32 %v5368, %v5560
        %v5562 = vpop.f32.mrf.mxu0
        %v5563 = vadd.f32 %v5370, %v5562
        %5564 = vmatprep.mubr.bf16.mxu0 %v3875
        %5565 = vmatmul.mubr.bf16.gmra.mxu0 %v3874
        %v5566 = vpop.f32.mrf.mxu0
        %v5567 = vadd.f32 %v5374, %v5566
        %v5568 = vpop.f32.mrf.mxu0
        %v5569 = vadd.f32 %v5376, %v5568
        %v5570 = vpop.f32.mrf.mxu0
        %v5571 = vadd.f32 %v5378, %v5570
        %v5572 = vpop.f32.mrf.mxu0
        %v5573 = vadd.f32 %v5380, %v5572
        %5574 = vmatprep.mubr.bf16.mxu0 %v3883
        %5575 = vmatmul.mubr.bf16.gmra.mxu0 %v3882
        %v5576 = vpop.f32.mrf.mxu0
        %v5577 = vadd.f32 %v5384, %v5576
        %v5578 = vpop.f32.mrf.mxu0
        %v5579 = vadd.f32 %v5386, %v5578
        %v5580 = vpop.f32.mrf.mxu0
        %v5581 = vadd.f32 %v5388, %v5580
        %v5582 = vpop.f32.mrf.mxu0
        %v5583 = vadd.f32 %v5390, %v5582
        %5584 = vmatprep.mubr.bf16.mxu0 %v3891
        %5585 = vmatmul.mubr.bf16.gmra.mxu0 %v3890
        %v5586 = vpop.f32.mrf.mxu0
        %v5587 = vadd.f32 %v5394, %v5586
        %v5588 = vpop.f32.mrf.mxu0
        %v5589 = vadd.f32 %v5396, %v5588
        %v5590 = vpop.f32.mrf.mxu0
        %v5591 = vadd.f32 %v5398, %v5590
        %v5592 = vpop.f32.mrf.mxu0
        %v5593 = vadd.f32 %v5400, %v5592
        %5594 = vmatprep.mubr.bf16.mxu0 %v3899
        %5595 = vmatmul.mubr.bf16.gmra.mxu0 %v3898
        %v5596 = vpop.f32.mrf.mxu0
        %v5597 = vadd.f32 %v5404, %v5596
        %v5598 = vpop.f32.mrf.mxu0
        %v5599 = vadd.f32 %v5406, %v5598
        %v5600 = vpop.f32.mrf.mxu0
        %v5601 = vadd.f32 %v5408, %v5600
        %v5602 = vpop.f32.mrf.mxu0
        %v5603 = vadd.f32 %v5410, %v5602
        %5604 = vmatprep.mubr.bf16.mxu0 %v3907
        %5605 = vmatmul.mubr.bf16.gmra.mxu0 %v3906
        %v5606 = vpop.f32.mrf.mxu0
        %v5607 = vadd.f32 %v5414, %v5606
        %v5608 = vpop.f32.mrf.mxu0
        %v5609 = vadd.f32 %v5416, %v5608
        %v5610 = vpop.f32.mrf.mxu0
        %v5611 = vadd.f32 %v5418, %v5610
        %v5612 = vpop.f32.mrf.mxu0
        %v5613 = vadd.f32 %v5420, %v5612
        %5614 = vmatprep.mubr.bf16.mxu0 %v3915
        %5615 = vmatmul.mubr.bf16.gmra.mxu0 %v3914
        %v5616 = vpop.f32.mrf.mxu0
        %v5617 = vadd.f32 %v5424, %v5616
        %v5618 = vpop.f32.mrf.mxu0
        %v5619 = vadd.f32 %v5426, %v5618
        %v5620 = vpop.f32.mrf.mxu0
        %v5621 = vadd.f32 %v5428, %v5620
        %v5622 = vpop.f32.mrf.mxu0
        %v5623 = vadd.f32 %v5430, %v5622
        %5624 = vmatprep.mubr.bf16.mxu0 %v3923
        %5625 = vmatmul.mubr.bf16.gmra.mxu0 %v3922
        %v5626 = vpop.f32.mrf.mxu0
        %v5627 = vadd.f32 %v5434, %v5626
        %v5628 = vpop.f32.mrf.mxu0
        %v5629 = vadd.f32 %v5436, %v5628
        %v5630 = vpop.f32.mrf.mxu0
        %v5631 = vadd.f32 %v5438, %v5630
        %v5632 = vpop.f32.mrf.mxu0
        %v5633 = vadd.f32 %v5440, %v5632
        %5634 = vmatprep.mubr.bf16.mxu0 %v3931
        %5635 = vmatmul.mubr.bf16.gmra.mxu0 %v3930
        %v5636 = vpop.f32.mrf.mxu0
        %v5637 = vadd.f32 %v5444, %v5636
        %v5638 = vpop.f32.mrf.mxu0
        %v5639 = vadd.f32 %v5446, %v5638
        %v5640 = vpop.f32.mrf.mxu0
        %v5641 = vadd.f32 %v5448, %v5640
        %v5642 = vpop.f32.mrf.mxu0
        %v5643 = vadd.f32 %v5450, %v5642
        %5644 = vmatprep.mubr.bf16.mxu0 %v3939
        %5645 = vmatmul.mubr.bf16.gmra.mxu0 %v3938
        %v5646 = vpop.f32.mrf.mxu0
        %v5647 = vadd.f32 %v5454, %v5646
        %v5648 = vpop.f32.mrf.mxu0
        %v5649 = vadd.f32 %v5456, %v5648
        %v5650 = vpop.f32.mrf.mxu0
        %v5651 = vadd.f32 %v5458, %v5650
        %v5652 = vpop.f32.mrf.mxu0
        %v5653 = vadd.f32 %v5460, %v5652
        %5654 = vdwg.mxu0
        %5655 = vmatprep.subr.bf16.mxu0 %v4954
        %5656 = vmatpush1.bf16.msra.mxu0 %v4953
        %5657 = vmatprep.subr.bf16.mxu0 %v4951
        %5658 = vmatpush1.bf16.msra.mxu0 %v4950
        %5659 = vmatprep.subr.bf16.mxu0 %v4948
        %5660 = vmatpush1.bf16.msra.mxu0 %v4947
        %5661 = vmatprep.subr.bf16.mxu0 %v4945
        %5662 = vmatpush1.bf16.msra.mxu0 %v4944
        %5663 = vmatprep.subr.bf16.mxu0 %v4942
        %5664 = vmatpush1.bf16.msra.mxu0 %v4941
        %5665 = vmatprep.subr.bf16.mxu0 %v4939
        %5666 = vmatpush1.bf16.msra.mxu0 %v4938
        %5667 = vmatprep.subr.bf16.mxu0 %v4936
        %5668 = vmatpush1.bf16.msra.mxu0 %v4935
        %5669 = vmatprep.subr.bf16.mxu0 %v4933
        %5670 = vmatpush1.bf16.msra.mxu0 %v4932
        %5671 = vmatprep.subr.bf16.mxu0 %v4978
        %5672 = vmatpush2.bf16.msra.mxu0 %v4977
        %5673 = vmatprep.subr.bf16.mxu0 %v4975
        %5674 = vmatpush2.bf16.msra.mxu0 %v4974
        %5675 = vmatprep.subr.bf16.mxu0 %v4972
        %5676 = vmatpush2.bf16.msra.mxu0 %v4971
        %5677 = vmatprep.subr.bf16.mxu0 %v4969
        %5678 = vmatpush2.bf16.msra.mxu0 %v4968
        %5679 = vmatprep.subr.bf16.mxu0 %v4966
        %5680 = vmatpush2.bf16.msra.mxu0 %v4965
        %5681 = vmatprep.subr.bf16.mxu0 %v4963
        %5682 = vmatpush2.bf16.msra.mxu0 %v4962
        %5683 = vmatprep.subr.bf16.mxu0 %v4960
        %5684 = vmatpush2.bf16.msra.mxu0 %v4959
        %5685 = vmatprep.subr.bf16.mxu0 %v4957
        %5686 = vmatpush2.bf16.msra.mxu0 %v4956
        %5687 = vmatprep.mubr.bf16.mxu0 %v3821
        %5688 = vmatmul.mubr.bf16.gmra.mxu0 %v3820
        %v5689 = vpop.f32.mrf.mxu0
        %v5690 = vadd.f32 %v5497, %v5689
        %v5691 = vpop.f32.mrf.mxu0
        %v5692 = vadd.f32 %v5499, %v5691
        %v5693 = vpop.f32.mrf.mxu0
        %v5694 = vadd.f32 %v5501, %v5693
        %v5695 = vpop.f32.mrf.mxu0
        %v5696 = vadd.f32 %v5503, %v5695
        %5697 = vmatprep.mubr.bf16.mxu0 %v3829
        %5698 = vmatmul.mubr.bf16.gmra.mxu0 %v3828
        %v5699 = vpop.f32.mrf.mxu0
        %v5700 = vadd.f32 %v5507, %v5699
        %v5701 = vpop.f32.mrf.mxu0
        %v5702 = vadd.f32 %v5509, %v5701
        %v5703 = vpop.f32.mrf.mxu0
        %v5704 = vadd.f32 %v5511, %v5703
        %v5705 = vpop.f32.mrf.mxu0
        %v5706 = vadd.f32 %v5513, %v5705
        %5707 = vmatprep.mubr.bf16.mxu0 %v3837
        %5708 = vmatmul.mubr.bf16.gmra.mxu0 %v3836
        %v5709 = vpop.f32.mrf.mxu0
        %v5710 = vadd.f32 %v5517, %v5709
        %v5711 = vpop.f32.mrf.mxu0
        %v5712 = vadd.f32 %v5519, %v5711
        %v5713 = vpop.f32.mrf.mxu0
        %v5714 = vadd.f32 %v5521, %v5713
        %v5715 = vpop.f32.mrf.mxu0
        %v5716 = vadd.f32 %v5523, %v5715
        %5717 = vmatprep.mubr.bf16.mxu0 %v3845
        %5718 = vmatmul.mubr.bf16.gmra.mxu0 %v3844
        %v5719 = vpop.f32.mrf.mxu0
        %v5720 = vadd.f32 %v5527, %v5719
        %v5721 = vpop.f32.mrf.mxu0
        %v5722 = vadd.f32 %v5529, %v5721
        %v5723 = vpop.f32.mrf.mxu0
        %v5724 = vadd.f32 %v5531, %v5723
        %v5725 = vpop.f32.mrf.mxu0
        %v5726 = vadd.f32 %v5533, %v5725
        %5727 = vmatprep.mubr.bf16.mxu0 %v3853
        %5728 = vmatmul.mubr.bf16.gmra.mxu0 %v3852
        %v5729 = vpop.f32.mrf.mxu0
        %v5730 = vadd.f32 %v5537, %v5729
        %v5731 = vpop.f32.mrf.mxu0
        %v5732 = vadd.f32 %v5539, %v5731
        %v5733 = vpop.f32.mrf.mxu0
        %v5734 = vadd.f32 %v5541, %v5733
        %v5735 = vpop.f32.mrf.mxu0
        %v5736 = vadd.f32 %v5543, %v5735
        %5737 = vmatprep.mubr.bf16.mxu0 %v3861
        %5738 = vmatmul.mubr.bf16.gmra.mxu0 %v3860
        %v5739 = vpop.f32.mrf.mxu0
        %v5740 = vadd.f32 %v5547, %v5739
        %v5741 = vpop.f32.mrf.mxu0
        %v5742 = vadd.f32 %v5549, %v5741
        %v5743 = vpop.f32.mrf.mxu0
        %v5744 = vadd.f32 %v5551, %v5743
        %v5745 = vpop.f32.mrf.mxu0
        %v5746 = vadd.f32 %v5553, %v5745
        %5747 = vmatprep.mubr.bf16.mxu0 %v3869
        %5748 = vmatmul.mubr.bf16.gmra.mxu0 %v3868
        %v5749 = vpop.f32.mrf.mxu0
        %v5750 = vadd.f32 %v5557, %v5749
        %v5751 = vpop.f32.mrf.mxu0
        %v5752 = vadd.f32 %v5559, %v5751
        %v5753 = vpop.f32.mrf.mxu0
        %v5754 = vadd.f32 %v5561, %v5753
        %v5755 = vpop.f32.mrf.mxu0
        %v5756 = vadd.f32 %v5563, %v5755
        %5757 = vmatprep.mubr.bf16.mxu0 %v3877
        %5758 = vmatmul.mubr.bf16.gmra.mxu0 %v3876
        %v5759 = vpop.f32.mrf.mxu0
        %v5760 = vadd.f32 %v5567, %v5759
        %v5761 = vpop.f32.mrf.mxu0
        %v5762 = vadd.f32 %v5569, %v5761
        %v5763 = vpop.f32.mrf.mxu0
        %v5764 = vadd.f32 %v5571, %v5763
        %v5765 = vpop.f32.mrf.mxu0
        %v5766 = vadd.f32 %v5573, %v5765
        %5767 = vmatprep.mubr.bf16.mxu0 %v3885
        %5768 = vmatmul.mubr.bf16.gmra.mxu0 %v3884
        %v5769 = vpop.f32.mrf.mxu0
        %v5770 = vadd.f32 %v5577, %v5769
        %v5771 = vpop.f32.mrf.mxu0
        %v5772 = vadd.f32 %v5579, %v5771
        %v5773 = vpop.f32.mrf.mxu0
        %v5774 = vadd.f32 %v5581, %v5773
        %v5775 = vpop.f32.mrf.mxu0
        %v5776 = vadd.f32 %v5583, %v5775
        %5777 = vmatprep.mubr.bf16.mxu0 %v3893
        %5778 = vmatmul.mubr.bf16.gmra.mxu0 %v3892
        %v5779 = vpop.f32.mrf.mxu0
        %v5780 = vadd.f32 %v5587, %v5779
        %v5781 = vpop.f32.mrf.mxu0
        %v5782 = vadd.f32 %v5589, %v5781
        %v5783 = vpop.f32.mrf.mxu0
        %v5784 = vadd.f32 %v5591, %v5783
        %v5785 = vpop.f32.mrf.mxu0
        %v5786 = vadd.f32 %v5593, %v5785
        %5787 = vmatprep.mubr.bf16.mxu0 %v3901
        %5788 = vmatmul.mubr.bf16.gmra.mxu0 %v3900
        %v5789 = vpop.f32.mrf.mxu0
        %v5790 = vadd.f32 %v5597, %v5789
        %v5791 = vpop.f32.mrf.mxu0
        %v5792 = vadd.f32 %v5599, %v5791
        %v5793 = vpop.f32.mrf.mxu0
        %v5794 = vadd.f32 %v5601, %v5793
        %v5795 = vpop.f32.mrf.mxu0
        %v5796 = vadd.f32 %v5603, %v5795
        %5797 = vmatprep.mubr.bf16.mxu0 %v3909
        %5798 = vmatmul.mubr.bf16.gmra.mxu0 %v3908
        %v5799 = vpop.f32.mrf.mxu0
        %v5800 = vadd.f32 %v5607, %v5799
        %v5801 = vpop.f32.mrf.mxu0
        %v5802 = vadd.f32 %v5609, %v5801
        %v5803 = vpop.f32.mrf.mxu0
        %v5804 = vadd.f32 %v5611, %v5803
        %v5805 = vpop.f32.mrf.mxu0
        %v5806 = vadd.f32 %v5613, %v5805
        %5807 = vmatprep.mubr.bf16.mxu0 %v3917
        %5808 = vmatmul.mubr.bf16.gmra.mxu0 %v3916
        %v5809 = vpop.f32.mrf.mxu0
        %v5810 = vadd.f32 %v5617, %v5809
        %v5811 = vpop.f32.mrf.mxu0
        %v5812 = vadd.f32 %v5619, %v5811
        %v5813 = vpop.f32.mrf.mxu0
        %v5814 = vadd.f32 %v5621, %v5813
        %v5815 = vpop.f32.mrf.mxu0
        %v5816 = vadd.f32 %v5623, %v5815
        %5817 = vmatprep.mubr.bf16.mxu0 %v3925
        %5818 = vmatmul.mubr.bf16.gmra.mxu0 %v3924
        %v5819 = vpop.f32.mrf.mxu0
        %v5820 = vadd.f32 %v5627, %v5819
        %v5821 = vpop.f32.mrf.mxu0
        %v5822 = vadd.f32 %v5629, %v5821
        %v5823 = vpop.f32.mrf.mxu0
        %v5824 = vadd.f32 %v5631, %v5823
        %v5825 = vpop.f32.mrf.mxu0
        %v5826 = vadd.f32 %v5633, %v5825
        %5827 = vmatprep.mubr.bf16.mxu0 %v3933
        %5828 = vmatmul.mubr.bf16.gmra.mxu0 %v3932
        %v5829 = vpop.f32.mrf.mxu0
        %v5830 = vadd.f32 %v5637, %v5829
        %v5831 = vpop.f32.mrf.mxu0
        %v5832 = vadd.f32 %v5639, %v5831
        %v5833 = vpop.f32.mrf.mxu0
        %v5834 = vadd.f32 %v5641, %v5833
        %v5835 = vpop.f32.mrf.mxu0
        %v5836 = vadd.f32 %v5643, %v5835
        %5837 = vmatprep.mubr.bf16.mxu0 %v3941
        %5838 = vmatmul.mubr.bf16.gmra.mxu0 %v3940
        %v5839 = vpop.f32.mrf.mxu0
        %v5840 = vadd.f32 %v5647, %v5839
        %v5841 = vpop.f32.mrf.mxu0
        %v5842 = vadd.f32 %v5649, %v5841
        %v5843 = vpop.f32.mrf.mxu0
        %v5844 = vadd.f32 %v5651, %v5843
        %v5845 = vpop.f32.mrf.mxu0
        %v5846 = vadd.f32 %v5653, %v5845
        %5847 = vdwg.mxu0
        %5848 = vmatprep.subr.bf16.mxu0 %v5002
        %5849 = vmatpush1.bf16.msra.mxu0 %v5001
        %5850 = vmatprep.subr.bf16.mxu0 %v4999
        %5851 = vmatpush1.bf16.msra.mxu0 %v4998
        %5852 = vmatprep.subr.bf16.mxu0 %v4996
        %5853 = vmatpush1.bf16.msra.mxu0 %v4995
        %5854 = vmatprep.subr.bf16.mxu0 %v4993
        %5855 = vmatpush1.bf16.msra.mxu0 %v4992
        %5856 = vmatprep.subr.bf16.mxu0 %v4990
        %5857 = vmatpush1.bf16.msra.mxu0 %v4989
        %5858 = vmatprep.subr.bf16.mxu0 %v4987
        %5859 = vmatpush1.bf16.msra.mxu0 %v4986
        %5860 = vmatprep.subr.bf16.mxu0 %v4984
        %5861 = vmatpush1.bf16.msra.mxu0 %v4983
        %5862 = vmatprep.subr.bf16.mxu0 %v4981
        %5863 = vmatpush1.bf16.msra.mxu0 %v4980
        %5864 = vmatprep.subr.bf16.mxu0 0
        %5865 = vmatpush2.bf16.msra.mxu0 0
        %5866 = vmatprep.subr.bf16.mxu0 %v5264
        %5867 = vmatpush2.bf16.msra.mxu0 %v5261
        %5868 = vmatprep.subr.bf16.mxu0 %v5020
        %5869 = vmatpush2.bf16.msra.mxu0 %v5019
        %5870 = vmatprep.subr.bf16.mxu0 %v5017
        %5871 = vmatpush2.bf16.msra.mxu0 %v5016
        %5872 = vmatprep.subr.bf16.mxu0 %v5014
        %5873 = vmatpush2.bf16.msra.mxu0 %v5013
        %5874 = vmatprep.subr.bf16.mxu0 %v5011
        %5875 = vmatpush2.bf16.msra.mxu0 %v5010
        %5876 = vmatprep.subr.bf16.mxu0 %v5008
        %5877 = vmatpush2.bf16.msra.mxu0 %v5007
        %5878 = vmatprep.subr.bf16.mxu0 %v5005
        %5879 = vmatpush2.bf16.msra.mxu0 %v5004
        %5880 = vmatprep.mubr.bf16.mxu0 %v5212
        %5881 = vmatmul.mubr.bf16.gmra.mxu0 %v3822
        %v5882 = vpop.f32.mrf.mxu0
        %v5883 = vadd.f32 %v5690, %v5882
        %v5884 = vpop.f32.mrf.mxu0
        %v5885 = vadd.f32 %v5692, %v5884
        %v5886 = vpop.f32.mrf.mxu0
        %v5887 = vadd.f32 %v5694, %v5886
        %v5888 = vpop.f32.mrf.mxu0
        %v5889 = vadd.f32 %v5696, %v5888
        %5890 = vmatprep.mubr.bf16.mxu0 %v5215
        %5891 = vmatmul.mubr.bf16.gmra.mxu0 %v3830
        %v5892 = vpop.f32.mrf.mxu0
        %v5893 = vadd.f32 %v5700, %v5892
        %v5894 = vpop.f32.mrf.mxu0
        %v5895 = vadd.f32 %v5702, %v5894
        %v5896 = vpop.f32.mrf.mxu0
        %v5897 = vadd.f32 %v5704, %v5896
        %v5898 = vpop.f32.mrf.mxu0
        %v5899 = vadd.f32 %v5706, %v5898
        %5900 = vmatprep.mubr.bf16.mxu0 %v5218
        %5901 = vmatmul.mubr.bf16.gmra.mxu0 %v3838
        %v5902 = vpop.f32.mrf.mxu0
        %v5903 = vadd.f32 %v5710, %v5902
        %v5904 = vpop.f32.mrf.mxu0
        %v5905 = vadd.f32 %v5712, %v5904
        %v5906 = vpop.f32.mrf.mxu0
        %v5907 = vadd.f32 %v5714, %v5906
        %v5908 = vpop.f32.mrf.mxu0
        %v5909 = vadd.f32 %v5716, %v5908
        %5910 = vmatprep.mubr.bf16.mxu0 %v5221
        %5911 = vmatmul.mubr.bf16.gmra.mxu0 %v3846
        %v5912 = vpop.f32.mrf.mxu0
        %v5913 = vadd.f32 %v5720, %v5912
        %v5914 = vpop.f32.mrf.mxu0
        %v5915 = vadd.f32 %v5722, %v5914
        %v5916 = vpop.f32.mrf.mxu0
        %v5917 = vadd.f32 %v5724, %v5916
        %v5918 = vpop.f32.mrf.mxu0
        %v5919 = vadd.f32 %v5726, %v5918
        %5920 = vmatprep.mubr.bf16.mxu0 %v5224
        %5921 = vmatmul.mubr.bf16.gmra.mxu0 %v3854
        %v5922 = vpop.f32.mrf.mxu0
        %v5923 = vadd.f32 %v5730, %v5922
        %v5924 = vpop.f32.mrf.mxu0
        %v5925 = vadd.f32 %v5732, %v5924
        %v5926 = vpop.f32.mrf.mxu0
        %v5927 = vadd.f32 %v5734, %v5926
        %v5928 = vpop.f32.mrf.mxu0
        %v5929 = vadd.f32 %v5736, %v5928
        %5930 = vmatprep.mubr.bf16.mxu0 %v5227
        %5931 = vmatmul.mubr.bf16.gmra.mxu0 %v3862
        %v5932 = vpop.f32.mrf.mxu0
        %v5933 = vadd.f32 %v5740, %v5932
        %v5934 = vpop.f32.mrf.mxu0
        %v5935 = vadd.f32 %v5742, %v5934
        %v5936 = vpop.f32.mrf.mxu0
        %v5937 = vadd.f32 %v5744, %v5936
        %v5938 = vpop.f32.mrf.mxu0
        %v5939 = vadd.f32 %v5746, %v5938
        %5940 = vmatprep.mubr.bf16.mxu0 %v5230
        %5941 = vmatmul.mubr.bf16.gmra.mxu0 %v3870
        %v5942 = vpop.f32.mrf.mxu0
        %v5943 = vadd.f32 %v5750, %v5942
        %v5944 = vpop.f32.mrf.mxu0
        %v5945 = vadd.f32 %v5752, %v5944
        %v5946 = vpop.f32.mrf.mxu0
        %v5947 = vadd.f32 %v5754, %v5946
        %v5948 = vpop.f32.mrf.mxu0
        %v5949 = vadd.f32 %v5756, %v5948
        %5950 = vmatprep.mubr.bf16.mxu0 %v5233
        %5951 = vmatmul.mubr.bf16.gmra.mxu0 %v3878
        %v5952 = vpop.f32.mrf.mxu0
        %v5953 = vadd.f32 %v5760, %v5952
        %v5954 = vpop.f32.mrf.mxu0
        %v5955 = vadd.f32 %v5762, %v5954
        %v5956 = vpop.f32.mrf.mxu0
        %v5957 = vadd.f32 %v5764, %v5956
        %v5958 = vpop.f32.mrf.mxu0
        %v5959 = vadd.f32 %v5766, %v5958
        %5960 = vmatprep.mubr.bf16.mxu0 %v5236
        %5961 = vmatmul.mubr.bf16.gmra.mxu0 %v3886
        %v5962 = vpop.f32.mrf.mxu0
        %v5963 = vadd.f32 %v5770, %v5962
        %v5964 = vpop.f32.mrf.mxu0
        %v5965 = vadd.f32 %v5772, %v5964
        %v5966 = vpop.f32.mrf.mxu0
        %v5967 = vadd.f32 %v5774, %v5966
        %v5968 = vpop.f32.mrf.mxu0
        %v5969 = vadd.f32 %v5776, %v5968
        %5970 = vmatprep.mubr.bf16.mxu0 %v5239
        %5971 = vmatmul.mubr.bf16.gmra.mxu0 %v3894
        %v5972 = vpop.f32.mrf.mxu0
        %v5973 = vadd.f32 %v5780, %v5972
        %v5974 = vpop.f32.mrf.mxu0
        %v5975 = vadd.f32 %v5782, %v5974
        %v5976 = vpop.f32.mrf.mxu0
        %v5977 = vadd.f32 %v5784, %v5976
        %v5978 = vpop.f32.mrf.mxu0
        %v5979 = vadd.f32 %v5786, %v5978
        %5980 = vmatprep.mubr.bf16.mxu0 %v5242
        %5981 = vmatmul.mubr.bf16.gmra.mxu0 %v3902
        %v5982 = vpop.f32.mrf.mxu0
        %v5983 = vadd.f32 %v5790, %v5982
        %v5984 = vpop.f32.mrf.mxu0
        %v5985 = vadd.f32 %v5792, %v5984
        %v5986 = vpop.f32.mrf.mxu0
        %v5987 = vadd.f32 %v5794, %v5986
        %v5988 = vpop.f32.mrf.mxu0
        %v5989 = vadd.f32 %v5796, %v5988
        %5990 = vmatprep.mubr.bf16.mxu0 %v5245
        %5991 = vmatmul.mubr.bf16.gmra.mxu0 %v3910
        %v5992 = vpop.f32.mrf.mxu0
        %v5993 = vadd.f32 %v5800, %v5992
        %v5994 = vpop.f32.mrf.mxu0
        %v5995 = vadd.f32 %v5802, %v5994
        %v5996 = vpop.f32.mrf.mxu0
        %v5997 = vadd.f32 %v5804, %v5996
        %v5998 = vpop.f32.mrf.mxu0
        %v5999 = vadd.f32 %v5806, %v5998
        %6000 = vmatprep.mubr.bf16.mxu0 %v5248
        %6001 = vmatmul.mubr.bf16.gmra.mxu0 %v3918
        %v6002 = vpop.f32.mrf.mxu0
        %v6003 = vadd.f32 %v5810, %v6002
        %v6004 = vpop.f32.mrf.mxu0
        %v6005 = vadd.f32 %v5812, %v6004
        %v6006 = vpop.f32.mrf.mxu0
        %v6007 = vadd.f32 %v5814, %v6006
        %v6008 = vpop.f32.mrf.mxu0
        %v6009 = vadd.f32 %v5816, %v6008
        %6010 = vmatprep.mubr.bf16.mxu0 %v5251
        %6011 = vmatmul.mubr.bf16.gmra.mxu0 %v3926
        %v6012 = vpop.f32.mrf.mxu0
        %v6013 = vadd.f32 %v5820, %v6012
        %v6014 = vpop.f32.mrf.mxu0
        %v6015 = vadd.f32 %v5822, %v6014
        %v6016 = vpop.f32.mrf.mxu0
        %v6017 = vadd.f32 %v5824, %v6016
        %v6018 = vpop.f32.mrf.mxu0
        %v6019 = vadd.f32 %v5826, %v6018
        %6020 = vmatprep.mubr.bf16.mxu0 %v5254
        %6021 = vmatmul.mubr.bf16.gmra.mxu0 %v3934
        %v6022 = vpop.f32.mrf.mxu0
        %v6023 = vadd.f32 %v5830, %v6022
        %v6024 = vpop.f32.mrf.mxu0
        %v6025 = vadd.f32 %v5832, %v6024
        %v6026 = vpop.f32.mrf.mxu0
        %v6027 = vadd.f32 %v5834, %v6026
        %v6028 = vpop.f32.mrf.mxu0
        %v6029 = vadd.f32 %v5836, %v6028
        %6030 = vmatprep.mubr.bf16.mxu0 %v5257
        %6031 = vmatmul.mubr.bf16.gmra.mxu0 %v3942
        %v6032 = vpop.f32.mrf.mxu0
        %v6033 = vadd.f32 %v5840, %v6032
        %v6034 = vpop.f32.mrf.mxu0
        %v6035 = vadd.f32 %v5842, %v6034
        %v6036 = vpop.f32.mrf.mxu0
        %v6037 = vadd.f32 %v5844, %v6036
        %v6038 = vpop.f32.mrf.mxu0
        %v6039 = vadd.f32 %v5846, %v6038
        %6040 = vdwg.mxu0
        %6041 = vmatprep.subr.bf16.mxu0 0
        %6042 = vmatpush1.bf16.msra.mxu0 %v4859
        %6043 = vmatprep.subr.bf16.mxu0 0
        %6044 = vmatpush1.bf16.msra.mxu0 %v4856
        %6045 = vmatprep.subr.bf16.mxu0 0
        %6046 = vmatpush1.bf16.msra.mxu0 %v4853
        %6047 = vmatprep.subr.bf16.mxu0 0
        %6048 = vmatpush1.bf16.msra.mxu0 %v4850
        %6049 = vmatprep.subr.bf16.mxu0 0
        %6050 = vmatpush1.bf16.msra.mxu0 %v4847
        %6051 = vmatprep.subr.bf16.mxu0 0
        %6052 = vmatpush1.bf16.msra.mxu0 %v4844
        %6053 = vmatprep.subr.bf16.mxu0 0
        %6054 = vmatpush1.bf16.msra.mxu0 %v4841
        %6055 = vmatprep.subr.bf16.mxu0 0
        %6056 = vmatpush1.bf16.msra.mxu0 %v4838
        %6057 = vmatprep.subr.bf16.mxu0 0
        %6058 = vmatpush2.bf16.msra.mxu0 %v4883
        %6059 = vmatprep.subr.bf16.mxu0 0
        %6060 = vmatpush2.bf16.msra.mxu0 %v4880
        %6061 = vmatprep.subr.bf16.mxu0 0
        %6062 = vmatpush2.bf16.msra.mxu0 %v4877
        %6063 = vmatprep.subr.bf16.mxu0 0
        %6064 = vmatpush2.bf16.msra.mxu0 %v4874
        %6065 = vmatprep.subr.bf16.mxu0 0
        %6066 = vmatpush2.bf16.msra.mxu0 %v4871
        %6067 = vmatprep.subr.bf16.mxu0 0
        %6068 = vmatpush2.bf16.msra.mxu0 %v4868
        %6069 = vmatprep.subr.bf16.mxu0 0
        %6070 = vmatpush2.bf16.msra.mxu0 %v4865
        %6071 = vmatprep.subr.bf16.mxu0 0
        %6072 = vmatpush2.bf16.msra.mxu0 %v4862
        %6073 = vmatprep.mubr.bf16.mxu0 %v3817
        %6074 = vmatmul.mubr.bf16.gmra.mxu0 %v3816
        %v6075 = vpop.f32.mrf.mxu0
        %v6076 = vadd.f32 %v4207, %v6075
        %v6077 = vpop.f32.mrf.mxu0
        %v6078 = vpop.f32.mrf.mxu0
        %v6079 = vadd.f32 %v4207, %v6078
        %v6080 = vpop.f32.mrf.mxu0
        %6081 = vmatprep.mubr.bf16.mxu0 %v3825
        %6082 = vmatmul.mubr.bf16.gmra.mxu0 %v3824
        %v6083 = vpop.f32.mrf.mxu0
        %v6084 = vadd.f32 %v4207, %v6083
        %v6085 = vpop.f32.mrf.mxu0
        %v6086 = vpop.f32.mrf.mxu0
        %v6087 = vadd.f32 %v4207, %v6086
        %v6088 = vpop.f32.mrf.mxu0
        %6089 = vmatprep.mubr.bf16.mxu0 %v3833
        %6090 = vmatmul.mubr.bf16.gmra.mxu0 %v3832
        %v6091 = vpop.f32.mrf.mxu0
        %v6092 = vadd.f32 %v4207, %v6091
        %v6093 = vpop.f32.mrf.mxu0
        %v6094 = vpop.f32.mrf.mxu0
        %v6095 = vadd.f32 %v4207, %v6094
        %v6096 = vpop.f32.mrf.mxu0
        %6097 = vmatprep.mubr.bf16.mxu0 %v3841
        %6098 = vmatmul.mubr.bf16.gmra.mxu0 %v3840
        %v6099 = vpop.f32.mrf.mxu0
        %v6100 = vadd.f32 %v4207, %v6099
        %v6101 = vpop.f32.mrf.mxu0
        %v6102 = vpop.f32.mrf.mxu0
        %v6103 = vadd.f32 %v4207, %v6102
        %v6104 = vpop.f32.mrf.mxu0
        %6105 = vmatprep.mubr.bf16.mxu0 %v3849
        %6106 = vmatmul.mubr.bf16.gmra.mxu0 %v3848
        %v6107 = vpop.f32.mrf.mxu0
        %v6108 = vadd.f32 %v4207, %v6107
        %v6109 = vpop.f32.mrf.mxu0
        %v6110 = vpop.f32.mrf.mxu0
        %v6111 = vadd.f32 %v4207, %v6110
        %v6112 = vpop.f32.mrf.mxu0
        %6113 = vmatprep.mubr.bf16.mxu0 %v3857
        %6114 = vmatmul.mubr.bf16.gmra.mxu0 %v3856
        %v6115 = vpop.f32.mrf.mxu0
        %v6116 = vadd.f32 %v4207, %v6115
        %v6117 = vpop.f32.mrf.mxu0
        %v6118 = vpop.f32.mrf.mxu0
        %v6119 = vadd.f32 %v4207, %v6118
        %v6120 = vpop.f32.mrf.mxu0
        %6121 = vmatprep.mubr.bf16.mxu0 %v3865
        %6122 = vmatmul.mubr.bf16.gmra.mxu0 %v3864
        %v6123 = vpop.f32.mrf.mxu0
        %v6124 = vadd.f32 %v4207, %v6123
        %v6125 = vpop.f32.mrf.mxu0
        %v6126 = vpop.f32.mrf.mxu0
        %v6127 = vadd.f32 %v4207, %v6126
        %v6128 = vpop.f32.mrf.mxu0
        %6129 = vmatprep.mubr.bf16.mxu0 %v3873
        %6130 = vmatmul.mubr.bf16.gmra.mxu0 %v3872
        %v6131 = vpop.f32.mrf.mxu0
        %v6132 = vadd.f32 %v4207, %v6131
        %v6133 = vpop.f32.mrf.mxu0
        %v6134 = vpop.f32.mrf.mxu0
        %v6135 = vadd.f32 %v4207, %v6134
        %v6136 = vpop.f32.mrf.mxu0
        %6137 = vmatprep.mubr.bf16.mxu0 %v3881
        %6138 = vmatmul.mubr.bf16.gmra.mxu0 %v3880
        %v6139 = vpop.f32.mrf.mxu0
        %v6140 = vadd.f32 %v4207, %v6139
        %v6141 = vpop.f32.mrf.mxu0
        %v6142 = vpop.f32.mrf.mxu0
        %v6143 = vadd.f32 %v4207, %v6142
        %v6144 = vpop.f32.mrf.mxu0
        %6145 = vmatprep.mubr.bf16.mxu0 %v3889
        %6146 = vmatmul.mubr.bf16.gmra.mxu0 %v3888
        %v6147 = vpop.f32.mrf.mxu0
        %v6148 = vadd.f32 %v4207, %v6147
        %v6149 = vpop.f32.mrf.mxu0
        %v6150 = vpop.f32.mrf.mxu0
        %v6151 = vadd.f32 %v4207, %v6150
        %v6152 = vpop.f32.mrf.mxu0
        %6153 = vmatprep.mubr.bf16.mxu0 %v3897
        %6154 = vmatmul.mubr.bf16.gmra.mxu0 %v3896
        %v6155 = vpop.f32.mrf.mxu0
        %v6156 = vadd.f32 %v4207, %v6155
        %v6157 = vpop.f32.mrf.mxu0
        %v6158 = vpop.f32.mrf.mxu0
        %v6159 = vadd.f32 %v4207, %v6158
        %v6160 = vpop.f32.mrf.mxu0
        %6161 = vmatprep.mubr.bf16.mxu0 %v3905
        %6162 = vmatmul.mubr.bf16.gmra.mxu0 %v3904
        %v6163 = vpop.f32.mrf.mxu0
        %v6164 = vadd.f32 %v4207, %v6163
        %v6165 = vpop.f32.mrf.mxu0
        %v6166 = vpop.f32.mrf.mxu0
        %v6167 = vadd.f32 %v4207, %v6166
        %v6168 = vpop.f32.mrf.mxu0
        %6169 = vmatprep.mubr.bf16.mxu0 %v3913
        %6170 = vmatmul.mubr.bf16.gmra.mxu0 %v3912
        %v6171 = vpop.f32.mrf.mxu0
        %v6172 = vadd.f32 %v4207, %v6171
        %v6173 = vpop.f32.mrf.mxu0
        %v6174 = vpop.f32.mrf.mxu0
        %v6175 = vadd.f32 %v4207, %v6174
        %v6176 = vpop.f32.mrf.mxu0
        %6177 = vmatprep.mubr.bf16.mxu0 %v3921
        %6178 = vmatmul.mubr.bf16.gmra.mxu0 %v3920
        %v6179 = vpop.f32.mrf.mxu0
        %v6180 = vadd.f32 %v4207, %v6179
        %v6181 = vpop.f32.mrf.mxu0
        %v6182 = vpop.f32.mrf.mxu0
        %v6183 = vadd.f32 %v4207, %v6182
        %v6184 = vpop.f32.mrf.mxu0
        %6185 = vmatprep.mubr.bf16.mxu0 %v3929
        %6186 = vmatmul.mubr.bf16.gmra.mxu0 %v3928
        %v6187 = vpop.f32.mrf.mxu0
        %v6188 = vadd.f32 %v4207, %v6187
        %v6189 = vpop.f32.mrf.mxu0
        %v6190 = vpop.f32.mrf.mxu0
        %v6191 = vadd.f32 %v4207, %v6190
        %v6192 = vpop.f32.mrf.mxu0
        %6193 = vmatprep.mubr.bf16.mxu0 %v3937
        %6194 = vmatmul.mubr.bf16.gmra.mxu0 %v3936
        %v6195 = vpop.f32.mrf.mxu0
        %v6196 = vadd.f32 %v4207, %v6195
        %v6197 = vpop.f32.mrf.mxu0
        %v6198 = vpop.f32.mrf.mxu0
        %v6199 = vadd.f32 %v4207, %v6198
        %v6200 = vpop.f32.mrf.mxu0
        %6201 = vdwg.mxu0
        %6202 = vmatprep.subr.bf16.mxu0 0
        %6203 = vmatpush1.bf16.msra.mxu0 %v4907
        %6204 = vmatprep.subr.bf16.mxu0 0
        %6205 = vmatpush1.bf16.msra.mxu0 %v4904
        %6206 = vmatprep.subr.bf16.mxu0 0
        %6207 = vmatpush1.bf16.msra.mxu0 %v4901
        %6208 = vmatprep.subr.bf16.mxu0 0
        %6209 = vmatpush1.bf16.msra.mxu0 %v4898
        %6210 = vmatprep.subr.bf16.mxu0 0
        %6211 = vmatpush1.bf16.msra.mxu0 %v4895
        %6212 = vmatprep.subr.bf16.mxu0 0
        %6213 = vmatpush1.bf16.msra.mxu0 %v4892
        %6214 = vmatprep.subr.bf16.mxu0 0
        %6215 = vmatpush1.bf16.msra.mxu0 %v4889
        %6216 = vmatprep.subr.bf16.mxu0 0
        %6217 = vmatpush1.bf16.msra.mxu0 %v4886
        %6218 = vmatprep.subr.bf16.mxu0 0
        %6219 = vmatpush2.bf16.msra.mxu0 %v4931
        %6220 = vmatprep.subr.bf16.mxu0 0
        %6221 = vmatpush2.bf16.msra.mxu0 %v4928
        %6222 = vmatprep.subr.bf16.mxu0 0
        %6223 = vmatpush2.bf16.msra.mxu0 %v4925
        %6224 = vmatprep.subr.bf16.mxu0 0
        %6225 = vmatpush2.bf16.msra.mxu0 %v4922
        %6226 = vmatprep.subr.bf16.mxu0 0
        %6227 = vmatpush2.bf16.msra.mxu0 %v4919
        %6228 = vmatprep.subr.bf16.mxu0 0
        %6229 = vmatpush2.bf16.msra.mxu0 %v4916
        %6230 = vmatprep.subr.bf16.mxu0 0
        %6231 = vmatpush2.bf16.msra.mxu0 %v4913
        %6232 = vmatprep.subr.bf16.mxu0 0
        %6233 = vmatpush2.bf16.msra.mxu0 %v4910
        %6234 = vmatprep.mubr.bf16.mxu0 %v3819
        %6235 = vmatmul.mubr.bf16.gmra.mxu0 %v3818
        %v6236 = vpop.f32.mrf.mxu0
        %v6237 = vadd.f32 %v6076, %v6236
        %v6238 = vpop.f32.mrf.mxu0
        %v6239 = vpop.f32.mrf.mxu0
        %v6240 = vadd.f32 %v6079, %v6239
        %v6241 = vpop.f32.mrf.mxu0
        %6242 = vmatprep.mubr.bf16.mxu0 %v3827
        %6243 = vmatmul.mubr.bf16.gmra.mxu0 %v3826
        %v6244 = vpop.f32.mrf.mxu0
        %v6245 = vadd.f32 %v6084, %v6244
        %v6246 = vpop.f32.mrf.mxu0
        %v6247 = vpop.f32.mrf.mxu0
        %v6248 = vadd.f32 %v6087, %v6247
        %v6249 = vpop.f32.mrf.mxu0
        %6250 = vmatprep.mubr.bf16.mxu0 %v3835
        %6251 = vmatmul.mubr.bf16.gmra.mxu0 %v3834
        %v6252 = vpop.f32.mrf.mxu0
        %v6253 = vadd.f32 %v6092, %v6252
        %v6254 = vpop.f32.mrf.mxu0
        %v6255 = vpop.f32.mrf.mxu0
        %v6256 = vadd.f32 %v6095, %v6255
        %v6257 = vpop.f32.mrf.mxu0
        %6258 = vmatprep.mubr.bf16.mxu0 %v3843
        %6259 = vmatmul.mubr.bf16.gmra.mxu0 %v3842
        %v6260 = vpop.f32.mrf.mxu0
        %v6261 = vadd.f32 %v6100, %v6260
        %v6262 = vpop.f32.mrf.mxu0
        %v6263 = vpop.f32.mrf.mxu0
        %v6264 = vadd.f32 %v6103, %v6263
        %v6265 = vpop.f32.mrf.mxu0
        %6266 = vmatprep.mubr.bf16.mxu0 %v3851
        %6267 = vmatmul.mubr.bf16.gmra.mxu0 %v3850
        %v6268 = vpop.f32.mrf.mxu0
        %v6269 = vadd.f32 %v6108, %v6268
        %v6270 = vpop.f32.mrf.mxu0
        %v6271 = vpop.f32.mrf.mxu0
        %v6272 = vadd.f32 %v6111, %v6271
        %v6273 = vpop.f32.mrf.mxu0
        %6274 = vmatprep.mubr.bf16.mxu0 %v3859
        %6275 = vmatmul.mubr.bf16.gmra.mxu0 %v3858
        %v6276 = vpop.f32.mrf.mxu0
        %v6277 = vadd.f32 %v6116, %v6276
        %v6278 = vpop.f32.mrf.mxu0
        %v6279 = vpop.f32.mrf.mxu0
        %v6280 = vadd.f32 %v6119, %v6279
        %v6281 = vpop.f32.mrf.mxu0
        %6282 = vmatprep.mubr.bf16.mxu0 %v3867
        %6283 = vmatmul.mubr.bf16.gmra.mxu0 %v3866
        %v6284 = vpop.f32.mrf.mxu0
        %v6285 = vadd.f32 %v6124, %v6284
        %v6286 = vpop.f32.mrf.mxu0
        %v6287 = vpop.f32.mrf.mxu0
        %v6288 = vadd.f32 %v6127, %v6287
        %v6289 = vpop.f32.mrf.mxu0
        %6290 = vmatprep.mubr.bf16.mxu0 %v3875
        %6291 = vmatmul.mubr.bf16.gmra.mxu0 %v3874
        %v6292 = vpop.f32.mrf.mxu0
        %v6293 = vadd.f32 %v6132, %v6292
        %v6294 = vpop.f32.mrf.mxu0
        %v6295 = vpop.f32.mrf.mxu0
        %v6296 = vadd.f32 %v6135, %v6295
        %v6297 = vpop.f32.mrf.mxu0
        %6298 = vmatprep.mubr.bf16.mxu0 %v3883
        %6299 = vmatmul.mubr.bf16.gmra.mxu0 %v3882
        %v6300 = vpop.f32.mrf.mxu0
        %v6301 = vadd.f32 %v6140, %v6300
        %v6302 = vpop.f32.mrf.mxu0
        %v6303 = vpop.f32.mrf.mxu0
        %v6304 = vadd.f32 %v6143, %v6303
        %v6305 = vpop.f32.mrf.mxu0
        %6306 = vmatprep.mubr.bf16.mxu0 %v3891
        %6307 = vmatmul.mubr.bf16.gmra.mxu0 %v3890
        %v6308 = vpop.f32.mrf.mxu0
        %v6309 = vadd.f32 %v6148, %v6308
        %v6310 = vpop.f32.mrf.mxu0
        %v6311 = vpop.f32.mrf.mxu0
        %v6312 = vadd.f32 %v6151, %v6311
        %v6313 = vpop.f32.mrf.mxu0
        %6314 = vmatprep.mubr.bf16.mxu0 %v3899
        %6315 = vmatmul.mubr.bf16.gmra.mxu0 %v3898
        %v6316 = vpop.f32.mrf.mxu0
        %v6317 = vadd.f32 %v6156, %v6316
        %v6318 = vpop.f32.mrf.mxu0
        %v6319 = vpop.f32.mrf.mxu0
        %v6320 = vadd.f32 %v6159, %v6319
        %v6321 = vpop.f32.mrf.mxu0
        %6322 = vmatprep.mubr.bf16.mxu0 %v3907
        %6323 = vmatmul.mubr.bf16.gmra.mxu0 %v3906
        %v6324 = vpop.f32.mrf.mxu0
        %v6325 = vadd.f32 %v6164, %v6324
        %v6326 = vpop.f32.mrf.mxu0
        %v6327 = vpop.f32.mrf.mxu0
        %v6328 = vadd.f32 %v6167, %v6327
        %v6329 = vpop.f32.mrf.mxu0
        %6330 = vmatprep.mubr.bf16.mxu0 %v3915
        %6331 = vmatmul.mubr.bf16.gmra.mxu0 %v3914
        %v6332 = vpop.f32.mrf.mxu0
        %v6333 = vadd.f32 %v6172, %v6332
        %v6334 = vpop.f32.mrf.mxu0
        %v6335 = vpop.f32.mrf.mxu0
        %v6336 = vadd.f32 %v6175, %v6335
        %v6337 = vpop.f32.mrf.mxu0
        %6338 = vmatprep.mubr.bf16.mxu0 %v3923
        %6339 = vmatmul.mubr.bf16.gmra.mxu0 %v3922
        %v6340 = vpop.f32.mrf.mxu0
        %v6341 = vadd.f32 %v6180, %v6340
        %v6342 = vpop.f32.mrf.mxu0
        %v6343 = vpop.f32.mrf.mxu0
        %v6344 = vadd.f32 %v6183, %v6343
        %v6345 = vpop.f32.mrf.mxu0
        %6346 = vmatprep.mubr.bf16.mxu0 %v3931
        %6347 = vmatmul.mubr.bf16.gmra.mxu0 %v3930
        %v6348 = vpop.f32.mrf.mxu0
        %v6349 = vadd.f32 %v6188, %v6348
        %v6350 = vpop.f32.mrf.mxu0
        %v6351 = vpop.f32.mrf.mxu0
        %v6352 = vadd.f32 %v6191, %v6351
        %v6353 = vpop.f32.mrf.mxu0
        %6354 = vmatprep.mubr.bf16.mxu0 %v3939
        %6355 = vmatmul.mubr.bf16.gmra.mxu0 %v3938
        %v6356 = vpop.f32.mrf.mxu0
        %v6357 = vadd.f32 %v6196, %v6356
        %v6358 = vpop.f32.mrf.mxu0
        %v6359 = vpop.f32.mrf.mxu0
        %v6360 = vadd.f32 %v6199, %v6359
        %v6361 = vpop.f32.mrf.mxu0
        %6362 = vdwg.mxu0
        %6363 = vmatprep.subr.bf16.mxu0 0
        %6364 = vmatpush1.bf16.msra.mxu0 %v4955
        %6365 = vmatprep.subr.bf16.mxu0 0
        %6366 = vmatpush1.bf16.msra.mxu0 %v4952
        %6367 = vmatprep.subr.bf16.mxu0 0
        %6368 = vmatpush1.bf16.msra.mxu0 %v4949
        %6369 = vmatprep.subr.bf16.mxu0 0
        %6370 = vmatpush1.bf16.msra.mxu0 %v4946
        %6371 = vmatprep.subr.bf16.mxu0 0
        %6372 = vmatpush1.bf16.msra.mxu0 %v4943
        %6373 = vmatprep.subr.bf16.mxu0 0
        %6374 = vmatpush1.bf16.msra.mxu0 %v4940
        %6375 = vmatprep.subr.bf16.mxu0 0
        %6376 = vmatpush1.bf16.msra.mxu0 %v4937
        %6377 = vmatprep.subr.bf16.mxu0 0
        %6378 = vmatpush1.bf16.msra.mxu0 %v4934
        %6379 = vmatprep.subr.bf16.mxu0 0
        %6380 = vmatpush2.bf16.msra.mxu0 %v4979
        %6381 = vmatprep.subr.bf16.mxu0 0
        %6382 = vmatpush2.bf16.msra.mxu0 %v4976
        %6383 = vmatprep.subr.bf16.mxu0 0
        %6384 = vmatpush2.bf16.msra.mxu0 %v4973
        %6385 = vmatprep.subr.bf16.mxu0 0
        %6386 = vmatpush2.bf16.msra.mxu0 %v4970
        %6387 = vmatprep.subr.bf16.mxu0 0
        %6388 = vmatpush2.bf16.msra.mxu0 %v4967
        %6389 = vmatprep.subr.bf16.mxu0 0
        %6390 = vmatpush2.bf16.msra.mxu0 %v4964
        %6391 = vmatprep.subr.bf16.mxu0 0
        %6392 = vmatpush2.bf16.msra.mxu0 %v4961
        %6393 = vmatprep.subr.bf16.mxu0 0
        %6394 = vmatpush2.bf16.msra.mxu0 %v4958
        %6395 = vmatprep.mubr.bf16.mxu0 %v3821
        %6396 = vmatmul.mubr.bf16.gmra.mxu0 %v3820
        %v6397 = vpop.f32.mrf.mxu0
        %v6398 = vadd.f32 %v6237, %v6397
        %v6399 = vpop.f32.mrf.mxu0
        %v6400 = vpop.f32.mrf.mxu0
        %v6401 = vadd.f32 %v6240, %v6400
        %v6402 = vpop.f32.mrf.mxu0
        %6403 = vmatprep.mubr.bf16.mxu0 %v3829
        %6404 = vmatmul.mubr.bf16.gmra.mxu0 %v3828
        %v6405 = vpop.f32.mrf.mxu0
        %v6406 = vadd.f32 %v6245, %v6405
        %v6407 = vpop.f32.mrf.mxu0
        %v6408 = vpop.f32.mrf.mxu0
        %v6409 = vadd.f32 %v6248, %v6408
        %v6410 = vpop.f32.mrf.mxu0
        %6411 = vmatprep.mubr.bf16.mxu0 %v3837
        %6412 = vmatmul.mubr.bf16.gmra.mxu0 %v3836
        %v6413 = vpop.f32.mrf.mxu0
        %v6414 = vadd.f32 %v6253, %v6413
        %v6415 = vpop.f32.mrf.mxu0
        %v6416 = vpop.f32.mrf.mxu0
        %v6417 = vadd.f32 %v6256, %v6416
        %v6418 = vpop.f32.mrf.mxu0
        %6419 = vmatprep.mubr.bf16.mxu0 %v3845
        %6420 = vmatmul.mubr.bf16.gmra.mxu0 %v3844
        %v6421 = vpop.f32.mrf.mxu0
        %v6422 = vadd.f32 %v6261, %v6421
        %v6423 = vpop.f32.mrf.mxu0
        %v6424 = vpop.f32.mrf.mxu0
        %v6425 = vadd.f32 %v6264, %v6424
        %v6426 = vpop.f32.mrf.mxu0
        %6427 = vmatprep.mubr.bf16.mxu0 %v3853
        %6428 = vmatmul.mubr.bf16.gmra.mxu0 %v3852
        %v6429 = vpop.f32.mrf.mxu0
        %v6430 = vadd.f32 %v6269, %v6429
        %v6431 = vpop.f32.mrf.mxu0
        %v6432 = vpop.f32.mrf.mxu0
        %v6433 = vadd.f32 %v6272, %v6432
        %v6434 = vpop.f32.mrf.mxu0
        %6435 = vmatprep.mubr.bf16.mxu0 %v3861
        %6436 = vmatmul.mubr.bf16.gmra.mxu0 %v3860
        %v6437 = vpop.f32.mrf.mxu0
        %v6438 = vadd.f32 %v6277, %v6437
        %v6439 = vpop.f32.mrf.mxu0
        %v6440 = vpop.f32.mrf.mxu0
        %v6441 = vadd.f32 %v6280, %v6440
        %v6442 = vpop.f32.mrf.mxu0
        %6443 = vmatprep.mubr.bf16.mxu0 %v3869
        %6444 = vmatmul.mubr.bf16.gmra.mxu0 %v3868
        %v6445 = vpop.f32.mrf.mxu0
        %v6446 = vadd.f32 %v6285, %v6445
        %v6447 = vpop.f32.mrf.mxu0
        %v6448 = vpop.f32.mrf.mxu0
        %v6449 = vadd.f32 %v6288, %v6448
        %v6450 = vpop.f32.mrf.mxu0
        %6451 = vmatprep.mubr.bf16.mxu0 %v3877
        %6452 = vmatmul.mubr.bf16.gmra.mxu0 %v3876
        %v6453 = vpop.f32.mrf.mxu0
        %v6454 = vadd.f32 %v6293, %v6453
        %v6455 = vpop.f32.mrf.mxu0
        %v6456 = vpop.f32.mrf.mxu0
        %v6457 = vadd.f32 %v6296, %v6456
        %v6458 = vpop.f32.mrf.mxu0
        %6459 = vmatprep.mubr.bf16.mxu0 %v3885
        %6460 = vmatmul.mubr.bf16.gmra.mxu0 %v3884
        %v6461 = vpop.f32.mrf.mxu0
        %v6462 = vadd.f32 %v6301, %v6461
        %v6463 = vpop.f32.mrf.mxu0
        %v6464 = vpop.f32.mrf.mxu0
        %v6465 = vadd.f32 %v6304, %v6464
        %v6466 = vpop.f32.mrf.mxu0
        %6467 = vmatprep.mubr.bf16.mxu0 %v3893
        %6468 = vmatmul.mubr.bf16.gmra.mxu0 %v3892
        %v6469 = vpop.f32.mrf.mxu0
        %v6470 = vadd.f32 %v6309, %v6469
        %v6471 = vpop.f32.mrf.mxu0
        %v6472 = vpop.f32.mrf.mxu0
        %v6473 = vadd.f32 %v6312, %v6472
        %v6474 = vpop.f32.mrf.mxu0
        %6475 = vmatprep.mubr.bf16.mxu0 %v3901
        %6476 = vmatmul.mubr.bf16.gmra.mxu0 %v3900
        %v6477 = vpop.f32.mrf.mxu0
        %v6478 = vadd.f32 %v6317, %v6477
        %v6479 = vpop.f32.mrf.mxu0
        %v6480 = vpop.f32.mrf.mxu0
        %v6481 = vadd.f32 %v6320, %v6480
        %v6482 = vpop.f32.mrf.mxu0
        %6483 = vmatprep.mubr.bf16.mxu0 %v3909
        %6484 = vmatmul.mubr.bf16.gmra.mxu0 %v3908
        %v6485 = vpop.f32.mrf.mxu0
        %v6486 = vadd.f32 %v6325, %v6485
        %v6487 = vpop.f32.mrf.mxu0
        %v6488 = vpop.f32.mrf.mxu0
        %v6489 = vadd.f32 %v6328, %v6488
        %v6490 = vpop.f32.mrf.mxu0
        %6491 = vmatprep.mubr.bf16.mxu0 %v3917
        %6492 = vmatmul.mubr.bf16.gmra.mxu0 %v3916
        %v6493 = vpop.f32.mrf.mxu0
        %v6494 = vadd.f32 %v6333, %v6493
        %v6495 = vpop.f32.mrf.mxu0
        %v6496 = vpop.f32.mrf.mxu0
        %v6497 = vadd.f32 %v6336, %v6496
        %v6498 = vpop.f32.mrf.mxu0
        %6499 = vmatprep.mubr.bf16.mxu0 %v3925
        %6500 = vmatmul.mubr.bf16.gmra.mxu0 %v3924
        %v6501 = vpop.f32.mrf.mxu0
        %v6502 = vadd.f32 %v6341, %v6501
        %v6503 = vpop.f32.mrf.mxu0
        %v6504 = vpop.f32.mrf.mxu0
        %v6505 = vadd.f32 %v6344, %v6504
        %v6506 = vpop.f32.mrf.mxu0
        %6507 = vmatprep.mubr.bf16.mxu0 %v3933
        %6508 = vmatmul.mubr.bf16.gmra.mxu0 %v3932
        %v6509 = vpop.f32.mrf.mxu0
        %v6510 = vadd.f32 %v6349, %v6509
        %v6511 = vpop.f32.mrf.mxu0
        %v6512 = vpop.f32.mrf.mxu0
        %v6513 = vadd.f32 %v6352, %v6512
        %v6514 = vpop.f32.mrf.mxu0
        %6515 = vmatprep.mubr.bf16.mxu0 %v3941
        %6516 = vmatmul.mubr.bf16.gmra.mxu0 %v3940
        %v6517 = vpop.f32.mrf.mxu0
        %v6518 = vadd.f32 %v6357, %v6517
        %v6519 = vpop.f32.mrf.mxu0
        %v6520 = vpop.f32.mrf.mxu0
        %v6521 = vadd.f32 %v6360, %v6520
        %v6522 = vpop.f32.mrf.mxu0
        %6523 = vdwg.mxu0
        %6524 = vmatprep.subr.bf16.mxu0 0
        %6525 = vmatpush1.bf16.msra.mxu0 %v5003
        %6526 = vmatprep.subr.bf16.mxu0 0
        %6527 = vmatpush1.bf16.msra.mxu0 %v5000
        %6528 = vmatprep.subr.bf16.mxu0 0
        %6529 = vmatpush1.bf16.msra.mxu0 %v4997
        %6530 = vmatprep.subr.bf16.mxu0 0
        %6531 = vmatpush1.bf16.msra.mxu0 %v4994
        %6532 = vmatprep.subr.bf16.mxu0 0
        %6533 = vmatpush1.bf16.msra.mxu0 %v4991
        %6534 = vmatprep.subr.bf16.mxu0 0
        %6535 = vmatpush1.bf16.msra.mxu0 %v4988
        %6536 = vmatprep.subr.bf16.mxu0 0
        %6537 = vmatpush1.bf16.msra.mxu0 %v4985
        %6538 = vmatprep.subr.bf16.mxu0 0
        %6539 = vmatpush1.bf16.msra.mxu0 %v4982
        %6540 = vmatprep.subr.bf16.mxu0 0
        %6541 = vmatpush2.bf16.msra.mxu0 0
        %6542 = vmatprep.subr.bf16.mxu0 0
        %6543 = vmatpush2.bf16.msra.mxu0 %v5267
        %6544 = vmatprep.subr.bf16.mxu0 0
        %6545 = vmatpush2.bf16.msra.mxu0 %v5021
        %6546 = vmatprep.subr.bf16.mxu0 0
        %6547 = vmatpush2.bf16.msra.mxu0 %v5018
        %6548 = vmatprep.subr.bf16.mxu0 0
        %6549 = vmatpush2.bf16.msra.mxu0 %v5015
        %6550 = vmatprep.subr.bf16.mxu0 0
        %6551 = vmatpush2.bf16.msra.mxu0 %v5012
        %6552 = vmatprep.subr.bf16.mxu0 0
        %6553 = vmatpush2.bf16.msra.mxu0 %v5009
        %6554 = vmatprep.subr.bf16.mxu0 0
        %6555 = vmatpush2.bf16.msra.mxu0 %v5006
        %6556 = vmatprep.mubr.bf16.mxu0 %v5212
        %6557 = vmatmul.mubr.bf16.gmra.mxu0 %v3822
        %v6558 = vpop.f32.mrf.mxu0
        %v6559 = vadd.f32 %v6398, %v6558
        %v6560 = vpop.f32.mrf.mxu0
        %v6561 = vpop.f32.mrf.mxu0
        %v6562 = vadd.f32 %v6401, %v6561
        %v6563 = vpop.f32.mrf.mxu0
        %6564 = vmatprep.mubr.bf16.mxu0 %v5215
        %6565 = vmatmul.mubr.bf16.gmra.mxu0 %v3830
        %v6566 = vpop.f32.mrf.mxu0
        %v6567 = vadd.f32 %v6406, %v6566
        %v6568 = vpop.f32.mrf.mxu0
        %v6569 = vpop.f32.mrf.mxu0
        %v6570 = vadd.f32 %v6409, %v6569
        %v6571 = vpop.f32.mrf.mxu0
        %6572 = vmatprep.mubr.bf16.mxu0 %v5218
        %6573 = vmatmul.mubr.bf16.gmra.mxu0 %v3838
        %v6574 = vpop.f32.mrf.mxu0
        %v6575 = vadd.f32 %v6414, %v6574
        %v6576 = vpop.f32.mrf.mxu0
        %v6577 = vpop.f32.mrf.mxu0
        %v6578 = vadd.f32 %v6417, %v6577
        %v6579 = vpop.f32.mrf.mxu0
        %6580 = vmatprep.mubr.bf16.mxu0 %v5221
        %6581 = vmatmul.mubr.bf16.gmra.mxu0 %v3846
        %v6582 = vpop.f32.mrf.mxu0
        %v6583 = vadd.f32 %v6422, %v6582
        %v6584 = vpop.f32.mrf.mxu0
        %v6585 = vpop.f32.mrf.mxu0
        %v6586 = vadd.f32 %v6425, %v6585
        %v6587 = vpop.f32.mrf.mxu0
        %6588 = vmatprep.mubr.bf16.mxu0 %v5224
        %6589 = vmatmul.mubr.bf16.gmra.mxu0 %v3854
        %v6590 = vpop.f32.mrf.mxu0
        %v6591 = vadd.f32 %v6430, %v6590
        %v6592 = vpop.f32.mrf.mxu0
        %v6593 = vpop.f32.mrf.mxu0
        %v6594 = vadd.f32 %v6433, %v6593
        %v6595 = vpop.f32.mrf.mxu0
        %6596 = vmatprep.mubr.bf16.mxu0 %v5227
        %6597 = vmatmul.mubr.bf16.gmra.mxu0 %v3862
        %v6598 = vpop.f32.mrf.mxu0
        %v6599 = vadd.f32 %v6438, %v6598
        %v6600 = vpop.f32.mrf.mxu0
        %v6601 = vpop.f32.mrf.mxu0
        %v6602 = vadd.f32 %v6441, %v6601
        %v6603 = vpop.f32.mrf.mxu0
        %6604 = vmatprep.mubr.bf16.mxu0 %v5230
        %6605 = vmatmul.mubr.bf16.gmra.mxu0 %v3870
        %v6606 = vpop.f32.mrf.mxu0
        %v6607 = vadd.f32 %v6446, %v6606
        %v6608 = vpop.f32.mrf.mxu0
        %v6609 = vpop.f32.mrf.mxu0
        %v6610 = vadd.f32 %v6449, %v6609
        %v6611 = vpop.f32.mrf.mxu0
        %6612 = vmatprep.mubr.bf16.mxu0 %v5233
        %6613 = vmatmul.mubr.bf16.gmra.mxu0 %v3878
        %v6614 = vpop.f32.mrf.mxu0
        %v6615 = vadd.f32 %v6454, %v6614
        %v6616 = vpop.f32.mrf.mxu0
        %v6617 = vpop.f32.mrf.mxu0
        %v6618 = vadd.f32 %v6457, %v6617
        %v6619 = vpop.f32.mrf.mxu0
        %6620 = vmatprep.mubr.bf16.mxu0 %v5236
        %6621 = vmatmul.mubr.bf16.gmra.mxu0 %v3886
        %v6622 = vpop.f32.mrf.mxu0
        %v6623 = vadd.f32 %v6462, %v6622
        %v6624 = vpop.f32.mrf.mxu0
        %v6625 = vpop.f32.mrf.mxu0
        %v6626 = vadd.f32 %v6465, %v6625
        %v6627 = vpop.f32.mrf.mxu0
        %6628 = vmatprep.mubr.bf16.mxu0 %v5239
        %6629 = vmatmul.mubr.bf16.gmra.mxu0 %v3894
        %v6630 = vpop.f32.mrf.mxu0
        %v6631 = vadd.f32 %v6470, %v6630
        %v6632 = vpop.f32.mrf.mxu0
        %v6633 = vpop.f32.mrf.mxu0
        %v6634 = vadd.f32 %v6473, %v6633
        %v6635 = vpop.f32.mrf.mxu0
        %6636 = vmatprep.mubr.bf16.mxu0 %v5242
        %6637 = vmatmul.mubr.bf16.gmra.mxu0 %v3902
        %v6638 = vpop.f32.mrf.mxu0
        %v6639 = vadd.f32 %v6478, %v6638
        %v6640 = vpop.f32.mrf.mxu0
        %v6641 = vpop.f32.mrf.mxu0
        %v6642 = vadd.f32 %v6481, %v6641
        %v6643 = vpop.f32.mrf.mxu0
        %6644 = vmatprep.mubr.bf16.mxu0 %v5245
        %6645 = vmatmul.mubr.bf16.gmra.mxu0 %v3910
        %v6646 = vpop.f32.mrf.mxu0
        %v6647 = vadd.f32 %v6486, %v6646
        %v6648 = vpop.f32.mrf.mxu0
        %v6649 = vpop.f32.mrf.mxu0
        %v6650 = vadd.f32 %v6489, %v6649
        %v6651 = vpop.f32.mrf.mxu0
        %6652 = vmatprep.mubr.bf16.mxu0 %v5248
        %6653 = vmatmul.mubr.bf16.gmra.mxu0 %v3918
        %v6654 = vpop.f32.mrf.mxu0
        %v6655 = vadd.f32 %v6494, %v6654
        %v6656 = vpop.f32.mrf.mxu0
        %v6657 = vpop.f32.mrf.mxu0
        %v6658 = vadd.f32 %v6497, %v6657
        %v6659 = vpop.f32.mrf.mxu0
        %6660 = vmatprep.mubr.bf16.mxu0 %v5251
        %6661 = vmatmul.mubr.bf16.gmra.mxu0 %v3926
        %v6662 = vpop.f32.mrf.mxu0
        %v6663 = vadd.f32 %v6502, %v6662
        %v6664 = vpop.f32.mrf.mxu0
        %v6665 = vpop.f32.mrf.mxu0
        %v6666 = vadd.f32 %v6505, %v6665
        %v6667 = vpop.f32.mrf.mxu0
        %6668 = vmatprep.mubr.bf16.mxu0 %v5254
        %6669 = vmatmul.mubr.bf16.gmra.mxu0 %v3934
        %v6670 = vpop.f32.mrf.mxu0
        %v6671 = vadd.f32 %v6510, %v6670
        %v6672 = vpop.f32.mrf.mxu0
        %v6673 = vpop.f32.mrf.mxu0
        %v6674 = vadd.f32 %v6513, %v6673
        %v6675 = vpop.f32.mrf.mxu0
        %6676 = vmatprep.mubr.bf16.mxu0 %v5257
        %6677 = vmatmul.mubr.bf16.gmra.mxu0 %v3942
        %v6678 = vpop.f32.mrf.mxu0
        %v6679 = vadd.f32 %v6518, %v6678
        %v6680 = vpop.f32.mrf.mxu0
        %v6681 = vpop.f32.mrf.mxu0
        %v6682 = vadd.f32 %v6521, %v6681
        %v6683 = vpop.f32.mrf.mxu0
        %6684 = vdwg.mxu0
        %v6685 = vsub.f32 %v5883, %v339
        %v6686 = vsub.f32 %v5885, %v340
        %v6687 = vsub.f32 %v6559, %v341
        %v6688 = vsub.f32 %v5887, %v342
        %v6689 = vsub.f32 %v5889, %v343
        %v6690 = vsub.f32 %v6562, %v344
        %v6691 = vsub.f32 %v5893, %v345
        %v6692 = vsub.f32 %v5895, %v346
        %v6693 = vsub.f32 %v6567, %v347
        %v6694 = vsub.f32 %v5897, %v348
        %v6695 = vsub.f32 %v5899, %v349
        %v6696 = vsub.f32 %v6570, %v350
        %v6697 = vsub.f32 %v5903, %v351
        %v6698 = vsub.f32 %v5905, %v352
        %v6699 = vsub.f32 %v6575, %v353
        %v6700 = vsub.f32 %v5907, %v354
        %v6701 = vsub.f32 %v5909, %v355
        %v6702 = vsub.f32 %v6578, %v356
        %v6703 = vsub.f32 %v5913, %v357
        %v6704 = vsub.f32 %v5915, %v358
        %v6705 = vsub.f32 %v6583, %v359
        %v6706 = vsub.f32 %v5917, %v360
        %v6707 = vsub.f32 %v5919, %v361
        %v6708 = vsub.f32 %v6586, %v362
        %v6709 = vsub.f32 %v5923, %v363
        %v6710 = vsub.f32 %v5925, %v364
        %v6711 = vsub.f32 %v6591, %v365
        %v6712 = vsub.f32 %v5927, %v366
        %v6713 = vsub.f32 %v5929, %v367
        %v6714 = vsub.f32 %v6594, %v368
        %v6715 = vsub.f32 %v5933, %v369
        %v6716 = vsub.f32 %v5935, %v370
        %v6717 = vsub.f32 %v6599, %v371
        %v6718 = vsub.f32 %v5937, %v372
        %v6719 = vsub.f32 %v5939, %v373
        %v6720 = vsub.f32 %v6602, %v374
        %v6721 = vsub.f32 %v5943, %v375
        %v6722 = vsub.f32 %v5945, %v376
        %v6723 = vsub.f32 %v6607, %v377
        %v6724 = vsub.f32 %v5947, %v378
        %v6725 = vsub.f32 %v5949, %v379
        %v6726 = vsub.f32 %v6610, %v380
        %v6727 = vsub.f32 %v5953, %v381
        %v6728 = vsub.f32 %v5955, %v382
        %v6729 = vsub.f32 %v6615, %v383
        %v6730 = vsub.f32 %v5957, %v384
        %v6731 = vsub.f32 %v5959, %v385
        %v6732 = vsub.f32 %v6618, %v386
        %v6733 = vsub.f32 %v5963, %v387
        %v6734 = vsub.f32 %v5965, %v388
        %v6735 = vsub.f32 %v6623, %v389
        %v6736 = vsub.f32 %v5967, %v390
        %v6737 = vsub.f32 %v5969, %v391
        %v6738 = vsub.f32 %v6626, %v392
        %v6739 = vsub.f32 %v5973, %v393
        %v6740 = vsub.f32 %v5975, %v394
        %v6741 = vsub.f32 %v6631, %v395
        %v6742 = vsub.f32 %v5977, %v396
        %v6743 = vsub.f32 %v5979, %v397
        %v6744 = vsub.f32 %v6634, %v398
        %v6745 = vsub.f32 %v5983, %v399
        %v6746 = vsub.f32 %v5985, %v400
        %v6747 = vsub.f32 %v6639, %v401
        %v6748 = vsub.f32 %v5987, %v402
        %v6749 = vsub.f32 %v5989, %v403
        %v6750 = vsub.f32 %v6642, %v404
        %v6751 = vsub.f32 %v5993, %v405
        %v6752 = vsub.f32 %v5995, %v406
        %v6753 = vsub.f32 %v6647, %v407
        %v6754 = vsub.f32 %v5997, %v408
        %v6755 = vsub.f32 %v5999, %v409
        %v6756 = vsub.f32 %v6650, %v410
        %v6757 = vsub.f32 %v6003, %v411
        %v6758 = vsub.f32 %v6005, %v412
        %v6759 = vsub.f32 %v6655, %v413
        %v6760 = vsub.f32 %v6007, %v414
        %v6761 = vsub.f32 %v6009, %v415
        %v6762 = vsub.f32 %v6658, %v416
        %v6763 = vsub.f32 %v6013, %v417
        %v6764 = vsub.f32 %v6015, %v418
        %v6765 = vsub.f32 %v6663, %v419
        %v6766 = vsub.f32 %v6017, %v420
        %v6767 = vsub.f32 %v6019, %v421
        %v6768 = vsub.f32 %v6666, %v422
        %v6769 = vsub.f32 %v6023, %v423
        %v6770 = vsub.f32 %v6025, %v424
        %v6771 = vsub.f32 %v6671, %v425
        %v6772 = vsub.f32 %v6027, %v426
        %v6773 = vsub.f32 %v6029, %v427
        %v6774 = vsub.f32 %v6674, %v428
        %v6775 = vsub.f32 %v6033, %v429
        %v6776 = vsub.f32 %v6035, %v430
        %v6777 = vsub.f32 %v6679, %v431
        %v6778 = vsub.f32 %v6037, %v432
        %v6779 = vsub.f32 %v6039, %v433
        %v6780 = vsub.f32 %v6682, %v434
        %p6781 = scmp.eq.s32.totalorder %s22, 1
        %p6782 = scmp.ne.s32.totalorder %s22, 1
        // Predicated region
        $region41: #{spine_forward.1} parent=39 // pred_check
          %p6783 = pneg %p6782
        $region42: #{spine_forward.1} parent=39 // pred_check_branch
          %6785 = sbr.rel (%p6783) target = $region44
        $region43: #{spine_forward.1} parent=39 // pred_region
          %v6786 = vadd.f32 %v3303, %v3311
          %v6787 = vadd.f32 %v6786, %v3319
          %v6788 = vadd.f32 %v6787, %v3327
          %v6789 = vadd.f32 %v6788, %v3335
          %v6790 = vadd.f32 %v6789, %v3343
          %v6791 = vadd.f32 %v6790, %v3351
          %v6792 = vadd.f32 %v6791, %v3359
          %v6793 = vadd.f32 %v6792, %v3367
          %v6794 = vadd.f32 %v6793, %v3375
          %v6795 = vadd.f32 %v6794, %v3383
          %v6796 = vadd.f32 %v6795, %v3391
          %v6797 = vadd.f32 %v6796, %v3399
          %v6798 = vadd.f32 %v6797, %v3407
          %v6799 = vadd.f32 %v6798, %v3415
          %v6800 = vadd.f32 %v6799, %v3423
          %v6801 = vadd.f32 %v6800, %v3431
          %v6802 = vadd.f32 %v6801, %v3439
          %v6803 = vadd.f32 %v6802, %v3447
          %v6804 = vadd.f32 %v6803, %v3455
          %v6805 = vadd.f32 %v6804, %v3463
          %v6806 = vadd.f32 %v6805, %v3471
          %v6807 = vadd.f32 %v6806, %v3479
          %v6808 = vadd.f32 %v6807, %v3487
          %v6809 = vadd.f32 %v6808, %v3495
          %v6810 = vadd.f32 %v6809, %v3503
          %v6811 = vadd.f32 %v6810, %v3511
          %v6812 = vadd.f32 %v6811, %v3519
          %v6813 = vadd.f32 %v6812, %v3527
          %v6814 = vadd.f32 %v6813, %v3535
          %v6815 = vadd.f32 %v6814, %v3543
          %v6816 = vadd.f32 %v6815, %v3551
          %v6817 = vrot.slane %v6816, 4
          %v6818 = vadd.f32 %v6816, %v6817
          %v6819 = vrot.slane %v6818, 2
          %v6820 = vadd.f32 %v6818, %v6819
          %v6821 = vrot.slane %v6820, 1
          %v6822 = vadd.f32 %v6820, %v6821
          %v6823 = vadd.f32 %v3304, %v3312
          %v6824 = vadd.f32 %v6823, %v3320
          %v6825 = vadd.f32 %v6824, %v3328
          %v6826 = vadd.f32 %v6825, %v3336
          %v6827 = vadd.f32 %v6826, %v3344
          %v6828 = vadd.f32 %v6827, %v3352
          %v6829 = vadd.f32 %v6828, %v3360
          %v6830 = vadd.f32 %v6829, %v3368
          %v6831 = vadd.f32 %v6830, %v3376
          %v6832 = vadd.f32 %v6831, %v3384
          %v6833 = vadd.f32 %v6832, %v3392
          %v6834 = vadd.f32 %v6833, %v3400
          %v6835 = vadd.f32 %v6834, %v3408
          %v6836 = vadd.f32 %v6835, %v3416
          %v6837 = vadd.f32 %v6836, %v3424
          %v6838 = vadd.f32 %v6837, %v3432
          %v6839 = vadd.f32 %v6838, %v3440
          %v6840 = vadd.f32 %v6839, %v3448
          %v6841 = vadd.f32 %v6840, %v3456
          %v6842 = vadd.f32 %v6841, %v3464
          %v6843 = vadd.f32 %v6842, %v3472
          %v6844 = vadd.f32 %v6843, %v3480
          %v6845 = vadd.f32 %v6844, %v3488
          %v6846 = vadd.f32 %v6845, %v3496
          %v6847 = vadd.f32 %v6846, %v3504
          %v6848 = vadd.f32 %v6847, %v3512
          %v6849 = vadd.f32 %v6848, %v3520
          %v6850 = vadd.f32 %v6849, %v3528
          %v6851 = vadd.f32 %v6850, %v3536
          %v6852 = vadd.f32 %v6851, %v3544
          %v6853 = vadd.f32 %v6852, %v3552
          %v6854 = vrot.slane %v6853, 4
          %v6855 = vadd.f32 %v6853, %v6854
          %v6856 = vrot.slane %v6855, 2
          %v6857 = vadd.f32 %v6855, %v6856
          %v6858 = vrot.slane %v6857, 1
          %v6859 = vadd.f32 %v6857, %v6858
          %v6860 = vadd.f32 %v3305, %v3313
          %v6861 = vadd.f32 %v6860, %v3321
          %v6862 = vadd.f32 %v6861, %v3329
          %v6863 = vadd.f32 %v6862, %v3337
          %v6864 = vadd.f32 %v6863, %v3345
          %v6865 = vadd.f32 %v6864, %v3353
          %v6866 = vadd.f32 %v6865, %v3361
          %v6867 = vadd.f32 %v6866, %v3369
          %v6868 = vadd.f32 %v6867, %v3377
          %v6869 = vadd.f32 %v6868, %v3385
          %v6870 = vadd.f32 %v6869, %v3393
          %v6871 = vadd.f32 %v6870, %v3401
          %v6872 = vadd.f32 %v6871, %v3409
          %v6873 = vadd.f32 %v6872, %v3417
          %v6874 = vadd.f32 %v6873, %v3425
          %v6875 = vadd.f32 %v6874, %v3433
          %v6876 = vadd.f32 %v6875, %v3441
          %v6877 = vadd.f32 %v6876, %v3449
          %v6878 = vadd.f32 %v6877, %v3457
          %v6879 = vadd.f32 %v6878, %v3465
          %v6880 = vadd.f32 %v6879, %v3473
          %v6881 = vadd.f32 %v6880, %v3481
          %v6882 = vadd.f32 %v6881, %v3489
          %v6883 = vadd.f32 %v6882, %v3497
          %v6884 = vadd.f32 %v6883, %v3505
          %v6885 = vadd.f32 %v6884, %v3513
          %v6886 = vadd.f32 %v6885, %v3521
          %v6887 = vadd.f32 %v6886, %v3529
          %v6888 = vadd.f32 %v6887, %v3537
          %v6889 = vadd.f32 %v6888, %v3545
          %v6890 = vadd.f32 %v6889, %v3553
          %v6891 = vrot.slane %v6890, 4
          %v6892 = vadd.f32 %v6890, %v6891
          %v6893 = vrot.slane %v6892, 2
          %v6894 = vadd.f32 %v6892, %v6893
          %v6895 = vrot.slane %v6894, 1
          %v6896 = vadd.f32 %v6894, %v6895
          %v6897 = vadd.f32 %v3306, %v3314
          %v6898 = vadd.f32 %v6897, %v3322
          %v6899 = vadd.f32 %v6898, %v3330
          %v6900 = vadd.f32 %v6899, %v3338
          %v6901 = vadd.f32 %v6900, %v3346
          %v6902 = vadd.f32 %v6901, %v3354
          %v6903 = vadd.f32 %v6902, %v3362
          %v6904 = vadd.f32 %v6903, %v3370
          %v6905 = vadd.f32 %v6904, %v3378
          %v6906 = vadd.f32 %v6905, %v3386
          %v6907 = vadd.f32 %v6906, %v3394
          %v6908 = vadd.f32 %v6907, %v3402
          %v6909 = vadd.f32 %v6908, %v3410
          %v6910 = vadd.f32 %v6909, %v3418
          %v6911 = vadd.f32 %v6910, %v3426
          %v6912 = vadd.f32 %v6911, %v3434
          %v6913 = vadd.f32 %v6912, %v3442
          %v6914 = vadd.f32 %v6913, %v3450
          %v6915 = vadd.f32 %v6914, %v3458
          %v6916 = vadd.f32 %v6915, %v3466
          %v6917 = vadd.f32 %v6916, %v3474
          %v6918 = vadd.f32 %v6917, %v3482
          %v6919 = vadd.f32 %v6918, %v3490
          %v6920 = vadd.f32 %v6919, %v3498
          %v6921 = vadd.f32 %v6920, %v3506
          %v6922 = vadd.f32 %v6921, %v3514
          %v6923 = vadd.f32 %v6922, %v3522
          %v6924 = vadd.f32 %v6923, %v3530
          %v6925 = vadd.f32 %v6924, %v3538
          %v6926 = vadd.f32 %v6925, %v3546
          %v6927 = vadd.f32 %v6926, %v3554
          %v6928 = vrot.slane %v6927, 4
          %v6929 = vadd.f32 %v6927, %v6928
          %v6930 = vrot.slane %v6929, 2
          %v6931 = vadd.f32 %v6929, %v6930
          %v6932 = vrot.slane %v6931, 1
          %v6933 = vadd.f32 %v6931, %v6932
          %v6934 = vadd.f32 %v3307, %v3315
          %v6935 = vadd.f32 %v6934, %v3323
          %v6936 = vadd.f32 %v6935, %v3331
          %v6937 = vadd.f32 %v6936, %v3339
          %v6938 = vadd.f32 %v6937, %v3347
          %v6939 = vadd.f32 %v6938, %v3355
          %v6940 = vadd.f32 %v6939, %v3363
          %v6941 = vadd.f32 %v6940, %v3371
          %v6942 = vadd.f32 %v6941, %v3379
          %v6943 = vadd.f32 %v6942, %v3387
          %v6944 = vadd.f32 %v6943, %v3395
          %v6945 = vadd.f32 %v6944, %v3403
          %v6946 = vadd.f32 %v6945, %v3411
          %v6947 = vadd.f32 %v6946, %v3419
          %v6948 = vadd.f32 %v6947, %v3427
          %v6949 = vadd.f32 %v6948, %v3435
          %v6950 = vadd.f32 %v6949, %v3443
          %v6951 = vadd.f32 %v6950, %v3451
          %v6952 = vadd.f32 %v6951, %v3459
          %v6953 = vadd.f32 %v6952, %v3467
          %v6954 = vadd.f32 %v6953, %v3475
          %v6955 = vadd.f32 %v6954, %v3483
          %v6956 = vadd.f32 %v6955, %v3491
          %v6957 = vadd.f32 %v6956, %v3499
          %v6958 = vadd.f32 %v6957, %v3507
          %v6959 = vadd.f32 %v6958, %v3515
          %v6960 = vadd.f32 %v6959, %v3523
          %v6961 = vadd.f32 %v6960, %v3531
          %v6962 = vadd.f32 %v6961, %v3539
          %v6963 = vadd.f32 %v6962, %v3547
          %v6964 = vadd.f32 %v6963, %v3555
          %v6965 = vrot.slane %v6964, 4
          %v6966 = vadd.f32 %v6964, %v6965
          %v6967 = vrot.slane %v6966, 2
          %v6968 = vadd.f32 %v6966, %v6967
          %v6969 = vrot.slane %v6968, 1
          %v6970 = vadd.f32 %v6968, %v6969
          %v6971 = vadd.f32 %v3308, %v3316
          %v6972 = vadd.f32 %v6971, %v3324
          %v6973 = vadd.f32 %v6972, %v3332
          %v6974 = vadd.f32 %v6973, %v3340
          %v6975 = vadd.f32 %v6974, %v3348
          %v6976 = vadd.f32 %v6975, %v3356
          %v6977 = vadd.f32 %v6976, %v3364
          %v6978 = vadd.f32 %v6977, %v3372
          %v6979 = vadd.f32 %v6978, %v3380
          %v6980 = vadd.f32 %v6979, %v3388
          %v6981 = vadd.f32 %v6980, %v3396
          %v6982 = vadd.f32 %v6981, %v3404
          %v6983 = vadd.f32 %v6982, %v3412
          %v6984 = vadd.f32 %v6983, %v3420
          %v6985 = vadd.f32 %v6984, %v3428
          %v6986 = vadd.f32 %v6985, %v3436
          %v6987 = vadd.f32 %v6986, %v3444
          %v6988 = vadd.f32 %v6987, %v3452
          %v6989 = vadd.f32 %v6988, %v3460
          %v6990 = vadd.f32 %v6989, %v3468
          %v6991 = vadd.f32 %v6990, %v3476
          %v6992 = vadd.f32 %v6991, %v3484
          %v6993 = vadd.f32 %v6992, %v3492
          %v6994 = vadd.f32 %v6993, %v3500
          %v6995 = vadd.f32 %v6994, %v3508
          %v6996 = vadd.f32 %v6995, %v3516
          %v6997 = vadd.f32 %v6996, %v3524
          %v6998 = vadd.f32 %v6997, %v3532
          %v6999 = vadd.f32 %v6998, %v3540
          %v7000 = vadd.f32 %v6999, %v3548
          %v7001 = vadd.f32 %v7000, %v3556
          %v7002 = vrot.slane %v7001, 4
          %v7003 = vadd.f32 %v7001, %v7002
          %v7004 = vrot.slane %v7003, 2
          %v7005 = vadd.f32 %v7003, %v7004
          %v7006 = vrot.slane %v7005, 1
          %v7007 = vadd.f32 %v7005, %v7006
          %v7008 = vadd.f32 %v3309, %v3317
          %v7009 = vadd.f32 %v7008, %v3325
          %v7010 = vadd.f32 %v7009, %v3333
          %v7011 = vadd.f32 %v7010, %v3341
          %v7012 = vadd.f32 %v7011, %v3349
          %v7013 = vadd.f32 %v7012, %v3357
          %v7014 = vadd.f32 %v7013, %v3365
          %v7015 = vadd.f32 %v7014, %v3373
          %v7016 = vadd.f32 %v7015, %v3381
          %v7017 = vadd.f32 %v7016, %v3389
          %v7018 = vadd.f32 %v7017, %v3397
          %v7019 = vadd.f32 %v7018, %v3405
          %v7020 = vadd.f32 %v7019, %v3413
          %v7021 = vadd.f32 %v7020, %v3421
          %v7022 = vadd.f32 %v7021, %v3429
          %v7023 = vadd.f32 %v7022, %v3437
          %v7024 = vadd.f32 %v7023, %v3445
          %v7025 = vadd.f32 %v7024, %v3453
          %v7026 = vadd.f32 %v7025, %v3461
          %v7027 = vadd.f32 %v7026, %v3469
          %v7028 = vadd.f32 %v7027, %v3477
          %v7029 = vadd.f32 %v7028, %v3485
          %v7030 = vadd.f32 %v7029, %v3493
          %v7031 = vadd.f32 %v7030, %v3501
          %v7032 = vadd.f32 %v7031, %v3509
          %v7033 = vadd.f32 %v7032, %v3517
          %v7034 = vadd.f32 %v7033, %v3525
          %v7035 = vadd.f32 %v7034, %v3533
          %v7036 = vadd.f32 %v7035, %v3541
          %v7037 = vadd.f32 %v7036, %v3549
          %v7038 = vadd.f32 %v7037, %v3557
          %v7039 = vrot.slane %v7038, 4
          %v7040 = vadd.f32 %v7038, %v7039
          %v7041 = vrot.slane %v7040, 2
          %v7042 = vadd.f32 %v7040, %v7041
          %v7043 = vrot.slane %v7042, 1
          %v7044 = vadd.f32 %v7042, %v7043
          %v7045 = vsel %vm3566, %v3310, 0.0
          %v7046 = vsel %vm3566, %v3318, 0.0
          %v7047 = vadd.f32 %v7045, %v7046
          %v7048 = vsel %vm3566, %v3326, 0.0
          %v7049 = vadd.f32 %v7047, %v7048
          %v7050 = vsel %vm3566, %v3334, 0.0
          %v7051 = vadd.f32 %v7049, %v7050
          %v7052 = vsel %vm3566, %v3342, 0.0
          %v7053 = vadd.f32 %v7051, %v7052
          %v7054 = vsel %vm3566, %v3350, 0.0
          %v7055 = vadd.f32 %v7053, %v7054
          %v7056 = vsel %vm3566, %v3358, 0.0
          %v7057 = vadd.f32 %v7055, %v7056
          %v7058 = vsel %vm3566, %v3366, 0.0
          %v7059 = vadd.f32 %v7057, %v7058
          %v7060 = vsel %vm3566, %v3374, 0.0
          %v7061 = vadd.f32 %v7059, %v7060
          %v7062 = vsel %vm3566, %v3382, 0.0
          %v7063 = vadd.f32 %v7061, %v7062
          %v7064 = vsel %vm3566, %v3390, 0.0
          %v7065 = vadd.f32 %v7063, %v7064
          %v7066 = vsel %vm3566, %v3398, 0.0
          %v7067 = vadd.f32 %v7065, %v7066
          %v7068 = vsel %vm3566, %v3406, 0.0
          %v7069 = vadd.f32 %v7067, %v7068
          %v7070 = vsel %vm3566, %v3414, 0.0
          %v7071 = vadd.f32 %v7069, %v7070
          %v7072 = vsel %vm3566, %v3422, 0.0
          %v7073 = vadd.f32 %v7071, %v7072
          %v7074 = vsel %vm3566, %v3430, 0.0
          %v7075 = vadd.f32 %v7073, %v7074
          %v7076 = vsel %vm3566, %v3438, 0.0
          %v7077 = vadd.f32 %v7075, %v7076
          %v7078 = vsel %vm3566, %v3446, 0.0
          %v7079 = vadd.f32 %v7077, %v7078
          %v7080 = vsel %vm3566, %v3454, 0.0
          %v7081 = vadd.f32 %v7079, %v7080
          %v7082 = vsel %vm3566, %v3462, 0.0
          %v7083 = vadd.f32 %v7081, %v7082
          %v7084 = vsel %vm3566, %v3470, 0.0
          %v7085 = vadd.f32 %v7083, %v7084
          %v7086 = vsel %vm3566, %v3478, 0.0
          %v7087 = vadd.f32 %v7085, %v7086
          %v7088 = vsel %vm3566, %v3486, 0.0
          %v7089 = vadd.f32 %v7087, %v7088
          %v7090 = vsel %vm3566, %v3494, 0.0
          %v7091 = vadd.f32 %v7089, %v7090
          %v7092 = vsel %vm3566, %v3502, 0.0
          %v7093 = vadd.f32 %v7091, %v7092
          %v7094 = vsel %vm3566, %v3510, 0.0
          %v7095 = vadd.f32 %v7093, %v7094
          %v7096 = vsel %vm3566, %v3518, 0.0
          %v7097 = vadd.f32 %v7095, %v7096
          %v7098 = vsel %vm3566, %v3526, 0.0
          %v7099 = vadd.f32 %v7097, %v7098
          %v7100 = vsel %vm3566, %v3534, 0.0
          %v7101 = vadd.f32 %v7099, %v7100
          %v7102 = vsel %vm3566, %v3542, 0.0
          %v7103 = vadd.f32 %v7101, %v7102
          %v7104 = vsel %vm3566, %v3550, 0.0
          %v7105 = vadd.f32 %v7103, %v7104
          %v7106 = vsel %vm3566, %v3558, 0.0
          %v7107 = vadd.f32 %v7105, %v7106
          %v7108 = vrot.slane %v7107, 4
          %v7109 = vadd.f32 %v7107, %v7108
          %v7110 = vrot.slane %v7109, 2
          %v7111 = vadd.f32 %v7109, %v7110
          %v7112 = vrot.slane %v7111, 1
          %v7113 = vadd.f32 %v7111, %v7112
          %v7122 = vcombine.low %v6822, %v6859
          %v7123 = vcombine.low %v6896, %v6933
          %v7124 = vcombine.low %v6970, %v7007
          %v7125 = vcombine.low %v7044, %v7113
          %v7127 = vunpack.c.l.s4 1966171168
          %v7128 = vunpack.c.0.s8 %v7127
          %v7129 = vlaneseq
          %v7130 = vshrl.u32 %v7129, 7
          %v7131 = vsub.s32 %v7128, %v7130
          %v7132 = vrot.slane %v7122, %v7131
          %v7134 = vunpack.c.l.s4 1966171168
          %v7135 = vunpack.c.0.s8 %v7134
          %v7136 = vlaneseq
          %v7137 = vshrl.u32 %v7136, 7
          %v7138 = vsub.s32 %v7135, %v7137
          %v7139 = vrot.slane %v7123, %v7138
          %v7141 = vunpack.c.l.s4 1966171168
          %v7142 = vunpack.c.0.s8 %v7141
          %v7143 = vlaneseq
          %v7144 = vshrl.u32 %v7143, 7
          %v7145 = vsub.s32 %v7142, %v7144
          %v7146 = vrot.slane %v7124, %v7145
          %v7148 = vunpack.c.l.s4 1966171168
          %v7149 = vunpack.c.0.s8 %v7148
          %v7150 = vlaneseq
          %v7151 = vshrl.u32 %v7150, 7
          %v7152 = vsub.s32 %v7149, %v7151
          %v7153 = vrot.slane %v7125, %v7152
          %v7154 = vcombine.low %v7132, %v7139
          %v7155 = vcombine.low %v7146, %v7153
          %v7157 = vunpack.c.l.s4 1966171168
          %v7158 = vunpack.c.0.s8 %v7157
          %v7159 = vlaneseq
          %v7160 = vshrl.u32 %v7159, 7
          %v7161 = vsub.s32 %v7158, %v7160
          %v7162 = vrot.slane %v7154, %v7161
          %v7164 = vunpack.c.l.s4 1966171168
          %v7165 = vunpack.c.0.s8 %v7164
          %v7166 = vlaneseq
          %v7167 = vshrl.u32 %v7166, 7
          %v7168 = vsub.s32 %v7165, %v7167
          %v7169 = vrot.slane %v7155, %v7168
          %v7170 = vcombine.low %v7162, %v7169
          %v7172 = vlaneseq
          %vm7173 = vcmp.ge.s32.totalorder %v7172, 0
          %vm7174 = vcmp.lt.s32.totalorder %v7172, 1000
          %vm7175 = vmand %vm7173, %vm7174
          %7176 = vst.msk [vmem:[%s332] ss:$8 sm:$0xf] %vm7175, %v7170
          %7177 = vst.msk [vmem:[%s332] ss:$8 sm:$0xf0] %vm7175, %v7170
          %v7178 = vsub.f32 1.0, %v3303
          %v7179 = vsub.f32 1.0, %v3304
          %v7180 = vsub.f32 1.0, %v3305
          %v7181 = vsub.f32 1.0, %v3306
          %v7182 = vsub.f32 1.0, %v3307
          %v7183 = vsub.f32 1.0, %v3308
          %v7184 = vsub.f32 1.0, %v3309
          %v7185 = vsub.f32 1.0, %v3310
          %v7186 = vsub.f32 1.0, %v3311
          %v7187 = vsub.f32 1.0, %v3312
          %v7188 = vsub.f32 1.0, %v3313
          %v7189 = vsub.f32 1.0, %v3314
          %v7190 = vsub.f32 1.0, %v3315
          %v7191 = vsub.f32 1.0, %v3316
          %v7192 = vsub.f32 1.0, %v3317
          %v7193 = vsub.f32 1.0, %v3318
          %v7194 = vsub.f32 1.0, %v3319
          %v7195 = vsub.f32 1.0, %v3320
          %v7196 = vsub.f32 1.0, %v3321
          %v7197 = vsub.f32 1.0, %v3322
          %v7198 = vsub.f32 1.0, %v3323
          %v7199 = vsub.f32 1.0, %v3324
          %v7200 = vsub.f32 1.0, %v3325
          %v7201 = vsub.f32 1.0, %v3326
          %v7202 = vsub.f32 1.0, %v3327
          %v7203 = vsub.f32 1.0, %v3328
          %v7204 = vsub.f32 1.0, %v3329
          %v7205 = vsub.f32 1.0, %v3330
          %v7206 = vsub.f32 1.0, %v3331
          %v7207 = vsub.f32 1.0, %v3332
          %v7208 = vsub.f32 1.0, %v3333
          %v7209 = vsub.f32 1.0, %v3334
          %v7210 = vsub.f32 1.0, %v3335
          %v7211 = vsub.f32 1.0, %v3336
          %v7212 = vsub.f32 1.0, %v3337
          %v7213 = vsub.f32 1.0, %v3338
          %v7214 = vsub.f32 1.0, %v3339
          %v7215 = vsub.f32 1.0, %v3340
          %v7216 = vsub.f32 1.0, %v3341
          %v7217 = vsub.f32 1.0, %v3342
          %v7218 = vsub.f32 1.0, %v3343
          %v7219 = vsub.f32 1.0, %v3344
          %v7220 = vsub.f32 1.0, %v3345
          %v7221 = vsub.f32 1.0, %v3346
          %v7222 = vsub.f32 1.0, %v3347
          %v7223 = vsub.f32 1.0, %v3348
          %v7224 = vsub.f32 1.0, %v3349
          %v7225 = vsub.f32 1.0, %v3350
          %v7226 = vsub.f32 1.0, %v3351
          %v7227 = vsub.f32 1.0, %v3352
          %v7228 = vsub.f32 1.0, %v3353
          %v7229 = vsub.f32 1.0, %v3354
          %v7230 = vsub.f32 1.0, %v3355
          %v7231 = vsub.f32 1.0, %v3356
          %v7232 = vsub.f32 1.0, %v3357
          %v7233 = vsub.f32 1.0, %v3358
          %v7234 = vsub.f32 1.0, %v3359
          %v7235 = vsub.f32 1.0, %v3360
          %v7236 = vsub.f32 1.0, %v3361
          %v7237 = vsub.f32 1.0, %v3362
          %v7238 = vsub.f32 1.0, %v3363
          %v7239 = vsub.f32 1.0, %v3364
          %v7240 = vsub.f32 1.0, %v3365
          %v7241 = vsub.f32 1.0, %v3366
          %v7242 = vsub.f32 1.0, %v3367
          %v7243 = vsub.f32 1.0, %v3368
          %v7244 = vsub.f32 1.0, %v3369
          %v7245 = vsub.f32 1.0, %v3370
          %v7246 = vsub.f32 1.0, %v3371
          %v7247 = vsub.f32 1.0, %v3372
          %v7248 = vsub.f32 1.0, %v3373
          %v7249 = vsub.f32 1.0, %v3374
          %v7250 = vsub.f32 1.0, %v3375
          %v7251 = vsub.f32 1.0, %v3376
          %v7252 = vsub.f32 1.0, %v3377
          %v7253 = vsub.f32 1.0, %v3378
          %v7254 = vsub.f32 1.0, %v3379
          %v7255 = vsub.f32 1.0, %v3380
          %v7256 = vsub.f32 1.0, %v3381
          %v7257 = vsub.f32 1.0, %v3382
          %v7258 = vsub.f32 1.0, %v3383
          %v7259 = vsub.f32 1.0, %v3384
          %v7260 = vsub.f32 1.0, %v3385
          %v7261 = vsub.f32 1.0, %v3386
          %v7262 = vsub.f32 1.0, %v3387
          %v7263 = vsub.f32 1.0, %v3388
          %v7264 = vsub.f32 1.0, %v3389
          %v7265 = vsub.f32 1.0, %v3390
          %v7266 = vsub.f32 1.0, %v3391
          %v7267 = vsub.f32 1.0, %v3392
          %v7268 = vsub.f32 1.0, %v3393
          %v7269 = vsub.f32 1.0, %v3394
          %v7270 = vsub.f32 1.0, %v3395
          %v7271 = vsub.f32 1.0, %v3396
          %v7272 = vsub.f32 1.0, %v3397
          %v7273 = vsub.f32 1.0, %v3398
          %v7274 = vsub.f32 1.0, %v3399
          %v7275 = vsub.f32 1.0, %v3400
          %v7276 = vsub.f32 1.0, %v3401
          %v7277 = vsub.f32 1.0, %v3402
          %v7278 = vsub.f32 1.0, %v3403
          %v7279 = vsub.f32 1.0, %v3404
          %v7280 = vsub.f32 1.0, %v3405
          %v7281 = vsub.f32 1.0, %v3406
          %v7282 = vsub.f32 1.0, %v3407
          %v7283 = vsub.f32 1.0, %v3408
          %v7284 = vsub.f32 1.0, %v3409
          %v7285 = vsub.f32 1.0, %v3410
          %v7286 = vsub.f32 1.0, %v3411
          %v7287 = vsub.f32 1.0, %v3412
          %v7288 = vsub.f32 1.0, %v3413
          %v7289 = vsub.f32 1.0, %v3414
          %v7290 = vsub.f32 1.0, %v3415
          %v7291 = vsub.f32 1.0, %v3416
          %v7292 = vsub.f32 1.0, %v3417
          %v7293 = vsub.f32 1.0, %v3418
          %v7294 = vsub.f32 1.0, %v3419
          %v7295 = vsub.f32 1.0, %v3420
          %v7296 = vsub.f32 1.0, %v3421
          %v7297 = vsub.f32 1.0, %v3422
          %v7298 = vsub.f32 1.0, %v3423
          %v7299 = vsub.f32 1.0, %v3424
          %v7300 = vsub.f32 1.0, %v3425
          %v7301 = vsub.f32 1.0, %v3426
          %v7302 = vsub.f32 1.0, %v3427
          %v7303 = vsub.f32 1.0, %v3428
          %v7304 = vsub.f32 1.0, %v3429
          %v7305 = vsub.f32 1.0, %v3430
          %v7306 = vsub.f32 1.0, %v3431
          %v7307 = vsub.f32 1.0, %v3432
          %v7308 = vsub.f32 1.0, %v3433
          %v7309 = vsub.f32 1.0, %v3434
          %v7310 = vsub.f32 1.0, %v3435
          %v7311 = vsub.f32 1.0, %v3436
          %v7312 = vsub.f32 1.0, %v3437
          %v7313 = vsub.f32 1.0, %v3438
          %v7314 = vsub.f32 1.0, %v3439
          %v7315 = vsub.f32 1.0, %v3440
          %v7316 = vsub.f32 1.0, %v3441
          %v7317 = vsub.f32 1.0, %v3442
          %v7318 = vsub.f32 1.0, %v3443
          %v7319 = vsub.f32 1.0, %v3444
          %v7320 = vsub.f32 1.0, %v3445
          %v7321 = vsub.f32 1.0, %v3446
          %v7322 = vsub.f32 1.0, %v3447
          %v7323 = vsub.f32 1.0, %v3448
          %v7324 = vsub.f32 1.0, %v3449
          %v7325 = vsub.f32 1.0, %v3450
          %v7326 = vsub.f32 1.0, %v3451
          %v7327 = vsub.f32 1.0, %v3452
          %v7328 = vsub.f32 1.0, %v3453
          %v7329 = vsub.f32 1.0, %v3454
          %v7330 = vsub.f32 1.0, %v3455
          %v7331 = vsub.f32 1.0, %v3456
          %v7332 = vsub.f32 1.0, %v3457
          %v7333 = vsub.f32 1.0, %v3458
          %v7334 = vsub.f32 1.0, %v3459
          %v7335 = vsub.f32 1.0, %v3460
          %v7336 = vsub.f32 1.0, %v3461
          %v7337 = vsub.f32 1.0, %v3462
          %v7338 = vsub.f32 1.0, %v3463
          %v7339 = vsub.f32 1.0, %v3464
          %v7340 = vsub.f32 1.0, %v3465
          %v7341 = vsub.f32 1.0, %v3466
          %v7342 = vsub.f32 1.0, %v3467
          %v7343 = vsub.f32 1.0, %v3468
          %v7344 = vsub.f32 1.0, %v3469
          %v7345 = vsub.f32 1.0, %v3470
          %v7346 = vsub.f32 1.0, %v3471
          %v7347 = vsub.f32 1.0, %v3472
          %v7348 = vsub.f32 1.0, %v3473
          %v7349 = vsub.f32 1.0, %v3474
          %v7350 = vsub.f32 1.0, %v3475
          %v7351 = vsub.f32 1.0, %v3476
          %v7352 = vsub.f32 1.0, %v3477
          %v7353 = vsub.f32 1.0, %v3478
          %v7354 = vsub.f32 1.0, %v3479
          %v7355 = vsub.f32 1.0, %v3480
          %v7356 = vsub.f32 1.0, %v3481
          %v7357 = vsub.f32 1.0, %v3482
          %v7358 = vsub.f32 1.0, %v3483
          %v7359 = vsub.f32 1.0, %v3484
          %v7360 = vsub.f32 1.0, %v3485
          %v7361 = vsub.f32 1.0, %v3486
          %v7362 = vsub.f32 1.0, %v3487
          %v7363 = vsub.f32 1.0, %v3488
          %v7364 = vsub.f32 1.0, %v3489
          %v7365 = vsub.f32 1.0, %v3490
          %v7366 = vsub.f32 1.0, %v3491
          %v7367 = vsub.f32 1.0, %v3492
          %v7368 = vsub.f32 1.0, %v3493
          %v7369 = vsub.f32 1.0, %v3494
          %v7370 = vsub.f32 1.0, %v3495
          %v7371 = vsub.f32 1.0, %v3496
          %v7372 = vsub.f32 1.0, %v3497
          %v7373 = vsub.f32 1.0, %v3498
          %v7374 = vsub.f32 1.0, %v3499
          %v7375 = vsub.f32 1.0, %v3500
          %v7376 = vsub.f32 1.0, %v3501
          %v7377 = vsub.f32 1.0, %v3502
          %v7378 = vsub.f32 1.0, %v3503
          %v7379 = vsub.f32 1.0, %v3504
          %v7380 = vsub.f32 1.0, %v3505
          %v7381 = vsub.f32 1.0, %v3506
          %v7382 = vsub.f32 1.0, %v3507
          %v7383 = vsub.f32 1.0, %v3508
          %v7384 = vsub.f32 1.0, %v3509
          %v7385 = vsub.f32 1.0, %v3510
          %v7386 = vsub.f32 1.0, %v3511
          %v7387 = vsub.f32 1.0, %v3512
          %v7388 = vsub.f32 1.0, %v3513
          %v7389 = vsub.f32 1.0, %v3514
          %v7390 = vsub.f32 1.0, %v3515
          %v7391 = vsub.f32 1.0, %v3516
          %v7392 = vsub.f32 1.0, %v3517
          %v7393 = vsub.f32 1.0, %v3518
          %v7394 = vsub.f32 1.0, %v3519
          %v7395 = vsub.f32 1.0, %v3520
          %v7396 = vsub.f32 1.0, %v3521
          %v7397 = vsub.f32 1.0, %v3522
          %v7398 = vsub.f32 1.0, %v3523
          %v7399 = vsub.f32 1.0, %v3524
          %v7400 = vsub.f32 1.0, %v3525
          %v7401 = vsub.f32 1.0, %v3526
          %v7402 = vsub.f32 1.0, %v3527
          %v7403 = vsub.f32 1.0, %v3528
          %v7404 = vsub.f32 1.0, %v3529
          %v7405 = vsub.f32 1.0, %v3530
          %v7406 = vsub.f32 1.0, %v3531
          %v7407 = vsub.f32 1.0, %v3532
          %v7408 = vsub.f32 1.0, %v3533
          %v7409 = vsub.f32 1.0, %v3534
          %v7410 = vsub.f32 1.0, %v3535
          %v7411 = vsub.f32 1.0, %v3536
          %v7412 = vsub.f32 1.0, %v3537
          %v7413 = vsub.f32 1.0, %v3538
          %v7414 = vsub.f32 1.0, %v3539
          %v7415 = vsub.f32 1.0, %v3540
          %v7416 = vsub.f32 1.0, %v3541
          %v7417 = vsub.f32 1.0, %v3542
          %v7418 = vsub.f32 1.0, %v3543
          %v7419 = vsub.f32 1.0, %v3544
          %v7420 = vsub.f32 1.0, %v3545
          %v7421 = vsub.f32 1.0, %v3546
          %v7422 = vsub.f32 1.0, %v3547
          %v7423 = vsub.f32 1.0, %v3548
          %v7424 = vsub.f32 1.0, %v3549
          %v7425 = vsub.f32 1.0, %v3550
          %v7426 = vsub.f32 1.0, %v3551
          %v7427 = vsub.f32 1.0, %v3552
          %v7428 = vsub.f32 1.0, %v3553
          %v7429 = vsub.f32 1.0, %v3554
          %v7430 = vsub.f32 1.0, %v3555
          %v7431 = vsub.f32 1.0, %v3556
          %v7432 = vsub.f32 1.0, %v3557
          %v7433 = vsub.f32 1.0, %v3558
          %v7434 = vmul.f32 %v3303, %v7178
          %v7435 = vmul.f32 %v3304, %v7179
          %v7436 = vmul.f32 %v3305, %v7180
          %v7437 = vmul.f32 %v3306, %v7181
          %v7438 = vmul.f32 %v3307, %v7182
          %v7439 = vmul.f32 %v3308, %v7183
          %v7440 = vmul.f32 %v3309, %v7184
          %v7441 = vmul.f32 %v3310, %v7185
          %v7442 = vmul.f32 %v3311, %v7186
          %v7443 = vmul.f32 %v3312, %v7187
          %v7444 = vmul.f32 %v3313, %v7188
          %v7445 = vmul.f32 %v3314, %v7189
          %v7446 = vmul.f32 %v3315, %v7190
          %v7447 = vmul.f32 %v3316, %v7191
          %v7448 = vmul.f32 %v3317, %v7192
          %v7449 = vmul.f32 %v3318, %v7193
          %v7450 = vmul.f32 %v3319, %v7194
          %v7451 = vmul.f32 %v3320, %v7195
          %v7452 = vmul.f32 %v3321, %v7196
          %v7453 = vmul.f32 %v3322, %v7197
          %v7454 = vmul.f32 %v3323, %v7198
          %v7455 = vmul.f32 %v3324, %v7199
          %v7456 = vmul.f32 %v3325, %v7200
          %v7457 = vmul.f32 %v3326, %v7201
          %v7458 = vmul.f32 %v3327, %v7202
          %v7459 = vmul.f32 %v3328, %v7203
          %v7460 = vmul.f32 %v3329, %v7204
          %v7461 = vmul.f32 %v3330, %v7205
          %v7462 = vmul.f32 %v3331, %v7206
          %v7463 = vmul.f32 %v3332, %v7207
          %v7464 = vmul.f32 %v3333, %v7208
          %v7465 = vmul.f32 %v3334, %v7209
          %v7466 = vmul.f32 %v3335, %v7210
          %v7467 = vmul.f32 %v3336, %v7211
          %v7468 = vmul.f32 %v3337, %v7212
          %v7469 = vmul.f32 %v3338, %v7213
          %v7470 = vmul.f32 %v3339, %v7214
          %v7471 = vmul.f32 %v3340, %v7215
          %v7472 = vmul.f32 %v3341, %v7216
          %v7473 = vmul.f32 %v3342, %v7217
          %v7474 = vmul.f32 %v3343, %v7218
          %v7475 = vmul.f32 %v3344, %v7219
          %v7476 = vmul.f32 %v3345, %v7220
          %v7477 = vmul.f32 %v3346, %v7221
          %v7478 = vmul.f32 %v3347, %v7222
          %v7479 = vmul.f32 %v3348, %v7223
          %v7480 = vmul.f32 %v3349, %v7224
          %v7481 = vmul.f32 %v3350, %v7225
          %v7482 = vmul.f32 %v3351, %v7226
          %v7483 = vmul.f32 %v3352, %v7227
          %v7484 = vmul.f32 %v3353, %v7228
          %v7485 = vmul.f32 %v3354, %v7229
          %v7486 = vmul.f32 %v3355, %v7230
          %v7487 = vmul.f32 %v3356, %v7231
          %v7488 = vmul.f32 %v3357, %v7232
          %v7489 = vmul.f32 %v3358, %v7233
          %v7490 = vmul.f32 %v3359, %v7234
          %v7491 = vmul.f32 %v3360, %v7235
          %v7492 = vmul.f32 %v3361, %v7236
          %v7493 = vmul.f32 %v3362, %v7237
          %v7494 = vmul.f32 %v3363, %v7238
          %v7495 = vmul.f32 %v3364, %v7239
          %v7496 = vmul.f32 %v3365, %v7240
          %v7497 = vmul.f32 %v3366, %v7241
          %v7498 = vmul.f32 %v3367, %v7242
          %v7499 = vmul.f32 %v3368, %v7243
          %v7500 = vmul.f32 %v3369, %v7244
          %v7501 = vmul.f32 %v3370, %v7245
          %v7502 = vmul.f32 %v3371, %v7246
          %v7503 = vmul.f32 %v3372, %v7247
          %v7504 = vmul.f32 %v3373, %v7248
          %v7505 = vmul.f32 %v3374, %v7249
          %v7506 = vmul.f32 %v3375, %v7250
          %v7507 = vmul.f32 %v3376, %v7251
          %v7508 = vmul.f32 %v3377, %v7252
          %v7509 = vmul.f32 %v3378, %v7253
          %v7510 = vmul.f32 %v3379, %v7254
          %v7511 = vmul.f32 %v3380, %v7255
          %v7512 = vmul.f32 %v3381, %v7256
          %v7513 = vmul.f32 %v3382, %v7257
          %v7514 = vmul.f32 %v3383, %v7258
          %v7515 = vmul.f32 %v3384, %v7259
          %v7516 = vmul.f32 %v3385, %v7260
          %v7517 = vmul.f32 %v3386, %v7261
          %v7518 = vmul.f32 %v3387, %v7262
          %v7519 = vmul.f32 %v3388, %v7263
          %v7520 = vmul.f32 %v3389, %v7264
          %v7521 = vmul.f32 %v3390, %v7265
          %v7522 = vmul.f32 %v3391, %v7266
          %v7523 = vmul.f32 %v3392, %v7267
          %v7524 = vmul.f32 %v3393, %v7268
          %v7525 = vmul.f32 %v3394, %v7269
          %v7526 = vmul.f32 %v3395, %v7270
          %v7527 = vmul.f32 %v3396, %v7271
          %v7528 = vmul.f32 %v3397, %v7272
          %v7529 = vmul.f32 %v3398, %v7273
          %v7530 = vmul.f32 %v3399, %v7274
          %v7531 = vmul.f32 %v3400, %v7275
          %v7532 = vmul.f32 %v3401, %v7276
          %v7533 = vmul.f32 %v3402, %v7277
          %v7534 = vmul.f32 %v3403, %v7278
          %v7535 = vmul.f32 %v3404, %v7279
          %v7536 = vmul.f32 %v3405, %v7280
          %v7537 = vmul.f32 %v3406, %v7281
          %v7538 = vmul.f32 %v3407, %v7282
          %v7539 = vmul.f32 %v3408, %v7283
          %v7540 = vmul.f32 %v3409, %v7284
          %v7541 = vmul.f32 %v3410, %v7285
          %v7542 = vmul.f32 %v3411, %v7286
          %v7543 = vmul.f32 %v3412, %v7287
          %v7544 = vmul.f32 %v3413, %v7288
          %v7545 = vmul.f32 %v3414, %v7289
          %v7546 = vmul.f32 %v3415, %v7290
          %v7547 = vmul.f32 %v3416, %v7291
          %v7548 = vmul.f32 %v3417, %v7292
          %v7549 = vmul.f32 %v3418, %v7293
          %v7550 = vmul.f32 %v3419, %v7294
          %v7551 = vmul.f32 %v3420, %v7295
          %v7552 = vmul.f32 %v3421, %v7296
          %v7553 = vmul.f32 %v3422, %v7297
          %v7554 = vmul.f32 %v3423, %v7298
          %v7555 = vmul.f32 %v3424, %v7299
          %v7556 = vmul.f32 %v3425, %v7300
          %v7557 = vmul.f32 %v3426, %v7301
          %v7558 = vmul.f32 %v3427, %v7302
          %v7559 = vmul.f32 %v3428, %v7303
          %v7560 = vmul.f32 %v3429, %v7304
          %v7561 = vmul.f32 %v3430, %v7305
          %v7562 = vmul.f32 %v3431, %v7306
          %v7563 = vmul.f32 %v3432, %v7307
          %v7564 = vmul.f32 %v3433, %v7308
          %v7565 = vmul.f32 %v3434, %v7309
          %v7566 = vmul.f32 %v3435, %v7310
          %v7567 = vmul.f32 %v3436, %v7311
          %v7568 = vmul.f32 %v3437, %v7312
          %v7569 = vmul.f32 %v3438, %v7313
          %v7570 = vmul.f32 %v3439, %v7314
          %v7571 = vmul.f32 %v3440, %v7315
          %v7572 = vmul.f32 %v3441, %v7316
          %v7573 = vmul.f32 %v3442, %v7317
          %v7574 = vmul.f32 %v3443, %v7318
          %v7575 = vmul.f32 %v3444, %v7319
          %v7576 = vmul.f32 %v3445, %v7320
          %v7577 = vmul.f32 %v3446, %v7321
          %v7578 = vmul.f32 %v3447, %v7322
          %v7579 = vmul.f32 %v3448, %v7323
          %v7580 = vmul.f32 %v3449, %v7324
          %v7581 = vmul.f32 %v3450, %v7325
          %v7582 = vmul.f32 %v3451, %v7326
          %v7583 = vmul.f32 %v3452, %v7327
          %v7584 = vmul.f32 %v3453, %v7328
          %v7585 = vmul.f32 %v3454, %v7329
          %v7586 = vmul.f32 %v3455, %v7330
          %v7587 = vmul.f32 %v3456, %v7331
          %v7588 = vmul.f32 %v3457, %v7332
          %v7589 = vmul.f32 %v3458, %v7333
          %v7590 = vmul.f32 %v3459, %v7334
          %v7591 = vmul.f32 %v3460, %v7335
          %v7592 = vmul.f32 %v3461, %v7336
          %v7593 = vmul.f32 %v3462, %v7337
          %v7594 = vmul.f32 %v3463, %v7338
          %v7595 = vmul.f32 %v3464, %v7339
          %v7596 = vmul.f32 %v3465, %v7340
          %v7597 = vmul.f32 %v3466, %v7341
          %v7598 = vmul.f32 %v3467, %v7342
          %v7599 = vmul.f32 %v3468, %v7343
          %v7600 = vmul.f32 %v3469, %v7344
          %v7601 = vmul.f32 %v3470, %v7345
          %v7602 = vmul.f32 %v3471, %v7346
          %v7603 = vmul.f32 %v3472, %v7347
          %v7604 = vmul.f32 %v3473, %v7348
          %v7605 = vmul.f32 %v3474, %v7349
          %v7606 = vmul.f32 %v3475, %v7350
          %v7607 = vmul.f32 %v3476, %v7351
          %v7608 = vmul.f32 %v3477, %v7352
          %v7609 = vmul.f32 %v3478, %v7353
          %v7610 = vmul.f32 %v3479, %v7354
          %v7611 = vmul.f32 %v3480, %v7355
          %v7612 = vmul.f32 %v3481, %v7356
          %v7613 = vmul.f32 %v3482, %v7357
          %v7614 = vmul.f32 %v3483, %v7358
          %v7615 = vmul.f32 %v3484, %v7359
          %v7616 = vmul.f32 %v3485, %v7360
          %v7617 = vmul.f32 %v3486, %v7361
          %v7618 = vmul.f32 %v3487, %v7362
          %v7619 = vmul.f32 %v3488, %v7363
          %v7620 = vmul.f32 %v3489, %v7364
          %v7621 = vmul.f32 %v3490, %v7365
          %v7622 = vmul.f32 %v3491, %v7366
          %v7623 = vmul.f32 %v3492, %v7367
          %v7624 = vmul.f32 %v3493, %v7368
          %v7625 = vmul.f32 %v3494, %v7369
          %v7626 = vmul.f32 %v3495, %v7370
          %v7627 = vmul.f32 %v3496, %v7371
          %v7628 = vmul.f32 %v3497, %v7372
          %v7629 = vmul.f32 %v3498, %v7373
          %v7630 = vmul.f32 %v3499, %v7374
          %v7631 = vmul.f32 %v3500, %v7375
          %v7632 = vmul.f32 %v3501, %v7376
          %v7633 = vmul.f32 %v3502, %v7377
          %v7634 = vmul.f32 %v3503, %v7378
          %v7635 = vmul.f32 %v3504, %v7379
          %v7636 = vmul.f32 %v3505, %v7380
          %v7637 = vmul.f32 %v3506, %v7381
          %v7638 = vmul.f32 %v3507, %v7382
          %v7639 = vmul.f32 %v3508, %v7383
          %v7640 = vmul.f32 %v3509, %v7384
          %v7641 = vmul.f32 %v3510, %v7385
          %v7642 = vmul.f32 %v3511, %v7386
          %v7643 = vmul.f32 %v3512, %v7387
          %v7644 = vmul.f32 %v3513, %v7388
          %v7645 = vmul.f32 %v3514, %v7389
          %v7646 = vmul.f32 %v3515, %v7390
          %v7647 = vmul.f32 %v3516, %v7391
          %v7648 = vmul.f32 %v3517, %v7392
          %v7649 = vmul.f32 %v3518, %v7393
          %v7650 = vmul.f32 %v3519, %v7394
          %v7651 = vmul.f32 %v3520, %v7395
          %v7652 = vmul.f32 %v3521, %v7396
          %v7653 = vmul.f32 %v3522, %v7397
          %v7654 = vmul.f32 %v3523, %v7398
          %v7655 = vmul.f32 %v3524, %v7399
          %v7656 = vmul.f32 %v3525, %v7400
          %v7657 = vmul.f32 %v3526, %v7401
          %v7658 = vmul.f32 %v3527, %v7402
          %v7659 = vmul.f32 %v3528, %v7403
          %v7660 = vmul.f32 %v3529, %v7404
          %v7661 = vmul.f32 %v3530, %v7405
          %v7662 = vmul.f32 %v3531, %v7406
          %v7663 = vmul.f32 %v3532, %v7407
          %v7664 = vmul.f32 %v3533, %v7408
          %v7665 = vmul.f32 %v3534, %v7409
          %v7666 = vmul.f32 %v3535, %v7410
          %v7667 = vmul.f32 %v3536, %v7411
          %v7668 = vmul.f32 %v3537, %v7412
          %v7669 = vmul.f32 %v3538, %v7413
          %v7670 = vmul.f32 %v3539, %v7414
          %v7671 = vmul.f32 %v3540, %v7415
          %v7672 = vmul.f32 %v3541, %v7416
          %v7673 = vmul.f32 %v3542, %v7417
          %v7674 = vmul.f32 %v3543, %v7418
          %v7675 = vmul.f32 %v3544, %v7419
          %v7676 = vmul.f32 %v3545, %v7420
          %v7677 = vmul.f32 %v3546, %v7421
          %v7678 = vmul.f32 %v3547, %v7422
          %v7679 = vmul.f32 %v3548, %v7423
          %v7680 = vmul.f32 %v3549, %v7424
          %v7681 = vmul.f32 %v3550, %v7425
          %v7682 = vmul.f32 %v3551, %v7426
          %v7683 = vmul.f32 %v3552, %v7427
          %v7684 = vmul.f32 %v3553, %v7428
          %v7685 = vmul.f32 %v3554, %v7429
          %v7686 = vmul.f32 %v3555, %v7430
          %v7687 = vmul.f32 %v3556, %v7431
          %v7688 = vmul.f32 %v3557, %v7432
          %v7689 = vmul.f32 %v3558, %v7433
          %v7690 = vadd.f32 %v7434, %v7442
          %v7691 = vadd.f32 %v7690, %v7450
          %v7692 = vadd.f32 %v7691, %v7458
          %v7693 = vadd.f32 %v7692, %v7466
          %v7694 = vadd.f32 %v7693, %v7474
          %v7695 = vadd.f32 %v7694, %v7482
          %v7696 = vadd.f32 %v7695, %v7490
          %v7697 = vadd.f32 %v7696, %v7498
          %v7698 = vadd.f32 %v7697, %v7506
          %v7699 = vadd.f32 %v7698, %v7514
          %v7700 = vadd.f32 %v7699, %v7522
          %v7701 = vadd.f32 %v7700, %v7530
          %v7702 = vadd.f32 %v7701, %v7538
          %v7703 = vadd.f32 %v7702, %v7546
          %v7704 = vadd.f32 %v7703, %v7554
          %v7705 = vadd.f32 %v7704, %v7562
          %v7706 = vadd.f32 %v7705, %v7570
          %v7707 = vadd.f32 %v7706, %v7578
          %v7708 = vadd.f32 %v7707, %v7586
          %v7709 = vadd.f32 %v7708, %v7594
          %v7710 = vadd.f32 %v7709, %v7602
          %v7711 = vadd.f32 %v7710, %v7610
          %v7712 = vadd.f32 %v7711, %v7618
          %v7713 = vadd.f32 %v7712, %v7626
          %v7714 = vadd.f32 %v7713, %v7634
          %v7715 = vadd.f32 %v7714, %v7642
          %v7716 = vadd.f32 %v7715, %v7650
          %v7717 = vadd.f32 %v7716, %v7658
          %v7718 = vadd.f32 %v7717, %v7666
          %v7719 = vadd.f32 %v7718, %v7674
          %v7720 = vadd.f32 %v7719, %v7682
          %v7721 = vrot.slane %v7720, 4
          %v7722 = vadd.f32 %v7720, %v7721
          %v7723 = vrot.slane %v7722, 2
          %v7724 = vadd.f32 %v7722, %v7723
          %v7725 = vrot.slane %v7724, 1
          %v7726 = vadd.f32 %v7724, %v7725
          %v7727 = vadd.f32 %v7435, %v7443
          %v7728 = vadd.f32 %v7727, %v7451
          %v7729 = vadd.f32 %v7728, %v7459
          %v7730 = vadd.f32 %v7729, %v7467
          %v7731 = vadd.f32 %v7730, %v7475
          %v7732 = vadd.f32 %v7731, %v7483
          %v7733 = vadd.f32 %v7732, %v7491
          %v7734 = vadd.f32 %v7733, %v7499
          %v7735 = vadd.f32 %v7734, %v7507
          %v7736 = vadd.f32 %v7735, %v7515
          %v7737 = vadd.f32 %v7736, %v7523
          %v7738 = vadd.f32 %v7737, %v7531
          %v7739 = vadd.f32 %v7738, %v7539
          %v7740 = vadd.f32 %v7739, %v7547
          %v7741 = vadd.f32 %v7740, %v7555
          %v7742 = vadd.f32 %v7741, %v7563
          %v7743 = vadd.f32 %v7742, %v7571
          %v7744 = vadd.f32 %v7743, %v7579
          %v7745 = vadd.f32 %v7744, %v7587
          %v7746 = vadd.f32 %v7745, %v7595
          %v7747 = vadd.f32 %v7746, %v7603
          %v7748 = vadd.f32 %v7747, %v7611
          %v7749 = vadd.f32 %v7748, %v7619
          %v7750 = vadd.f32 %v7749, %v7627
          %v7751 = vadd.f32 %v7750, %v7635
          %v7752 = vadd.f32 %v7751, %v7643
          %v7753 = vadd.f32 %v7752, %v7651
          %v7754 = vadd.f32 %v7753, %v7659
          %v7755 = vadd.f32 %v7754, %v7667
          %v7756 = vadd.f32 %v7755, %v7675
          %v7757 = vadd.f32 %v7756, %v7683
          %v7758 = vrot.slane %v7757, 4
          %v7759 = vadd.f32 %v7757, %v7758
          %v7760 = vrot.slane %v7759, 2
          %v7761 = vadd.f32 %v7759, %v7760
          %v7762 = vrot.slane %v7761, 1
          %v7763 = vadd.f32 %v7761, %v7762
          %v7764 = vadd.f32 %v7436, %v7444
          %v7765 = vadd.f32 %v7764, %v7452
          %v7766 = vadd.f32 %v7765, %v7460
          %v7767 = vadd.f32 %v7766, %v7468
          %v7768 = vadd.f32 %v7767, %v7476
          %v7769 = vadd.f32 %v7768, %v7484
          %v7770 = vadd.f32 %v7769, %v7492
          %v7771 = vadd.f32 %v7770, %v7500
          %v7772 = vadd.f32 %v7771, %v7508
          %v7773 = vadd.f32 %v7772, %v7516
          %v7774 = vadd.f32 %v7773, %v7524
          %v7775 = vadd.f32 %v7774, %v7532
          %v7776 = vadd.f32 %v7775, %v7540
          %v7777 = vadd.f32 %v7776, %v7548
          %v7778 = vadd.f32 %v7777, %v7556
          %v7779 = vadd.f32 %v7778, %v7564
          %v7780 = vadd.f32 %v7779, %v7572
          %v7781 = vadd.f32 %v7780, %v7580
          %v7782 = vadd.f32 %v7781, %v7588
          %v7783 = vadd.f32 %v7782, %v7596
          %v7784 = vadd.f32 %v7783, %v7604
          %v7785 = vadd.f32 %v7784, %v7612
          %v7786 = vadd.f32 %v7785, %v7620
          %v7787 = vadd.f32 %v7786, %v7628
          %v7788 = vadd.f32 %v7787, %v7636
          %v7789 = vadd.f32 %v7788, %v7644
          %v7790 = vadd.f32 %v7789, %v7652
          %v7791 = vadd.f32 %v7790, %v7660
          %v7792 = vadd.f32 %v7791, %v7668
          %v7793 = vadd.f32 %v7792, %v7676
          %v7794 = vadd.f32 %v7793, %v7684
          %v7795 = vrot.slane %v7794, 4
          %v7796 = vadd.f32 %v7794, %v7795
          %v7797 = vrot.slane %v7796, 2
          %v7798 = vadd.f32 %v7796, %v7797
          %v7799 = vrot.slane %v7798, 1
          %v7800 = vadd.f32 %v7798, %v7799
          %v7801 = vadd.f32 %v7437, %v7445
          %v7802 = vadd.f32 %v7801, %v7453
          %v7803 = vadd.f32 %v7802, %v7461
          %v7804 = vadd.f32 %v7803, %v7469
          %v7805 = vadd.f32 %v7804, %v7477
          %v7806 = vadd.f32 %v7805, %v7485
          %v7807 = vadd.f32 %v7806, %v7493
          %v7808 = vadd.f32 %v7807, %v7501
          %v7809 = vadd.f32 %v7808, %v7509
          %v7810 = vadd.f32 %v7809, %v7517
          %v7811 = vadd.f32 %v7810, %v7525
          %v7812 = vadd.f32 %v7811, %v7533
          %v7813 = vadd.f32 %v7812, %v7541
          %v7814 = vadd.f32 %v7813, %v7549
          %v7815 = vadd.f32 %v7814, %v7557
          %v7816 = vadd.f32 %v7815, %v7565
          %v7817 = vadd.f32 %v7816, %v7573
          %v7818 = vadd.f32 %v7817, %v7581
          %v7819 = vadd.f32 %v7818, %v7589
          %v7820 = vadd.f32 %v7819, %v7597
          %v7821 = vadd.f32 %v7820, %v7605
          %v7822 = vadd.f32 %v7821, %v7613
          %v7823 = vadd.f32 %v7822, %v7621
          %v7824 = vadd.f32 %v7823, %v7629
          %v7825 = vadd.f32 %v7824, %v7637
          %v7826 = vadd.f32 %v7825, %v7645
          %v7827 = vadd.f32 %v7826, %v7653
          %v7828 = vadd.f32 %v7827, %v7661
          %v7829 = vadd.f32 %v7828, %v7669
          %v7830 = vadd.f32 %v7829, %v7677
          %v7831 = vadd.f32 %v7830, %v7685
          %v7832 = vrot.slane %v7831, 4
          %v7833 = vadd.f32 %v7831, %v7832
          %v7834 = vrot.slane %v7833, 2
          %v7835 = vadd.f32 %v7833, %v7834
          %v7836 = vrot.slane %v7835, 1
          %v7837 = vadd.f32 %v7835, %v7836
          %v7838 = vadd.f32 %v7438, %v7446
          %v7839 = vadd.f32 %v7838, %v7454
          %v7840 = vadd.f32 %v7839, %v7462
          %v7841 = vadd.f32 %v7840, %v7470
          %v7842 = vadd.f32 %v7841, %v7478
          %v7843 = vadd.f32 %v7842, %v7486
          %v7844 = vadd.f32 %v7843, %v7494
          %v7845 = vadd.f32 %v7844, %v7502
          %v7846 = vadd.f32 %v7845, %v7510
          %v7847 = vadd.f32 %v7846, %v7518
          %v7848 = vadd.f32 %v7847, %v7526
          %v7849 = vadd.f32 %v7848, %v7534
          %v7850 = vadd.f32 %v7849, %v7542
          %v7851 = vadd.f32 %v7850, %v7550
          %v7852 = vadd.f32 %v7851, %v7558
          %v7853 = vadd.f32 %v7852, %v7566
          %v7854 = vadd.f32 %v7853, %v7574
          %v7855 = vadd.f32 %v7854, %v7582
          %v7856 = vadd.f32 %v7855, %v7590
          %v7857 = vadd.f32 %v7856, %v7598
          %v7858 = vadd.f32 %v7857, %v7606
          %v7859 = vadd.f32 %v7858, %v7614
          %v7860 = vadd.f32 %v7859, %v7622
          %v7861 = vadd.f32 %v7860, %v7630
          %v7862 = vadd.f32 %v7861, %v7638
          %v7863 = vadd.f32 %v7862, %v7646
          %v7864 = vadd.f32 %v7863, %v7654
          %v7865 = vadd.f32 %v7864, %v7662
          %v7866 = vadd.f32 %v7865, %v7670
          %v7867 = vadd.f32 %v7866, %v7678
          %v7868 = vadd.f32 %v7867, %v7686
          %v7869 = vrot.slane %v7868, 4
          %v7870 = vadd.f32 %v7868, %v7869
          %v7871 = vrot.slane %v7870, 2
          %v7872 = vadd.f32 %v7870, %v7871
          %v7873 = vrot.slane %v7872, 1
          %v7874 = vadd.f32 %v7872, %v7873
          %v7875 = vadd.f32 %v7439, %v7447
          %v7876 = vadd.f32 %v7875, %v7455
          %v7877 = vadd.f32 %v7876, %v7463
          %v7878 = vadd.f32 %v7877, %v7471
          %v7879 = vadd.f32 %v7878, %v7479
          %v7880 = vadd.f32 %v7879, %v7487
          %v7881 = vadd.f32 %v7880, %v7495
          %v7882 = vadd.f32 %v7881, %v7503
          %v7883 = vadd.f32 %v7882, %v7511
          %v7884 = vadd.f32 %v7883, %v7519
          %v7885 = vadd.f32 %v7884, %v7527
          %v7886 = vadd.f32 %v7885, %v7535
          %v7887 = vadd.f32 %v7886, %v7543
          %v7888 = vadd.f32 %v7887, %v7551
          %v7889 = vadd.f32 %v7888, %v7559
          %v7890 = vadd.f32 %v7889, %v7567
          %v7891 = vadd.f32 %v7890, %v7575
          %v7892 = vadd.f32 %v7891, %v7583
          %v7893 = vadd.f32 %v7892, %v7591
          %v7894 = vadd.f32 %v7893, %v7599
          %v7895 = vadd.f32 %v7894, %v7607
          %v7896 = vadd.f32 %v7895, %v7615
          %v7897 = vadd.f32 %v7896, %v7623
          %v7898 = vadd.f32 %v7897, %v7631
          %v7899 = vadd.f32 %v7898, %v7639
          %v7900 = vadd.f32 %v7899, %v7647
          %v7901 = vadd.f32 %v7900, %v7655
          %v7902 = vadd.f32 %v7901, %v7663
          %v7903 = vadd.f32 %v7902, %v7671
          %v7904 = vadd.f32 %v7903, %v7679
          %v7905 = vadd.f32 %v7904, %v7687
          %v7906 = vrot.slane %v7905, 4
          %v7907 = vadd.f32 %v7905, %v7906
          %v7908 = vrot.slane %v7907, 2
          %v7909 = vadd.f32 %v7907, %v7908
          %v7910 = vrot.slane %v7909, 1
          %v7911 = vadd.f32 %v7909, %v7910
          %v7912 = vadd.f32 %v7440, %v7448
          %v7913 = vadd.f32 %v7912, %v7456
          %v7914 = vadd.f32 %v7913, %v7464
          %v7915 = vadd.f32 %v7914, %v7472
          %v7916 = vadd.f32 %v7915, %v7480
          %v7917 = vadd.f32 %v7916, %v7488
          %v7918 = vadd.f32 %v7917, %v7496
          %v7919 = vadd.f32 %v7918, %v7504
          %v7920 = vadd.f32 %v7919, %v7512
          %v7921 = vadd.f32 %v7920, %v7520
          %v7922 = vadd.f32 %v7921, %v7528
          %v7923 = vadd.f32 %v7922, %v7536
          %v7924 = vadd.f32 %v7923, %v7544
          %v7925 = vadd.f32 %v7924, %v7552
          %v7926 = vadd.f32 %v7925, %v7560
          %v7927 = vadd.f32 %v7926, %v7568
          %v7928 = vadd.f32 %v7927, %v7576
          %v7929 = vadd.f32 %v7928, %v7584
          %v7930 = vadd.f32 %v7929, %v7592
          %v7931 = vadd.f32 %v7930, %v7600
          %v7932 = vadd.f32 %v7931, %v7608
          %v7933 = vadd.f32 %v7932, %v7616
          %v7934 = vadd.f32 %v7933, %v7624
          %v7935 = vadd.f32 %v7934, %v7632
          %v7936 = vadd.f32 %v7935, %v7640
          %v7937 = vadd.f32 %v7936, %v7648
          %v7938 = vadd.f32 %v7937, %v7656
          %v7939 = vadd.f32 %v7938, %v7664
          %v7940 = vadd.f32 %v7939, %v7672
          %v7941 = vadd.f32 %v7940, %v7680
          %v7942 = vadd.f32 %v7941, %v7688
          %v7943 = vrot.slane %v7942, 4
          %v7944 = vadd.f32 %v7942, %v7943
          %v7945 = vrot.slane %v7944, 2
          %v7946 = vadd.f32 %v7944, %v7945
          %v7947 = vrot.slane %v7946, 1
          %v7948 = vadd.f32 %v7946, %v7947
          %v7949 = vsel %vm3566, %v7441, 0.0
          %v7950 = vsel %vm3566, %v7449, 0.0
          %v7951 = vadd.f32 %v7949, %v7950
          %v7952 = vsel %vm3566, %v7457, 0.0
          %v7953 = vadd.f32 %v7951, %v7952
          %v7954 = vsel %vm3566, %v7465, 0.0
          %v7955 = vadd.f32 %v7953, %v7954
          %v7956 = vsel %vm3566, %v7473, 0.0
          %v7957 = vadd.f32 %v7955, %v7956
          %v7958 = vsel %vm3566, %v7481, 0.0
          %v7959 = vadd.f32 %v7957, %v7958
          %v7960 = vsel %vm3566, %v7489, 0.0
          %v7961 = vadd.f32 %v7959, %v7960
          %v7962 = vsel %vm3566, %v7497, 0.0
          %v7963 = vadd.f32 %v7961, %v7962
          %v7964 = vsel %vm3566, %v7505, 0.0
          %v7965 = vadd.f32 %v7963, %v7964
          %v7966 = vsel %vm3566, %v7513, 0.0
          %v7967 = vadd.f32 %v7965, %v7966
          %v7968 = vsel %vm3566, %v7521, 0.0
          %v7969 = vadd.f32 %v7967, %v7968
          %v7970 = vsel %vm3566, %v7529, 0.0
          %v7971 = vadd.f32 %v7969, %v7970
          %v7972 = vsel %vm3566, %v7537, 0.0
          %v7973 = vadd.f32 %v7971, %v7972
          %v7974 = vsel %vm3566, %v7545, 0.0
          %v7975 = vadd.f32 %v7973, %v7974
          %v7976 = vsel %vm3566, %v7553, 0.0
          %v7977 = vadd.f32 %v7975, %v7976
          %v7978 = vsel %vm3566, %v7561, 0.0
          %v7979 = vadd.f32 %v7977, %v7978
          %v7980 = vsel %vm3566, %v7569, 0.0
          %v7981 = vadd.f32 %v7979, %v7980
          %v7982 = vsel %vm3566, %v7577, 0.0
          %v7983 = vadd.f32 %v7981, %v7982
          %v7984 = vsel %vm3566, %v7585, 0.0
          %v7985 = vadd.f32 %v7983, %v7984
          %v7986 = vsel %vm3566, %v7593, 0.0
          %v7987 = vadd.f32 %v7985, %v7986
          %v7988 = vsel %vm3566, %v7601, 0.0
          %v7989 = vadd.f32 %v7987, %v7988
          %v7990 = vsel %vm3566, %v7609, 0.0
          %v7991 = vadd.f32 %v7989, %v7990
          %v7992 = vsel %vm3566, %v7617, 0.0
          %v7993 = vadd.f32 %v7991, %v7992
          %v7994 = vsel %vm3566, %v7625, 0.0
          %v7995 = vadd.f32 %v7993, %v7994
          %v7996 = vsel %vm3566, %v7633, 0.0
          %v7997 = vadd.f32 %v7995, %v7996
          %v7998 = vsel %vm3566, %v7641, 0.0
          %v7999 = vadd.f32 %v7997, %v7998
          %v8000 = vsel %vm3566, %v7649, 0.0
          %v8001 = vadd.f32 %v7999, %v8000
          %v8002 = vsel %vm3566, %v7657, 0.0
          %v8003 = vadd.f32 %v8001, %v8002
          %v8004 = vsel %vm3566, %v7665, 0.0
          %v8005 = vadd.f32 %v8003, %v8004
          %v8006 = vsel %vm3566, %v7673, 0.0
          %v8007 = vadd.f32 %v8005, %v8006
          %v8008 = vsel %vm3566, %v7681, 0.0
          %v8009 = vadd.f32 %v8007, %v8008
          %v8010 = vsel %vm3566, %v7689, 0.0
          %v8011 = vadd.f32 %v8009, %v8010
          %v8012 = vrot.slane %v8011, 4
          %v8013 = vadd.f32 %v8011, %v8012
          %v8014 = vrot.slane %v8013, 2
          %v8015 = vadd.f32 %v8013, %v8014
          %v8016 = vrot.slane %v8015, 1
          %v8017 = vadd.f32 %v8015, %v8016
          %v8026 = vcombine.low %v7726, %v7763
          %v8027 = vcombine.low %v7800, %v7837
          %v8028 = vcombine.low %v7874, %v7911
          %v8029 = vcombine.low %v7948, %v8017
          %v8031 = vunpack.c.l.s4 1966171168
          %v8032 = vunpack.c.0.s8 %v8031
          %v8033 = vlaneseq
          %v8034 = vshrl.u32 %v8033, 7
          %v8035 = vsub.s32 %v8032, %v8034
          %v8036 = vrot.slane %v8026, %v8035
          %v8038 = vunpack.c.l.s4 1966171168
          %v8039 = vunpack.c.0.s8 %v8038
          %v8040 = vlaneseq
          %v8041 = vshrl.u32 %v8040, 7
          %v8042 = vsub.s32 %v8039, %v8041
          %v8043 = vrot.slane %v8027, %v8042
          %v8045 = vunpack.c.l.s4 1966171168
          %v8046 = vunpack.c.0.s8 %v8045
          %v8047 = vlaneseq
          %v8048 = vshrl.u32 %v8047, 7
          %v8049 = vsub.s32 %v8046, %v8048
          %v8050 = vrot.slane %v8028, %v8049
          %v8052 = vunpack.c.l.s4 1966171168
          %v8053 = vunpack.c.0.s8 %v8052
          %v8054 = vlaneseq
          %v8055 = vshrl.u32 %v8054, 7
          %v8056 = vsub.s32 %v8053, %v8055
          %v8057 = vrot.slane %v8029, %v8056
          %v8058 = vcombine.low %v8036, %v8043
          %v8059 = vcombine.low %v8050, %v8057
          %v8061 = vunpack.c.l.s4 1966171168
          %v8062 = vunpack.c.0.s8 %v8061
          %v8063 = vlaneseq
          %v8064 = vshrl.u32 %v8063, 7
          %v8065 = vsub.s32 %v8062, %v8064
          %v8066 = vrot.slane %v8058, %v8065
          %v8068 = vunpack.c.l.s4 1966171168
          %v8069 = vunpack.c.0.s8 %v8068
          %v8070 = vlaneseq
          %v8071 = vshrl.u32 %v8070, 7
          %v8072 = vsub.s32 %v8069, %v8071
          %v8073 = vrot.slane %v8059, %v8072
          %v8074 = vcombine.low %v8066, %v8073
          %s8076 = scalar_lea.vmem %s332, 1
          %8077 = vst.msk [vmem:[%s8076] ss:$8 sm:$0xf] %vm7175, %v8074
          %8078 = vst.msk [vmem:[%s8076] ss:$8 sm:$0xf0] %vm7175, %v8074
          %v8079 = vmul.f32 %v6685, %v6685
          %v8080 = vmul.f32 %v6686, %v6686
          %v8081 = vmul.f32 %v6687, %v6687
          %v8082 = vmul.f32 %v6688, %v6688
          %v8083 = vmul.f32 %v6689, %v6689
          %v8084 = vmul.f32 %v6690, %v6690
          %v8085 = vmul.f32 %v6691, %v6691
          %v8086 = vmul.f32 %v6692, %v6692
          %v8087 = vmul.f32 %v6693, %v6693
          %v8088 = vmul.f32 %v6694, %v6694
          %v8089 = vmul.f32 %v6695, %v6695
          %v8090 = vmul.f32 %v6696, %v6696
          %v8091 = vmul.f32 %v6697, %v6697
          %v8092 = vmul.f32 %v6698, %v6698
          %v8093 = vmul.f32 %v6699, %v6699
          %v8094 = vmul.f32 %v6700, %v6700
          %v8095 = vmul.f32 %v6701, %v6701
          %v8096 = vmul.f32 %v6702, %v6702
          %v8097 = vmul.f32 %v6703, %v6703
          %v8098 = vmul.f32 %v6704, %v6704
          %v8099 = vmul.f32 %v6705, %v6705
          %v8100 = vmul.f32 %v6706, %v6706
          %v8101 = vmul.f32 %v6707, %v6707
          %v8102 = vmul.f32 %v6708, %v6708
          %v8103 = vmul.f32 %v6709, %v6709
          %v8104 = vmul.f32 %v6710, %v6710
          %v8105 = vmul.f32 %v6711, %v6711
          %v8106 = vmul.f32 %v6712, %v6712
          %v8107 = vmul.f32 %v6713, %v6713
          %v8108 = vmul.f32 %v6714, %v6714
          %v8109 = vmul.f32 %v6715, %v6715
          %v8110 = vmul.f32 %v6716, %v6716
          %v8111 = vmul.f32 %v6717, %v6717
          %v8112 = vmul.f32 %v6718, %v6718
          %v8113 = vmul.f32 %v6719, %v6719
          %v8114 = vmul.f32 %v6720, %v6720
          %v8115 = vmul.f32 %v6721, %v6721
          %v8116 = vmul.f32 %v6722, %v6722
          %v8117 = vmul.f32 %v6723, %v6723
          %v8118 = vmul.f32 %v6724, %v6724
          %v8119 = vmul.f32 %v6725, %v6725
          %v8120 = vmul.f32 %v6726, %v6726
          %v8121 = vmul.f32 %v6727, %v6727
          %v8122 = vmul.f32 %v6728, %v6728
          %v8123 = vmul.f32 %v6729, %v6729
          %v8124 = vmul.f32 %v6730, %v6730
          %v8125 = vmul.f32 %v6731, %v6731
          %v8126 = vmul.f32 %v6732, %v6732
          %v8127 = vmul.f32 %v6733, %v6733
          %v8128 = vmul.f32 %v6734, %v6734
          %v8129 = vmul.f32 %v6735, %v6735
          %v8130 = vmul.f32 %v6736, %v6736
          %v8131 = vmul.f32 %v6737, %v6737
          %v8132 = vmul.f32 %v6738, %v6738
          %v8133 = vmul.f32 %v6739, %v6739
          %v8134 = vmul.f32 %v6740, %v6740
          %v8135 = vmul.f32 %v6741, %v6741
          %v8136 = vmul.f32 %v6742, %v6742
          %v8137 = vmul.f32 %v6743, %v6743
          %v8138 = vmul.f32 %v6744, %v6744
          %v8139 = vmul.f32 %v6745, %v6745
          %v8140 = vmul.f32 %v6746, %v6746
          %v8141 = vmul.f32 %v6747, %v6747
          %v8142 = vmul.f32 %v6748, %v6748
          %v8143 = vmul.f32 %v6749, %v6749
          %v8144 = vmul.f32 %v6750, %v6750
          %v8145 = vmul.f32 %v6751, %v6751
          %v8146 = vmul.f32 %v6752, %v6752
          %v8147 = vmul.f32 %v6753, %v6753
          %v8148 = vmul.f32 %v6754, %v6754
          %v8149 = vmul.f32 %v6755, %v6755
          %v8150 = vmul.f32 %v6756, %v6756
          %v8151 = vmul.f32 %v6757, %v6757
          %v8152 = vmul.f32 %v6758, %v6758
          %v8153 = vmul.f32 %v6759, %v6759
          %v8154 = vmul.f32 %v6760, %v6760
          %v8155 = vmul.f32 %v6761, %v6761
          %v8156 = vmul.f32 %v6762, %v6762
          %v8157 = vmul.f32 %v6763, %v6763
          %v8158 = vmul.f32 %v6764, %v6764
          %v8159 = vmul.f32 %v6765, %v6765
          %v8160 = vmul.f32 %v6766, %v6766
          %v8161 = vmul.f32 %v6767, %v6767
          %v8162 = vmul.f32 %v6768, %v6768
          %v8163 = vmul.f32 %v6769, %v6769
          %v8164 = vmul.f32 %v6770, %v6770
          %v8165 = vmul.f32 %v6771, %v6771
          %v8166 = vmul.f32 %v6772, %v6772
          %v8167 = vmul.f32 %v6773, %v6773
          %v8168 = vmul.f32 %v6774, %v6774
          %v8169 = vmul.f32 %v6775, %v6775
          %v8170 = vmul.f32 %v6776, %v6776
          %v8171 = vmul.f32 %v6777, %v6777
          %v8172 = vmul.f32 %v6778, %v6778
          %v8173 = vmul.f32 %v6779, %v6779
          %v8174 = vmul.f32 %v6780, %v6780
          %v8175 = vadd.f32 %v8079, %v8082
          %v8176 = vadd.f32 %v8175, %v8085
          %v8177 = vadd.f32 %v8176, %v8088
          %v8178 = vadd.f32 %v8177, %v8091
          %v8179 = vadd.f32 %v8178, %v8094
          %v8180 = vadd.f32 %v8179, %v8097
          %v8181 = vadd.f32 %v8180, %v8100
          %v8182 = vadd.f32 %v8181, %v8103
          %v8183 = vadd.f32 %v8182, %v8106
          %v8184 = vadd.f32 %v8183, %v8109
          %v8185 = vadd.f32 %v8184, %v8112
          %v8186 = vadd.f32 %v8185, %v8115
          %v8187 = vadd.f32 %v8186, %v8118
          %v8188 = vadd.f32 %v8187, %v8121
          %v8189 = vadd.f32 %v8188, %v8124
          %v8190 = vadd.f32 %v8189, %v8127
          %v8191 = vadd.f32 %v8190, %v8130
          %v8192 = vadd.f32 %v8191, %v8133
          %v8193 = vadd.f32 %v8192, %v8136
          %v8194 = vadd.f32 %v8193, %v8139
          %v8195 = vadd.f32 %v8194, %v8142
          %v8196 = vadd.f32 %v8195, %v8145
          %v8197 = vadd.f32 %v8196, %v8148
          %v8198 = vadd.f32 %v8197, %v8151
          %v8199 = vadd.f32 %v8198, %v8154
          %v8200 = vadd.f32 %v8199, %v8157
          %v8201 = vadd.f32 %v8200, %v8160
          %v8202 = vadd.f32 %v8201, %v8163
          %v8203 = vadd.f32 %v8202, %v8166
          %v8204 = vadd.f32 %v8203, %v8169
          %v8205 = vadd.f32 %v8204, %v8172
          %v8206 = vrot.slane %v8205, 4
          %v8207 = vadd.f32 %v8205, %v8206
          %v8208 = vrot.slane %v8207, 2
          %v8209 = vadd.f32 %v8207, %v8208
          %v8210 = vrot.slane %v8209, 1
          %v8211 = vadd.f32 %v8209, %v8210
          %v8212 = vadd.f32 %v8080, %v8083
          %v8213 = vadd.f32 %v8212, %v8086
          %v8214 = vadd.f32 %v8213, %v8089
          %v8215 = vadd.f32 %v8214, %v8092
          %v8216 = vadd.f32 %v8215, %v8095
          %v8217 = vadd.f32 %v8216, %v8098
          %v8218 = vadd.f32 %v8217, %v8101
          %v8219 = vadd.f32 %v8218, %v8104
          %v8220 = vadd.f32 %v8219, %v8107
          %v8221 = vadd.f32 %v8220, %v8110
          %v8222 = vadd.f32 %v8221, %v8113
          %v8223 = vadd.f32 %v8222, %v8116
          %v8224 = vadd.f32 %v8223, %v8119
          %v8225 = vadd.f32 %v8224, %v8122
          %v8226 = vadd.f32 %v8225, %v8125
          %v8227 = vadd.f32 %v8226, %v8128
          %v8228 = vadd.f32 %v8227, %v8131
          %v8229 = vadd.f32 %v8228, %v8134
          %v8230 = vadd.f32 %v8229, %v8137
          %v8231 = vadd.f32 %v8230, %v8140
          %v8232 = vadd.f32 %v8231, %v8143
          %v8233 = vadd.f32 %v8232, %v8146
          %v8234 = vadd.f32 %v8233, %v8149
          %v8235 = vadd.f32 %v8234, %v8152
          %v8236 = vadd.f32 %v8235, %v8155
          %v8237 = vadd.f32 %v8236, %v8158
          %v8238 = vadd.f32 %v8237, %v8161
          %v8239 = vadd.f32 %v8238, %v8164
          %v8240 = vadd.f32 %v8239, %v8167
          %v8241 = vadd.f32 %v8240, %v8170
          %v8242 = vadd.f32 %v8241, %v8173
          %v8243 = vrot.slane %v8242, 4
          %v8244 = vadd.f32 %v8242, %v8243
          %v8245 = vrot.slane %v8244, 2
          %v8246 = vadd.f32 %v8244, %v8245
          %v8247 = vrot.slane %v8246, 1
          %v8248 = vadd.f32 %v8246, %v8247
          %v8249 = vsel %vm1429, %v8081, 0.0
          %v8250 = vsel %vm1429, %v8084, 0.0
          %v8251 = vadd.f32 %v8249, %v8250
          %v8252 = vsel %vm1429, %v8087, 0.0
          %v8253 = vadd.f32 %v8251, %v8252
          %v8254 = vsel %vm1429, %v8090, 0.0
          %v8255 = vadd.f32 %v8253, %v8254
          %v8256 = vsel %vm1429, %v8093, 0.0
          %v8257 = vadd.f32 %v8255, %v8256
          %v8258 = vsel %vm1429, %v8096, 0.0
          %v8259 = vadd.f32 %v8257, %v8258
          %v8260 = vsel %vm1429, %v8099, 0.0
          %v8261 = vadd.f32 %v8259, %v8260
          %v8262 = vsel %vm1429, %v8102, 0.0
          %v8263 = vadd.f32 %v8261, %v8262
          %v8264 = vsel %vm1429, %v8105, 0.0
          %v8265 = vadd.f32 %v8263, %v8264
          %v8266 = vsel %vm1429, %v8108, 0.0
          %v8267 = vadd.f32 %v8265, %v8266
          %v8268 = vsel %vm1429, %v8111, 0.0
          %v8269 = vadd.f32 %v8267, %v8268
          %v8270 = vsel %vm1429, %v8114, 0.0
          %v8271 = vadd.f32 %v8269, %v8270
          %v8272 = vsel %vm1429, %v8117, 0.0
          %v8273 = vadd.f32 %v8271, %v8272
          %v8274 = vsel %vm1429, %v8120, 0.0
          %v8275 = vadd.f32 %v8273, %v8274
          %v8276 = vsel %vm1429, %v8123, 0.0
          %v8277 = vadd.f32 %v8275, %v8276
          %v8278 = vsel %vm1429, %v8126, 0.0
          %v8279 = vadd.f32 %v8277, %v8278
          %v8280 = vsel %vm1429, %v8129, 0.0
          %v8281 = vadd.f32 %v8279, %v8280
          %v8282 = vsel %vm1429, %v8132, 0.0
          %v8283 = vadd.f32 %v8281, %v8282
          %v8284 = vsel %vm1429, %v8135, 0.0
          %v8285 = vadd.f32 %v8283, %v8284
          %v8286 = vsel %vm1429, %v8138, 0.0
          %v8287 = vadd.f32 %v8285, %v8286
          %v8288 = vsel %vm1429, %v8141, 0.0
          %v8289 = vadd.f32 %v8287, %v8288
          %v8290 = vsel %vm1429, %v8144, 0.0
          %v8291 = vadd.f32 %v8289, %v8290
          %v8292 = vsel %vm1429, %v8147, 0.0
          %v8293 = vadd.f32 %v8291, %v8292
          %v8294 = vsel %vm1429, %v8150, 0.0
          %v8295 = vadd.f32 %v8293, %v8294
          %v8296 = vsel %vm1429, %v8153, 0.0
          %v8297 = vadd.f32 %v8295, %v8296
          %v8298 = vsel %vm1429, %v8156, 0.0
          %v8299 = vadd.f32 %v8297, %v8298
          %v8300 = vsel %vm1429, %v8159, 0.0
          %v8301 = vadd.f32 %v8299, %v8300
          %v8302 = vsel %vm1429, %v8162, 0.0
          %v8303 = vadd.f32 %v8301, %v8302
          %v8304 = vsel %vm1429, %v8165, 0.0
          %v8305 = vadd.f32 %v8303, %v8304
          %v8306 = vsel %vm1429, %v8168, 0.0
          %v8307 = vadd.f32 %v8305, %v8306
          %v8308 = vsel %vm1429, %v8171, 0.0
          %v8309 = vadd.f32 %v8307, %v8308
          %v8310 = vsel %vm1429, %v8174, 0.0
          %v8311 = vadd.f32 %v8309, %v8310
          %v8312 = vrot.slane %v8311, 4
          %v8313 = vadd.f32 %v8311, %v8312
          %v8314 = vrot.slane %v8313, 2
          %v8315 = vadd.f32 %v8313, %v8314
          %v8316 = vrot.slane %v8315, 1
          %v8317 = vadd.f32 %v8315, %v8316
          %v8321 = vcombine.low %v8211, %v8248
          %v8323 = vunpack.c.l.s4 1966171168
          %v8324 = vunpack.c.0.s8 %v8323
          %v8325 = vlaneseq
          %v8326 = vshrl.u32 %v8325, 7
          %v8327 = vsub.s32 %v8324, %v8326
          %v8328 = vrot.slane %v8321, %v8327
          %v8330 = vunpack.c.l.s4 1966171168
          %v8331 = vunpack.c.0.s8 %v8330
          %v8332 = vlaneseq
          %v8333 = vshrl.u32 %v8332, 7
          %v8334 = vsub.s32 %v8331, %v8333
          %v8335 = vrot.slane %v8317, %v8334
          %v8336 = vcombine.low %v8328, %v8335
          %v8338 = vunpack.c.l.s4 1966171168
          %v8339 = vunpack.c.0.s8 %v8338
          %v8340 = vlaneseq
          %v8341 = vshrl.u32 %v8340, 7
          %v8342 = vsub.s32 %v8339, %v8341
          %v8343 = vrot.slane %v8336, %v8342
          %vm8345 = vcmp.lt.s32.totalorder %v7172, 300
          %vm8346 = vmand %vm7173, %vm8345
          %8347 = vst.msk [vmem:[%s337] ss:$8 sm:$0x7] %vm8346, %v8343
          %8348 = vst.msk [vmem:[%s337] ss:$8 sm:$0x0] %vm8346, %v8343
        $region44: #{spine_forward.1} parent=39 // pred_fallthru
          _
        // Predicated region
        $region45: #{spine_forward.1} parent=39 // pred_check
          %p8349 = pneg %p6781
        $region46: #{spine_forward.1} parent=39 // pred_check_branch
          %8351 = sbr.rel (%p8349) target = $region48
        $region47: #{spine_forward.1} parent=39 // pred_region
          %v8352 = vlaneseq
          %v8353 = vshrl.u32 %v8352, 7
          %v8354 = vadd.s32 %v8353, 8
          %v8355 = vadd.s32 %v8353, 16
          %v8356 = vadd.s32 %v8353, 24
          %v8357 = vadd.s32 %v8353, 32
          %v8358 = vadd.s32 %v8353, 40
          %v8359 = vadd.s32 %v8353, 48
          %v8360 = vadd.s32 %v8353, 56
          %v8361 = vadd.s32 %v8353, 64
          %v8362 = vadd.s32 %v8353, 72
          %v8363 = vadd.s32 %v8353, 80
          %v8364 = vadd.s32 %v8353, 88
          %v8365 = vadd.s32 %v8353, 96
          %v8366 = vadd.s32 %v8353, 104
          %v8367 = vadd.s32 %v8353, 112
          %v8368 = vadd.s32 %v8353, 120
          %v8369 = vadd.s32 %v8353, 128
          %v8370 = vadd.s32 %v8353, 136
          %v8371 = vadd.s32 %v8353, 144
          %v8372 = vadd.s32 %v8353, 152
          %v8373 = vadd.s32 %v8353, 160
          %v8374 = vadd.s32 %v8353, 168
          %v8375 = vadd.s32 %v8353, 176
          %v8376 = vadd.s32 %v8353, 184
          %v8377 = vadd.s32 %v8353, 192
          %v8378 = vadd.s32 %v8353, 200
          %v8379 = vadd.s32 %v8353, 208
          %v8380 = vadd.s32 %v8353, 216
          %v8381 = vadd.s32 %v8353, 224
          %v8382 = vadd.s32 %v8353, 232
          %v8383 = vadd.s32 %v8353, 240
          %v8384 = vadd.s32 %v8353, 248
          %vm8385 = vcmp.lt.s32.totalorder %v8353, 44
          %vm8386 = vcmp.lt.s32.totalorder %v8354, 44
          %vm8387 = vcmp.lt.s32.totalorder %v8355, 44
          %vm8388 = vcmp.lt.s32.totalorder %v8356, 44
          %vm8389 = vcmp.lt.s32.totalorder %v8357, 44
          %vm8390 = vcmp.lt.s32.totalorder %v8358, 44
          %vm8391 = vcmp.lt.s32.totalorder %v8359, 44
          %vm8392 = vcmp.lt.s32.totalorder %v8360, 44
          %vm8393 = vcmp.lt.s32.totalorder %v8361, 44
          %vm8394 = vcmp.lt.s32.totalorder %v8362, 44
          %vm8395 = vcmp.lt.s32.totalorder %v8363, 44
          %vm8396 = vcmp.lt.s32.totalorder %v8364, 44
          %vm8397 = vcmp.lt.s32.totalorder %v8365, 44
          %vm8398 = vcmp.lt.s32.totalorder %v8366, 44
          %vm8399 = vcmp.lt.s32.totalorder %v8367, 44
          %vm8400 = vcmp.lt.s32.totalorder %v8368, 44
          %vm8401 = vcmp.lt.s32.totalorder %v8369, 44
          %vm8402 = vcmp.lt.s32.totalorder %v8370, 44
          %vm8403 = vcmp.lt.s32.totalorder %v8371, 44
          %vm8404 = vcmp.lt.s32.totalorder %v8372, 44
          %vm8405 = vcmp.lt.s32.totalorder %v8373, 44
          %vm8406 = vcmp.lt.s32.totalorder %v8374, 44
          %vm8407 = vcmp.lt.s32.totalorder %v8375, 44
          %vm8408 = vcmp.lt.s32.totalorder %v8376, 44
          %vm8409 = vcmp.lt.s32.totalorder %v8377, 44
          %vm8410 = vcmp.lt.s32.totalorder %v8378, 44
          %vm8411 = vcmp.lt.s32.totalorder %v8379, 44
          %vm8412 = vcmp.lt.s32.totalorder %v8380, 44
          %vm8413 = vcmp.lt.s32.totalorder %v8381, 44
          %vm8414 = vcmp.lt.s32.totalorder %v8382, 44
          %vm8415 = vcmp.lt.s32.totalorder %v8383, 44
          %vm8416 = vcmp.lt.s32.totalorder %v8384, 44
          %v8417 = vsel %vm8385, 1, 0
          %v8418 = vsel %vm8386, 1, 0
          %v8419 = vsel %vm8387, 1, 0
          %v8420 = vsel %vm8388, 1, 0
          %v8421 = vsel %vm8389, 1, 0
          %v8422 = vsel %vm8390, 1, 0
          %v8423 = vsel %vm8391, 1, 0
          %v8424 = vsel %vm8392, 1, 0
          %v8425 = vsel %vm8393, 1, 0
          %v8426 = vsel %vm8394, 1, 0
          %v8427 = vsel %vm8395, 1, 0
          %v8428 = vsel %vm8396, 1, 0
          %v8429 = vsel %vm8397, 1, 0
          %v8430 = vsel %vm8398, 1, 0
          %v8431 = vsel %vm8399, 1, 0
          %v8432 = vsel %vm8400, 1, 0
          %v8433 = vsel %vm8401, 1, 0
          %v8434 = vsel %vm8402, 1, 0
          %v8435 = vsel %vm8403, 1, 0
          %v8436 = vsel %vm8404, 1, 0
          %v8437 = vsel %vm8405, 1, 0
          %v8438 = vsel %vm8406, 1, 0
          %v8439 = vsel %vm8407, 1, 0
          %v8440 = vsel %vm8408, 1, 0
          %v8441 = vsel %vm8409, 1, 0
          %v8442 = vsel %vm8410, 1, 0
          %v8443 = vsel %vm8411, 1, 0
          %v8444 = vsel %vm8412, 1, 0
          %v8445 = vsel %vm8413, 1, 0
          %v8446 = vsel %vm8414, 1, 0
          %v8447 = vsel %vm8415, 1, 0
          %v8448 = vsel %vm8416, 1, 0
          %vm8449 = vcmp.eq.s32.totalorder %v8417, 1
          %vm8450 = vcmp.eq.s32.totalorder %v8418, 1
          %vm8451 = vcmp.eq.s32.totalorder %v8419, 1
          %vm8452 = vcmp.eq.s32.totalorder %v8420, 1
          %vm8453 = vcmp.eq.s32.totalorder %v8421, 1
          %vm8454 = vcmp.eq.s32.totalorder %v8422, 1
          %vm8455 = vcmp.eq.s32.totalorder %v8423, 1
          %vm8456 = vcmp.eq.s32.totalorder %v8424, 1
          %vm8457 = vcmp.eq.s32.totalorder %v8425, 1
          %vm8458 = vcmp.eq.s32.totalorder %v8426, 1
          %vm8459 = vcmp.eq.s32.totalorder %v8427, 1
          %vm8460 = vcmp.eq.s32.totalorder %v8428, 1
          %vm8461 = vcmp.eq.s32.totalorder %v8429, 1
          %vm8462 = vcmp.eq.s32.totalorder %v8430, 1
          %vm8463 = vcmp.eq.s32.totalorder %v8431, 1
          %vm8464 = vcmp.eq.s32.totalorder %v8432, 1
          %vm8465 = vcmp.eq.s32.totalorder %v8433, 1
          %vm8466 = vcmp.eq.s32.totalorder %v8434, 1
          %vm8467 = vcmp.eq.s32.totalorder %v8435, 1
          %vm8468 = vcmp.eq.s32.totalorder %v8436, 1
          %vm8469 = vcmp.eq.s32.totalorder %v8437, 1
          %vm8470 = vcmp.eq.s32.totalorder %v8438, 1
          %vm8471 = vcmp.eq.s32.totalorder %v8439, 1
          %vm8472 = vcmp.eq.s32.totalorder %v8440, 1
          %vm8473 = vcmp.eq.s32.totalorder %v8441, 1
          %vm8474 = vcmp.eq.s32.totalorder %v8442, 1
          %vm8475 = vcmp.eq.s32.totalorder %v8443, 1
          %vm8476 = vcmp.eq.s32.totalorder %v8444, 1
          %vm8477 = vcmp.eq.s32.totalorder %v8445, 1
          %vm8478 = vcmp.eq.s32.totalorder %v8446, 1
          %vm8479 = vcmp.eq.s32.totalorder %v8447, 1
          %vm8480 = vcmp.eq.s32.totalorder %v8448, 1
          %v8481 = vsel %vm8449, %v3303, 0.0
          %v8482 = vsel %vm8449, %v3304, 0.0
          %v8483 = vsel %vm8449, %v3305, 0.0
          %v8484 = vsel %vm8449, %v3306, 0.0
          %v8485 = vsel %vm8449, %v3307, 0.0
          %v8486 = vsel %vm8449, %v3308, 0.0
          %v8487 = vsel %vm8449, %v3309, 0.0
          %v8488 = vsel %vm8449, %v3310, 0.0
          %v8489 = vsel %vm8450, %v3311, 0.0
          %v8490 = vsel %vm8450, %v3312, 0.0
          %v8491 = vsel %vm8450, %v3313, 0.0
          %v8492 = vsel %vm8450, %v3314, 0.0
          %v8493 = vsel %vm8450, %v3315, 0.0
          %v8494 = vsel %vm8450, %v3316, 0.0
          %v8495 = vsel %vm8450, %v3317, 0.0
          %v8496 = vsel %vm8450, %v3318, 0.0
          %v8497 = vsel %vm8451, %v3319, 0.0
          %v8498 = vsel %vm8451, %v3320, 0.0
          %v8499 = vsel %vm8451, %v3321, 0.0
          %v8500 = vsel %vm8451, %v3322, 0.0
          %v8501 = vsel %vm8451, %v3323, 0.0
          %v8502 = vsel %vm8451, %v3324, 0.0
          %v8503 = vsel %vm8451, %v3325, 0.0
          %v8504 = vsel %vm8451, %v3326, 0.0
          %v8505 = vsel %vm8452, %v3327, 0.0
          %v8506 = vsel %vm8452, %v3328, 0.0
          %v8507 = vsel %vm8452, %v3329, 0.0
          %v8508 = vsel %vm8452, %v3330, 0.0
          %v8509 = vsel %vm8452, %v3331, 0.0
          %v8510 = vsel %vm8452, %v3332, 0.0
          %v8511 = vsel %vm8452, %v3333, 0.0
          %v8512 = vsel %vm8452, %v3334, 0.0
          %v8513 = vsel %vm8453, %v3335, 0.0
          %v8514 = vsel %vm8453, %v3336, 0.0
          %v8515 = vsel %vm8453, %v3337, 0.0
          %v8516 = vsel %vm8453, %v3338, 0.0
          %v8517 = vsel %vm8453, %v3339, 0.0
          %v8518 = vsel %vm8453, %v3340, 0.0
          %v8519 = vsel %vm8453, %v3341, 0.0
          %v8520 = vsel %vm8453, %v3342, 0.0
          %v8521 = vsel %vm8454, %v3343, 0.0
          %v8522 = vsel %vm8454, %v3344, 0.0
          %v8523 = vsel %vm8454, %v3345, 0.0
          %v8524 = vsel %vm8454, %v3346, 0.0
          %v8525 = vsel %vm8454, %v3347, 0.0
          %v8526 = vsel %vm8454, %v3348, 0.0
          %v8527 = vsel %vm8454, %v3349, 0.0
          %v8528 = vsel %vm8454, %v3350, 0.0
          %v8529 = vsel %vm8455, %v3351, 0.0
          %v8530 = vsel %vm8455, %v3352, 0.0
          %v8531 = vsel %vm8455, %v3353, 0.0
          %v8532 = vsel %vm8455, %v3354, 0.0
          %v8533 = vsel %vm8455, %v3355, 0.0
          %v8534 = vsel %vm8455, %v3356, 0.0
          %v8535 = vsel %vm8455, %v3357, 0.0
          %v8536 = vsel %vm8455, %v3358, 0.0
          %v8537 = vsel %vm8456, %v3359, 0.0
          %v8538 = vsel %vm8456, %v3360, 0.0
          %v8539 = vsel %vm8456, %v3361, 0.0
          %v8540 = vsel %vm8456, %v3362, 0.0
          %v8541 = vsel %vm8456, %v3363, 0.0
          %v8542 = vsel %vm8456, %v3364, 0.0
          %v8543 = vsel %vm8456, %v3365, 0.0
          %v8544 = vsel %vm8456, %v3366, 0.0
          %v8545 = vsel %vm8457, %v3367, 0.0
          %v8546 = vsel %vm8457, %v3368, 0.0
          %v8547 = vsel %vm8457, %v3369, 0.0
          %v8548 = vsel %vm8457, %v3370, 0.0
          %v8549 = vsel %vm8457, %v3371, 0.0
          %v8550 = vsel %vm8457, %v3372, 0.0
          %v8551 = vsel %vm8457, %v3373, 0.0
          %v8552 = vsel %vm8457, %v3374, 0.0
          %v8553 = vsel %vm8458, %v3375, 0.0
          %v8554 = vsel %vm8458, %v3376, 0.0
          %v8555 = vsel %vm8458, %v3377, 0.0
          %v8556 = vsel %vm8458, %v3378, 0.0
          %v8557 = vsel %vm8458, %v3379, 0.0
          %v8558 = vsel %vm8458, %v3380, 0.0
          %v8559 = vsel %vm8458, %v3381, 0.0
          %v8560 = vsel %vm8458, %v3382, 0.0
          %v8561 = vsel %vm8459, %v3383, 0.0
          %v8562 = vsel %vm8459, %v3384, 0.0
          %v8563 = vsel %vm8459, %v3385, 0.0
          %v8564 = vsel %vm8459, %v3386, 0.0
          %v8565 = vsel %vm8459, %v3387, 0.0
          %v8566 = vsel %vm8459, %v3388, 0.0
          %v8567 = vsel %vm8459, %v3389, 0.0
          %v8568 = vsel %vm8459, %v3390, 0.0
          %v8569 = vsel %vm8460, %v3391, 0.0
          %v8570 = vsel %vm8460, %v3392, 0.0
          %v8571 = vsel %vm8460, %v3393, 0.0
          %v8572 = vsel %vm8460, %v3394, 0.0
          %v8573 = vsel %vm8460, %v3395, 0.0
          %v8574 = vsel %vm8460, %v3396, 0.0
          %v8575 = vsel %vm8460, %v3397, 0.0
          %v8576 = vsel %vm8460, %v3398, 0.0
          %v8577 = vsel %vm8461, %v3399, 0.0
          %v8578 = vsel %vm8461, %v3400, 0.0
          %v8579 = vsel %vm8461, %v3401, 0.0
          %v8580 = vsel %vm8461, %v3402, 0.0
          %v8581 = vsel %vm8461, %v3403, 0.0
          %v8582 = vsel %vm8461, %v3404, 0.0
          %v8583 = vsel %vm8461, %v3405, 0.0
          %v8584 = vsel %vm8461, %v3406, 0.0
          %v8585 = vsel %vm8462, %v3407, 0.0
          %v8586 = vsel %vm8462, %v3408, 0.0
          %v8587 = vsel %vm8462, %v3409, 0.0
          %v8588 = vsel %vm8462, %v3410, 0.0
          %v8589 = vsel %vm8462, %v3411, 0.0
          %v8590 = vsel %vm8462, %v3412, 0.0
          %v8591 = vsel %vm8462, %v3413, 0.0
          %v8592 = vsel %vm8462, %v3414, 0.0
          %v8593 = vsel %vm8463, %v3415, 0.0
          %v8594 = vsel %vm8463, %v3416, 0.0
          %v8595 = vsel %vm8463, %v3417, 0.0
          %v8596 = vsel %vm8463, %v3418, 0.0
          %v8597 = vsel %vm8463, %v3419, 0.0
          %v8598 = vsel %vm8463, %v3420, 0.0
          %v8599 = vsel %vm8463, %v3421, 0.0
          %v8600 = vsel %vm8463, %v3422, 0.0
          %v8601 = vsel %vm8464, %v3423, 0.0
          %v8602 = vsel %vm8464, %v3424, 0.0
          %v8603 = vsel %vm8464, %v3425, 0.0
          %v8604 = vsel %vm8464, %v3426, 0.0
          %v8605 = vsel %vm8464, %v3427, 0.0
          %v8606 = vsel %vm8464, %v3428, 0.0
          %v8607 = vsel %vm8464, %v3429, 0.0
          %v8608 = vsel %vm8464, %v3430, 0.0
          %v8609 = vsel %vm8465, %v3431, 0.0
          %v8610 = vsel %vm8465, %v3432, 0.0
          %v8611 = vsel %vm8465, %v3433, 0.0
          %v8612 = vsel %vm8465, %v3434, 0.0
          %v8613 = vsel %vm8465, %v3435, 0.0
          %v8614 = vsel %vm8465, %v3436, 0.0
          %v8615 = vsel %vm8465, %v3437, 0.0
          %v8616 = vsel %vm8465, %v3438, 0.0
          %v8617 = vsel %vm8466, %v3439, 0.0
          %v8618 = vsel %vm8466, %v3440, 0.0
          %v8619 = vsel %vm8466, %v3441, 0.0
          %v8620 = vsel %vm8466, %v3442, 0.0
          %v8621 = vsel %vm8466, %v3443, 0.0
          %v8622 = vsel %vm8466, %v3444, 0.0
          %v8623 = vsel %vm8466, %v3445, 0.0
          %v8624 = vsel %vm8466, %v3446, 0.0
          %v8625 = vsel %vm8467, %v3447, 0.0
          %v8626 = vsel %vm8467, %v3448, 0.0
          %v8627 = vsel %vm8467, %v3449, 0.0
          %v8628 = vsel %vm8467, %v3450, 0.0
          %v8629 = vsel %vm8467, %v3451, 0.0
          %v8630 = vsel %vm8467, %v3452, 0.0
          %v8631 = vsel %vm8467, %v3453, 0.0
          %v8632 = vsel %vm8467, %v3454, 0.0
          %v8633 = vsel %vm8468, %v3455, 0.0
          %v8634 = vsel %vm8468, %v3456, 0.0
          %v8635 = vsel %vm8468, %v3457, 0.0
          %v8636 = vsel %vm8468, %v3458, 0.0
          %v8637 = vsel %vm8468, %v3459, 0.0
          %v8638 = vsel %vm8468, %v3460, 0.0
          %v8639 = vsel %vm8468, %v3461, 0.0
          %v8640 = vsel %vm8468, %v3462, 0.0
          %v8641 = vsel %vm8469, %v3463, 0.0
          %v8642 = vsel %vm8469, %v3464, 0.0
          %v8643 = vsel %vm8469, %v3465, 0.0
          %v8644 = vsel %vm8469, %v3466, 0.0
          %v8645 = vsel %vm8469, %v3467, 0.0
          %v8646 = vsel %vm8469, %v3468, 0.0
          %v8647 = vsel %vm8469, %v3469, 0.0
          %v8648 = vsel %vm8469, %v3470, 0.0
          %v8649 = vsel %vm8470, %v3471, 0.0
          %v8650 = vsel %vm8470, %v3472, 0.0
          %v8651 = vsel %vm8470, %v3473, 0.0
          %v8652 = vsel %vm8470, %v3474, 0.0
          %v8653 = vsel %vm8470, %v3475, 0.0
          %v8654 = vsel %vm8470, %v3476, 0.0
          %v8655 = vsel %vm8470, %v3477, 0.0
          %v8656 = vsel %vm8470, %v3478, 0.0
          %v8657 = vsel %vm8471, %v3479, 0.0
          %v8658 = vsel %vm8471, %v3480, 0.0
          %v8659 = vsel %vm8471, %v3481, 0.0
          %v8660 = vsel %vm8471, %v3482, 0.0
          %v8661 = vsel %vm8471, %v3483, 0.0
          %v8662 = vsel %vm8471, %v3484, 0.0
          %v8663 = vsel %vm8471, %v3485, 0.0
          %v8664 = vsel %vm8471, %v3486, 0.0
          %v8665 = vsel %vm8472, %v3487, 0.0
          %v8666 = vsel %vm8472, %v3488, 0.0
          %v8667 = vsel %vm8472, %v3489, 0.0
          %v8668 = vsel %vm8472, %v3490, 0.0
          %v8669 = vsel %vm8472, %v3491, 0.0
          %v8670 = vsel %vm8472, %v3492, 0.0
          %v8671 = vsel %vm8472, %v3493, 0.0
          %v8672 = vsel %vm8472, %v3494, 0.0
          %v8673 = vsel %vm8473, %v3495, 0.0
          %v8674 = vsel %vm8473, %v3496, 0.0
          %v8675 = vsel %vm8473, %v3497, 0.0
          %v8676 = vsel %vm8473, %v3498, 0.0
          %v8677 = vsel %vm8473, %v3499, 0.0
          %v8678 = vsel %vm8473, %v3500, 0.0
          %v8679 = vsel %vm8473, %v3501, 0.0
          %v8680 = vsel %vm8473, %v3502, 0.0
          %v8681 = vsel %vm8474, %v3503, 0.0
          %v8682 = vsel %vm8474, %v3504, 0.0
          %v8683 = vsel %vm8474, %v3505, 0.0
          %v8684 = vsel %vm8474, %v3506, 0.0
          %v8685 = vsel %vm8474, %v3507, 0.0
          %v8686 = vsel %vm8474, %v3508, 0.0
          %v8687 = vsel %vm8474, %v3509, 0.0
          %v8688 = vsel %vm8474, %v3510, 0.0
          %v8689 = vsel %vm8475, %v3511, 0.0
          %v8690 = vsel %vm8475, %v3512, 0.0
          %v8691 = vsel %vm8475, %v3513, 0.0
          %v8692 = vsel %vm8475, %v3514, 0.0
          %v8693 = vsel %vm8475, %v3515, 0.0
          %v8694 = vsel %vm8475, %v3516, 0.0
          %v8695 = vsel %vm8475, %v3517, 0.0
          %v8696 = vsel %vm8475, %v3518, 0.0
          %v8697 = vsel %vm8476, %v3519, 0.0
          %v8698 = vsel %vm8476, %v3520, 0.0
          %v8699 = vsel %vm8476, %v3521, 0.0
          %v8700 = vsel %vm8476, %v3522, 0.0
          %v8701 = vsel %vm8476, %v3523, 0.0
          %v8702 = vsel %vm8476, %v3524, 0.0
          %v8703 = vsel %vm8476, %v3525, 0.0
          %v8704 = vsel %vm8476, %v3526, 0.0
          %v8705 = vsel %vm8477, %v3527, 0.0
          %v8706 = vsel %vm8477, %v3528, 0.0
          %v8707 = vsel %vm8477, %v3529, 0.0
          %v8708 = vsel %vm8477, %v3530, 0.0
          %v8709 = vsel %vm8477, %v3531, 0.0
          %v8710 = vsel %vm8477, %v3532, 0.0
          %v8711 = vsel %vm8477, %v3533, 0.0
          %v8712 = vsel %vm8477, %v3534, 0.0
          %v8713 = vsel %vm8478, %v3535, 0.0
          %v8714 = vsel %vm8478, %v3536, 0.0
          %v8715 = vsel %vm8478, %v3537, 0.0
          %v8716 = vsel %vm8478, %v3538, 0.0
          %v8717 = vsel %vm8478, %v3539, 0.0
          %v8718 = vsel %vm8478, %v3540, 0.0
          %v8719 = vsel %vm8478, %v3541, 0.0
          %v8720 = vsel %vm8478, %v3542, 0.0
          %v8721 = vsel %vm8479, %v3543, 0.0
          %v8722 = vsel %vm8479, %v3544, 0.0
          %v8723 = vsel %vm8479, %v3545, 0.0
          %v8724 = vsel %vm8479, %v3546, 0.0
          %v8725 = vsel %vm8479, %v3547, 0.0
          %v8726 = vsel %vm8479, %v3548, 0.0
          %v8727 = vsel %vm8479, %v3549, 0.0
          %v8728 = vsel %vm8479, %v3550, 0.0
          %v8729 = vsel %vm8480, %v3551, 0.0
          %v8730 = vsel %vm8480, %v3552, 0.0
          %v8731 = vsel %vm8480, %v3553, 0.0
          %v8732 = vsel %vm8480, %v3554, 0.0
          %v8733 = vsel %vm8480, %v3555, 0.0
          %v8734 = vsel %vm8480, %v3556, 0.0
          %v8735 = vsel %vm8480, %v3557, 0.0
          %v8736 = vsel %vm8480, %v3558, 0.0
          %v8737 = vsel %vm8449, %v6685, 0.0
          %v8738 = vsel %vm8449, %v6686, 0.0
          %v8739 = vsel %vm8449, %v6687, 0.0
          %v8740 = vsel %vm8450, %v6688, 0.0
          %v8741 = vsel %vm8450, %v6689, 0.0
          %v8742 = vsel %vm8450, %v6690, 0.0
          %v8743 = vsel %vm8451, %v6691, 0.0
          %v8744 = vsel %vm8451, %v6692, 0.0
          %v8745 = vsel %vm8451, %v6693, 0.0
          %v8746 = vsel %vm8452, %v6694, 0.0
          %v8747 = vsel %vm8452, %v6695, 0.0
          %v8748 = vsel %vm8452, %v6696, 0.0
          %v8749 = vsel %vm8453, %v6697, 0.0
          %v8750 = vsel %vm8453, %v6698, 0.0
          %v8751 = vsel %vm8453, %v6699, 0.0
          %v8752 = vsel %vm8454, %v6700, 0.0
          %v8753 = vsel %vm8454, %v6701, 0.0
          %v8754 = vsel %vm8454, %v6702, 0.0
          %v8755 = vsel %vm8455, %v6703, 0.0
          %v8756 = vsel %vm8455, %v6704, 0.0
          %v8757 = vsel %vm8455, %v6705, 0.0
          %v8758 = vsel %vm8456, %v6706, 0.0
          %v8759 = vsel %vm8456, %v6707, 0.0
          %v8760 = vsel %vm8456, %v6708, 0.0
          %v8761 = vsel %vm8457, %v6709, 0.0
          %v8762 = vsel %vm8457, %v6710, 0.0
          %v8763 = vsel %vm8457, %v6711, 0.0
          %v8764 = vsel %vm8458, %v6712, 0.0
          %v8765 = vsel %vm8458, %v6713, 0.0
          %v8766 = vsel %vm8458, %v6714, 0.0
          %v8767 = vsel %vm8459, %v6715, 0.0
          %v8768 = vsel %vm8459, %v6716, 0.0
          %v8769 = vsel %vm8459, %v6717, 0.0
          %v8770 = vsel %vm8460, %v6718, 0.0
          %v8771 = vsel %vm8460, %v6719, 0.0
          %v8772 = vsel %vm8460, %v6720, 0.0
          %v8773 = vsel %vm8461, %v6721, 0.0
          %v8774 = vsel %vm8461, %v6722, 0.0
          %v8775 = vsel %vm8461, %v6723, 0.0
          %v8776 = vsel %vm8462, %v6724, 0.0
          %v8777 = vsel %vm8462, %v6725, 0.0
          %v8778 = vsel %vm8462, %v6726, 0.0
          %v8779 = vsel %vm8463, %v6727, 0.0
          %v8780 = vsel %vm8463, %v6728, 0.0
          %v8781 = vsel %vm8463, %v6729, 0.0
          %v8782 = vsel %vm8464, %v6730, 0.0
          %v8783 = vsel %vm8464, %v6731, 0.0
          %v8784 = vsel %vm8464, %v6732, 0.0
          %v8785 = vsel %vm8465, %v6733, 0.0
          %v8786 = vsel %vm8465, %v6734, 0.0
          %v8787 = vsel %vm8465, %v6735, 0.0
          %v8788 = vsel %vm8466, %v6736, 0.0
          %v8789 = vsel %vm8466, %v6737, 0.0
          %v8790 = vsel %vm8466, %v6738, 0.0
          %v8791 = vsel %vm8467, %v6739, 0.0
          %v8792 = vsel %vm8467, %v6740, 0.0
          %v8793 = vsel %vm8467, %v6741, 0.0
          %v8794 = vsel %vm8468, %v6742, 0.0
          %v8795 = vsel %vm8468, %v6743, 0.0
          %v8796 = vsel %vm8468, %v6744, 0.0
          %v8797 = vsel %vm8469, %v6745, 0.0
          %v8798 = vsel %vm8469, %v6746, 0.0
          %v8799 = vsel %vm8469, %v6747, 0.0
          %v8800 = vsel %vm8470, %v6748, 0.0
          %v8801 = vsel %vm8470, %v6749, 0.0
          %v8802 = vsel %vm8470, %v6750, 0.0
          %v8803 = vsel %vm8471, %v6751, 0.0
          %v8804 = vsel %vm8471, %v6752, 0.0
          %v8805 = vsel %vm8471, %v6753, 0.0
          %v8806 = vsel %vm8472, %v6754, 0.0
          %v8807 = vsel %vm8472, %v6755, 0.0
          %v8808 = vsel %vm8472, %v6756, 0.0
          %v8809 = vsel %vm8473, %v6757, 0.0
          %v8810 = vsel %vm8473, %v6758, 0.0
          %v8811 = vsel %vm8473, %v6759, 0.0
          %v8812 = vsel %vm8474, %v6760, 0.0
          %v8813 = vsel %vm8474, %v6761, 0.0
          %v8814 = vsel %vm8474, %v6762, 0.0
          %v8815 = vsel %vm8475, %v6763, 0.0
          %v8816 = vsel %vm8475, %v6764, 0.0
          %v8817 = vsel %vm8475, %v6765, 0.0
          %v8818 = vsel %vm8476, %v6766, 0.0
          %v8819 = vsel %vm8476, %v6767, 0.0
          %v8820 = vsel %vm8476, %v6768, 0.0
          %v8821 = vsel %vm8477, %v6769, 0.0
          %v8822 = vsel %vm8477, %v6770, 0.0
          %v8823 = vsel %vm8477, %v6771, 0.0
          %v8824 = vsel %vm8478, %v6772, 0.0
          %v8825 = vsel %vm8478, %v6773, 0.0
          %v8826 = vsel %vm8478, %v6774, 0.0
          %v8827 = vsel %vm8479, %v6775, 0.0
          %v8828 = vsel %vm8479, %v6776, 0.0
          %v8829 = vsel %vm8479, %v6777, 0.0
          %v8830 = vsel %vm8480, %v6778, 0.0
          %v8831 = vsel %vm8480, %v6779, 0.0
          %v8832 = vsel %vm8480, %v6780, 0.0
          %v8833 = vadd.f32 %v8481, %v8489
          %v8834 = vadd.f32 %v8833, %v8497
          %v8835 = vadd.f32 %v8834, %v8505
          %v8836 = vadd.f32 %v8835, %v8513
          %v8837 = vadd.f32 %v8836, %v8521
          %v8838 = vadd.f32 %v8837, %v8529
          %v8839 = vadd.f32 %v8838, %v8537
          %v8840 = vadd.f32 %v8839, %v8545
          %v8841 = vadd.f32 %v8840, %v8553
          %v8842 = vadd.f32 %v8841, %v8561
          %v8843 = vadd.f32 %v8842, %v8569
          %v8844 = vadd.f32 %v8843, %v8577
          %v8845 = vadd.f32 %v8844, %v8585
          %v8846 = vadd.f32 %v8845, %v8593
          %v8847 = vadd.f32 %v8846, %v8601
          %v8848 = vadd.f32 %v8847, %v8609
          %v8849 = vadd.f32 %v8848, %v8617
          %v8850 = vadd.f32 %v8849, %v8625
          %v8851 = vadd.f32 %v8850, %v8633
          %v8852 = vadd.f32 %v8851, %v8641
          %v8853 = vadd.f32 %v8852, %v8649
          %v8854 = vadd.f32 %v8853, %v8657
          %v8855 = vadd.f32 %v8854, %v8665
          %v8856 = vadd.f32 %v8855, %v8673
          %v8857 = vadd.f32 %v8856, %v8681
          %v8858 = vadd.f32 %v8857, %v8689
          %v8859 = vadd.f32 %v8858, %v8697
          %v8860 = vadd.f32 %v8859, %v8705
          %v8861 = vadd.f32 %v8860, %v8713
          %v8862 = vadd.f32 %v8861, %v8721
          %v8863 = vadd.f32 %v8862, %v8729
          %v8864 = vrot.slane %v8863, 4
          %v8865 = vadd.f32 %v8863, %v8864
          %v8866 = vrot.slane %v8865, 2
          %v8867 = vadd.f32 %v8865, %v8866
          %v8868 = vrot.slane %v8867, 1
          %v8869 = vadd.f32 %v8867, %v8868
          %v8870 = vadd.f32 %v8482, %v8490
          %v8871 = vadd.f32 %v8870, %v8498
          %v8872 = vadd.f32 %v8871, %v8506
          %v8873 = vadd.f32 %v8872, %v8514
          %v8874 = vadd.f32 %v8873, %v8522
          %v8875 = vadd.f32 %v8874, %v8530
          %v8876 = vadd.f32 %v8875, %v8538
          %v8877 = vadd.f32 %v8876, %v8546
          %v8878 = vadd.f32 %v8877, %v8554
          %v8879 = vadd.f32 %v8878, %v8562
          %v8880 = vadd.f32 %v8879, %v8570
          %v8881 = vadd.f32 %v8880, %v8578
          %v8882 = vadd.f32 %v8881, %v8586
          %v8883 = vadd.f32 %v8882, %v8594
          %v8884 = vadd.f32 %v8883, %v8602
          %v8885 = vadd.f32 %v8884, %v8610
          %v8886 = vadd.f32 %v8885, %v8618
          %v8887 = vadd.f32 %v8886, %v8626
          %v8888 = vadd.f32 %v8887, %v8634
          %v8889 = vadd.f32 %v8888, %v8642
          %v8890 = vadd.f32 %v8889, %v8650
          %v8891 = vadd.f32 %v8890, %v8658
          %v8892 = vadd.f32 %v8891, %v8666
          %v8893 = vadd.f32 %v8892, %v8674
          %v8894 = vadd.f32 %v8893, %v8682
          %v8895 = vadd.f32 %v8894, %v8690
          %v8896 = vadd.f32 %v8895, %v8698
          %v8897 = vadd.f32 %v8896, %v8706
          %v8898 = vadd.f32 %v8897, %v8714
          %v8899 = vadd.f32 %v8898, %v8722
          %v8900 = vadd.f32 %v8899, %v8730
          %v8901 = vrot.slane %v8900, 4
          %v8902 = vadd.f32 %v8900, %v8901
          %v8903 = vrot.slane %v8902, 2
          %v8904 = vadd.f32 %v8902, %v8903
          %v8905 = vrot.slane %v8904, 1
          %v8906 = vadd.f32 %v8904, %v8905
          %v8907 = vadd.f32 %v8483, %v8491
          %v8908 = vadd.f32 %v8907, %v8499
          %v8909 = vadd.f32 %v8908, %v8507
          %v8910 = vadd.f32 %v8909, %v8515
          %v8911 = vadd.f32 %v8910, %v8523
          %v8912 = vadd.f32 %v8911, %v8531
          %v8913 = vadd.f32 %v8912, %v8539
          %v8914 = vadd.f32 %v8913, %v8547
          %v8915 = vadd.f32 %v8914, %v8555
          %v8916 = vadd.f32 %v8915, %v8563
          %v8917 = vadd.f32 %v8916, %v8571
          %v8918 = vadd.f32 %v8917, %v8579
          %v8919 = vadd.f32 %v8918, %v8587
          %v8920 = vadd.f32 %v8919, %v8595
          %v8921 = vadd.f32 %v8920, %v8603
          %v8922 = vadd.f32 %v8921, %v8611
          %v8923 = vadd.f32 %v8922, %v8619
          %v8924 = vadd.f32 %v8923, %v8627
          %v8925 = vadd.f32 %v8924, %v8635
          %v8926 = vadd.f32 %v8925, %v8643
          %v8927 = vadd.f32 %v8926, %v8651
          %v8928 = vadd.f32 %v8927, %v8659
          %v8929 = vadd.f32 %v8928, %v8667
          %v8930 = vadd.f32 %v8929, %v8675
          %v8931 = vadd.f32 %v8930, %v8683
          %v8932 = vadd.f32 %v8931, %v8691
          %v8933 = vadd.f32 %v8932, %v8699
          %v8934 = vadd.f32 %v8933, %v8707
          %v8935 = vadd.f32 %v8934, %v8715
          %v8936 = vadd.f32 %v8935, %v8723
          %v8937 = vadd.f32 %v8936, %v8731
          %v8938 = vrot.slane %v8937, 4
          %v8939 = vadd.f32 %v8937, %v8938
          %v8940 = vrot.slane %v8939, 2
          %v8941 = vadd.f32 %v8939, %v8940
          %v8942 = vrot.slane %v8941, 1
          %v8943 = vadd.f32 %v8941, %v8942
          %v8944 = vadd.f32 %v8484, %v8492
          %v8945 = vadd.f32 %v8944, %v8500
          %v8946 = vadd.f32 %v8945, %v8508
          %v8947 = vadd.f32 %v8946, %v8516
          %v8948 = vadd.f32 %v8947, %v8524
          %v8949 = vadd.f32 %v8948, %v8532
          %v8950 = vadd.f32 %v8949, %v8540
          %v8951 = vadd.f32 %v8950, %v8548
          %v8952 = vadd.f32 %v8951, %v8556
          %v8953 = vadd.f32 %v8952, %v8564
          %v8954 = vadd.f32 %v8953, %v8572
          %v8955 = vadd.f32 %v8954, %v8580
          %v8956 = vadd.f32 %v8955, %v8588
          %v8957 = vadd.f32 %v8956, %v8596
          %v8958 = vadd.f32 %v8957, %v8604
          %v8959 = vadd.f32 %v8958, %v8612
          %v8960 = vadd.f32 %v8959, %v8620
          %v8961 = vadd.f32 %v8960, %v8628
          %v8962 = vadd.f32 %v8961, %v8636
          %v8963 = vadd.f32 %v8962, %v8644
          %v8964 = vadd.f32 %v8963, %v8652
          %v8965 = vadd.f32 %v8964, %v8660
          %v8966 = vadd.f32 %v8965, %v8668
          %v8967 = vadd.f32 %v8966, %v8676
          %v8968 = vadd.f32 %v8967, %v8684
          %v8969 = vadd.f32 %v8968, %v8692
          %v8970 = vadd.f32 %v8969, %v8700
          %v8971 = vadd.f32 %v8970, %v8708
          %v8972 = vadd.f32 %v8971, %v8716
          %v8973 = vadd.f32 %v8972, %v8724
          %v8974 = vadd.f32 %v8973, %v8732
          %v8975 = vrot.slane %v8974, 4
          %v8976 = vadd.f32 %v8974, %v8975
          %v8977 = vrot.slane %v8976, 2
          %v8978 = vadd.f32 %v8976, %v8977
          %v8979 = vrot.slane %v8978, 1
          %v8980 = vadd.f32 %v8978, %v8979
          %v8981 = vadd.f32 %v8485, %v8493
          %v8982 = vadd.f32 %v8981, %v8501
          %v8983 = vadd.f32 %v8982, %v8509
          %v8984 = vadd.f32 %v8983, %v8517
          %v8985 = vadd.f32 %v8984, %v8525
          %v8986 = vadd.f32 %v8985, %v8533
          %v8987 = vadd.f32 %v8986, %v8541
          %v8988 = vadd.f32 %v8987, %v8549
          %v8989 = vadd.f32 %v8988, %v8557
          %v8990 = vadd.f32 %v8989, %v8565
          %v8991 = vadd.f32 %v8990, %v8573
          %v8992 = vadd.f32 %v8991, %v8581
          %v8993 = vadd.f32 %v8992, %v8589
          %v8994 = vadd.f32 %v8993, %v8597
          %v8995 = vadd.f32 %v8994, %v8605
          %v8996 = vadd.f32 %v8995, %v8613
          %v8997 = vadd.f32 %v8996, %v8621
          %v8998 = vadd.f32 %v8997, %v8629
          %v8999 = vadd.f32 %v8998, %v8637
          %v9000 = vadd.f32 %v8999, %v8645
          %v9001 = vadd.f32 %v9000, %v8653
          %v9002 = vadd.f32 %v9001, %v8661
          %v9003 = vadd.f32 %v9002, %v8669
          %v9004 = vadd.f32 %v9003, %v8677
          %v9005 = vadd.f32 %v9004, %v8685
          %v9006 = vadd.f32 %v9005, %v8693
          %v9007 = vadd.f32 %v9006, %v8701
          %v9008 = vadd.f32 %v9007, %v8709
          %v9009 = vadd.f32 %v9008, %v8717
          %v9010 = vadd.f32 %v9009, %v8725
          %v9011 = vadd.f32 %v9010, %v8733
          %v9012 = vrot.slane %v9011, 4
          %v9013 = vadd.f32 %v9011, %v9012
          %v9014 = vrot.slane %v9013, 2
          %v9015 = vadd.f32 %v9013, %v9014
          %v9016 = vrot.slane %v9015, 1
          %v9017 = vadd.f32 %v9015, %v9016
          %v9018 = vadd.f32 %v8486, %v8494
          %v9019 = vadd.f32 %v9018, %v8502
          %v9020 = vadd.f32 %v9019, %v8510
          %v9021 = vadd.f32 %v9020, %v8518
          %v9022 = vadd.f32 %v9021, %v8526
          %v9023 = vadd.f32 %v9022, %v8534
          %v9024 = vadd.f32 %v9023, %v8542
          %v9025 = vadd.f32 %v9024, %v8550
          %v9026 = vadd.f32 %v9025, %v8558
          %v9027 = vadd.f32 %v9026, %v8566
          %v9028 = vadd.f32 %v9027, %v8574
          %v9029 = vadd.f32 %v9028, %v8582
          %v9030 = vadd.f32 %v9029, %v8590
          %v9031 = vadd.f32 %v9030, %v8598
          %v9032 = vadd.f32 %v9031, %v8606
          %v9033 = vadd.f32 %v9032, %v8614
          %v9034 = vadd.f32 %v9033, %v8622
          %v9035 = vadd.f32 %v9034, %v8630
          %v9036 = vadd.f32 %v9035, %v8638
          %v9037 = vadd.f32 %v9036, %v8646
          %v9038 = vadd.f32 %v9037, %v8654
          %v9039 = vadd.f32 %v9038, %v8662
          %v9040 = vadd.f32 %v9039, %v8670
          %v9041 = vadd.f32 %v9040, %v8678
          %v9042 = vadd.f32 %v9041, %v8686
          %v9043 = vadd.f32 %v9042, %v8694
          %v9044 = vadd.f32 %v9043, %v8702
          %v9045 = vadd.f32 %v9044, %v8710
          %v9046 = vadd.f32 %v9045, %v8718
          %v9047 = vadd.f32 %v9046, %v8726
          %v9048 = vadd.f32 %v9047, %v8734
          %v9049 = vrot.slane %v9048, 4
          %v9050 = vadd.f32 %v9048, %v9049
          %v9051 = vrot.slane %v9050, 2
          %v9052 = vadd.f32 %v9050, %v9051
          %v9053 = vrot.slane %v9052, 1
          %v9054 = vadd.f32 %v9052, %v9053
          %v9055 = vadd.f32 %v8487, %v8495
          %v9056 = vadd.f32 %v9055, %v8503
          %v9057 = vadd.f32 %v9056, %v8511
          %v9058 = vadd.f32 %v9057, %v8519
          %v9059 = vadd.f32 %v9058, %v8527
          %v9060 = vadd.f32 %v9059, %v8535
          %v9061 = vadd.f32 %v9060, %v8543
          %v9062 = vadd.f32 %v9061, %v8551
          %v9063 = vadd.f32 %v9062, %v8559
          %v9064 = vadd.f32 %v9063, %v8567
          %v9065 = vadd.f32 %v9064, %v8575
          %v9066 = vadd.f32 %v9065, %v8583
          %v9067 = vadd.f32 %v9066, %v8591
          %v9068 = vadd.f32 %v9067, %v8599
          %v9069 = vadd.f32 %v9068, %v8607
          %v9070 = vadd.f32 %v9069, %v8615
          %v9071 = vadd.f32 %v9070, %v8623
          %v9072 = vadd.f32 %v9071, %v8631
          %v9073 = vadd.f32 %v9072, %v8639
          %v9074 = vadd.f32 %v9073, %v8647
          %v9075 = vadd.f32 %v9074, %v8655
          %v9076 = vadd.f32 %v9075, %v8663
          %v9077 = vadd.f32 %v9076, %v8671
          %v9078 = vadd.f32 %v9077, %v8679
          %v9079 = vadd.f32 %v9078, %v8687
          %v9080 = vadd.f32 %v9079, %v8695
          %v9081 = vadd.f32 %v9080, %v8703
          %v9082 = vadd.f32 %v9081, %v8711
          %v9083 = vadd.f32 %v9082, %v8719
          %v9084 = vadd.f32 %v9083, %v8727
          %v9085 = vadd.f32 %v9084, %v8735
          %v9086 = vrot.slane %v9085, 4
          %v9087 = vadd.f32 %v9085, %v9086
          %v9088 = vrot.slane %v9087, 2
          %v9089 = vadd.f32 %v9087, %v9088
          %v9090 = vrot.slane %v9089, 1
          %v9091 = vadd.f32 %v9089, %v9090
          %v9092 = vsel %vm3566, %v8488, 0.0
          %v9093 = vsel %vm3566, %v8496, 0.0
          %v9094 = vadd.f32 %v9092, %v9093
          %v9095 = vsel %vm3566, %v8504, 0.0
          %v9096 = vadd.f32 %v9094, %v9095
          %v9097 = vsel %vm3566, %v8512, 0.0
          %v9098 = vadd.f32 %v9096, %v9097
          %v9099 = vsel %vm3566, %v8520, 0.0
          %v9100 = vadd.f32 %v9098, %v9099
          %v9101 = vsel %vm3566, %v8528, 0.0
          %v9102 = vadd.f32 %v9100, %v9101
          %v9103 = vsel %vm3566, %v8536, 0.0
          %v9104 = vadd.f32 %v9102, %v9103
          %v9105 = vsel %vm3566, %v8544, 0.0
          %v9106 = vadd.f32 %v9104, %v9105
          %v9107 = vsel %vm3566, %v8552, 0.0
          %v9108 = vadd.f32 %v9106, %v9107
          %v9109 = vsel %vm3566, %v8560, 0.0
          %v9110 = vadd.f32 %v9108, %v9109
          %v9111 = vsel %vm3566, %v8568, 0.0
          %v9112 = vadd.f32 %v9110, %v9111
          %v9113 = vsel %vm3566, %v8576, 0.0
          %v9114 = vadd.f32 %v9112, %v9113
          %v9115 = vsel %vm3566, %v8584, 0.0
          %v9116 = vadd.f32 %v9114, %v9115
          %v9117 = vsel %vm3566, %v8592, 0.0
          %v9118 = vadd.f32 %v9116, %v9117
          %v9119 = vsel %vm3566, %v8600, 0.0
          %v9120 = vadd.f32 %v9118, %v9119
          %v9121 = vsel %vm3566, %v8608, 0.0
          %v9122 = vadd.f32 %v9120, %v9121
          %v9123 = vsel %vm3566, %v8616, 0.0
          %v9124 = vadd.f32 %v9122, %v9123
          %v9125 = vsel %vm3566, %v8624, 0.0
          %v9126 = vadd.f32 %v9124, %v9125
          %v9127 = vsel %vm3566, %v8632, 0.0
          %v9128 = vadd.f32 %v9126, %v9127
          %v9129 = vsel %vm3566, %v8640, 0.0
          %v9130 = vadd.f32 %v9128, %v9129
          %v9131 = vsel %vm3566, %v8648, 0.0
          %v9132 = vadd.f32 %v9130, %v9131
          %v9133 = vsel %vm3566, %v8656, 0.0
          %v9134 = vadd.f32 %v9132, %v9133
          %v9135 = vsel %vm3566, %v8664, 0.0
          %v9136 = vadd.f32 %v9134, %v9135
          %v9137 = vsel %vm3566, %v8672, 0.0
          %v9138 = vadd.f32 %v9136, %v9137
          %v9139 = vsel %vm3566, %v8680, 0.0
          %v9140 = vadd.f32 %v9138, %v9139
          %v9141 = vsel %vm3566, %v8688, 0.0
          %v9142 = vadd.f32 %v9140, %v9141
          %v9143 = vsel %vm3566, %v8696, 0.0
          %v9144 = vadd.f32 %v9142, %v9143
          %v9145 = vsel %vm3566, %v8704, 0.0
          %v9146 = vadd.f32 %v9144, %v9145
          %v9147 = vsel %vm3566, %v8712, 0.0
          %v9148 = vadd.f32 %v9146, %v9147
          %v9149 = vsel %vm3566, %v8720, 0.0
          %v9150 = vadd.f32 %v9148, %v9149
          %v9151 = vsel %vm3566, %v8728, 0.0
          %v9152 = vadd.f32 %v9150, %v9151
          %v9153 = vsel %vm3566, %v8736, 0.0
          %v9154 = vadd.f32 %v9152, %v9153
          %v9155 = vrot.slane %v9154, 4
          %v9156 = vadd.f32 %v9154, %v9155
          %v9157 = vrot.slane %v9156, 2
          %v9158 = vadd.f32 %v9156, %v9157
          %v9159 = vrot.slane %v9158, 1
          %v9160 = vadd.f32 %v9158, %v9159
          %v9169 = vcombine.low %v8869, %v8906
          %v9170 = vcombine.low %v8943, %v8980
          %v9171 = vcombine.low %v9017, %v9054
          %v9172 = vcombine.low %v9091, %v9160
          %v9174 = vunpack.c.l.s4 1966171168
          %v9175 = vunpack.c.0.s8 %v9174
          %v9176 = vlaneseq
          %v9177 = vshrl.u32 %v9176, 7
          %v9178 = vsub.s32 %v9175, %v9177
          %v9179 = vrot.slane %v9169, %v9178
          %v9181 = vunpack.c.l.s4 1966171168
          %v9182 = vunpack.c.0.s8 %v9181
          %v9183 = vlaneseq
          %v9184 = vshrl.u32 %v9183, 7
          %v9185 = vsub.s32 %v9182, %v9184
          %v9186 = vrot.slane %v9170, %v9185
          %v9188 = vunpack.c.l.s4 1966171168
          %v9189 = vunpack.c.0.s8 %v9188
          %v9190 = vlaneseq
          %v9191 = vshrl.u32 %v9190, 7
          %v9192 = vsub.s32 %v9189, %v9191
          %v9193 = vrot.slane %v9171, %v9192
          %v9195 = vunpack.c.l.s4 1966171168
          %v9196 = vunpack.c.0.s8 %v9195
          %v9197 = vlaneseq
          %v9198 = vshrl.u32 %v9197, 7
          %v9199 = vsub.s32 %v9196, %v9198
          %v9200 = vrot.slane %v9172, %v9199
          %v9201 = vcombine.low %v9179, %v9186
          %v9202 = vcombine.low %v9193, %v9200
          %v9204 = vunpack.c.l.s4 1966171168
          %v9205 = vunpack.c.0.s8 %v9204
          %v9206 = vlaneseq
          %v9207 = vshrl.u32 %v9206, 7
          %v9208 = vsub.s32 %v9205, %v9207
          %v9209 = vrot.slane %v9201, %v9208
          %v9211 = vunpack.c.l.s4 1966171168
          %v9212 = vunpack.c.0.s8 %v9211
          %v9213 = vlaneseq
          %v9214 = vshrl.u32 %v9213, 7
          %v9215 = vsub.s32 %v9212, %v9214
          %v9216 = vrot.slane %v9202, %v9215
          %v9217 = vcombine.low %v9209, %v9216
          %v9219 = vlaneseq
          %vm9220 = vcmp.ge.s32.totalorder %v9219, 0
          %vm9221 = vcmp.lt.s32.totalorder %v9219, 1000
          %vm9222 = vmand %vm9220, %vm9221
          %9223 = vst.msk [vmem:[%s332] ss:$8 sm:$0xf] %vm9222, %v9217
          %9224 = vst.msk [vmem:[%s332] ss:$8 sm:$0xf0] %vm9222, %v9217
          %v9225 = vsub.f32 1.0, %v8481
          %v9226 = vsub.f32 1.0, %v8482
          %v9227 = vsub.f32 1.0, %v8483
          %v9228 = vsub.f32 1.0, %v8484
          %v9229 = vsub.f32 1.0, %v8485
          %v9230 = vsub.f32 1.0, %v8486
          %v9231 = vsub.f32 1.0, %v8487
          %v9232 = vsub.f32 1.0, %v8488
          %v9233 = vsub.f32 1.0, %v8489
          %v9234 = vsub.f32 1.0, %v8490
          %v9235 = vsub.f32 1.0, %v8491
          %v9236 = vsub.f32 1.0, %v8492
          %v9237 = vsub.f32 1.0, %v8493
          %v9238 = vsub.f32 1.0, %v8494
          %v9239 = vsub.f32 1.0, %v8495
          %v9240 = vsub.f32 1.0, %v8496
          %v9241 = vsub.f32 1.0, %v8497
          %v9242 = vsub.f32 1.0, %v8498
          %v9243 = vsub.f32 1.0, %v8499
          %v9244 = vsub.f32 1.0, %v8500
          %v9245 = vsub.f32 1.0, %v8501
          %v9246 = vsub.f32 1.0, %v8502
          %v9247 = vsub.f32 1.0, %v8503
          %v9248 = vsub.f32 1.0, %v8504
          %v9249 = vsub.f32 1.0, %v8505
          %v9250 = vsub.f32 1.0, %v8506
          %v9251 = vsub.f32 1.0, %v8507
          %v9252 = vsub.f32 1.0, %v8508
          %v9253 = vsub.f32 1.0, %v8509
          %v9254 = vsub.f32 1.0, %v8510
          %v9255 = vsub.f32 1.0, %v8511
          %v9256 = vsub.f32 1.0, %v8512
          %v9257 = vsub.f32 1.0, %v8513
          %v9258 = vsub.f32 1.0, %v8514
          %v9259 = vsub.f32 1.0, %v8515
          %v9260 = vsub.f32 1.0, %v8516
          %v9261 = vsub.f32 1.0, %v8517
          %v9262 = vsub.f32 1.0, %v8518
          %v9263 = vsub.f32 1.0, %v8519
          %v9264 = vsub.f32 1.0, %v8520
          %v9265 = vsub.f32 1.0, %v8521
          %v9266 = vsub.f32 1.0, %v8522
          %v9267 = vsub.f32 1.0, %v8523
          %v9268 = vsub.f32 1.0, %v8524
          %v9269 = vsub.f32 1.0, %v8525
          %v9270 = vsub.f32 1.0, %v8526
          %v9271 = vsub.f32 1.0, %v8527
          %v9272 = vsub.f32 1.0, %v8528
          %v9273 = vsub.f32 1.0, %v8529
          %v9274 = vsub.f32 1.0, %v8530
          %v9275 = vsub.f32 1.0, %v8531
          %v9276 = vsub.f32 1.0, %v8532
          %v9277 = vsub.f32 1.0, %v8533
          %v9278 = vsub.f32 1.0, %v8534
          %v9279 = vsub.f32 1.0, %v8535
          %v9280 = vsub.f32 1.0, %v8536
          %v9281 = vsub.f32 1.0, %v8537
          %v9282 = vsub.f32 1.0, %v8538
          %v9283 = vsub.f32 1.0, %v8539
          %v9284 = vsub.f32 1.0, %v8540
          %v9285 = vsub.f32 1.0, %v8541
          %v9286 = vsub.f32 1.0, %v8542
          %v9287 = vsub.f32 1.0, %v8543
          %v9288 = vsub.f32 1.0, %v8544
          %v9289 = vsub.f32 1.0, %v8545
          %v9290 = vsub.f32 1.0, %v8546
          %v9291 = vsub.f32 1.0, %v8547
          %v9292 = vsub.f32 1.0, %v8548
          %v9293 = vsub.f32 1.0, %v8549
          %v9294 = vsub.f32 1.0, %v8550
          %v9295 = vsub.f32 1.0, %v8551
          %v9296 = vsub.f32 1.0, %v8552
          %v9297 = vsub.f32 1.0, %v8553
          %v9298 = vsub.f32 1.0, %v8554
          %v9299 = vsub.f32 1.0, %v8555
          %v9300 = vsub.f32 1.0, %v8556
          %v9301 = vsub.f32 1.0, %v8557
          %v9302 = vsub.f32 1.0, %v8558
          %v9303 = vsub.f32 1.0, %v8559
          %v9304 = vsub.f32 1.0, %v8560
          %v9305 = vsub.f32 1.0, %v8561
          %v9306 = vsub.f32 1.0, %v8562
          %v9307 = vsub.f32 1.0, %v8563
          %v9308 = vsub.f32 1.0, %v8564
          %v9309 = vsub.f32 1.0, %v8565
          %v9310 = vsub.f32 1.0, %v8566
          %v9311 = vsub.f32 1.0, %v8567
          %v9312 = vsub.f32 1.0, %v8568
          %v9313 = vsub.f32 1.0, %v8569
          %v9314 = vsub.f32 1.0, %v8570
          %v9315 = vsub.f32 1.0, %v8571
          %v9316 = vsub.f32 1.0, %v8572
          %v9317 = vsub.f32 1.0, %v8573
          %v9318 = vsub.f32 1.0, %v8574
          %v9319 = vsub.f32 1.0, %v8575
          %v9320 = vsub.f32 1.0, %v8576
          %v9321 = vsub.f32 1.0, %v8577
          %v9322 = vsub.f32 1.0, %v8578
          %v9323 = vsub.f32 1.0, %v8579
          %v9324 = vsub.f32 1.0, %v8580
          %v9325 = vsub.f32 1.0, %v8581
          %v9326 = vsub.f32 1.0, %v8582
          %v9327 = vsub.f32 1.0, %v8583
          %v9328 = vsub.f32 1.0, %v8584
          %v9329 = vsub.f32 1.0, %v8585
          %v9330 = vsub.f32 1.0, %v8586
          %v9331 = vsub.f32 1.0, %v8587
          %v9332 = vsub.f32 1.0, %v8588
          %v9333 = vsub.f32 1.0, %v8589
          %v9334 = vsub.f32 1.0, %v8590
          %v9335 = vsub.f32 1.0, %v8591
          %v9336 = vsub.f32 1.0, %v8592
          %v9337 = vsub.f32 1.0, %v8593
          %v9338 = vsub.f32 1.0, %v8594
          %v9339 = vsub.f32 1.0, %v8595
          %v9340 = vsub.f32 1.0, %v8596
          %v9341 = vsub.f32 1.0, %v8597
          %v9342 = vsub.f32 1.0, %v8598
          %v9343 = vsub.f32 1.0, %v8599
          %v9344 = vsub.f32 1.0, %v8600
          %v9345 = vsub.f32 1.0, %v8601
          %v9346 = vsub.f32 1.0, %v8602
          %v9347 = vsub.f32 1.0, %v8603
          %v9348 = vsub.f32 1.0, %v8604
          %v9349 = vsub.f32 1.0, %v8605
          %v9350 = vsub.f32 1.0, %v8606
          %v9351 = vsub.f32 1.0, %v8607
          %v9352 = vsub.f32 1.0, %v8608
          %v9353 = vsub.f32 1.0, %v8609
          %v9354 = vsub.f32 1.0, %v8610
          %v9355 = vsub.f32 1.0, %v8611
          %v9356 = vsub.f32 1.0, %v8612
          %v9357 = vsub.f32 1.0, %v8613
          %v9358 = vsub.f32 1.0, %v8614
          %v9359 = vsub.f32 1.0, %v8615
          %v9360 = vsub.f32 1.0, %v8616
          %v9361 = vsub.f32 1.0, %v8617
          %v9362 = vsub.f32 1.0, %v8618
          %v9363 = vsub.f32 1.0, %v8619
          %v9364 = vsub.f32 1.0, %v8620
          %v9365 = vsub.f32 1.0, %v8621
          %v9366 = vsub.f32 1.0, %v8622
          %v9367 = vsub.f32 1.0, %v8623
          %v9368 = vsub.f32 1.0, %v8624
          %v9369 = vsub.f32 1.0, %v8625
          %v9370 = vsub.f32 1.0, %v8626
          %v9371 = vsub.f32 1.0, %v8627
          %v9372 = vsub.f32 1.0, %v8628
          %v9373 = vsub.f32 1.0, %v8629
          %v9374 = vsub.f32 1.0, %v8630
          %v9375 = vsub.f32 1.0, %v8631
          %v9376 = vsub.f32 1.0, %v8632
          %v9377 = vsub.f32 1.0, %v8633
          %v9378 = vsub.f32 1.0, %v8634
          %v9379 = vsub.f32 1.0, %v8635
          %v9380 = vsub.f32 1.0, %v8636
          %v9381 = vsub.f32 1.0, %v8637
          %v9382 = vsub.f32 1.0, %v8638
          %v9383 = vsub.f32 1.0, %v8639
          %v9384 = vsub.f32 1.0, %v8640
          %v9385 = vsub.f32 1.0, %v8641
          %v9386 = vsub.f32 1.0, %v8642
          %v9387 = vsub.f32 1.0, %v8643
          %v9388 = vsub.f32 1.0, %v8644
          %v9389 = vsub.f32 1.0, %v8645
          %v9390 = vsub.f32 1.0, %v8646
          %v9391 = vsub.f32 1.0, %v8647
          %v9392 = vsub.f32 1.0, %v8648
          %v9393 = vsub.f32 1.0, %v8649
          %v9394 = vsub.f32 1.0, %v8650
          %v9395 = vsub.f32 1.0, %v8651
          %v9396 = vsub.f32 1.0, %v8652
          %v9397 = vsub.f32 1.0, %v8653
          %v9398 = vsub.f32 1.0, %v8654
          %v9399 = vsub.f32 1.0, %v8655
          %v9400 = vsub.f32 1.0, %v8656
          %v9401 = vsub.f32 1.0, %v8657
          %v9402 = vsub.f32 1.0, %v8658
          %v9403 = vsub.f32 1.0, %v8659
          %v9404 = vsub.f32 1.0, %v8660
          %v9405 = vsub.f32 1.0, %v8661
          %v9406 = vsub.f32 1.0, %v8662
          %v9407 = vsub.f32 1.0, %v8663
          %v9408 = vsub.f32 1.0, %v8664
          %v9409 = vsub.f32 1.0, %v8665
          %v9410 = vsub.f32 1.0, %v8666
          %v9411 = vsub.f32 1.0, %v8667
          %v9412 = vsub.f32 1.0, %v8668
          %v9413 = vsub.f32 1.0, %v8669
          %v9414 = vsub.f32 1.0, %v8670
          %v9415 = vsub.f32 1.0, %v8671
          %v9416 = vsub.f32 1.0, %v8672
          %v9417 = vsub.f32 1.0, %v8673
          %v9418 = vsub.f32 1.0, %v8674
          %v9419 = vsub.f32 1.0, %v8675
          %v9420 = vsub.f32 1.0, %v8676
          %v9421 = vsub.f32 1.0, %v8677
          %v9422 = vsub.f32 1.0, %v8678
          %v9423 = vsub.f32 1.0, %v8679
          %v9424 = vsub.f32 1.0, %v8680
          %v9425 = vsub.f32 1.0, %v8681
          %v9426 = vsub.f32 1.0, %v8682
          %v9427 = vsub.f32 1.0, %v8683
          %v9428 = vsub.f32 1.0, %v8684
          %v9429 = vsub.f32 1.0, %v8685
          %v9430 = vsub.f32 1.0, %v8686
          %v9431 = vsub.f32 1.0, %v8687
          %v9432 = vsub.f32 1.0, %v8688
          %v9433 = vsub.f32 1.0, %v8689
          %v9434 = vsub.f32 1.0, %v8690
          %v9435 = vsub.f32 1.0, %v8691
          %v9436 = vsub.f32 1.0, %v8692
          %v9437 = vsub.f32 1.0, %v8693
          %v9438 = vsub.f32 1.0, %v8694
          %v9439 = vsub.f32 1.0, %v8695
          %v9440 = vsub.f32 1.0, %v8696
          %v9441 = vsub.f32 1.0, %v8697
          %v9442 = vsub.f32 1.0, %v8698
          %v9443 = vsub.f32 1.0, %v8699
          %v9444 = vsub.f32 1.0, %v8700
          %v9445 = vsub.f32 1.0, %v8701
          %v9446 = vsub.f32 1.0, %v8702
          %v9447 = vsub.f32 1.0, %v8703
          %v9448 = vsub.f32 1.0, %v8704
          %v9449 = vsub.f32 1.0, %v8705
          %v9450 = vsub.f32 1.0, %v8706
          %v9451 = vsub.f32 1.0, %v8707
          %v9452 = vsub.f32 1.0, %v8708
          %v9453 = vsub.f32 1.0, %v8709
          %v9454 = vsub.f32 1.0, %v8710
          %v9455 = vsub.f32 1.0, %v8711
          %v9456 = vsub.f32 1.0, %v8712
          %v9457 = vsub.f32 1.0, %v8713
          %v9458 = vsub.f32 1.0, %v8714
          %v9459 = vsub.f32 1.0, %v8715
          %v9460 = vsub.f32 1.0, %v8716
          %v9461 = vsub.f32 1.0, %v8717
          %v9462 = vsub.f32 1.0, %v8718
          %v9463 = vsub.f32 1.0, %v8719
          %v9464 = vsub.f32 1.0, %v8720
          %v9465 = vsub.f32 1.0, %v8721
          %v9466 = vsub.f32 1.0, %v8722
          %v9467 = vsub.f32 1.0, %v8723
          %v9468 = vsub.f32 1.0, %v8724
          %v9469 = vsub.f32 1.0, %v8725
          %v9470 = vsub.f32 1.0, %v8726
          %v9471 = vsub.f32 1.0, %v8727
          %v9472 = vsub.f32 1.0, %v8728
          %v9473 = vsub.f32 1.0, %v8729
          %v9474 = vsub.f32 1.0, %v8730
          %v9475 = vsub.f32 1.0, %v8731
          %v9476 = vsub.f32 1.0, %v8732
          %v9477 = vsub.f32 1.0, %v8733
          %v9478 = vsub.f32 1.0, %v8734
          %v9479 = vsub.f32 1.0, %v8735
          %v9480 = vsub.f32 1.0, %v8736
          %v9481 = vmul.f32 %v8481, %v9225
          %v9482 = vmul.f32 %v8482, %v9226
          %v9483 = vmul.f32 %v8483, %v9227
          %v9484 = vmul.f32 %v8484, %v9228
          %v9485 = vmul.f32 %v8485, %v9229
          %v9486 = vmul.f32 %v8486, %v9230
          %v9487 = vmul.f32 %v8487, %v9231
          %v9488 = vmul.f32 %v8488, %v9232
          %v9489 = vmul.f32 %v8489, %v9233
          %v9490 = vmul.f32 %v8490, %v9234
          %v9491 = vmul.f32 %v8491, %v9235
          %v9492 = vmul.f32 %v8492, %v9236
          %v9493 = vmul.f32 %v8493, %v9237
          %v9494 = vmul.f32 %v8494, %v9238
          %v9495 = vmul.f32 %v8495, %v9239
          %v9496 = vmul.f32 %v8496, %v9240
          %v9497 = vmul.f32 %v8497, %v9241
          %v9498 = vmul.f32 %v8498, %v9242
          %v9499 = vmul.f32 %v8499, %v9243
          %v9500 = vmul.f32 %v8500, %v9244
          %v9501 = vmul.f32 %v8501, %v9245
          %v9502 = vmul.f32 %v8502, %v9246
          %v9503 = vmul.f32 %v8503, %v9247
          %v9504 = vmul.f32 %v8504, %v9248
          %v9505 = vmul.f32 %v8505, %v9249
          %v9506 = vmul.f32 %v8506, %v9250
          %v9507 = vmul.f32 %v8507, %v9251
          %v9508 = vmul.f32 %v8508, %v9252
          %v9509 = vmul.f32 %v8509, %v9253
          %v9510 = vmul.f32 %v8510, %v9254
          %v9511 = vmul.f32 %v8511, %v9255
          %v9512 = vmul.f32 %v8512, %v9256
          %v9513 = vmul.f32 %v8513, %v9257
          %v9514 = vmul.f32 %v8514, %v9258
          %v9515 = vmul.f32 %v8515, %v9259
          %v9516 = vmul.f32 %v8516, %v9260
          %v9517 = vmul.f32 %v8517, %v9261
          %v9518 = vmul.f32 %v8518, %v9262
          %v9519 = vmul.f32 %v8519, %v9263
          %v9520 = vmul.f32 %v8520, %v9264
          %v9521 = vmul.f32 %v8521, %v9265
          %v9522 = vmul.f32 %v8522, %v9266
          %v9523 = vmul.f32 %v8523, %v9267
          %v9524 = vmul.f32 %v8524, %v9268
          %v9525 = vmul.f32 %v8525, %v9269
          %v9526 = vmul.f32 %v8526, %v9270
          %v9527 = vmul.f32 %v8527, %v9271
          %v9528 = vmul.f32 %v8528, %v9272
          %v9529 = vmul.f32 %v8529, %v9273
          %v9530 = vmul.f32 %v8530, %v9274
          %v9531 = vmul.f32 %v8531, %v9275
          %v9532 = vmul.f32 %v8532, %v9276
          %v9533 = vmul.f32 %v8533, %v9277
          %v9534 = vmul.f32 %v8534, %v9278
          %v9535 = vmul.f32 %v8535, %v9279
          %v9536 = vmul.f32 %v8536, %v9280
          %v9537 = vmul.f32 %v8537, %v9281
          %v9538 = vmul.f32 %v8538, %v9282
          %v9539 = vmul.f32 %v8539, %v9283
          %v9540 = vmul.f32 %v8540, %v9284
          %v9541 = vmul.f32 %v8541, %v9285
          %v9542 = vmul.f32 %v8542, %v9286
          %v9543 = vmul.f32 %v8543, %v9287
          %v9544 = vmul.f32 %v8544, %v9288
          %v9545 = vmul.f32 %v8545, %v9289
          %v9546 = vmul.f32 %v8546, %v9290
          %v9547 = vmul.f32 %v8547, %v9291
          %v9548 = vmul.f32 %v8548, %v9292
          %v9549 = vmul.f32 %v8549, %v9293
          %v9550 = vmul.f32 %v8550, %v9294
          %v9551 = vmul.f32 %v8551, %v9295
          %v9552 = vmul.f32 %v8552, %v9296
          %v9553 = vmul.f32 %v8553, %v9297
          %v9554 = vmul.f32 %v8554, %v9298
          %v9555 = vmul.f32 %v8555, %v9299
          %v9556 = vmul.f32 %v8556, %v9300
          %v9557 = vmul.f32 %v8557, %v9301
          %v9558 = vmul.f32 %v8558, %v9302
          %v9559 = vmul.f32 %v8559, %v9303
          %v9560 = vmul.f32 %v8560, %v9304
          %v9561 = vmul.f32 %v8561, %v9305
          %v9562 = vmul.f32 %v8562, %v9306
          %v9563 = vmul.f32 %v8563, %v9307
          %v9564 = vmul.f32 %v8564, %v9308
          %v9565 = vmul.f32 %v8565, %v9309
          %v9566 = vmul.f32 %v8566, %v9310
          %v9567 = vmul.f32 %v8567, %v9311
          %v9568 = vmul.f32 %v8568, %v9312
          %v9569 = vmul.f32 %v8569, %v9313
          %v9570 = vmul.f32 %v8570, %v9314
          %v9571 = vmul.f32 %v8571, %v9315
          %v9572 = vmul.f32 %v8572, %v9316
          %v9573 = vmul.f32 %v8573, %v9317
          %v9574 = vmul.f32 %v8574, %v9318
          %v9575 = vmul.f32 %v8575, %v9319
          %v9576 = vmul.f32 %v8576, %v9320
          %v9577 = vmul.f32 %v8577, %v9321
          %v9578 = vmul.f32 %v8578, %v9322
          %v9579 = vmul.f32 %v8579, %v9323
          %v9580 = vmul.f32 %v8580, %v9324
          %v9581 = vmul.f32 %v8581, %v9325
          %v9582 = vmul.f32 %v8582, %v9326
          %v9583 = vmul.f32 %v8583, %v9327
          %v9584 = vmul.f32 %v8584, %v9328
          %v9585 = vmul.f32 %v8585, %v9329
          %v9586 = vmul.f32 %v8586, %v9330
          %v9587 = vmul.f32 %v8587, %v9331
          %v9588 = vmul.f32 %v8588, %v9332
          %v9589 = vmul.f32 %v8589, %v9333
          %v9590 = vmul.f32 %v8590, %v9334
          %v9591 = vmul.f32 %v8591, %v9335
          %v9592 = vmul.f32 %v8592, %v9336
          %v9593 = vmul.f32 %v8593, %v9337
          %v9594 = vmul.f32 %v8594, %v9338
          %v9595 = vmul.f32 %v8595, %v9339
          %v9596 = vmul.f32 %v8596, %v9340
          %v9597 = vmul.f32 %v8597, %v9341
          %v9598 = vmul.f32 %v8598, %v9342
          %v9599 = vmul.f32 %v8599, %v9343
          %v9600 = vmul.f32 %v8600, %v9344
          %v9601 = vmul.f32 %v8601, %v9345
          %v9602 = vmul.f32 %v8602, %v9346
          %v9603 = vmul.f32 %v8603, %v9347
          %v9604 = vmul.f32 %v8604, %v9348
          %v9605 = vmul.f32 %v8605, %v9349
          %v9606 = vmul.f32 %v8606, %v9350
          %v9607 = vmul.f32 %v8607, %v9351
          %v9608 = vmul.f32 %v8608, %v9352
          %v9609 = vmul.f32 %v8609, %v9353
          %v9610 = vmul.f32 %v8610, %v9354
          %v9611 = vmul.f32 %v8611, %v9355
          %v9612 = vmul.f32 %v8612, %v9356
          %v9613 = vmul.f32 %v8613, %v9357
          %v9614 = vmul.f32 %v8614, %v9358
          %v9615 = vmul.f32 %v8615, %v9359
          %v9616 = vmul.f32 %v8616, %v9360
          %v9617 = vmul.f32 %v8617, %v9361
          %v9618 = vmul.f32 %v8618, %v9362
          %v9619 = vmul.f32 %v8619, %v9363
          %v9620 = vmul.f32 %v8620, %v9364
          %v9621 = vmul.f32 %v8621, %v9365
          %v9622 = vmul.f32 %v8622, %v9366
          %v9623 = vmul.f32 %v8623, %v9367
          %v9624 = vmul.f32 %v8624, %v9368
          %v9625 = vmul.f32 %v8625, %v9369
          %v9626 = vmul.f32 %v8626, %v9370
          %v9627 = vmul.f32 %v8627, %v9371
          %v9628 = vmul.f32 %v8628, %v9372
          %v9629 = vmul.f32 %v8629, %v9373
          %v9630 = vmul.f32 %v8630, %v9374
          %v9631 = vmul.f32 %v8631, %v9375
          %v9632 = vmul.f32 %v8632, %v9376
          %v9633 = vmul.f32 %v8633, %v9377
          %v9634 = vmul.f32 %v8634, %v9378
          %v9635 = vmul.f32 %v8635, %v9379
          %v9636 = vmul.f32 %v8636, %v9380
          %v9637 = vmul.f32 %v8637, %v9381
          %v9638 = vmul.f32 %v8638, %v9382
          %v9639 = vmul.f32 %v8639, %v9383
          %v9640 = vmul.f32 %v8640, %v9384
          %v9641 = vmul.f32 %v8641, %v9385
          %v9642 = vmul.f32 %v8642, %v9386
          %v9643 = vmul.f32 %v8643, %v9387
          %v9644 = vmul.f32 %v8644, %v9388
          %v9645 = vmul.f32 %v8645, %v9389
          %v9646 = vmul.f32 %v8646, %v9390
          %v9647 = vmul.f32 %v8647, %v9391
          %v9648 = vmul.f32 %v8648, %v9392
          %v9649 = vmul.f32 %v8649, %v9393
          %v9650 = vmul.f32 %v8650, %v9394
          %v9651 = vmul.f32 %v8651, %v9395
          %v9652 = vmul.f32 %v8652, %v9396
          %v9653 = vmul.f32 %v8653, %v9397
          %v9654 = vmul.f32 %v8654, %v9398
          %v9655 = vmul.f32 %v8655, %v9399
          %v9656 = vmul.f32 %v8656, %v9400
          %v9657 = vmul.f32 %v8657, %v9401
          %v9658 = vmul.f32 %v8658, %v9402
          %v9659 = vmul.f32 %v8659, %v9403
          %v9660 = vmul.f32 %v8660, %v9404
          %v9661 = vmul.f32 %v8661, %v9405
          %v9662 = vmul.f32 %v8662, %v9406
          %v9663 = vmul.f32 %v8663, %v9407
          %v9664 = vmul.f32 %v8664, %v9408
          %v9665 = vmul.f32 %v8665, %v9409
          %v9666 = vmul.f32 %v8666, %v9410
          %v9667 = vmul.f32 %v8667, %v9411
          %v9668 = vmul.f32 %v8668, %v9412
          %v9669 = vmul.f32 %v8669, %v9413
          %v9670 = vmul.f32 %v8670, %v9414
          %v9671 = vmul.f32 %v8671, %v9415
          %v9672 = vmul.f32 %v8672, %v9416
          %v9673 = vmul.f32 %v8673, %v9417
          %v9674 = vmul.f32 %v8674, %v9418
          %v9675 = vmul.f32 %v8675, %v9419
          %v9676 = vmul.f32 %v8676, %v9420
          %v9677 = vmul.f32 %v8677, %v9421
          %v9678 = vmul.f32 %v8678, %v9422
          %v9679 = vmul.f32 %v8679, %v9423
          %v9680 = vmul.f32 %v8680, %v9424
          %v9681 = vmul.f32 %v8681, %v9425
          %v9682 = vmul.f32 %v8682, %v9426
          %v9683 = vmul.f32 %v8683, %v9427
          %v9684 = vmul.f32 %v8684, %v9428
          %v9685 = vmul.f32 %v8685, %v9429
          %v9686 = vmul.f32 %v8686, %v9430
          %v9687 = vmul.f32 %v8687, %v9431
          %v9688 = vmul.f32 %v8688, %v9432
          %v9689 = vmul.f32 %v8689, %v9433
          %v9690 = vmul.f32 %v8690, %v9434
          %v9691 = vmul.f32 %v8691, %v9435
          %v9692 = vmul.f32 %v8692, %v9436
          %v9693 = vmul.f32 %v8693, %v9437
          %v9694 = vmul.f32 %v8694, %v9438
          %v9695 = vmul.f32 %v8695, %v9439
          %v9696 = vmul.f32 %v8696, %v9440
          %v9697 = vmul.f32 %v8697, %v9441
          %v9698 = vmul.f32 %v8698, %v9442
          %v9699 = vmul.f32 %v8699, %v9443
          %v9700 = vmul.f32 %v8700, %v9444
          %v9701 = vmul.f32 %v8701, %v9445
          %v9702 = vmul.f32 %v8702, %v9446
          %v9703 = vmul.f32 %v8703, %v9447
          %v9704 = vmul.f32 %v8704, %v9448
          %v9705 = vmul.f32 %v8705, %v9449
          %v9706 = vmul.f32 %v8706, %v9450
          %v9707 = vmul.f32 %v8707, %v9451
          %v9708 = vmul.f32 %v8708, %v9452
          %v9709 = vmul.f32 %v8709, %v9453
          %v9710 = vmul.f32 %v8710, %v9454
          %v9711 = vmul.f32 %v8711, %v9455
          %v9712 = vmul.f32 %v8712, %v9456
          %v9713 = vmul.f32 %v8713, %v9457
          %v9714 = vmul.f32 %v8714, %v9458
          %v9715 = vmul.f32 %v8715, %v9459
          %v9716 = vmul.f32 %v8716, %v9460
          %v9717 = vmul.f32 %v8717, %v9461
          %v9718 = vmul.f32 %v8718, %v9462
          %v9719 = vmul.f32 %v8719, %v9463
          %v9720 = vmul.f32 %v8720, %v9464
          %v9721 = vmul.f32 %v8721, %v9465
          %v9722 = vmul.f32 %v8722, %v9466
          %v9723 = vmul.f32 %v8723, %v9467
          %v9724 = vmul.f32 %v8724, %v9468
          %v9725 = vmul.f32 %v8725, %v9469
          %v9726 = vmul.f32 %v8726, %v9470
          %v9727 = vmul.f32 %v8727, %v9471
          %v9728 = vmul.f32 %v8728, %v9472
          %v9729 = vmul.f32 %v8729, %v9473
          %v9730 = vmul.f32 %v8730, %v9474
          %v9731 = vmul.f32 %v8731, %v9475
          %v9732 = vmul.f32 %v8732, %v9476
          %v9733 = vmul.f32 %v8733, %v9477
          %v9734 = vmul.f32 %v8734, %v9478
          %v9735 = vmul.f32 %v8735, %v9479
          %v9736 = vmul.f32 %v8736, %v9480
          %v9737 = vadd.f32 %v9481, %v9489
          %v9738 = vadd.f32 %v9737, %v9497
          %v9739 = vadd.f32 %v9738, %v9505
          %v9740 = vadd.f32 %v9739, %v9513
          %v9741 = vadd.f32 %v9740, %v9521
          %v9742 = vadd.f32 %v9741, %v9529
          %v9743 = vadd.f32 %v9742, %v9537
          %v9744 = vadd.f32 %v9743, %v9545
          %v9745 = vadd.f32 %v9744, %v9553
          %v9746 = vadd.f32 %v9745, %v9561
          %v9747 = vadd.f32 %v9746, %v9569
          %v9748 = vadd.f32 %v9747, %v9577
          %v9749 = vadd.f32 %v9748, %v9585
          %v9750 = vadd.f32 %v9749, %v9593
          %v9751 = vadd.f32 %v9750, %v9601
          %v9752 = vadd.f32 %v9751, %v9609
          %v9753 = vadd.f32 %v9752, %v9617
          %v9754 = vadd.f32 %v9753, %v9625
          %v9755 = vadd.f32 %v9754, %v9633
          %v9756 = vadd.f32 %v9755, %v9641
          %v9757 = vadd.f32 %v9756, %v9649
          %v9758 = vadd.f32 %v9757, %v9657
          %v9759 = vadd.f32 %v9758, %v9665
          %v9760 = vadd.f32 %v9759, %v9673
          %v9761 = vadd.f32 %v9760, %v9681
          %v9762 = vadd.f32 %v9761, %v9689
          %v9763 = vadd.f32 %v9762, %v9697
          %v9764 = vadd.f32 %v9763, %v9705
          %v9765 = vadd.f32 %v9764, %v9713
          %v9766 = vadd.f32 %v9765, %v9721
          %v9767 = vadd.f32 %v9766, %v9729
          %v9768 = vrot.slane %v9767, 4
          %v9769 = vadd.f32 %v9767, %v9768
          %v9770 = vrot.slane %v9769, 2
          %v9771 = vadd.f32 %v9769, %v9770
          %v9772 = vrot.slane %v9771, 1
          %v9773 = vadd.f32 %v9771, %v9772
          %v9774 = vadd.f32 %v9482, %v9490
          %v9775 = vadd.f32 %v9774, %v9498
          %v9776 = vadd.f32 %v9775, %v9506
          %v9777 = vadd.f32 %v9776, %v9514
          %v9778 = vadd.f32 %v9777, %v9522
          %v9779 = vadd.f32 %v9778, %v9530
          %v9780 = vadd.f32 %v9779, %v9538
          %v9781 = vadd.f32 %v9780, %v9546
          %v9782 = vadd.f32 %v9781, %v9554
          %v9783 = vadd.f32 %v9782, %v9562
          %v9784 = vadd.f32 %v9783, %v9570
          %v9785 = vadd.f32 %v9784, %v9578
          %v9786 = vadd.f32 %v9785, %v9586
          %v9787 = vadd.f32 %v9786, %v9594
          %v9788 = vadd.f32 %v9787, %v9602
          %v9789 = vadd.f32 %v9788, %v9610
          %v9790 = vadd.f32 %v9789, %v9618
          %v9791 = vadd.f32 %v9790, %v9626
          %v9792 = vadd.f32 %v9791, %v9634
          %v9793 = vadd.f32 %v9792, %v9642
          %v9794 = vadd.f32 %v9793, %v9650
          %v9795 = vadd.f32 %v9794, %v9658
          %v9796 = vadd.f32 %v9795, %v9666
          %v9797 = vadd.f32 %v9796, %v9674
          %v9798 = vadd.f32 %v9797, %v9682
          %v9799 = vadd.f32 %v9798, %v9690
          %v9800 = vadd.f32 %v9799, %v9698
          %v9801 = vadd.f32 %v9800, %v9706
          %v9802 = vadd.f32 %v9801, %v9714
          %v9803 = vadd.f32 %v9802, %v9722
          %v9804 = vadd.f32 %v9803, %v9730
          %v9805 = vrot.slane %v9804, 4
          %v9806 = vadd.f32 %v9804, %v9805
          %v9807 = vrot.slane %v9806, 2
          %v9808 = vadd.f32 %v9806, %v9807
          %v9809 = vrot.slane %v9808, 1
          %v9810 = vadd.f32 %v9808, %v9809
          %v9811 = vadd.f32 %v9483, %v9491
          %v9812 = vadd.f32 %v9811, %v9499
          %v9813 = vadd.f32 %v9812, %v9507
          %v9814 = vadd.f32 %v9813, %v9515
          %v9815 = vadd.f32 %v9814, %v9523
          %v9816 = vadd.f32 %v9815, %v9531
          %v9817 = vadd.f32 %v9816, %v9539
          %v9818 = vadd.f32 %v9817, %v9547
          %v9819 = vadd.f32 %v9818, %v9555
          %v9820 = vadd.f32 %v9819, %v9563
          %v9821 = vadd.f32 %v9820, %v9571
          %v9822 = vadd.f32 %v9821, %v9579
          %v9823 = vadd.f32 %v9822, %v9587
          %v9824 = vadd.f32 %v9823, %v9595
          %v9825 = vadd.f32 %v9824, %v9603
          %v9826 = vadd.f32 %v9825, %v9611
          %v9827 = vadd.f32 %v9826, %v9619
          %v9828 = vadd.f32 %v9827, %v9627
          %v9829 = vadd.f32 %v9828, %v9635
          %v9830 = vadd.f32 %v9829, %v9643
          %v9831 = vadd.f32 %v9830, %v9651
          %v9832 = vadd.f32 %v9831, %v9659
          %v9833 = vadd.f32 %v9832, %v9667
          %v9834 = vadd.f32 %v9833, %v9675
          %v9835 = vadd.f32 %v9834, %v9683
          %v9836 = vadd.f32 %v9835, %v9691
          %v9837 = vadd.f32 %v9836, %v9699
          %v9838 = vadd.f32 %v9837, %v9707
          %v9839 = vadd.f32 %v9838, %v9715
          %v9840 = vadd.f32 %v9839, %v9723
          %v9841 = vadd.f32 %v9840, %v9731
          %v9842 = vrot.slane %v9841, 4
          %v9843 = vadd.f32 %v9841, %v9842
          %v9844 = vrot.slane %v9843, 2
          %v9845 = vadd.f32 %v9843, %v9844
          %v9846 = vrot.slane %v9845, 1
          %v9847 = vadd.f32 %v9845, %v9846
          %v9848 = vadd.f32 %v9484, %v9492
          %v9849 = vadd.f32 %v9848, %v9500
          %v9850 = vadd.f32 %v9849, %v9508
          %v9851 = vadd.f32 %v9850, %v9516
          %v9852 = vadd.f32 %v9851, %v9524
          %v9853 = vadd.f32 %v9852, %v9532
          %v9854 = vadd.f32 %v9853, %v9540
          %v9855 = vadd.f32 %v9854, %v9548
          %v9856 = vadd.f32 %v9855, %v9556
          %v9857 = vadd.f32 %v9856, %v9564
          %v9858 = vadd.f32 %v9857, %v9572
          %v9859 = vadd.f32 %v9858, %v9580
          %v9860 = vadd.f32 %v9859, %v9588
          %v9861 = vadd.f32 %v9860, %v9596
          %v9862 = vadd.f32 %v9861, %v9604
          %v9863 = vadd.f32 %v9862, %v9612
          %v9864 = vadd.f32 %v9863, %v9620
          %v9865 = vadd.f32 %v9864, %v9628
          %v9866 = vadd.f32 %v9865, %v9636
          %v9867 = vadd.f32 %v9866, %v9644
          %v9868 = vadd.f32 %v9867, %v9652
          %v9869 = vadd.f32 %v9868, %v9660
          %v9870 = vadd.f32 %v9869, %v9668
          %v9871 = vadd.f32 %v9870, %v9676
          %v9872 = vadd.f32 %v9871, %v9684
          %v9873 = vadd.f32 %v9872, %v9692
          %v9874 = vadd.f32 %v9873, %v9700
          %v9875 = vadd.f32 %v9874, %v9708
          %v9876 = vadd.f32 %v9875, %v9716
          %v9877 = vadd.f32 %v9876, %v9724
          %v9878 = vadd.f32 %v9877, %v9732
          %v9879 = vrot.slane %v9878, 4
          %v9880 = vadd.f32 %v9878, %v9879
          %v9881 = vrot.slane %v9880, 2
          %v9882 = vadd.f32 %v9880, %v9881
          %v9883 = vrot.slane %v9882, 1
          %v9884 = vadd.f32 %v9882, %v9883
          %v9885 = vadd.f32 %v9485, %v9493
          %v9886 = vadd.f32 %v9885, %v9501
          %v9887 = vadd.f32 %v9886, %v9509
          %v9888 = vadd.f32 %v9887, %v9517
          %v9889 = vadd.f32 %v9888, %v9525
          %v9890 = vadd.f32 %v9889, %v9533
          %v9891 = vadd.f32 %v9890, %v9541
          %v9892 = vadd.f32 %v9891, %v9549
          %v9893 = vadd.f32 %v9892, %v9557
          %v9894 = vadd.f32 %v9893, %v9565
          %v9895 = vadd.f32 %v9894, %v9573
          %v9896 = vadd.f32 %v9895, %v9581
          %v9897 = vadd.f32 %v9896, %v9589
          %v9898 = vadd.f32 %v9897, %v9597
          %v9899 = vadd.f32 %v9898, %v9605
          %v9900 = vadd.f32 %v9899, %v9613
          %v9901 = vadd.f32 %v9900, %v9621
          %v9902 = vadd.f32 %v9901, %v9629
          %v9903 = vadd.f32 %v9902, %v9637
          %v9904 = vadd.f32 %v9903, %v9645
          %v9905 = vadd.f32 %v9904, %v9653
          %v9906 = vadd.f32 %v9905, %v9661
          %v9907 = vadd.f32 %v9906, %v9669
          %v9908 = vadd.f32 %v9907, %v9677
          %v9909 = vadd.f32 %v9908, %v9685
          %v9910 = vadd.f32 %v9909, %v9693
          %v9911 = vadd.f32 %v9910, %v9701
          %v9912 = vadd.f32 %v9911, %v9709
          %v9913 = vadd.f32 %v9912, %v9717
          %v9914 = vadd.f32 %v9913, %v9725
          %v9915 = vadd.f32 %v9914, %v9733
          %v9916 = vrot.slane %v9915, 4
          %v9917 = vadd.f32 %v9915, %v9916
          %v9918 = vrot.slane %v9917, 2
          %v9919 = vadd.f32 %v9917, %v9918
          %v9920 = vrot.slane %v9919, 1
          %v9921 = vadd.f32 %v9919, %v9920
          %v9922 = vadd.f32 %v9486, %v9494
          %v9923 = vadd.f32 %v9922, %v9502
          %v9924 = vadd.f32 %v9923, %v9510
          %v9925 = vadd.f32 %v9924, %v9518
          %v9926 = vadd.f32 %v9925, %v9526
          %v9927 = vadd.f32 %v9926, %v9534
          %v9928 = vadd.f32 %v9927, %v9542
          %v9929 = vadd.f32 %v9928, %v9550
          %v9930 = vadd.f32 %v9929, %v9558
          %v9931 = vadd.f32 %v9930, %v9566
          %v9932 = vadd.f32 %v9931, %v9574
          %v9933 = vadd.f32 %v9932, %v9582
          %v9934 = vadd.f32 %v9933, %v9590
          %v9935 = vadd.f32 %v9934, %v9598
          %v9936 = vadd.f32 %v9935, %v9606
          %v9937 = vadd.f32 %v9936, %v9614
          %v9938 = vadd.f32 %v9937, %v9622
          %v9939 = vadd.f32 %v9938, %v9630
          %v9940 = vadd.f32 %v9939, %v9638
          %v9941 = vadd.f32 %v9940, %v9646
          %v9942 = vadd.f32 %v9941, %v9654
          %v9943 = vadd.f32 %v9942, %v9662
          %v9944 = vadd.f32 %v9943, %v9670
          %v9945 = vadd.f32 %v9944, %v9678
          %v9946 = vadd.f32 %v9945, %v9686
          %v9947 = vadd.f32 %v9946, %v9694
          %v9948 = vadd.f32 %v9947, %v9702
          %v9949 = vadd.f32 %v9948, %v9710
          %v9950 = vadd.f32 %v9949, %v9718
          %v9951 = vadd.f32 %v9950, %v9726
          %v9952 = vadd.f32 %v9951, %v9734
          %v9953 = vrot.slane %v9952, 4
          %v9954 = vadd.f32 %v9952, %v9953
          %v9955 = vrot.slane %v9954, 2
          %v9956 = vadd.f32 %v9954, %v9955
          %v9957 = vrot.slane %v9956, 1
          %v9958 = vadd.f32 %v9956, %v9957
          %v9959 = vadd.f32 %v9487, %v9495
          %v9960 = vadd.f32 %v9959, %v9503
          %v9961 = vadd.f32 %v9960, %v9511
          %v9962 = vadd.f32 %v9961, %v9519
          %v9963 = vadd.f32 %v9962, %v9527
          %v9964 = vadd.f32 %v9963, %v9535
          %v9965 = vadd.f32 %v9964, %v9543
          %v9966 = vadd.f32 %v9965, %v9551
          %v9967 = vadd.f32 %v9966, %v9559
          %v9968 = vadd.f32 %v9967, %v9567
          %v9969 = vadd.f32 %v9968, %v9575
          %v9970 = vadd.f32 %v9969, %v9583
          %v9971 = vadd.f32 %v9970, %v9591
          %v9972 = vadd.f32 %v9971, %v9599
          %v9973 = vadd.f32 %v9972, %v9607
          %v9974 = vadd.f32 %v9973, %v9615
          %v9975 = vadd.f32 %v9974, %v9623
          %v9976 = vadd.f32 %v9975, %v9631
          %v9977 = vadd.f32 %v9976, %v9639
          %v9978 = vadd.f32 %v9977, %v9647
          %v9979 = vadd.f32 %v9978, %v9655
          %v9980 = vadd.f32 %v9979, %v9663
          %v9981 = vadd.f32 %v9980, %v9671
          %v9982 = vadd.f32 %v9981, %v9679
          %v9983 = vadd.f32 %v9982, %v9687
          %v9984 = vadd.f32 %v9983, %v9695
          %v9985 = vadd.f32 %v9984, %v9703
          %v9986 = vadd.f32 %v9985, %v9711
          %v9987 = vadd.f32 %v9986, %v9719
          %v9988 = vadd.f32 %v9987, %v9727
          %v9989 = vadd.f32 %v9988, %v9735
          %v9990 = vrot.slane %v9989, 4
          %v9991 = vadd.f32 %v9989, %v9990
          %v9992 = vrot.slane %v9991, 2
          %v9993 = vadd.f32 %v9991, %v9992
          %v9994 = vrot.slane %v9993, 1
          %v9995 = vadd.f32 %v9993, %v9994
          %v9996 = vsel %vm3566, %v9488, 0.0
          %v9997 = vsel %vm3566, %v9496, 0.0
          %v9998 = vadd.f32 %v9996, %v9997
          %v9999 = vsel %vm3566, %v9504, 0.0
          %v10000 = vadd.f32 %v9998, %v9999
          %v10001 = vsel %vm3566, %v9512, 0.0
          %v10002 = vadd.f32 %v10000, %v10001
          %v10003 = vsel %vm3566, %v9520, 0.0
          %v10004 = vadd.f32 %v10002, %v10003
          %v10005 = vsel %vm3566, %v9528, 0.0
          %v10006 = vadd.f32 %v10004, %v10005
          %v10007 = vsel %vm3566, %v9536, 0.0
          %v10008 = vadd.f32 %v10006, %v10007
          %v10009 = vsel %vm3566, %v9544, 0.0
          %v10010 = vadd.f32 %v10008, %v10009
          %v10011 = vsel %vm3566, %v9552, 0.0
          %v10012 = vadd.f32 %v10010, %v10011
          %v10013 = vsel %vm3566, %v9560, 0.0
          %v10014 = vadd.f32 %v10012, %v10013
          %v10015 = vsel %vm3566, %v9568, 0.0
          %v10016 = vadd.f32 %v10014, %v10015
          %v10017 = vsel %vm3566, %v9576, 0.0
          %v10018 = vadd.f32 %v10016, %v10017
          %v10019 = vsel %vm3566, %v9584, 0.0
          %v10020 = vadd.f32 %v10018, %v10019
          %v10021 = vsel %vm3566, %v9592, 0.0
          %v10022 = vadd.f32 %v10020, %v10021
          %v10023 = vsel %vm3566, %v9600, 0.0
          %v10024 = vadd.f32 %v10022, %v10023
          %v10025 = vsel %vm3566, %v9608, 0.0
          %v10026 = vadd.f32 %v10024, %v10025
          %v10027 = vsel %vm3566, %v9616, 0.0
          %v10028 = vadd.f32 %v10026, %v10027
          %v10029 = vsel %vm3566, %v9624, 0.0
          %v10030 = vadd.f32 %v10028, %v10029
          %v10031 = vsel %vm3566, %v9632, 0.0
          %v10032 = vadd.f32 %v10030, %v10031
          %v10033 = vsel %vm3566, %v9640, 0.0
          %v10034 = vadd.f32 %v10032, %v10033
          %v10035 = vsel %vm3566, %v9648, 0.0
          %v10036 = vadd.f32 %v10034, %v10035
          %v10037 = vsel %vm3566, %v9656, 0.0
          %v10038 = vadd.f32 %v10036, %v10037
          %v10039 = vsel %vm3566, %v9664, 0.0
          %v10040 = vadd.f32 %v10038, %v10039
          %v10041 = vsel %vm3566, %v9672, 0.0
          %v10042 = vadd.f32 %v10040, %v10041
          %v10043 = vsel %vm3566, %v9680, 0.0
          %v10044 = vadd.f32 %v10042, %v10043
          %v10045 = vsel %vm3566, %v9688, 0.0
          %v10046 = vadd.f32 %v10044, %v10045
          %v10047 = vsel %vm3566, %v9696, 0.0
          %v10048 = vadd.f32 %v10046, %v10047
          %v10049 = vsel %vm3566, %v9704, 0.0
          %v10050 = vadd.f32 %v10048, %v10049
          %v10051 = vsel %vm3566, %v9712, 0.0
          %v10052 = vadd.f32 %v10050, %v10051
          %v10053 = vsel %vm3566, %v9720, 0.0
          %v10054 = vadd.f32 %v10052, %v10053
          %v10055 = vsel %vm3566, %v9728, 0.0
          %v10056 = vadd.f32 %v10054, %v10055
          %v10057 = vsel %vm3566, %v9736, 0.0
          %v10058 = vadd.f32 %v10056, %v10057
          %v10059 = vrot.slane %v10058, 4
          %v10060 = vadd.f32 %v10058, %v10059
          %v10061 = vrot.slane %v10060, 2
          %v10062 = vadd.f32 %v10060, %v10061
          %v10063 = vrot.slane %v10062, 1
          %v10064 = vadd.f32 %v10062, %v10063
          %v10073 = vcombine.low %v9773, %v9810
          %v10074 = vcombine.low %v9847, %v9884
          %v10075 = vcombine.low %v9921, %v9958
          %v10076 = vcombine.low %v9995, %v10064
          %v10078 = vunpack.c.l.s4 1966171168
          %v10079 = vunpack.c.0.s8 %v10078
          %v10080 = vlaneseq
          %v10081 = vshrl.u32 %v10080, 7
          %v10082 = vsub.s32 %v10079, %v10081
          %v10083 = vrot.slane %v10073, %v10082
          %v10085 = vunpack.c.l.s4 1966171168
          %v10086 = vunpack.c.0.s8 %v10085
          %v10087 = vlaneseq
          %v10088 = vshrl.u32 %v10087, 7
          %v10089 = vsub.s32 %v10086, %v10088
          %v10090 = vrot.slane %v10074, %v10089
          %v10092 = vunpack.c.l.s4 1966171168
          %v10093 = vunpack.c.0.s8 %v10092
          %v10094 = vlaneseq
          %v10095 = vshrl.u32 %v10094, 7
          %v10096 = vsub.s32 %v10093, %v10095
          %v10097 = vrot.slane %v10075, %v10096
          %v10099 = vunpack.c.l.s4 1966171168
          %v10100 = vunpack.c.0.s8 %v10099
          %v10101 = vlaneseq
          %v10102 = vshrl.u32 %v10101, 7
          %v10103 = vsub.s32 %v10100, %v10102
          %v10104 = vrot.slane %v10076, %v10103
          %v10105 = vcombine.low %v10083, %v10090
          %v10106 = vcombine.low %v10097, %v10104
          %v10108 = vunpack.c.l.s4 1966171168
          %v10109 = vunpack.c.0.s8 %v10108
          %v10110 = vlaneseq
          %v10111 = vshrl.u32 %v10110, 7
          %v10112 = vsub.s32 %v10109, %v10111
          %v10113 = vrot.slane %v10105, %v10112
          %v10115 = vunpack.c.l.s4 1966171168
          %v10116 = vunpack.c.0.s8 %v10115
          %v10117 = vlaneseq
          %v10118 = vshrl.u32 %v10117, 7
          %v10119 = vsub.s32 %v10116, %v10118
          %v10120 = vrot.slane %v10106, %v10119
          %v10121 = vcombine.low %v10113, %v10120
          %s10123 = scalar_lea.vmem %s332, 1
          %10124 = vst.msk [vmem:[%s10123] ss:$8 sm:$0xf] %vm9222, %v10121
          %10125 = vst.msk [vmem:[%s10123] ss:$8 sm:$0xf0] %vm9222, %v10121
          %v10126 = vmul.f32 %v8737, %v8737
          %v10127 = vmul.f32 %v8738, %v8738
          %v10128 = vmul.f32 %v8739, %v8739
          %v10129 = vmul.f32 %v8740, %v8740
          %v10130 = vmul.f32 %v8741, %v8741
          %v10131 = vmul.f32 %v8742, %v8742
          %v10132 = vmul.f32 %v8743, %v8743
          %v10133 = vmul.f32 %v8744, %v8744
          %v10134 = vmul.f32 %v8745, %v8745
          %v10135 = vmul.f32 %v8746, %v8746
          %v10136 = vmul.f32 %v8747, %v8747
          %v10137 = vmul.f32 %v8748, %v8748
          %v10138 = vmul.f32 %v8749, %v8749
          %v10139 = vmul.f32 %v8750, %v8750
          %v10140 = vmul.f32 %v8751, %v8751
          %v10141 = vmul.f32 %v8752, %v8752
          %v10142 = vmul.f32 %v8753, %v8753
          %v10143 = vmul.f32 %v8754, %v8754
          %v10144 = vmul.f32 %v8755, %v8755
          %v10145 = vmul.f32 %v8756, %v8756
          %v10146 = vmul.f32 %v8757, %v8757
          %v10147 = vmul.f32 %v8758, %v8758
          %v10148 = vmul.f32 %v8759, %v8759
          %v10149 = vmul.f32 %v8760, %v8760
          %v10150 = vmul.f32 %v8761, %v8761
          %v10151 = vmul.f32 %v8762, %v8762
          %v10152 = vmul.f32 %v8763, %v8763
          %v10153 = vmul.f32 %v8764, %v8764
          %v10154 = vmul.f32 %v8765, %v8765
          %v10155 = vmul.f32 %v8766, %v8766
          %v10156 = vmul.f32 %v8767, %v8767
          %v10157 = vmul.f32 %v8768, %v8768
          %v10158 = vmul.f32 %v8769, %v8769
          %v10159 = vmul.f32 %v8770, %v8770
          %v10160 = vmul.f32 %v8771, %v8771
          %v10161 = vmul.f32 %v8772, %v8772
          %v10162 = vmul.f32 %v8773, %v8773
          %v10163 = vmul.f32 %v8774, %v8774
          %v10164 = vmul.f32 %v8775, %v8775
          %v10165 = vmul.f32 %v8776, %v8776
          %v10166 = vmul.f32 %v8777, %v8777
          %v10167 = vmul.f32 %v8778, %v8778
          %v10168 = vmul.f32 %v8779, %v8779
          %v10169 = vmul.f32 %v8780, %v8780
          %v10170 = vmul.f32 %v8781, %v8781
          %v10171 = vmul.f32 %v8782, %v8782
          %v10172 = vmul.f32 %v8783, %v8783
          %v10173 = vmul.f32 %v8784, %v8784
          %v10174 = vmul.f32 %v8785, %v8785
          %v10175 = vmul.f32 %v8786, %v8786
          %v10176 = vmul.f32 %v8787, %v8787
          %v10177 = vmul.f32 %v8788, %v8788
          %v10178 = vmul.f32 %v8789, %v8789
          %v10179 = vmul.f32 %v8790, %v8790
          %v10180 = vmul.f32 %v8791, %v8791
          %v10181 = vmul.f32 %v8792, %v8792
          %v10182 = vmul.f32 %v8793, %v8793
          %v10183 = vmul.f32 %v8794, %v8794
          %v10184 = vmul.f32 %v8795, %v8795
          %v10185 = vmul.f32 %v8796, %v8796
          %v10186 = vmul.f32 %v8797, %v8797
          %v10187 = vmul.f32 %v8798, %v8798
          %v10188 = vmul.f32 %v8799, %v8799
          %v10189 = vmul.f32 %v8800, %v8800
          %v10190 = vmul.f32 %v8801, %v8801
          %v10191 = vmul.f32 %v8802, %v8802
          %v10192 = vmul.f32 %v8803, %v8803
          %v10193 = vmul.f32 %v8804, %v8804
          %v10194 = vmul.f32 %v8805, %v8805
          %v10195 = vmul.f32 %v8806, %v8806
          %v10196 = vmul.f32 %v8807, %v8807
          %v10197 = vmul.f32 %v8808, %v8808
          %v10198 = vmul.f32 %v8809, %v8809
          %v10199 = vmul.f32 %v8810, %v8810
          %v10200 = vmul.f32 %v8811, %v8811
          %v10201 = vmul.f32 %v8812, %v8812
          %v10202 = vmul.f32 %v8813, %v8813
          %v10203 = vmul.f32 %v8814, %v8814
          %v10204 = vmul.f32 %v8815, %v8815
          %v10205 = vmul.f32 %v8816, %v8816
          %v10206 = vmul.f32 %v8817, %v8817
          %v10207 = vmul.f32 %v8818, %v8818
          %v10208 = vmul.f32 %v8819, %v8819
          %v10209 = vmul.f32 %v8820, %v8820
          %v10210 = vmul.f32 %v8821, %v8821
          %v10211 = vmul.f32 %v8822, %v8822
          %v10212 = vmul.f32 %v8823, %v8823
          %v10213 = vmul.f32 %v8824, %v8824
          %v10214 = vmul.f32 %v8825, %v8825
          %v10215 = vmul.f32 %v8826, %v8826
          %v10216 = vmul.f32 %v8827, %v8827
          %v10217 = vmul.f32 %v8828, %v8828
          %v10218 = vmul.f32 %v8829, %v8829
          %v10219 = vmul.f32 %v8830, %v8830
          %v10220 = vmul.f32 %v8831, %v8831
          %v10221 = vmul.f32 %v8832, %v8832
          %v10222 = vadd.f32 %v10126, %v10129
          %v10223 = vadd.f32 %v10222, %v10132
          %v10224 = vadd.f32 %v10223, %v10135
          %v10225 = vadd.f32 %v10224, %v10138
          %v10226 = vadd.f32 %v10225, %v10141
          %v10227 = vadd.f32 %v10226, %v10144
          %v10228 = vadd.f32 %v10227, %v10147
          %v10229 = vadd.f32 %v10228, %v10150
          %v10230 = vadd.f32 %v10229, %v10153
          %v10231 = vadd.f32 %v10230, %v10156
          %v10232 = vadd.f32 %v10231, %v10159
          %v10233 = vadd.f32 %v10232, %v10162
          %v10234 = vadd.f32 %v10233, %v10165
          %v10235 = vadd.f32 %v10234, %v10168
          %v10236 = vadd.f32 %v10235, %v10171
          %v10237 = vadd.f32 %v10236, %v10174
          %v10238 = vadd.f32 %v10237, %v10177
          %v10239 = vadd.f32 %v10238, %v10180
          %v10240 = vadd.f32 %v10239, %v10183
          %v10241 = vadd.f32 %v10240, %v10186
          %v10242 = vadd.f32 %v10241, %v10189
          %v10243 = vadd.f32 %v10242, %v10192
          %v10244 = vadd.f32 %v10243, %v10195
          %v10245 = vadd.f32 %v10244, %v10198
          %v10246 = vadd.f32 %v10245, %v10201
          %v10247 = vadd.f32 %v10246, %v10204
          %v10248 = vadd.f32 %v10247, %v10207
          %v10249 = vadd.f32 %v10248, %v10210
          %v10250 = vadd.f32 %v10249, %v10213
          %v10251 = vadd.f32 %v10250, %v10216
          %v10252 = vadd.f32 %v10251, %v10219
          %v10253 = vrot.slane %v10252, 4
          %v10254 = vadd.f32 %v10252, %v10253
          %v10255 = vrot.slane %v10254, 2
          %v10256 = vadd.f32 %v10254, %v10255
          %v10257 = vrot.slane %v10256, 1
          %v10258 = vadd.f32 %v10256, %v10257
          %v10259 = vadd.f32 %v10127, %v10130
          %v10260 = vadd.f32 %v10259, %v10133
          %v10261 = vadd.f32 %v10260, %v10136
          %v10262 = vadd.f32 %v10261, %v10139
          %v10263 = vadd.f32 %v10262, %v10142
          %v10264 = vadd.f32 %v10263, %v10145
          %v10265 = vadd.f32 %v10264, %v10148
          %v10266 = vadd.f32 %v10265, %v10151
          %v10267 = vadd.f32 %v10266, %v10154
          %v10268 = vadd.f32 %v10267, %v10157
          %v10269 = vadd.f32 %v10268, %v10160
          %v10270 = vadd.f32 %v10269, %v10163
          %v10271 = vadd.f32 %v10270, %v10166
          %v10272 = vadd.f32 %v10271, %v10169
          %v10273 = vadd.f32 %v10272, %v10172
          %v10274 = vadd.f32 %v10273, %v10175
          %v10275 = vadd.f32 %v10274, %v10178
          %v10276 = vadd.f32 %v10275, %v10181
          %v10277 = vadd.f32 %v10276, %v10184
          %v10278 = vadd.f32 %v10277, %v10187
          %v10279 = vadd.f32 %v10278, %v10190
          %v10280 = vadd.f32 %v10279, %v10193
          %v10281 = vadd.f32 %v10280, %v10196
          %v10282 = vadd.f32 %v10281, %v10199
          %v10283 = vadd.f32 %v10282, %v10202
          %v10284 = vadd.f32 %v10283, %v10205
          %v10285 = vadd.f32 %v10284, %v10208
          %v10286 = vadd.f32 %v10285, %v10211
          %v10287 = vadd.f32 %v10286, %v10214
          %v10288 = vadd.f32 %v10287, %v10217
          %v10289 = vadd.f32 %v10288, %v10220
          %v10290 = vrot.slane %v10289, 4
          %v10291 = vadd.f32 %v10289, %v10290
          %v10292 = vrot.slane %v10291, 2
          %v10293 = vadd.f32 %v10291, %v10292
          %v10294 = vrot.slane %v10293, 1
          %v10295 = vadd.f32 %v10293, %v10294
          %v10296 = vsel %vm1429, %v10128, 0.0
          %v10297 = vsel %vm1429, %v10131, 0.0
          %v10298 = vadd.f32 %v10296, %v10297
          %v10299 = vsel %vm1429, %v10134, 0.0
          %v10300 = vadd.f32 %v10298, %v10299
          %v10301 = vsel %vm1429, %v10137, 0.0
          %v10302 = vadd.f32 %v10300, %v10301
          %v10303 = vsel %vm1429, %v10140, 0.0
          %v10304 = vadd.f32 %v10302, %v10303
          %v10305 = vsel %vm1429, %v10143, 0.0
          %v10306 = vadd.f32 %v10304, %v10305
          %v10307 = vsel %vm1429, %v10146, 0.0
          %v10308 = vadd.f32 %v10306, %v10307
          %v10309 = vsel %vm1429, %v10149, 0.0
          %v10310 = vadd.f32 %v10308, %v10309
          %v10311 = vsel %vm1429, %v10152, 0.0
          %v10312 = vadd.f32 %v10310, %v10311
          %v10313 = vsel %vm1429, %v10155, 0.0
          %v10314 = vadd.f32 %v10312, %v10313
          %v10315 = vsel %vm1429, %v10158, 0.0
          %v10316 = vadd.f32 %v10314, %v10315
          %v10317 = vsel %vm1429, %v10161, 0.0
          %v10318 = vadd.f32 %v10316, %v10317
          %v10319 = vsel %vm1429, %v10164, 0.0
          %v10320 = vadd.f32 %v10318, %v10319
          %v10321 = vsel %vm1429, %v10167, 0.0
          %v10322 = vadd.f32 %v10320, %v10321
          %v10323 = vsel %vm1429, %v10170, 0.0
          %v10324 = vadd.f32 %v10322, %v10323
          %v10325 = vsel %vm1429, %v10173, 0.0
          %v10326 = vadd.f32 %v10324, %v10325
          %v10327 = vsel %vm1429, %v10176, 0.0
          %v10328 = vadd.f32 %v10326, %v10327
          %v10329 = vsel %vm1429, %v10179, 0.0
          %v10330 = vadd.f32 %v10328, %v10329
          %v10331 = vsel %vm1429, %v10182, 0.0
          %v10332 = vadd.f32 %v10330, %v10331
          %v10333 = vsel %vm1429, %v10185, 0.0
          %v10334 = vadd.f32 %v10332, %v10333
          %v10335 = vsel %vm1429, %v10188, 0.0
          %v10336 = vadd.f32 %v10334, %v10335
          %v10337 = vsel %vm1429, %v10191, 0.0
          %v10338 = vadd.f32 %v10336, %v10337
          %v10339 = vsel %vm1429, %v10194, 0.0
          %v10340 = vadd.f32 %v10338, %v10339
          %v10341 = vsel %vm1429, %v10197, 0.0
          %v10342 = vadd.f32 %v10340, %v10341
          %v10343 = vsel %vm1429, %v10200, 0.0
          %v10344 = vadd.f32 %v10342, %v10343
          %v10345 = vsel %vm1429, %v10203, 0.0
          %v10346 = vadd.f32 %v10344, %v10345
          %v10347 = vsel %vm1429, %v10206, 0.0
          %v10348 = vadd.f32 %v10346, %v10347
          %v10349 = vsel %vm1429, %v10209, 0.0
          %v10350 = vadd.f32 %v10348, %v10349
          %v10351 = vsel %vm1429, %v10212, 0.0
          %v10352 = vadd.f32 %v10350, %v10351
          %v10353 = vsel %vm1429, %v10215, 0.0
          %v10354 = vadd.f32 %v10352, %v10353
          %v10355 = vsel %vm1429, %v10218, 0.0
          %v10356 = vadd.f32 %v10354, %v10355
          %v10357 = vsel %vm1429, %v10221, 0.0
          %v10358 = vadd.f32 %v10356, %v10357
          %v10359 = vrot.slane %v10358, 4
          %v10360 = vadd.f32 %v10358, %v10359
          %v10361 = vrot.slane %v10360, 2
          %v10362 = vadd.f32 %v10360, %v10361
          %v10363 = vrot.slane %v10362, 1
          %v10364 = vadd.f32 %v10362, %v10363
          %v10368 = vcombine.low %v10258, %v10295
          %v10370 = vunpack.c.l.s4 1966171168
          %v10371 = vunpack.c.0.s8 %v10370
          %v10372 = vlaneseq
          %v10373 = vshrl.u32 %v10372, 7
          %v10374 = vsub.s32 %v10371, %v10373
          %v10375 = vrot.slane %v10368, %v10374
          %v10377 = vunpack.c.l.s4 1966171168
          %v10378 = vunpack.c.0.s8 %v10377
          %v10379 = vlaneseq
          %v10380 = vshrl.u32 %v10379, 7
          %v10381 = vsub.s32 %v10378, %v10380
          %v10382 = vrot.slane %v10364, %v10381
          %v10383 = vcombine.low %v10375, %v10382
          %v10385 = vunpack.c.l.s4 1966171168
          %v10386 = vunpack.c.0.s8 %v10385
          %v10387 = vlaneseq
          %v10388 = vshrl.u32 %v10387, 7
          %v10389 = vsub.s32 %v10386, %v10388
          %v10390 = vrot.slane %v10383, %v10389
          %vm10392 = vcmp.lt.s32.totalorder %v9219, 300
          %vm10393 = vmand %vm9220, %vm10392
          %10394 = vst.msk [vmem:[%s337] ss:$8 sm:$0x7] %vm10393, %v10390
          %10395 = vst.msk [vmem:[%s337] ss:$8 sm:$0x0] %vm10393, %v10390
        $region48: #{spine_forward.1} parent=39 // pred_fallthru
          _
        %s10396 = sand.u32 %s140, 1
        %s10397 = scalar_lea.sflag [#allocation3], %s10396
        %s10398 = sand.u32 %s140, 1
        %s10399 = smul.addr %s10398, 2048
        %s10400 = scalar_lea.vmem [#allocation2], %s10399
        %p10401 = scmp.lt.s32.totalorder %s22, 1
        %s10402 = scalar_select %p10401, %s22, 1
        %s10403 = smul.addr %s10402, 8
        %s10404 = smul.addr %s10403, 8
        %s10405 = scalar_lea.vmem %s6, %s10404
        %p10406 = scmp.lt.s32.totalorder %s22, 1
        %s10407 = scalar_select %p10406, %s22, 1
        %s10408 = smul.addr %s10407, 3
        %s10409 = smul.addr %s10408, 8
        %s10410 = scalar_lea.vmem %s7, %s10409
        // Predicated region
        $region49: #{spine_forward.1} parent=39 // pred_check
          %p10411 = pneg %p150
        $region50: #{spine_forward.1} parent=39 // pred_check_branch
          %10413 = sbr.rel (%p10411) target = $region52
        $region51: #{spine_forward.1} parent=39 // pred_region
          %s10414 = smul.u32 32, %s22
          %s10415 = ssub.s32 38, %s10414
          %p10416 = scmp.lt.s32.totalorder %s10415, 32
          %s10417 = scalar_select %p10416, %s10415, 32
          %s10418 = smul.u32 128, %s10417
          %s10419 = smul.u32 %s10418, 8
          %s10421 = ssub.s32 32768, %s10419
          %10422 = vsyncadd %s10397, %s10421
          %p10423 = scmp.ne.s32.totalorder 0, %s10419
          %s10424 = smul.addr %s10414, 8
          %s10425 = smul.addr %s10424, 128
          %s10426 = scalar_lea.hbm %s5, %s10425
          %s10427 = smul.u32 64, %s10417
          %s10428 = sshll.u32 %s10400, 4
          %s10429 = int_to_ptr.vmem [resolvable:$true] %s10428
          %s10430 = sshll.u32 %s10427, 4
          %10434 = dma.vmem_to_hbm [thread:$0]  (%p10423), %s10429, %s10430, %s10426, %s10397, 1024, 1024, 64
        $region52: #{spine_forward.1} parent=39 // pred_fallthru
          _
        // Predicated region
        $region53: #{spine_forward.1} parent=39 // pred_check
          %p10435 = pneg %p176
        $region54: #{spine_forward.1} parent=39 // pred_check_branch
          %10437 = sbr.rel (%p10435) target = $region56
        $region55: #{spine_forward.1} parent=39 // pred_region
          _
        $region56: #{spine_forward.1} parent=39 // pred_fallthru
          _
        // Predicated region
        $region57: #{spine_forward.1} parent=39 // pred_check
          %p10438 = pneg %p202
        $region58: #{spine_forward.1} parent=39 // pred_check_branch
          %10440 = sbr.rel (%p10438) target = $region60
        $region59: #{spine_forward.1} parent=39 // pred_region
          _
        $region60: #{spine_forward.1} parent=39 // pred_fallthru
          _
      $region40: #{spine_forward.1} parent=5 // pred_fallthru
        _
      %p10441 = scmp.le.s32.totalorder 2, %s17
      // Predicated region
      $region61: #{spine_forward.1} parent=5 // pred_check
        %p10442 = pneg %p10441
      $region62: #{spine_forward.1} parent=5 // pred_check_branch
        %10444 = sbr.rel (%p10442) target = $region64
      $region63: #{spine_forward.1} parent=5 // pred_region
        %s10445 = ssub.s32 %s17, 2
        // Predicated region
        $region65: #{spine_forward.1} parent=63 // pred_check
          %p10446 = pneg %p156
        $region66: #{spine_forward.1} parent=63 // pred_check_branch
          %10448 = sbr.rel (%p10446) target = $region68
        $region67: #{spine_forward.1} parent=63 // pred_region
          %s10449 = sand.u32 %s141, 1
          %s10450 = scalar_lea.sflag [#allocation3], %s10449
          %s10451 = sand.u32 %s141, 1
          %s10452 = smul.addr %s10451, 2048
          %s10453 = scalar_lea.vmem [#allocation2], %s10452
          %10454 = dma.done %s10450, 32768
        $region68: #{spine_forward.1} parent=63 // pred_fallthru
          _
        // Predicated region
        $region69: #{spine_forward.1} parent=63 // pred_check
          %p10455 = pneg %p182
        $region70: #{spine_forward.1} parent=63 // pred_check_branch
          %10457 = sbr.rel (%p10455) target = $region72
        $region71: #{spine_forward.1} parent=63 // pred_region
          %p10458 = scmp.lt.s32.totalorder %s23, 1
          %s10459 = scalar_select %p10458, %s23, 1
          %s10460 = smul.addr %s10459, 8
          %s10461 = smul.addr %s10460, 8
          %s10462 = scalar_lea.vmem %s6, %s10461
        $region72: #{spine_forward.1} parent=63 // pred_fallthru
          _
        // Predicated region
        $region73: #{spine_forward.1} parent=63 // pred_check
          %p10463 = pneg %p208
        $region74: #{spine_forward.1} parent=63 // pred_check_branch
          %10465 = sbr.rel (%p10463) target = $region76
        $region75: #{spine_forward.1} parent=63 // pred_region
          %p10466 = scmp.lt.s32.totalorder %s23, 1
          %s10467 = scalar_select %p10466, %s23, 1
          %s10468 = smul.addr %s10467, 3
          %s10469 = smul.addr %s10468, 8
          %s10470 = scalar_lea.vmem %s7, %s10469
        $region76: #{spine_forward.1} parent=63 // pred_fallthru
          _
      $region64: #{spine_forward.1} parent=5 // pred_fallthru
        _
    $region6: #{spine_forward.1} parent=1 // loop_footer
      %s21 = sadd.s32 1, %s17
    $region7: #{spine_forward.1} parent=1 // loop_footer_branch
      %16 = sbr.rel target = $region3
    $region8: #{spine_forward.1} parent=1 // loop_exit
      _
    %10471 = vsyncpa [#allocation3], 1
    %s10472 = scalar_lea.sflag [#allocation3], 1
    %10473 = vsyncpa %s10472, 1

</llo_original>
